<compile_context>
chip_gen: v7x
topology: tpu7x:2x2x1
jax: 0.10.0
libtpu: 0.0.40
codegen_flags: <defaults>
</compile_context>

<pallas_src>
import jax
import jax.numpy as jnp
import numpy as np
from jax import lax
from jax.experimental import pallas as pl
from jax.experimental.pallas import tpu as pltpu


# ----------------------------------------------------------------------------
# Wrapper: single pallas_call for the whole forward pass, TB samples per step
# ----------------------------------------------------------------------------
def forward(kparams, x, *, block_b=8):
    """x: (B, input_dim) float32 -> (B, 2) float32."""
    B, L = x.shape
    assert L % 8 == 0, "input_dim must be divisible by 8"
    assert block_b % 8 == 0, "block_b must be a multiple of 8"
    TB = block_b                      # samples per grid step (128 on v5e,
                                      # 128-256 on v6e/v7x for full MXU rows)
    Lq = L // 8
    cdt = kparams["w1"].dtype         # matmul-operand dtype (f32 or bf16)

    # Pitched per-sample layout: pitch P_i, valid data at offsets [D_i, D_i+Lin_i).
    P1, P2, P3 = L + 8, L // 2 + 4, L // 4 + 2
    D1, D2, D3 = 3, 2, 1              # == conv paddings, so tap shift == tap index
    N1, N2, N3 = TB * P1, TB * P2, TB * P3

    nb = pl.cdiv(B, TB)
    B_pad = nb * TB
    if B_pad != B:
        x = jnp.pad(x, ((0, B_pad - B), (0, 0)))
    # Pre-bake conv1's per-sample zero padding; contiguous (TB*P1)*4B DMA/step.
    # (Position must sit on sublanes for the im2col, hence the trailing dim 1.)
    xp = jnp.pad(x, ((0, 0), (D1, P1 - L - D1))).reshape(B_pad * P1, 1)

    # Validity masks for the pooled rows (zero out cross-sample "waste" rows so
    # they become the next layer's zero padding).  Constant across grid steps.
    m1 = jnp.tile((jnp.arange(P2) < L // 2).astype(jnp.float32)[:, None], (TB, 32))
    m2 = jnp.tile((jnp.arange(P3) < L // 4).astype(jnp.float32)[:, None], (TB, 64))

    def kernel(xp_ref, m1_ref, m2_ref,
               w1_ref, b1_ref, w2_ref, b2_ref, w3_ref, b3_ref,
               fw1_ref, fb1_ref, fw2_ref, fb2_ref, fw3_ref, fb3_ref,
               o_ref,
               a1, y1, hp2, a2, y2, hp3, a3, y3):

        def im2col(src_ref, a_ref, cin, k_taps):
            # A[b*P + t, k*cin:(k+1)*cin] = padded_src[b*P + t + k, :]:
            # one contiguous shifted copy per tap for the whole batch tile.
            n = a_ref.shape[0]
            for k in range(k_taps):
                a_ref[0:n - k, k * cin:(k + 1) * cin] = (
                    src_ref[k:n, :].astype(a_ref.dtype))

        def pool_mask_store(y_ref, b_ref, m_ref, dst_ref, d_off):
            # relu(max(y[2j], y[2j+1]) + b) == maxpool2(relu(conv + b)).
            m = y_ref.shape[0] // 2
            even = y_ref[pl.ds(0, m, stride=2), :]
            odd = y_ref[pl.ds(1, m, stride=2), :]
            pooled = jnp.maximum(jnp.maximum(even, odd) + b_ref[...], 0.0)
            pooled = jnp.where(m_ref[...] > 0.5, pooled, 0.0)   # kill waste rows
            # Shift by d_off so valid rows land at the next layer's data offset;
            # masked waste rows land exactly on its zero-padding rows.
            dst_ref[0:d_off, :] = jnp.zeros((d_off, dst_ref.shape[1]),
                                            dst_ref.dtype)
            dst_ref[d_off:m, :] = pooled[0:m - d_off, :].astype(dst_ref.dtype)

        # ---- conv1 (K=7, 1->32) + pool ----
        im2col(xp_ref, a1, 1, 7)
        y1[...] = jnp.dot(a1[...], w1_ref[...],
                          preferred_element_type=jnp.float32)
        pool_mask_store(y1, b1_ref, m1_ref, hp2, D2)

        # ---- conv2 (K=5, 32->64) + pool ----
        im2col(hp2, a2, 32, 5)
        y2[...] = jnp.dot(a2[...], w2_ref[...],
                          preferred_element_type=jnp.float32)
        pool_mask_store(y2, b2_ref, m2_ref, hp3, D3)

        # ---- conv3 (K=3, 64->128) ----
        im2col(hp3, a3, 64, 3)
        y3[...] = jnp.dot(a3[...], w3_ref[...],
                          preferred_element_type=jnp.float32)

        # ---- pool3 + flatten + fc1, fused: per output position p, gather the
        # pooled (TB, 128) slab with strided reads and accumulate against the
        # matching 128-row block of the (pre-permuted) fc1 weight. ----
        z = None
        for p in range(Lq):
            ev = y3[pl.ds(2 * p, TB, stride=P3), :]
            od = y3[pl.ds(2 * p + 1, TB, stride=P3), :]
            hpos = jnp.maximum(jnp.maximum(ev, od) + b3_ref[...], 0.0)
            part = jnp.dot(hpos.astype(cdt), fw1_ref[p * 128:(p + 1) * 128, :],
                           preferred_element_type=jnp.float32)
            z = part if z is None else z + part
        z = jnp.maximum(z + fb1_ref[...], 0.0)                  # (TB, 256)
        # TODO(synk): nn.Dropout(0.3) is inference-mode identity (no RNG mask).
        z = jnp.maximum(jnp.dot(z.astype(cdt), fw2_ref[...],
                                preferred_element_type=jnp.float32)
                        + fb2_ref[...], 0.0)                    # (TB, 64)
        z = jnp.dot(z.astype(cdt), fw3_ref[...],
                    preferred_element_type=jnp.float32) + fb3_ref[...]
        o_ref[...] = z.astype(o_ref.dtype)                      # (TB, 128)

    def full(a):                      # whole-array block, loaded once
        return pl.BlockSpec(a.shape, lambda g: (0,) * a.ndim)

    # TODO(synk): for very large input_dim on v7x, single-buffer the constant
    # weight blocks (pipeline_mode=pl.Buffered(1)) to halve resident weight VMEM.
    out = pl.pallas_call(
        kernel,
        out_shape=jax.ShapeDtypeStruct((B_pad, 128), jnp.float32),
        grid=(nb,),
        in_specs=[
            pl.BlockSpec((N1, 1), lambda g: (g, 0)),
            full(m1), full(m2),
            full(kparams["w1"]), full(kparams["b1"]),
            full(kparams["w2"]), full(kparams["b2"]),
            full(kparams["w3"]), full(kparams["b3"]),
            full(kparams["fw1"]), full(kparams["fb1"]),
            full(kparams["fw2"]), full(kparams["fb2"]),
            full(kparams["fw3"]), full(kparams["fb3"]),
        ],
        out_specs=pl.BlockSpec((TB, 128), lambda g: (g, 0)),
        scratch_shapes=[
            pltpu.VMEM((N1, 7), cdt),            # im2col, conv1
            pltpu.VMEM((N1, 32), jnp.float32),   # conv1 result (pre-pool)
            pltpu.VMEM((N2, 32), cdt),           # padded pooled-1 activations
            pltpu.VMEM((N2, 160), cdt),          # im2col, conv2
            pltpu.VMEM((N2, 64), jnp.float32),   # conv2 result
            pltpu.VMEM((N3, 64), cdt),           # padded pooled-2 activations
            pltpu.VMEM((N3, 192), cdt),          # im2col, conv3
            pltpu.VMEM((N3, 128), jnp.float32),  # conv3 result
        ],
        compiler_params=pltpu.CompilerParams(
            dimension_semantics=("parallel",),
            vmem_limit_bytes=64 * 1024 * 1024),
    )(xp, m1, m2,
      kparams["w1"], kparams["b1"], kparams["w2"], kparams["b2"],
      kparams["w3"], kparams["b3"], kparams["fw1"], kparams["fb1"],
      kparams["fw2"], kparams["fb2"], kparams["fw3"], kparams["fb3"])
    return out[:B, :2]


# ----------------------------------------------------------------------------
# Parameters: PyTorch-layout init + one-time kernel-layout preparation
# ----------------------------------------------------------------------------
def init_params(key, input_dim):
    ks = jax.random.split(key, 12)

    def u(k, shape, fan_in):
        bound = 1.0 / np.sqrt(fan_in)
        return jax.random.uniform(k, shape, jnp.float32, -bound, bound)

    flat = 128 * (input_dim // 8)
    return {
        "c1_w": u(ks[0], (32, 1, 7), 1 * 7),    "c1_b": u(ks[1], (32,), 1 * 7),
        "c2_w": u(ks[2], (64, 32, 5), 32 * 5),  "c2_b": u(ks[3], (64,), 32 * 5),
        "c3_w": u(ks[4], (128, 64, 3), 64 * 3), "c3_b": u(ks[5], (128,), 64 * 3),
        "f1_w": u(ks[6], (256, flat), flat),    "f1_b": u(ks[7], (256,), flat),
        "f2_w": u(ks[8], (64, 256), 256),       "f2_b": u(ks[9], (64,), 256),
        "f3_w": u(ks[10], (2, 64), 64),         "f3_b": u(ks[11], (2,), 64),
    }


def prepare_params(params, input_dim, compute_dtype=jnp.float32):
    """One-time relayout of PyTorch-layout params into kernel layout.

    Conv weights (Cout, Cin, K) -> im2col layout (K*Cin, Cout); FC weights are
    transposed to (in, out); fc1's input rows are permuted from PyTorch's
    channel-major flatten order (c*Lq + p) to position-major (p*128 + c), which
    removes the runtime flatten transpose; fc3 is zero-padded to 128 outputs so
    the kernel's output store is lane-dense.  Matmul operands are cast to
    `compute_dtype` (bfloat16 recommended); biases stay float32.
    """
    Lq = input_dim // 8

    def conv_w(w_oik):
        cout, cin, k = w_oik.shape
        return (jnp.transpose(w_oik, (2, 1, 0))
                .reshape(k * cin, cout).astype(compute_dtype))

    w1t = params["f1_w"].T                        # (128*Lq, 256), row = c*Lq + p
    fw1 = (w1t.reshape(128, Lq, 256)
           .transpose(1, 0, 2)                    # -> [p, c, :]
           .reshape(Lq * 128, 256).astype(compute_dtype))

    fw3 = jnp.zeros((64, 128), compute_dtype).at[:, :2].set(
        params["f3_w"].T.astype(compute_dtype))
    fb3 = jnp.zeros((1, 128), jnp.float32).at[:, :2].set(params["f3_b"][None, :])

    return {
        "w1": conv_w(params["c1_w"]), "b1": params["c1_b"].reshape(1, -1),
        "w2": conv_w(params["c2_w"]), "b2": params["c2_b"].reshape(1, -1),
        "w3": conv_w(params["c3_w"]), "b3": params["c3_b"].reshape(1, -1),
        "fw1": fw1, "fb1": params["f1_b"].reshape(1, -1),
        "fw2": params["f2_w"].T.astype(compute_dtype),
        "fb2": params["f2_b"].reshape(1, -1),
        "fw3": fw3, "fb3": fb3,
    }


# ----------------------------------------------------------------------------
# Pure-JAX reference (mirrors the PyTorch forward) for a sanity check
# ----------------------------------------------------------------------------
def reference(params, x):
    h = x[:, None, :]                             # (B, 1, L)  NCL
    for name, pad in (("c1", 3), ("c2", 2), ("c3", 1)):
        w, b = params[name + "_w"], params[name + "_b"]
        h = lax.conv_general_dilated(
            h, w, window_strides=(1,), padding=[(pad, pad)],
            dimension_numbers=("NCH", "OIH", "NCH"))
        h = jnp.maximum(h + b[None, :, None], 0.0)
        Bb, C, Ll = h.shape
        h = jnp.max(h.reshape(Bb, C, Ll // 2, 2), axis=-1)
    h = h.reshape(h.shape[0], -1)                 # channel-major flatten
    h = jnp.maximum(h @ params["f1_w"].T + params["f1_b"], 0.0)
    h = jnp.maximum(h @ params["f2_w"].T + params["f2_b"], 0.0)
    h = h @ params["f3_w"].T + params["f3_b"]
    return h


if __name__ == "__main__":
    INPUT_DIM = 64          # must be divisible by 8 (flat_features = 128 * L/8)
    BATCH = 16
    BLOCK_B = 8             # small test tile; use 128 (v5e) / 256 (v6e, v7x)

    key = jax.random.PRNGKey(0)
    pkey, xkey = jax.random.split(key)
    params = init_params(pkey, INPUT_DIM)
    x = jax.random.normal(xkey, (BATCH, INPUT_DIM), jnp.float32)

    ref = jax.block_until_ready(reference(params, x))
    fwd = jax.jit(forward, static_argnames=("block_b",))

    # float32 matmul operands: tight check against the pure-JAX reference.
    kp_f32 = prepare_params(params, INPUT_DIM, compute_dtype=jnp.float32)
    out_f32 = jax.block_until_ready(fwd(kp_f32, x, block_b=BLOCK_B))
    assert out_f32.shape == (BATCH, 2)
    np.testing.assert_allclose(np.asarray(out_f32), np.asarray(ref),
                               rtol=1e-3, atol=1e-3)

    # bfloat16 matmul operands (full-rate MXU), f32 accumulate + f32 epilogue.
    kp_bf16 = prepare_params(params, INPUT_DIM, compute_dtype=jnp.bfloat16)
    out_bf16 = jax.block_until_ready(fwd(kp_bf16, x, block_b=BLOCK_B))
    np.testing.assert_allclose(np.asarray(out_bf16), np.asarray(ref),
                               rtol=6e-2, atol=6e-2)

    print("KERNEL_OK")
</pallas_src>

<mosaic_0001>
module attributes {stable_mosaic.version = 11 : i64} {
  func.func @kernel(%arg0: i32, %arg1: memref<576x1xf32, #tpu.memory_space<vmem>>, %arg2: memref<288x32xf32, #tpu.memory_space<vmem>>, %arg3: memref<144x64xf32, #tpu.memory_space<vmem>>, %arg4: memref<7x32xf32, #tpu.memory_space<vmem>>, %arg5: memref<1x32xf32, #tpu.memory_space<vmem>>, %arg6: memref<160x64xf32, #tpu.memory_space<vmem>>, %arg7: memref<1x64xf32, #tpu.memory_space<vmem>>, %arg8: memref<192x128xf32, #tpu.memory_space<vmem>>, %arg9: memref<1x128xf32, #tpu.memory_space<vmem>>, %arg10: memref<1024x256xf32, #tpu.memory_space<vmem>>, %arg11: memref<1x256xf32, #tpu.memory_space<vmem>>, %arg12: memref<256x64xf32, #tpu.memory_space<vmem>>, %arg13: memref<1x64xf32, #tpu.memory_space<vmem>>, %arg14: memref<64x128xf32, #tpu.memory_space<vmem>>, %arg15: memref<1x128xf32, #tpu.memory_space<vmem>>, %arg16: memref<8x128xf32, #tpu.memory_space<vmem>>, %arg17: memref<576x7xf32, #tpu.memory_space<vmem>>, %arg18: memref<576x32xf32, #tpu.memory_space<vmem>>, %arg19: memref<288x32xf32, #tpu.memory_space<vmem>>, %arg20: memref<288x160xf32, #tpu.memory_space<vmem>>, %arg21: memref<288x64xf32, #tpu.memory_space<vmem>>, %arg22: memref<144x64xf32, #tpu.memory_space<vmem>>, %arg23: memref<144x192xf32, #tpu.memory_space<vmem>>, %arg24: memref<144x128xf32, #tpu.memory_space<vmem>>) attributes {dimension_semantics = [#tpu.dimension_semantics<parallel>], iteration_bounds = array<i64: 2>, scalar_prefetch = 0 : i64, scratch_operands = 8 : i64, tpu.core_type = #tpu.core_type<tc>, window_params = [{transform_indices = @transform_0, window_bounds = array<i64: 576, 1>}, {pipeline_mode = #tpu.pipeline_mode<synchronous>, transform_indices = @transform_1, window_bounds = array<i64: 288, 32>}, {pipeline_mode = #tpu.pipeline_mode<synchronous>, transform_indices = @transform_2, window_bounds = array<i64: 144, 64>}, {pipeline_mode = #tpu.pipeline_mode<synchronous>, transform_indices = @transform_3, window_bounds = array<i64: 7, 32>}, {pipeline_mode = #tpu.pipeline_mode<synchronous>, transform_indices = @transform_4, window_bounds = array<i64: 1, 32>}, {pipeline_mode = #tpu.pipeline_mode<synchronous>, transform_indices = @transform_5, window_bounds = array<i64: 160, 64>}, {pipeline_mode = #tpu.pipeline_mode<synchronous>, transform_indices = @transform_6, window_bounds = array<i64: 1, 64>}, {pipeline_mode = #tpu.pipeline_mode<synchronous>, transform_indices = @transform_7, window_bounds = array<i64: 192, 128>}, {pipeline_mode = #tpu.pipeline_mode<synchronous>, transform_indices = @transform_8, window_bounds = array<i64: 1, 128>}, {pipeline_mode = #tpu.pipeline_mode<synchronous>, transform_indices = @transform_9, window_bounds = array<i64: 1024, 256>}, {pipeline_mode = #tpu.pipeline_mode<synchronous>, transform_indices = @transform_10, window_bounds = array<i64: 1, 256>}, {pipeline_mode = #tpu.pipeline_mode<synchronous>, transform_indices = @transform_11, window_bounds = array<i64: 256, 64>}, {pipeline_mode = #tpu.pipeline_mode<synchronous>, transform_indices = @transform_12, window_bounds = array<i64: 1, 64>}, {pipeline_mode = #tpu.pipeline_mode<synchronous>, transform_indices = @transform_13, window_bounds = array<i64: 64, 128>}, {pipeline_mode = #tpu.pipeline_mode<synchronous>, transform_indices = @transform_14, window_bounds = array<i64: 1, 128>}, {transform_indices = @transform_15, window_bounds = array<i64: 8, 128>}]} {
    %c0 = arith.constant 0 : index
    %c0_0 = arith.constant 0 : index
    %0 = vector.load %arg1[%c0, %c0_0] : memref<576x1xf32, #tpu.memory_space<vmem>>, vector<576x1xf32>
    %c0_1 = arith.constant 0 : index
    %c0_2 = arith.constant 0 : index
    %1 = vector.load %arg17[%c0_1, %c0_2] : memref<576x7xf32, #tpu.memory_space<vmem>>, vector<576x1xf32>
    tpu.vector_store %arg17[%c0_1, %c0_2], %0 {strides = array<i32>} : memref<576x7xf32, #tpu.memory_space<vmem>>, vector<576x1xf32>,
    %c1 = arith.constant 1 : index
    %c0_3 = arith.constant 0 : index
    %2 = vector.load %arg1[%c1, %c0_3] : memref<576x1xf32, #tpu.memory_space<vmem>>, vector<575x1xf32>
    %c0_4 = arith.constant 0 : index
    %c1_5 = arith.constant 1 : index
    %3 = vector.load %arg17[%c0_4, %c1_5] : memref<576x7xf32, #tpu.memory_space<vmem>>, vector<575x1xf32>
    tpu.vector_store %arg17[%c0_4, %c1_5], %2 {strides = array<i32>} : memref<576x7xf32, #tpu.memory_space<vmem>>, vector<575x1xf32>,
    %c2 = arith.constant 2 : index
    %c0_6 = arith.constant 0 : index
    %4 = vector.load %arg1[%c2, %c0_6] : memref<576x1xf32, #tpu.memory_space<vmem>>, vector<574x1xf32>
    %c0_7 = arith.constant 0 : index
    %c2_8 = arith.constant 2 : index
    %5 = vector.load %arg17[%c0_7, %c2_8] : memref<576x7xf32, #tpu.memory_space<vmem>>, vector<574x1xf32>
    tpu.vector_store %arg17[%c0_7, %c2_8], %4 {strides = array<i32>} : memref<576x7xf32, #tpu.memory_space<vmem>>, vector<574x1xf32>,
    %c3 = arith.constant 3 : index
    %c0_9 = arith.constant 0 : index
    %6 = vector.load %arg1[%c3, %c0_9] : memref<576x1xf32, #tpu.memory_space<vmem>>, vector<573x1xf32>
    %c0_10 = arith.constant 0 : index
    %c3_11 = arith.constant 3 : index
    %7 = vector.load %arg17[%c0_10, %c3_11] : memref<576x7xf32, #tpu.memory_space<vmem>>, vector<573x1xf32>
    tpu.vector_store %arg17[%c0_10, %c3_11], %6 {strides = array<i32>} : memref<576x7xf32, #tpu.memory_space<vmem>>, vector<573x1xf32>,
    %c4 = arith.constant 4 : index
    %c0_12 = arith.constant 0 : index
    %8 = vector.load %arg1[%c4, %c0_12] : memref<576x1xf32, #tpu.memory_space<vmem>>, vector<572x1xf32>
    %c0_13 = arith.constant 0 : index
    %c4_14 = arith.constant 4 : index
    %9 = vector.load %arg17[%c0_13, %c4_14] : memref<576x7xf32, #tpu.memory_space<vmem>>, vector<572x1xf32>
    tpu.vector_store %arg17[%c0_13, %c4_14], %8 {strides = array<i32>} : memref<576x7xf32, #tpu.memory_space<vmem>>, vector<572x1xf32>,
    %c5 = arith.constant 5 : index
    %c0_15 = arith.constant 0 : index
    %10 = vector.load %arg1[%c5, %c0_15] : memref<576x1xf32, #tpu.memory_space<vmem>>, vector<571x1xf32>
    %c0_16 = arith.constant 0 : index
    %c5_17 = arith.constant 5 : index
    %11 = vector.load %arg17[%c0_16, %c5_17] : memref<576x7xf32, #tpu.memory_space<vmem>>, vector<571x1xf32>
    tpu.vector_store %arg17[%c0_16, %c5_17], %10 {strides = array<i32>} : memref<576x7xf32, #tpu.memory_space<vmem>>, vector<571x1xf32>,
    %c6 = arith.constant 6 : index
    %c0_18 = arith.constant 0 : index
    %12 = vector.load %arg1[%c6, %c0_18] : memref<576x1xf32, #tpu.memory_space<vmem>>, vector<570x1xf32>
    %c0_19 = arith.constant 0 : index
    %c6_20 = arith.constant 6 : index
    %13 = vector.load %arg17[%c0_19, %c6_20] : memref<576x7xf32, #tpu.memory_space<vmem>>, vector<570x1xf32>
    tpu.vector_store %arg17[%c0_19, %c6_20], %12 {strides = array<i32>} : memref<576x7xf32, #tpu.memory_space<vmem>>, vector<570x1xf32>,
    %c0_21 = arith.constant 0 : index
    %c0_22 = arith.constant 0 : index
    %14 = vector.load %arg17[%c0_21, %c0_22] : memref<576x7xf32, #tpu.memory_space<vmem>>, vector<576x7xf32>
    %c0_23 = arith.constant 0 : index
    %c0_24 = arith.constant 0 : index
    %15 = vector.load %arg4[%c0_23, %c0_24] : memref<7x32xf32, #tpu.memory_space<vmem>>, vector<7x32xf32>
    %cst = arith.constant dense<0.000000e+00> : vector<576x32xf32>
    %16 = tpu.matmul %14, %15, %cst {dimension_numbers = #tpu.dot_dimension_numbers<[1], [0], [0], [1], [0, 0, 1, 1], [], []>} : vector<576x7xf32>, vector<7x32xf32>, vector<576x32xf32> -> vector<576x32xf32>
    %c0_25 = arith.constant 0 : index
    %c0_26 = arith.constant 0 : index
    %17 = vector.load %arg18[%c0_25, %c0_26] : memref<576x32xf32, #tpu.memory_space<vmem>>, vector<576x32xf32>
    tpu.vector_store %arg18[%c0_25, %c0_26], %16 {strides = array<i32>} : memref<576x32xf32, #tpu.memory_space<vmem>>, vector<576x32xf32>,
    %c0_27 = arith.constant 0 : index
    %c0_28 = arith.constant 0 : index
    %18 = tpu.strided_load %arg18[%c0_27, %c0_28] {strides = array<i32: 2, 1>} : memref<576x32xf32, #tpu.memory_space<vmem>>, vector<288x32xf32>
    %c1_29 = arith.constant 1 : index
    %c0_30 = arith.constant 0 : index
    %19 = tpu.strided_load %arg18[%c1_29, %c0_30] {strides = array<i32: 2, 1>} : memref<576x32xf32, #tpu.memory_space<vmem>>, vector<288x32xf32>
    %20 = arith.maximumf %18, %19 : vector<288x32xf32>
    %c0_31 = arith.constant 0 : index
    %c0_32 = arith.constant 0 : index
    %21 = vector.load %arg5[%c0_31, %c0_32] : memref<1x32xf32, #tpu.memory_space<vmem>>, vector<1x32xf32>
    %22 = vector.broadcast %21 : vector<1x32xf32> to vector<288x32xf32>
    %23 = arith.addf %20, %22 : vector<288x32xf32>
    %cst_33 = arith.constant 0.000000e+00 : f32
    %24 = vector.broadcast %cst_33 : f32 to vector<288x32xf32>
    %25 = arith.maximumf %23, %24 : vector<288x32xf32>
    %c0_34 = arith.constant 0 : index
    %c0_35 = arith.constant 0 : index
    %26 = vector.load %arg2[%c0_34, %c0_35] : memref<288x32xf32, #tpu.memory_space<vmem>>, vector<288x32xf32>
    %cst_36 = arith.constant 5.000000e-01 : f32
    %27 = vector.broadcast %cst_36 : f32 to vector<288x32xf32>
    %28 = arith.cmpf ogt, %26, %27 : vector<288x32xf32>
    %cst_37 = arith.constant 0.000000e+00 : f32
    %29 = vector.broadcast %cst_37 : f32 to vector<288x32xf32>
    %30 = arith.select %28, %25, %29 : vector<288x32xi1>, vector<288x32xf32>
    %cst_38 = arith.constant 0.000000e+00 : f32
    %31 = vector.broadcast %cst_38 : f32 to vector<2x32xf32>
    %c0_39 = arith.constant 0 : index
    %c0_40 = arith.constant 0 : index
    %32 = vector.load %arg19[%c0_39, %c0_40] : memref<288x32xf32, #tpu.memory_space<vmem>>, vector<2x32xf32>
    tpu.vector_store %arg19[%c0_39, %c0_40], %31 {strides = array<i32>} : memref<288x32xf32, #tpu.memory_space<vmem>>, vector<2x32xf32>,
    %33 = vector.extract_strided_slice %30 {offsets = [0, 0], sizes = [286, 32], strides = [1, 1]} : vector<288x32xf32> to vector<286x32xf32>
    %c2_41 = arith.constant 2 : index
    %c0_42 = arith.constant 0 : index
    %34 = vector.load %arg19[%c2_41, %c0_42] : memref<288x32xf32, #tpu.memory_space<vmem>>, vector<286x32xf32>
    tpu.vector_store %arg19[%c2_41, %c0_42], %33 {strides = array<i32>} : memref<288x32xf32, #tpu.memory_space<vmem>>, vector<286x32xf32>,
    %c0_43 = arith.constant 0 : index
    %c0_44 = arith.constant 0 : index
    %35 = vector.load %arg19[%c0_43, %c0_44] : memref<288x32xf32, #tpu.memory_space<vmem>>, vector<288x32xf32>
    %c0_45 = arith.constant 0 : index
    %c0_46 = arith.constant 0 : index
    %36 = vector.load %arg20[%c0_45, %c0_46] : memref<288x160xf32, #tpu.memory_space<vmem>>, vector<288x32xf32>
    tpu.vector_store %arg20[%c0_45, %c0_46], %35 {strides = array<i32>} : memref<288x160xf32, #tpu.memory_space<vmem>>, vector<288x32xf32>,
    %c1_47 = arith.constant 1 : index
    %c0_48 = arith.constant 0 : index
    %37 = vector.load %arg19[%c1_47, %c0_48] : memref<288x32xf32, #tpu.memory_space<vmem>>, vector<287x32xf32>
    %c0_49 = arith.constant 0 : index
    %c32 = arith.constant 32 : index
    %38 = vector.load %arg20[%c0_49, %c32] : memref<288x160xf32, #tpu.memory_space<vmem>>, vector<287x32xf32>
    tpu.vector_store %arg20[%c0_49, %c32], %37 {strides = array<i32>} : memref<288x160xf32, #tpu.memory_space<vmem>>, vector<287x32xf32>,
    %c2_50 = arith.constant 2 : index
    %c0_51 = arith.constant 0 : index
    %39 = vector.load %arg19[%c2_50, %c0_51] : memref<288x32xf32, #tpu.memory_space<vmem>>, vector<286x32xf32>
    %c0_52 = arith.constant 0 : index
    %c64 = arith.constant 64 : index
    %40 = vector.load %arg20[%c0_52, %c64] : memref<288x160xf32, #tpu.memory_space<vmem>>, vector<286x32xf32>
    tpu.vector_store %arg20[%c0_52, %c64], %39 {strides = array<i32>} : memref<288x160xf32, #tpu.memory_space<vmem>>, vector<286x32xf32>,
    %c3_53 = arith.constant 3 : index
    %c0_54 = arith.constant 0 : index
    %41 = vector.load %arg19[%c3_53, %c0_54] : memref<288x32xf32, #tpu.memory_space<vmem>>, vector<285x32xf32>
    %c0_55 = arith.constant 0 : index
    %c96 = arith.constant 96 : index
    %42 = vector.load %arg20[%c0_55, %c96] : memref<288x160xf32, #tpu.memory_space<vmem>>, vector<285x32xf32>
    tpu.vector_store %arg20[%c0_55, %c96], %41 {strides = array<i32>} : memref<288x160xf32, #tpu.memory_space<vmem>>, vector<285x32xf32>,
    %c4_56 = arith.constant 4 : index
    %c0_57 = arith.constant 0 : index
    %43 = vector.load %arg19[%c4_56, %c0_57] : memref<288x32xf32, #tpu.memory_space<vmem>>, vector<284x32xf32>
    %c0_58 = arith.constant 0 : index
    %c128 = arith.constant 128 : index
    %44 = vector.load %arg20[%c0_58, %c128] : memref<288x160xf32, #tpu.memory_space<vmem>>, vector<284x32xf32>
    tpu.vector_store %arg20[%c0_58, %c128], %43 {strides = array<i32>} : memref<288x160xf32, #tpu.memory_space<vmem>>, vector<284x32xf32>,
    %c0_59 = arith.constant 0 : index
    %c0_60 = arith.constant 0 : index
    %45 = vector.load %arg20[%c0_59, %c0_60] : memref<288x160xf32, #tpu.memory_space<vmem>>, vector<288x160xf32>
    %c0_61 = arith.constant 0 : index
    %c0_62 = arith.constant 0 : index
    %46 = vector.load %arg6[%c0_61, %c0_62] : memref<160x64xf32, #tpu.memory_space<vmem>>, vector<160x64xf32>
    %cst_63 = arith.constant dense<0.000000e+00> : vector<288x64xf32>
    %47 = tpu.matmul %45, %46, %cst_63 {dimension_numbers = #tpu.dot_dimension_numbers<[1], [0], [0], [1], [0, 0, 1, 1], [], []>} : vector<288x160xf32>, vector<160x64xf32>, vector<288x64xf32> -> vector<288x64xf32>
    %c0_64 = arith.constant 0 : index
    %c0_65 = arith.constant 0 : index
    %48 = vector.load %arg21[%c0_64, %c0_65] : memref<288x64xf32, #tpu.memory_space<vmem>>, vector<288x64xf32>
    tpu.vector_store %arg21[%c0_64, %c0_65], %47 {strides = array<i32>} : memref<288x64xf32, #tpu.memory_space<vmem>>, vector<288x64xf32>,
    %c0_66 = arith.constant 0 : index
    %c0_67 = arith.constant 0 : index
    %49 = tpu.strided_load %arg21[%c0_66, %c0_67] {strides = array<i32: 2, 1>} : memref<288x64xf32, #tpu.memory_space<vmem>>, vector<144x64xf32>
    %c1_68 = arith.constant 1 : index
    %c0_69 = arith.constant 0 : index
    %50 = tpu.strided_load %arg21[%c1_68, %c0_69] {strides = array<i32: 2, 1>} : memref<288x64xf32, #tpu.memory_space<vmem>>, vector<144x64xf32>
    %51 = arith.maximumf %49, %50 : vector<144x64xf32>
    %c0_70 = arith.constant 0 : index
    %c0_71 = arith.constant 0 : index
    %52 = vector.load %arg7[%c0_70, %c0_71] : memref<1x64xf32, #tpu.memory_space<vmem>>, vector<1x64xf32>
    %53 = vector.broadcast %52 : vector<1x64xf32> to vector<144x64xf32>
    %54 = arith.addf %51, %53 : vector<144x64xf32>
    %cst_72 = arith.constant 0.000000e+00 : f32
    %55 = vector.broadcast %cst_72 : f32 to vector<144x64xf32>
    %56 = arith.maximumf %54, %55 : vector<144x64xf32>
    %c0_73 = arith.constant 0 : index
    %c0_74 = arith.constant 0 : index
    %57 = vector.load %arg3[%c0_73, %c0_74] : memref<144x64xf32, #tpu.memory_space<vmem>>, vector<144x64xf32>
    %cst_75 = arith.constant 5.000000e-01 : f32
    %58 = vector.broadcast %cst_75 : f32 to vector<144x64xf32>
    %59 = arith.cmpf ogt, %57, %58 : vector<144x64xf32>
    %cst_76 = arith.constant 0.000000e+00 : f32
    %60 = vector.broadcast %cst_76 : f32 to vector<144x64xf32>
    %61 = arith.select %59, %56, %60 : vector<144x64xi1>, vector<144x64xf32>
    %cst_77 = arith.constant 0.000000e+00 : f32
    %62 = vector.broadcast %cst_77 : f32 to vector<1x64xf32>
    %c0_78 = arith.constant 0 : index
    %c0_79 = arith.constant 0 : index
    %63 = vector.load %arg22[%c0_78, %c0_79] : memref<144x64xf32, #tpu.memory_space<vmem>>, vector<1x64xf32>
    tpu.vector_store %arg22[%c0_78, %c0_79], %62 {strides = array<i32>} : memref<144x64xf32, #tpu.memory_space<vmem>>, vector<1x64xf32>,
    %64 = vector.extract_strided_slice %61 {offsets = [0, 0], sizes = [143, 64], strides = [1, 1]} : vector<144x64xf32> to vector<143x64xf32>
    %c1_80 = arith.constant 1 : index
    %c0_81 = arith.constant 0 : index
    %65 = vector.load %arg22[%c1_80, %c0_81] : memref<144x64xf32, #tpu.memory_space<vmem>>, vector<143x64xf32>
    tpu.vector_store %arg22[%c1_80, %c0_81], %64 {strides = array<i32>} : memref<144x64xf32, #tpu.memory_space<vmem>>, vector<143x64xf32>,
    %c0_82 = arith.constant 0 : index
    %c0_83 = arith.constant 0 : index
    %66 = vector.load %arg22[%c0_82, %c0_83] : memref<144x64xf32, #tpu.memory_space<vmem>>, vector<144x64xf32>
    %c0_84 = arith.constant 0 : index
    %c0_85 = arith.constant 0 : index
    %67 = vector.load %arg23[%c0_84, %c0_85] : memref<144x192xf32, #tpu.memory_space<vmem>>, vector<144x64xf32>
    tpu.vector_store %arg23[%c0_84, %c0_85], %66 {strides = array<i32>} : memref<144x192xf32, #tpu.memory_space<vmem>>, vector<144x64xf32>,
    %c1_86 = arith.constant 1 : index
    %c0_87 = arith.constant 0 : index
    %68 = vector.load %arg22[%c1_86, %c0_87] : memref<144x64xf32, #tpu.memory_space<vmem>>, vector<143x64xf32>
    %c0_88 = arith.constant 0 : index
    %c64_89 = arith.constant 64 : index
    %69 = vector.load %arg23[%c0_88, %c64_89] : memref<144x192xf32, #tpu.memory_space<vmem>>, vector<143x64xf32>
    tpu.vector_store %arg23[%c0_88, %c64_89], %68 {strides = array<i32>} : memref<144x192xf32, #tpu.memory_space<vmem>>, vector<143x64xf32>,
    %c2_90 = arith.constant 2 : index
    %c0_91 = arith.constant 0 : index
    %70 = vector.load %arg22[%c2_90, %c0_91] : memref<144x64xf32, #tpu.memory_space<vmem>>, vector<142x64xf32>
    %c0_92 = arith.constant 0 : index
    %c128_93 = arith.constant 128 : index
    %71 = vector.load %arg23[%c0_92, %c128_93] : memref<144x192xf32, #tpu.memory_space<vmem>>, vector<142x64xf32>
    tpu.vector_store %arg23[%c0_92, %c128_93], %70 {strides = array<i32>} : memref<144x192xf32, #tpu.memory_space<vmem>>, vector<142x64xf32>,
    %c0_94 = arith.constant 0 : index
    %c0_95 = arith.constant 0 : index
    %72 = vector.load %arg23[%c0_94, %c0_95] : memref<144x192xf32, #tpu.memory_space<vmem>>, vector<144x192xf32>
    %c0_96 = arith.constant 0 : index
    %c0_97 = arith.constant 0 : index
    %73 = vector.load %arg8[%c0_96, %c0_97] : memref<192x128xf32, #tpu.memory_space<vmem>>, vector<192x128xf32>
    %cst_98 = arith.constant dense<0.000000e+00> : vector<144x128xf32>
    %74 = tpu.matmul %72, %73, %cst_98 {dimension_numbers = #tpu.dot_dimension_numbers<[1], [0], [0], [1], [0, 0, 1, 1], [], []>} : vector<144x192xf32>, vector<192x128xf32>, vector<144x128xf32> -> vector<144x128xf32>
    %c0_99 = arith.constant 0 : index
    %c0_100 = arith.constant 0 : index
    %75 = vector.load %arg24[%c0_99, %c0_100] : memref<144x128xf32, #tpu.memory_space<vmem>>, vector<144x128xf32>
    tpu.vector_store %arg24[%c0_99, %c0_100], %74 {strides = array<i32>} : memref<144x128xf32, #tpu.memory_space<vmem>>, vector<144x128xf32>,
    %c0_101 = arith.constant 0 : index
    %c0_102 = arith.constant 0 : index
    %76 = tpu.strided_load %arg24[%c0_101, %c0_102] {strides = array<i32: 18, 1>} : memref<144x128xf32, #tpu.memory_space<vmem>>, vector<8x128xf32>
    %c1_103 = arith.constant 1 : index
    %c0_104 = arith.constant 0 : index
    %77 = tpu.strided_load %arg24[%c1_103, %c0_104] {strides = array<i32: 18, 1>} : memref<144x128xf32, #tpu.memory_space<vmem>>, vector<8x128xf32>
    %78 = arith.maximumf %76, %77 : vector<8x128xf32>
    %c0_105 = arith.constant 0 : index
    %c0_106 = arith.constant 0 : index
    %79 = vector.load %arg9[%c0_105, %c0_106] : memref<1x128xf32, #tpu.memory_space<vmem>>, vector<1x128xf32>
    %80 = vector.broadcast %79 : vector<1x128xf32> to vector<8x128xf32>
    %81 = arith.addf %78, %80 : vector<8x128xf32>
    %cst_107 = arith.constant 0.000000e+00 : f32
    %82 = vector.broadcast %cst_107 : f32 to vector<8x128xf32>
    %83 = arith.maximumf %81, %82 : vector<8x128xf32>
    %c0_108 = arith.constant 0 : index
    %c0_109 = arith.constant 0 : index
    %84 = vector.load %arg10[%c0_108, %c0_109] : memref<1024x256xf32, #tpu.memory_space<vmem>>, vector<128x256xf32>
    %cst_110 = arith.constant dense<0.000000e+00> : vector<8x256xf32>
    %85 = tpu.matmul %83, %84, %cst_110 {dimension_numbers = #tpu.dot_dimension_numbers<[1], [0], [0], [1], [0, 0, 1, 1], [], []>} : vector<8x128xf32>, vector<128x256xf32>, vector<8x256xf32> -> vector<8x256xf32>
    %c2_111 = arith.constant 2 : index
    %c0_112 = arith.constant 0 : index
    %86 = tpu.strided_load %arg24[%c2_111, %c0_112] {strides = array<i32: 18, 1>} : memref<144x128xf32, #tpu.memory_space<vmem>>, vector<8x128xf32>
    %c3_113 = arith.constant 3 : index
    %c0_114 = arith.constant 0 : index
    %87 = tpu.strided_load %arg24[%c3_113, %c0_114] {strides = array<i32: 18, 1>} : memref<144x128xf32, #tpu.memory_space<vmem>>, vector<8x128xf32>
    %88 = arith.maximumf %86, %87 : vector<8x128xf32>
    %c0_115 = arith.constant 0 : index
    %c0_116 = arith.constant 0 : index
    %89 = vector.load %arg9[%c0_115, %c0_116] : memref<1x128xf32, #tpu.memory_space<vmem>>, vector<1x128xf32>
    %90 = vector.broadcast %89 : vector<1x128xf32> to vector<8x128xf32>
    %91 = arith.addf %88, %90 : vector<8x128xf32>
    %cst_117 = arith.constant 0.000000e+00 : f32
    %92 = vector.broadcast %cst_117 : f32 to vector<8x128xf32>
    %93 = arith.maximumf %91, %92 : vector<8x128xf32>
    %c128_118 = arith.constant 128 : index
    %c0_119 = arith.constant 0 : index
    %94 = vector.load %arg10[%c128_118, %c0_119] : memref<1024x256xf32, #tpu.memory_space<vmem>>, vector<128x256xf32>
    %cst_120 = arith.constant dense<0.000000e+00> : vector<8x256xf32>
    %95 = tpu.matmul %93, %94, %cst_120 {dimension_numbers = #tpu.dot_dimension_numbers<[1], [0], [0], [1], [0, 0, 1, 1], [], []>} : vector<8x128xf32>, vector<128x256xf32>, vector<8x256xf32> -> vector<8x256xf32>
    %96 = arith.addf %85, %95 : vector<8x256xf32>
    %c4_121 = arith.constant 4 : index
    %c0_122 = arith.constant 0 : index
    %97 = tpu.strided_load %arg24[%c4_121, %c0_122] {strides = array<i32: 18, 1>} : memref<144x128xf32, #tpu.memory_space<vmem>>, vector<8x128xf32>
    %c5_123 = arith.constant 5 : index
    %c0_124 = arith.constant 0 : index
    %98 = tpu.strided_load %arg24[%c5_123, %c0_124] {strides = array<i32: 18, 1>} : memref<144x128xf32, #tpu.memory_space<vmem>>, vector<8x128xf32>
    %99 = arith.maximumf %97, %98 : vector<8x128xf32>
    %c0_125 = arith.constant 0 : index
    %c0_126 = arith.constant 0 : index
    %100 = vector.load %arg9[%c0_125, %c0_126] : memref<1x128xf32, #tpu.memory_space<vmem>>, vector<1x128xf32>
    %101 = vector.broadcast %100 : vector<1x128xf32> to vector<8x128xf32>
    %102 = arith.addf %99, %101 : vector<8x128xf32>
    %cst_127 = arith.constant 0.000000e+00 : f32
    %103 = vector.broadcast %cst_127 : f32 to vector<8x128xf32>
    %104 = arith.maximumf %102, %103 : vector<8x128xf32>
    %c256 = arith.constant 256 : index
    %c0_128 = arith.constant 0 : index
    %105 = vector.load %arg10[%c256, %c0_128] : memref<1024x256xf32, #tpu.memory_space<vmem>>, vector<128x256xf32>
    %cst_129 = arith.constant dense<0.000000e+00> : vector<8x256xf32>
    %106 = tpu.matmul %104, %105, %cst_129 {dimension_numbers = #tpu.dot_dimension_numbers<[1], [0], [0], [1], [0, 0, 1, 1], [], []>} : vector<8x128xf32>, vector<128x256xf32>, vector<8x256xf32> -> vector<8x256xf32>
    %107 = arith.addf %96, %106 : vector<8x256xf32>
    %c6_130 = arith.constant 6 : index
    %c0_131 = arith.constant 0 : index
    %108 = tpu.strided_load %arg24[%c6_130, %c0_131] {strides = array<i32: 18, 1>} : memref<144x128xf32, #tpu.memory_space<vmem>>, vector<8x128xf32>
    %c7 = arith.constant 7 : index
    %c0_132 = arith.constant 0 : index
    %109 = tpu.strided_load %arg24[%c7, %c0_132] {strides = array<i32: 18, 1>} : memref<144x128xf32, #tpu.memory_space<vmem>>, vector<8x128xf32>
    %110 = arith.maximumf %108, %109 : vector<8x128xf32>
    %c0_133 = arith.constant 0 : index
    %c0_134 = arith.constant 0 : index
    %111 = vector.load %arg9[%c0_133, %c0_134] : memref<1x128xf32, #tpu.memory_space<vmem>>, vector<1x128xf32>
    %112 = vector.broadcast %111 : vector<1x128xf32> to vector<8x128xf32>
    %113 = arith.addf %110, %112 : vector<8x128xf32>
    %cst_135 = arith.constant 0.000000e+00 : f32
    %114 = vector.broadcast %cst_135 : f32 to vector<8x128xf32>
    %115 = arith.maximumf %113, %114 : vector<8x128xf32>
    %c384 = arith.constant 384 : index
    %c0_136 = arith.constant 0 : index
    %116 = vector.load %arg10[%c384, %c0_136] : memref<1024x256xf32, #tpu.memory_space<vmem>>, vector<128x256xf32>
    %cst_137 = arith.constant dense<0.000000e+00> : vector<8x256xf32>
    %117 = tpu.matmul %115, %116, %cst_137 {dimension_numbers = #tpu.dot_dimension_numbers<[1], [0], [0], [1], [0, 0, 1, 1], [], []>} : vector<8x128xf32>, vector<128x256xf32>, vector<8x256xf32> -> vector<8x256xf32>
    %118 = arith.addf %107, %117 : vector<8x256xf32>
    %c8 = arith.constant 8 : index
    %c0_138 = arith.constant 0 : index
    %119 = tpu.strided_load %arg24[%c8, %c0_138] {strides = array<i32: 18, 1>} : memref<144x128xf32, #tpu.memory_space<vmem>>, vector<8x128xf32>
    %c9 = arith.constant 9 : index
    %c0_139 = arith.constant 0 : index
    %120 = tpu.strided_load %arg24[%c9, %c0_139] {strides = array<i32: 18, 1>} : memref<144x128xf32, #tpu.memory_space<vmem>>, vector<8x128xf32>
    %121 = arith.maximumf %119, %120 : vector<8x128xf32>
    %c0_140 = arith.constant 0 : index
    %c0_141 = arith.constant 0 : index
    %122 = vector.load %arg9[%c0_140, %c0_141] : memref<1x128xf32, #tpu.memory_space<vmem>>, vector<1x128xf32>
    %123 = vector.broadcast %122 : vector<1x128xf32> to vector<8x128xf32>
    %124 = arith.addf %121, %123 : vector<8x128xf32>
    %cst_142 = arith.constant 0.000000e+00 : f32
    %125 = vector.broadcast %cst_142 : f32 to vector<8x128xf32>
    %126 = arith.maximumf %124, %125 : vector<8x128xf32>
    %c512 = arith.constant 512 : index
    %c0_143 = arith.constant 0 : index
    %127 = vector.load %arg10[%c512, %c0_143] : memref<1024x256xf32, #tpu.memory_space<vmem>>, vector<128x256xf32>
    %cst_144 = arith.constant dense<0.000000e+00> : vector<8x256xf32>
    %128 = tpu.matmul %126, %127, %cst_144 {dimension_numbers = #tpu.dot_dimension_numbers<[1], [0], [0], [1], [0, 0, 1, 1], [], []>} : vector<8x128xf32>, vector<128x256xf32>, vector<8x256xf32> -> vector<8x256xf32>
    %129 = arith.addf %118, %128 : vector<8x256xf32>
    %c10 = arith.constant 10 : index
    %c0_145 = arith.constant 0 : index
    %130 = tpu.strided_load %arg24[%c10, %c0_145] {strides = array<i32: 18, 1>} : memref<144x128xf32, #tpu.memory_space<vmem>>, vector<8x128xf32>
    %c11 = arith.constant 11 : index
    %c0_146 = arith.constant 0 : index
    %131 = tpu.strided_load %arg24[%c11, %c0_146] {strides = array<i32: 18, 1>} : memref<144x128xf32, #tpu.memory_space<vmem>>, vector<8x128xf32>
    %132 = arith.maximumf %130, %131 : vector<8x128xf32>
    %c0_147 = arith.constant 0 : index
    %c0_148 = arith.constant 0 : index
    %133 = vector.load %arg9[%c0_147, %c0_148] : memref<1x128xf32, #tpu.memory_space<vmem>>, vector<1x128xf32>
    %134 = vector.broadcast %133 : vector<1x128xf32> to vector<8x128xf32>
    %135 = arith.addf %132, %134 : vector<8x128xf32>
    %cst_149 = arith.constant 0.000000e+00 : f32
    %136 = vector.broadcast %cst_149 : f32 to vector<8x128xf32>
    %137 = arith.maximumf %135, %136 : vector<8x128xf32>
    %c640 = arith.constant 640 : index
    %c0_150 = arith.constant 0 : index
    %138 = vector.load %arg10[%c640, %c0_150] : memref<1024x256xf32, #tpu.memory_space<vmem>>, vector<128x256xf32>
    %cst_151 = arith.constant dense<0.000000e+00> : vector<8x256xf32>
    %139 = tpu.matmul %137, %138, %cst_151 {dimension_numbers = #tpu.dot_dimension_numbers<[1], [0], [0], [1], [0, 0, 1, 1], [], []>} : vector<8x128xf32>, vector<128x256xf32>, vector<8x256xf32> -> vector<8x256xf32>
    %140 = arith.addf %129, %139 : vector<8x256xf32>
    %c12 = arith.constant 12 : index
    %c0_152 = arith.constant 0 : index
    %141 = tpu.strided_load %arg24[%c12, %c0_152] {strides = array<i32: 18, 1>} : memref<144x128xf32, #tpu.memory_space<vmem>>, vector<8x128xf32>
    %c13 = arith.constant 13 : index
    %c0_153 = arith.constant 0 : index
    %142 = tpu.strided_load %arg24[%c13, %c0_153] {strides = array<i32: 18, 1>} : memref<144x128xf32, #tpu.memory_space<vmem>>, vector<8x128xf32>
    %143 = arith.maximumf %141, %142 : vector<8x128xf32>
    %c0_154 = arith.constant 0 : index
    %c0_155 = arith.constant 0 : index
    %144 = vector.load %arg9[%c0_154, %c0_155] : memref<1x128xf32, #tpu.memory_space<vmem>>, vector<1x128xf32>
    %145 = vector.broadcast %144 : vector<1x128xf32> to vector<8x128xf32>
    %146 = arith.addf %143, %145 : vector<8x128xf32>
    %cst_156 = arith.constant 0.000000e+00 : f32
    %147 = vector.broadcast %cst_156 : f32 to vector<8x128xf32>
    %148 = arith.maximumf %146, %147 : vector<8x128xf32>
    %c768 = arith.constant 768 : index
    %c0_157 = arith.constant 0 : index
    %149 = vector.load %arg10[%c768, %c0_157] : memref<1024x256xf32, #tpu.memory_space<vmem>>, vector<128x256xf32>
    %cst_158 = arith.constant dense<0.000000e+00> : vector<8x256xf32>
    %150 = tpu.matmul %148, %149, %cst_158 {dimension_numbers = #tpu.dot_dimension_numbers<[1], [0], [0], [1], [0, 0, 1, 1], [], []>} : vector<8x128xf32>, vector<128x256xf32>, vector<8x256xf32> -> vector<8x256xf32>
    %151 = arith.addf %140, %150 : vector<8x256xf32>
    %c14 = arith.constant 14 : index
    %c0_159 = arith.constant 0 : index
    %152 = tpu.strided_load %arg24[%c14, %c0_159] {strides = array<i32: 18, 1>} : memref<144x128xf32, #tpu.memory_space<vmem>>, vector<8x128xf32>
    %c15 = arith.constant 15 : index
    %c0_160 = arith.constant 0 : index
    %153 = tpu.strided_load %arg24[%c15, %c0_160] {strides = array<i32: 18, 1>} : memref<144x128xf32, #tpu.memory_space<vmem>>, vector<8x128xf32>
    %154 = arith.maximumf %152, %153 : vector<8x128xf32>
    %c0_161 = arith.constant 0 : index
    %c0_162 = arith.constant 0 : index
    %155 = vector.load %arg9[%c0_161, %c0_162] : memref<1x128xf32, #tpu.memory_space<vmem>>, vector<1x128xf32>
    %156 = vector.broadcast %155 : vector<1x128xf32> to vector<8x128xf32>
    %157 = arith.addf %154, %156 : vector<8x128xf32>
    %cst_163 = arith.constant 0.000000e+00 : f32
    %158 = vector.broadcast %cst_163 : f32 to vector<8x128xf32>
    %159 = arith.maximumf %157, %158 : vector<8x128xf32>
    %c896 = arith.constant 896 : index
    %c0_164 = arith.constant 0 : index
    %160 = vector.load %arg10[%c896, %c0_164] : memref<1024x256xf32, #tpu.memory_space<vmem>>, vector<128x256xf32>
    %cst_165 = arith.constant dense<0.000000e+00> : vector<8x256xf32>
    %161 = tpu.matmul %159, %160, %cst_165 {dimension_numbers = #tpu.dot_dimension_numbers<[1], [0], [0], [1], [0, 0, 1, 1], [], []>} : vector<8x128xf32>, vector<128x256xf32>, vector<8x256xf32> -> vector<8x256xf32>
    %162 = arith.addf %151, %161 : vector<8x256xf32>
    %c0_166 = arith.constant 0 : index
    %c0_167 = arith.constant 0 : index
    %163 = vector.load %arg11[%c0_166, %c0_167] : memref<1x256xf32, #tpu.memory_space<vmem>>, vector<1x256xf32>
    %164 = vector.broadcast %163 : vector<1x256xf32> to vector<8x256xf32>
    %165 = arith.addf %162, %164 : vector<8x256xf32>
    %cst_168 = arith.constant 0.000000e+00 : f32
    %166 = vector.broadcast %cst_168 : f32 to vector<8x256xf32>
    %167 = arith.maximumf %165, %166 : vector<8x256xf32>
    %c0_169 = arith.constant 0 : index
    %c0_170 = arith.constant 0 : index
    %168 = vector.load %arg12[%c0_169, %c0_170] : memref<256x64xf32, #tpu.memory_space<vmem>>, vector<256x64xf32>
    %cst_171 = arith.constant dense<0.000000e+00> : vector<8x64xf32>
    %169 = tpu.matmul %167, %168, %cst_171 {dimension_numbers = #tpu.dot_dimension_numbers<[1], [0], [0], [1], [0, 0, 1, 1], [], []>} : vector<8x256xf32>, vector<256x64xf32>, vector<8x64xf32> -> vector<8x64xf32>
    %c0_172 = arith.constant 0 : index
    %c0_173 = arith.constant 0 : index
    %170 = vector.load %arg13[%c0_172, %c0_173] : memref<1x64xf32, #tpu.memory_space<vmem>>, vector<1x64xf32>
    %171 = vector.broadcast %170 : vector<1x64xf32> to vector<8x64xf32>
    %172 = arith.addf %169, %171 : vector<8x64xf32>
    %cst_174 = arith.constant 0.000000e+00 : f32
    %173 = vector.broadcast %cst_174 : f32 to vector<8x64xf32>
    %174 = arith.maximumf %172, %173 : vector<8x64xf32>
    %c0_175 = arith.constant 0 : index
    %c0_176 = arith.constant 0 : index
    %175 = vector.load %arg14[%c0_175, %c0_176] : memref<64x128xf32, #tpu.memory_space<vmem>>, vector<64x128xf32>
    %cst_177 = arith.constant dense<0.000000e+00> : vector<8x128xf32>
    %176 = tpu.matmul %174, %175, %cst_177 {dimension_numbers = #tpu.dot_dimension_numbers<[1], [0], [0], [1], [0, 0, 1, 1], [], []>} : vector<8x64xf32>, vector<64x128xf32>, vector<8x128xf32> -> vector<8x128xf32>
    %c0_178 = arith.constant 0 : index
    %c0_179 = arith.constant 0 : index
    %177 = vector.load %arg15[%c0_178, %c0_179] : memref<1x128xf32, #tpu.memory_space<vmem>>, vector<1x128xf32>
    %178 = vector.broadcast %177 : vector<1x128xf32> to vector<8x128xf32>
    %179 = arith.addf %176, %178 : vector<8x128xf32>
    %c0_180 = arith.constant 0 : index
    %c0_181 = arith.constant 0 : index
    %180 = vector.load %arg16[%c0_180, %c0_181] : memref<8x128xf32, #tpu.memory_space<vmem>>, vector<8x128xf32>
    tpu.vector_store %arg16[%c0_180, %c0_181], %179 {strides = array<i32>} : memref<8x128xf32, #tpu.memory_space<vmem>>, vector<8x128xf32>,
    return
  }
  func.func @transform_0(%arg0: i32) -> (i32, i32) {
    %c0_i32 = arith.constant 0 : i32
    %c0_i32_0 = arith.constant 0 : i32
    return %arg0, %c0_i32 : i32, i32
  }
  func.func @transform_1(%arg0: i32) -> (i32, i32) {
    %c0_i32 = arith.constant 0 : i32
    %c0_i32_0 = arith.constant 0 : i32
    %c0_i32_1 = arith.constant 0 : i32
    return %c0_i32, %c0_i32_0 : i32, i32
  }
  func.func @transform_2(%arg0: i32) -> (i32, i32) {
    %c0_i32 = arith.constant 0 : i32
    %c0_i32_0 = arith.constant 0 : i32
    %c0_i32_1 = arith.constant 0 : i32
    return %c0_i32, %c0_i32_0 : i32, i32
  }
  func.func @transform_3(%arg0: i32) -> (i32, i32) {
    %c0_i32 = arith.constant 0 : i32
    %c0_i32_0 = arith.constant 0 : i32
    %c0_i32_1 = arith.constant 0 : i32
    return %c0_i32, %c0_i32_0 : i32, i32
  }
  func.func @transform_4(%arg0: i32) -> (i32, i32) {
    %c0_i32 = arith.constant 0 : i32
    %c0_i32_0 = arith.constant 0 : i32
    %c0_i32_1 = arith.constant 0 : i32
    return %c0_i32, %c0_i32_0 : i32, i32
  }
  func.func @transform_5(%arg0: i32) -> (i32, i32) {
    %c0_i32 = arith.constant 0 : i32
    %c0_i32_0 = arith.constant 0 : i32
    %c0_i32_1 = arith.constant 0 : i32
    return %c0_i32, %c0_i32_0 : i32, i32
  }
  func.func @transform_6(%arg0: i32) -> (i32, i32) {
    %c0_i32 = arith.constant 0 : i32
    %c0_i32_0 = arith.constant 0 : i32
    %c0_i32_1 = arith.constant 0 : i32
    return %c0_i32, %c0_i32_0 : i32, i32
  }
  func.func @transform_7(%arg0: i32) -> (i32, i32) {
    %c0_i32 = arith.constant 0 : i32
    %c0_i32_0 = arith.constant 0 : i32
    %c0_i32_1 = arith.constant 0 : i32
    return %c0_i32, %c0_i32_0 : i32, i32
  }
  func.func @transform_8(%arg0: i32) -> (i32, i32) {
    %c0_i32 = arith.constant 0 : i32
    %c0_i32_0 = arith.constant 0 : i32
    %c0_i32_1 = arith.constant 0 : i32
    return %c0_i32, %c0_i32_0 : i32, i32
  }
  func.func @transform_9(%arg0: i32) -> (i32, i32) {
    %c0_i32 = arith.constant 0 : i32
    %c0_i32_0 = arith.constant 0 : i32
    %c0_i32_1 = arith.constant 0 : i32
    return %c0_i32, %c0_i32_0 : i32, i32
  }
  func.func @transform_10(%arg0: i32) -> (i32, i32) {
    %c0_i32 = arith.constant 0 : i32
    %c0_i32_0 = arith.constant 0 : i32
    %c0_i32_1 = arith.constant 0 : i32
    return %c0_i32, %c0_i32_0 : i32, i32
  }
  func.func @transform_11(%arg0: i32) -> (i32, i32) {
    %c0_i32 = arith.constant 0 : i32
    %c0_i32_0 = arith.constant 0 : i32
    %c0_i32_1 = arith.constant 0 : i32
    return %c0_i32, %c0_i32_0 : i32, i32
  }
  func.func @transform_12(%arg0: i32) -> (i32, i32) {
    %c0_i32 = arith.constant 0 : i32
    %c0_i32_0 = arith.constant 0 : i32
    %c0_i32_1 = arith.constant 0 : i32
    return %c0_i32, %c0_i32_0 : i32, i32
  }
  func.func @transform_13(%arg0: i32) -> (i32, i32) {
    %c0_i32 = arith.constant 0 : i32
    %c0_i32_0 = arith.constant 0 : i32
    %c0_i32_1 = arith.constant 0 : i32
    return %c0_i32, %c0_i32_0 : i32, i32
  }
  func.func @transform_14(%arg0: i32) -> (i32, i32) {
    %c0_i32 = arith.constant 0 : i32
    %c0_i32_0 = arith.constant 0 : i32
    %c0_i32_1 = arith.constant 0 : i32
    return %c0_i32, %c0_i32_0 : i32, i32
  }
  func.func @transform_15(%arg0: i32) -> (i32, i32) {
    %c0_i32 = arith.constant 0 : i32
    %c0_i32_0 = arith.constant 0 : i32
    return %arg0, %c0_i32 : i32, i32
  }
}

</mosaic_0001>

<llo_original>
// kernel: forward.1
$region0: #{forward.1}
  #allocation0 [shape = 'u32[]', space=smem, size = 0x4, offset = 0x4, fixed_abs, tag = 'smem constant byte address 0x4 - core index']
  #allocation1 [shape = 'u32[144,128]{1,0:T(1,128)}', space=vmem, size = 0x12000, scoped, tag = 'internal scratch']
  #allocation2 [shape = 'f32[576,7]{1,0:T(8,128)}', space=vmem, size = 0x48000, scoped, tag = 'scratch operand']
  #allocation3 [shape = 'f32[576,32]{1,0:T(8,128)}', space=vmem, size = 0x48000, scoped, tag = 'scratch operand']
  #allocation4 [shape = 'f32[288,32]{1,0:T(8,128)}', space=vmem, size = 0x24000, scoped, tag = 'scratch operand']
  #allocation5 [shape = 'f32[288,160]{1,0:T(8,128)}', space=vmem, size = 0x48000, scoped, tag = 'scratch operand']
  #allocation6 [shape = 'f32[288,64]{1,0:T(8,128)}', space=vmem, size = 0x24000, scoped, tag = 'scratch operand']
  #allocation7 [shape = 'f32[144,64]{1,0:T(8,128)}', space=vmem, size = 0x12000, scoped, tag = 'scratch operand']
  #allocation8 [shape = 'f32[144,192]{1,0:T(8,128)}', space=vmem, size = 0x24000, scoped, tag = 'scratch operand']
  #allocation9 [shape = 'f32[144,128]{1,0:T(8,128)}', space=vmem, size = 0x12000, scoped, tag = 'scratch operand']
  %s0 = inlined_call_operand.hbm [shape: f32[1152,1], index: 0, kind: input, shape index: {}]
  %s1 = inlined_call_operand.hbm [shape: f32[288,32], index: 1, kind: input, shape index: {}]
  %s2 = inlined_call_operand.hbm [shape: f32[144,64], index: 2, kind: input, shape index: {}]
  %s3 = inlined_call_operand.hbm [shape: f32[7,32], index: 3, kind: input, shape index: {}]
  %s4 = inlined_call_operand.hbm [shape: f32[1,32], index: 4, kind: input, shape index: {}]
  %s5 = inlined_call_operand.hbm [shape: f32[160,64], index: 5, kind: input, shape index: {}]
  %s6 = inlined_call_operand.hbm [shape: f32[1,64], index: 6, kind: input, shape index: {}]
  %s7 = inlined_call_operand.hbm [shape: f32[192,128], index: 7, kind: input, shape index: {}]
  %s8 = inlined_call_operand.hbm [shape: f32[1,128], index: 8, kind: input, shape index: {}]
  %s9 = inlined_call_operand.hbm [shape: f32[1024,256], index: 9, kind: input, shape index: {}]
  %s10 = inlined_call_operand.hbm [shape: f32[1,256], index: 10, kind: input, shape index: {}]
  %s11 = inlined_call_operand.hbm [shape: f32[256,64], index: 11, kind: input, shape index: {}]
  %s12 = inlined_call_operand.hbm [shape: f32[1,64], index: 12, kind: input, shape index: {}]
  %s13 = inlined_call_operand.hbm [shape: f32[64,128], index: 13, kind: input, shape index: {}]
  %s14 = inlined_call_operand.hbm [shape: f32[1,128], index: 14, kind: input, shape index: {}]
  %s15 = inlined_call_operand.hbm [shape: f32[16,128], index: 15, kind: output, shape index: {}]
  %s16 = sld [smem:[#allocation0]]
  $region153: #{forward.1} parent=0
    _
  %s18 = ssub.s32 1, %s16
  %s19 = scalar_select 0, %s18, %s16
  $region1: #{forward.1} parent=0
    #allocation10 [shape = 'u8[589824]{0}', space=vmem, size = 0x90000, scoped, tag = 'input window, operand 0']
    #allocation11 [shape = 's32[2]{0}', space=sflag, size = 0x8, scoped, tag = 'scoped memory for forward.1']
    #allocation12 [shape = 's32[2]{0}', space=sflag, size = 0x8, scoped, tag = 'scoped memory for forward.1']
    #allocation13 [shape = 'u8[147456]{0}', space=vmem, size = 0x24000, scoped, tag = 'input window, operand 1, single buffered']
    #allocation14 [shape = 's32[1]{0}', space=sflag, size = 0x4, scoped, tag = 'scoped memory for forward.1']
    #allocation15 [shape = 'u8[73728]{0}', space=vmem, size = 0x12000, scoped, tag = 'input window, operand 2, single buffered']
    #allocation16 [shape = 'u8[4096]{0}', space=vmem, size = 0x1000, scoped, tag = 'input window, operand 3, single buffered']
    #allocation17 [shape = 's32[1]{0}', space=sflag, size = 0x4, scoped, tag = 'scoped memory for forward.1']
    #allocation18 [shape = 'u8[512]{0}', space=vmem, size = 0x400, scoped, tag = 'input window, operand 4, single buffered']
    #allocation19 [shape = 'u8[81920]{0}', space=vmem, size = 0x14000, scoped, tag = 'input window, operand 5, single buffered']
    #allocation20 [shape = 's32[1]{0}', space=sflag, size = 0x4, scoped, tag = 'scoped memory for forward.1']
    #allocation21 [shape = 'u8[512]{0}', space=vmem, size = 0x400, scoped, tag = 'input window, operand 6, single buffered']
    #allocation22 [shape = 'u8[98304]{0}', space=vmem, size = 0x18000, scoped, tag = 'input window, operand 7, single buffered']
    #allocation23 [shape = 's32[1]{0}', space=sflag, size = 0x4, scoped, tag = 'scoped memory for forward.1']
    #allocation24 [shape = 'u8[512]{0}', space=vmem, size = 0x400, scoped, tag = 'input window, operand 8, single buffered']
    #allocation25 [shape = 'u8[1048576]{0}', space=vmem, size = 0x100000, scoped, tag = 'input window, operand 9, single buffered']
    #allocation26 [shape = 's32[1]{0}', space=sflag, size = 0x4, scoped, tag = 'scoped memory for forward.1']
    #allocation27 [shape = 'u8[1024]{0}', space=vmem, size = 0x400, scoped, tag = 'input window, operand 10, single buffered']
    #allocation28 [shape = 'u8[131072]{0}', space=vmem, size = 0x20000, scoped, tag = 'input window, operand 11, single buffered']
    #allocation29 [shape = 's32[1]{0}', space=sflag, size = 0x4, scoped, tag = 'scoped memory for forward.1']
    #allocation30 [shape = 'u8[512]{0}', space=vmem, size = 0x400, scoped, tag = 'input window, operand 12, single buffered']
    #allocation31 [shape = 'u8[32768]{0}', space=vmem, size = 0x8000, scoped, tag = 'input window, operand 13, single buffered']
    #allocation32 [shape = 's32[1]{0}', space=sflag, size = 0x4, scoped, tag = 'scoped memory for forward.1']
    #allocation33 [shape = 'u8[512]{0}', space=vmem, size = 0x400, scoped, tag = 'input window, operand 14, single buffered']
    #allocation34 [shape = 'u8[8192]{0}', space=vmem, size = 0x2000, scoped, tag = 'output window, operand 0']
    %20 = vsyncpa [#allocation11], 0
    %s21 = scalar_lea.sflag [#allocation11], 1
    %22 = vsyncpa %s21, 0
    %23 = vsyncpa [#allocation14], 0
    %24 = vsyncpa [#allocation17], 0
    %25 = vsyncpa [#allocation20], 0
    %26 = vsyncpa [#allocation23], 0
    %27 = vsyncpa [#allocation26], 0
    %28 = vsyncpa [#allocation29], 0
    %29 = vsyncpa [#allocation32], 0
    %30 = vsyncpa [#allocation12], 0
    %s31 = scalar_lea.sflag [#allocation12], 1
    %32 = vsyncpa %s31, 0
    loop: start=0, step=1, limit=4
    $region2: #{forward.1} parent=1 // loop_pre_header
      _
    $region3: #{forward.1} parent=1 // loop_header
      %s34 = sphi 0, %s38
      %p35 = scmp.ge.s32.totalorder %s34, 4
      %s44 = sphi 0, %s46
      %s47 = sphi 0, %s44
      %s48 = sphi 0, %s47
      %s64 = sphi 0, %s48
      %s68 = sphi 0, %s68
      %s70 = sphi 0, %s68
      %s71 = sphi 0, %s70
      %s85 = sphi 0, %s71
      %s89 = sphi 0, %s89
      %s91 = sphi 0, %s89
      %s92 = sphi 0, %s91
      %s106 = sphi 0, %s92
      %s110 = sphi 0, %s110
      %s112 = sphi 0, %s110
      %s113 = sphi 0, %s112
      %s127 = sphi 0, %s113
      %s131 = sphi 0, %s131
      %s133 = sphi 0, %s131
      %s134 = sphi 0, %s133
      %s148 = sphi 0, %s134
      %s152 = sphi 0, %s152
      %s154 = sphi 0, %s152
      %s155 = sphi 0, %s154
      %s169 = sphi 0, %s155
      %s173 = sphi 0, %s173
      %s175 = sphi 0, %s173
      %s176 = sphi 0, %s175
      %s190 = sphi 0, %s176
      %s194 = sphi 0, %s194
      %s196 = sphi 0, %s194
      %s197 = sphi 0, %s196
      %s211 = sphi 0, %s197
      %s215 = sphi 0, %s215
      %s217 = sphi 0, %s215
      %s218 = sphi 0, %s217
      %s232 = sphi 0, %s218
      %s236 = sphi 0, %s236
      %s238 = sphi 0, %s236
      %s239 = sphi 0, %s238
      %s253 = sphi 0, %s239
      %s257 = sphi 0, %s257
      %s259 = sphi 0, %s257
      %s260 = sphi 0, %s259
      %s274 = sphi 0, %s260
      %s278 = sphi 0, %s278
      %s280 = sphi 0, %s278
      %s281 = sphi 0, %s280
      %s295 = sphi 0, %s281
      %s299 = sphi 0, %s299
      %s301 = sphi 0, %s299
      %s302 = sphi 0, %s301
      %s316 = sphi 0, %s302
      %s320 = sphi 0, %s320
      %s322 = sphi 0, %s320
      %s323 = sphi 0, %s322
      %s337 = sphi 0, %s323
      %s341 = sphi 0, %s341
      %s343 = sphi 0, %s341
      %s344 = sphi 0, %s343
      %s358 = sphi 0, %s344
      %s364 = sphi 0, %s366
      %s367 = sphi 0, %s364
      %s368 = sphi 0, %s367
      %s384 = sphi 0, %s368
    $region4: #{forward.1} parent=1 // loop_header_branch
      %37 = sbr.rel (%p35) target = $region8
    $region5: #{forward.1} parent=1 // loop_body
      %s39 = ssub.s32 %s34, 1
      %s40 = ssub.s32 %s34, 2
      %s41 = sadd.s32 %s34, 1
      %s42 = ssub.s32 %s34, %s41
      %p43 = scmp.eq.s32.totalorder %s42, 0
      %s45 = sadd.s32 %s44, 1
      %s46 = scalar_select %p43, %s44, %s45
      %p49 = pneg %p43
      %p50 = scmp.eq.s32.totalorder %s34, 1
      %p51 = por %p49, %p50
      %p52 = scmp.ne.s32.totalorder %s44, %s47
      %p53 = scmp.eq.s32.totalorder %s34, 0
      %p54 = por %p52, %p53
      %p55 = scmp.ne.s32.totalorder %s44, %s47
      %p56 = scmp.eq.s32.totalorder %s39, 1
      %p57 = por %p55, %p56
      %p58 = scmp.ne.s32.totalorder %s47, %s48
      %p59 = scmp.eq.s32.totalorder %s39, 0
      %p60 = por %p58, %p59
      %p61 = scmp.ne.s32.totalorder %s47, %s48
      %p62 = scmp.eq.s32.totalorder %s40, 1
      %p63 = por %p61, %p62
      %p65 = scmp.ne.s32.totalorder %s48, %s64
      %p66 = scmp.eq.s32.totalorder %s40, 0
      %p67 = por %p65, %p66
      %s69 = sadd.s32 %s68, 1
      %p72 = scmp.eq.s32.totalorder %s34, 1
      %p73 = scmp.ne.s32.totalorder %s68, %s70
      %p74 = scmp.eq.s32.totalorder %s34, 0
      %p75 = por %p73, %p74
      %p76 = scmp.ne.s32.totalorder %s68, %s70
      %p77 = scmp.eq.s32.totalorder %s39, 1
      %p78 = por %p76, %p77
      %p79 = scmp.ne.s32.totalorder %s70, %s71
      %p80 = scmp.eq.s32.totalorder %s39, 0
      %p81 = por %p79, %p80
      %p82 = scmp.ne.s32.totalorder %s70, %s71
      %p83 = scmp.eq.s32.totalorder %s40, 1
      %p84 = por %p82, %p83
      %p86 = scmp.ne.s32.totalorder %s71, %s85
      %p87 = scmp.eq.s32.totalorder %s40, 0
      %p88 = por %p86, %p87
      %s90 = sadd.s32 %s89, 1
      %p93 = scmp.eq.s32.totalorder %s34, 1
      %p94 = scmp.ne.s32.totalorder %s89, %s91
      %p95 = scmp.eq.s32.totalorder %s34, 0
      %p96 = por %p94, %p95
      %p97 = scmp.ne.s32.totalorder %s89, %s91
      %p98 = scmp.eq.s32.totalorder %s39, 1
      %p99 = por %p97, %p98
      %p100 = scmp.ne.s32.totalorder %s91, %s92
      %p101 = scmp.eq.s32.totalorder %s39, 0
      %p102 = por %p100, %p101
      %p103 = scmp.ne.s32.totalorder %s91, %s92
      %p104 = scmp.eq.s32.totalorder %s40, 1
      %p105 = por %p103, %p104
      %p107 = scmp.ne.s32.totalorder %s92, %s106
      %p108 = scmp.eq.s32.totalorder %s40, 0
      %p109 = por %p107, %p108
      %s111 = sadd.s32 %s110, 1
      %p114 = scmp.eq.s32.totalorder %s34, 1
      %p115 = scmp.ne.s32.totalorder %s110, %s112
      %p116 = scmp.eq.s32.totalorder %s34, 0
      %p117 = por %p115, %p116
      %p118 = scmp.ne.s32.totalorder %s110, %s112
      %p119 = scmp.eq.s32.totalorder %s39, 1
      %p120 = por %p118, %p119
      %p121 = scmp.ne.s32.totalorder %s112, %s113
      %p122 = scmp.eq.s32.totalorder %s39, 0
      %p123 = por %p121, %p122
      %p124 = scmp.ne.s32.totalorder %s112, %s113
      %p125 = scmp.eq.s32.totalorder %s40, 1
      %p126 = por %p124, %p125
      %p128 = scmp.ne.s32.totalorder %s113, %s127
      %p129 = scmp.eq.s32.totalorder %s40, 0
      %p130 = por %p128, %p129
      %s132 = sadd.s32 %s131, 1
      %p135 = scmp.eq.s32.totalorder %s34, 1
      %p136 = scmp.ne.s32.totalorder %s131, %s133
      %p137 = scmp.eq.s32.totalorder %s34, 0
      %p138 = por %p136, %p137
      %p139 = scmp.ne.s32.totalorder %s131, %s133
      %p140 = scmp.eq.s32.totalorder %s39, 1
      %p141 = por %p139, %p140
      %p142 = scmp.ne.s32.totalorder %s133, %s134
      %p143 = scmp.eq.s32.totalorder %s39, 0
      %p144 = por %p142, %p143
      %p145 = scmp.ne.s32.totalorder %s133, %s134
      %p146 = scmp.eq.s32.totalorder %s40, 1
      %p147 = por %p145, %p146
      %p149 = scmp.ne.s32.totalorder %s134, %s148
      %p150 = scmp.eq.s32.totalorder %s40, 0
      %p151 = por %p149, %p150
      %s153 = sadd.s32 %s152, 1
      %p156 = scmp.eq.s32.totalorder %s34, 1
      %p157 = scmp.ne.s32.totalorder %s152, %s154
      %p158 = scmp.eq.s32.totalorder %s34, 0
      %p159 = por %p157, %p158
      %p160 = scmp.ne.s32.totalorder %s152, %s154
      %p161 = scmp.eq.s32.totalorder %s39, 1
      %p162 = por %p160, %p161
      %p163 = scmp.ne.s32.totalorder %s154, %s155
      %p164 = scmp.eq.s32.totalorder %s39, 0
      %p165 = por %p163, %p164
      %p166 = scmp.ne.s32.totalorder %s154, %s155
      %p167 = scmp.eq.s32.totalorder %s40, 1
      %p168 = por %p166, %p167
      %p170 = scmp.ne.s32.totalorder %s155, %s169
      %p171 = scmp.eq.s32.totalorder %s40, 0
      %p172 = por %p170, %p171
      %s174 = sadd.s32 %s173, 1
      %p177 = scmp.eq.s32.totalorder %s34, 1
      %p178 = scmp.ne.s32.totalorder %s173, %s175
      %p179 = scmp.eq.s32.totalorder %s34, 0
      %p180 = por %p178, %p179
      %p181 = scmp.ne.s32.totalorder %s173, %s175
      %p182 = scmp.eq.s32.totalorder %s39, 1
      %p183 = por %p181, %p182
      %p184 = scmp.ne.s32.totalorder %s175, %s176
      %p185 = scmp.eq.s32.totalorder %s39, 0
      %p186 = por %p184, %p185
      %p187 = scmp.ne.s32.totalorder %s175, %s176
      %p188 = scmp.eq.s32.totalorder %s40, 1
      %p189 = por %p187, %p188
      %p191 = scmp.ne.s32.totalorder %s176, %s190
      %p192 = scmp.eq.s32.totalorder %s40, 0
      %p193 = por %p191, %p192
      %s195 = sadd.s32 %s194, 1
      %p198 = scmp.eq.s32.totalorder %s34, 1
      %p199 = scmp.ne.s32.totalorder %s194, %s196
      %p200 = scmp.eq.s32.totalorder %s34, 0
      %p201 = por %p199, %p200
      %p202 = scmp.ne.s32.totalorder %s194, %s196
      %p203 = scmp.eq.s32.totalorder %s39, 1
      %p204 = por %p202, %p203
      %p205 = scmp.ne.s32.totalorder %s196, %s197
      %p206 = scmp.eq.s32.totalorder %s39, 0
      %p207 = por %p205, %p206
      %p208 = scmp.ne.s32.totalorder %s196, %s197
      %p209 = scmp.eq.s32.totalorder %s40, 1
      %p210 = por %p208, %p209
      %p212 = scmp.ne.s32.totalorder %s197, %s211
      %p213 = scmp.eq.s32.totalorder %s40, 0
      %p214 = por %p212, %p213
      %s216 = sadd.s32 %s215, 1
      %p219 = scmp.eq.s32.totalorder %s34, 1
      %p220 = scmp.ne.s32.totalorder %s215, %s217
      %p221 = scmp.eq.s32.totalorder %s34, 0
      %p222 = por %p220, %p221
      %p223 = scmp.ne.s32.totalorder %s215, %s217
      %p224 = scmp.eq.s32.totalorder %s39, 1
      %p225 = por %p223, %p224
      %p226 = scmp.ne.s32.totalorder %s217, %s218
      %p227 = scmp.eq.s32.totalorder %s39, 0
      %p228 = por %p226, %p227
      %p229 = scmp.ne.s32.totalorder %s217, %s218
      %p230 = scmp.eq.s32.totalorder %s40, 1
      %p231 = por %p229, %p230
      %p233 = scmp.ne.s32.totalorder %s218, %s232
      %p234 = scmp.eq.s32.totalorder %s40, 0
      %p235 = por %p233, %p234
      %s237 = sadd.s32 %s236, 1
      %p240 = scmp.eq.s32.totalorder %s34, 1
      %p241 = scmp.ne.s32.totalorder %s236, %s238
      %p242 = scmp.eq.s32.totalorder %s34, 0
      %p243 = por %p241, %p242
      %p244 = scmp.ne.s32.totalorder %s236, %s238
      %p245 = scmp.eq.s32.totalorder %s39, 1
      %p246 = por %p244, %p245
      %p247 = scmp.ne.s32.totalorder %s238, %s239
      %p248 = scmp.eq.s32.totalorder %s39, 0
      %p249 = por %p247, %p248
      %p250 = scmp.ne.s32.totalorder %s238, %s239
      %p251 = scmp.eq.s32.totalorder %s40, 1
      %p252 = por %p250, %p251
      %p254 = scmp.ne.s32.totalorder %s239, %s253
      %p255 = scmp.eq.s32.totalorder %s40, 0
      %p256 = por %p254, %p255
      %s258 = sadd.s32 %s257, 1
      %p261 = scmp.eq.s32.totalorder %s34, 1
      %p262 = scmp.ne.s32.totalorder %s257, %s259
      %p263 = scmp.eq.s32.totalorder %s34, 0
      %p264 = por %p262, %p263
      %p265 = scmp.ne.s32.totalorder %s257, %s259
      %p266 = scmp.eq.s32.totalorder %s39, 1
      %p267 = por %p265, %p266
      %p268 = scmp.ne.s32.totalorder %s259, %s260
      %p269 = scmp.eq.s32.totalorder %s39, 0
      %p270 = por %p268, %p269
      %p271 = scmp.ne.s32.totalorder %s259, %s260
      %p272 = scmp.eq.s32.totalorder %s40, 1
      %p273 = por %p271, %p272
      %p275 = scmp.ne.s32.totalorder %s260, %s274
      %p276 = scmp.eq.s32.totalorder %s40, 0
      %p277 = por %p275, %p276
      %s279 = sadd.s32 %s278, 1
      %p282 = scmp.eq.s32.totalorder %s34, 1
      %p283 = scmp.ne.s32.totalorder %s278, %s280
      %p284 = scmp.eq.s32.totalorder %s34, 0
      %p285 = por %p283, %p284
      %p286 = scmp.ne.s32.totalorder %s278, %s280
      %p287 = scmp.eq.s32.totalorder %s39, 1
      %p288 = por %p286, %p287
      %p289 = scmp.ne.s32.totalorder %s280, %s281
      %p290 = scmp.eq.s32.totalorder %s39, 0
      %p291 = por %p289, %p290
      %p292 = scmp.ne.s32.totalorder %s280, %s281
      %p293 = scmp.eq.s32.totalorder %s40, 1
      %p294 = por %p292, %p293
      %p296 = scmp.ne.s32.totalorder %s281, %s295
      %p297 = scmp.eq.s32.totalorder %s40, 0
      %p298 = por %p296, %p297
      %s300 = sadd.s32 %s299, 1
      %p303 = scmp.eq.s32.totalorder %s34, 1
      %p304 = scmp.ne.s32.totalorder %s299, %s301
      %p305 = scmp.eq.s32.totalorder %s34, 0
      %p306 = por %p304, %p305
      %p307 = scmp.ne.s32.totalorder %s299, %s301
      %p308 = scmp.eq.s32.totalorder %s39, 1
      %p309 = por %p307, %p308
      %p310 = scmp.ne.s32.totalorder %s301, %s302
      %p311 = scmp.eq.s32.totalorder %s39, 0
      %p312 = por %p310, %p311
      %p313 = scmp.ne.s32.totalorder %s301, %s302
      %p314 = scmp.eq.s32.totalorder %s40, 1
      %p315 = por %p313, %p314
      %p317 = scmp.ne.s32.totalorder %s302, %s316
      %p318 = scmp.eq.s32.totalorder %s40, 0
      %p319 = por %p317, %p318
      %s321 = sadd.s32 %s320, 1
      %p324 = scmp.eq.s32.totalorder %s34, 1
      %p325 = scmp.ne.s32.totalorder %s320, %s322
      %p326 = scmp.eq.s32.totalorder %s34, 0
      %p327 = por %p325, %p326
      %p328 = scmp.ne.s32.totalorder %s320, %s322
      %p329 = scmp.eq.s32.totalorder %s39, 1
      %p330 = por %p328, %p329
      %p331 = scmp.ne.s32.totalorder %s322, %s323
      %p332 = scmp.eq.s32.totalorder %s39, 0
      %p333 = por %p331, %p332
      %p334 = scmp.ne.s32.totalorder %s322, %s323
      %p335 = scmp.eq.s32.totalorder %s40, 1
      %p336 = por %p334, %p335
      %p338 = scmp.ne.s32.totalorder %s323, %s337
      %p339 = scmp.eq.s32.totalorder %s40, 0
      %p340 = por %p338, %p339
      %s342 = sadd.s32 %s341, 1
      %p345 = scmp.eq.s32.totalorder %s34, 1
      %p346 = scmp.ne.s32.totalorder %s341, %s343
      %p347 = scmp.eq.s32.totalorder %s34, 0
      %p348 = por %p346, %p347
      %p349 = scmp.ne.s32.totalorder %s341, %s343
      %p350 = scmp.eq.s32.totalorder %s39, 1
      %p351 = por %p349, %p350
      %p352 = scmp.ne.s32.totalorder %s343, %s344
      %p353 = scmp.eq.s32.totalorder %s39, 0
      %p354 = por %p352, %p353
      %p355 = scmp.ne.s32.totalorder %s343, %s344
      %p356 = scmp.eq.s32.totalorder %s40, 1
      %p357 = por %p355, %p356
      %p359 = scmp.ne.s32.totalorder %s344, %s358
      %p360 = scmp.eq.s32.totalorder %s40, 0
      %p361 = por %p359, %p360
      %s362 = ssub.s32 %s34, %s41
      %p363 = scmp.eq.s32.totalorder %s362, 0
      %s365 = sadd.s32 %s364, 1
      %s366 = scalar_select %p363, %s364, %s365
      %p369 = pneg %p363
      %p370 = scmp.eq.s32.totalorder %s34, 1
      %p371 = por %p369, %p370
      %p372 = scmp.ne.s32.totalorder %s364, %s367
      %p373 = scmp.eq.s32.totalorder %s34, 0
      %p374 = por %p372, %p373
      %p375 = scmp.ne.s32.totalorder %s364, %s367
      %p376 = scmp.eq.s32.totalorder %s39, 1
      %p377 = por %p375, %p376
      %p378 = scmp.ne.s32.totalorder %s367, %s368
      %p379 = scmp.eq.s32.totalorder %s39, 0
      %p380 = por %p378, %p379
      %p381 = scmp.ne.s32.totalorder %s367, %s368
      %p382 = scmp.eq.s32.totalorder %s40, 1
      %p383 = por %p381, %p382
      %p385 = scmp.ne.s32.totalorder %s368, %s384
      %p386 = scmp.eq.s32.totalorder %s40, 0
      %p387 = por %p385, %p386
      %p388 = scmp.le.s32.totalorder 1, %s34
      %p389 = scmp.lt.s32.totalorder %s34, 3
      %p390 = pnand %p388, %p389
      %p391 = pneg %p390
      // Predicated region
      $region9: #{forward.1} parent=5 // pred_check
        _
      $region10: #{forward.1} parent=5 // pred_check_branch
        %393 = sbr.rel (%p390) target = $region12
      $region11: #{forward.1} parent=5 // pred_region
        %s394 = ssub.s32 %s34, 1
        // Predicated region
        $region13: #{forward.1} parent=11 // pred_check
          %p395 = pneg %p81
        $region14: #{forward.1} parent=11 // pred_check_branch
          %397 = sbr.rel (%p395) target = $region16
        $region15: #{forward.1} parent=11 // pred_region
          %s399 = ssub.s32 4608, 4608
          %400 = vsyncadd [#allocation14], %s399
          %s401 = sshll.u32 [#allocation13], 4
          %s402 = int_to_ptr.vmem [resolvable:$true] %s401
          %407 = dma.hbm_to_vmem [thread:$0]  %s1, 4608, %s402, [#allocation14], 128, 128, 8
        $region16: #{forward.1} parent=11 // pred_fallthru
          _
        // Predicated region
        $region17: #{forward.1} parent=11 // pred_check
          %p408 = pneg %p102
        $region18: #{forward.1} parent=11 // pred_check_branch
          %410 = sbr.rel (%p408) target = $region20
        $region19: #{forward.1} parent=11 // pred_region
          %s412 = ssub.s32 2304, 2304
          %413 = vsyncadd [#allocation14], %s412
          %s414 = sshll.u32 [#allocation15], 4
          %s415 = int_to_ptr.vmem [resolvable:$true] %s414
          %420 = dma.hbm_to_vmem [thread:$0]  %s2, 2304, %s415, [#allocation14], 128, 128, 8
        $region20: #{forward.1} parent=11 // pred_fallthru
          _
        // Predicated region
        $region21: #{forward.1} parent=11 // pred_check
          %p421 = pneg %p123
        $region22: #{forward.1} parent=11 // pred_check_branch
          %423 = sbr.rel (%p421) target = $region24
        $region23: #{forward.1} parent=11 // pred_region
          %s425 = ssub.s32 128, 128
          %426 = vsyncadd [#allocation17], %s425
          %s428 = sshll.u32 [#allocation16], 4
          %s429 = int_to_ptr.vmem [resolvable:$true] %s428
          %431 = dma.hbm_to_vmem [thread:$0]  %s3, 128, %s429, [#allocation17]
        $region24: #{forward.1} parent=11 // pred_fallthru
          _
        // Predicated region
        $region25: #{forward.1} parent=11 // pred_check
          %p432 = pneg %p144
        $region26: #{forward.1} parent=11 // pred_check_branch
          %434 = sbr.rel (%p432) target = $region28
        $region27: #{forward.1} parent=11 // pred_region
          %s436 = ssub.s32 16, 16
          %437 = vsyncadd [#allocation17], %s436
          %s439 = sshll.u32 [#allocation18], 4
          %s440 = int_to_ptr.vmem [resolvable:$true] %s439
          %442 = dma.hbm_to_vmem [thread:$0]  %s4, 16, %s440, [#allocation17]
        $region28: #{forward.1} parent=11 // pred_fallthru
          _
        // Predicated region
        $region29: #{forward.1} parent=11 // pred_check
          %p443 = pneg %p165
        $region30: #{forward.1} parent=11 // pred_check_branch
          %445 = sbr.rel (%p443) target = $region32
        $region31: #{forward.1} parent=11 // pred_region
          %s447 = ssub.s32 2560, 2560
          %448 = vsyncadd [#allocation20], %s447
          %s449 = sshll.u32 [#allocation19], 4
          %s450 = int_to_ptr.vmem [resolvable:$true] %s449
          %455 = dma.hbm_to_vmem [thread:$0]  %s5, 2560, %s450, [#allocation20], 128, 128, 8
        $region32: #{forward.1} parent=11 // pred_fallthru
          _
        // Predicated region
        $region33: #{forward.1} parent=11 // pred_check
          %p456 = pneg %p186
        $region34: #{forward.1} parent=11 // pred_check_branch
          %458 = sbr.rel (%p456) target = $region36
        $region35: #{forward.1} parent=11 // pred_region
          %s460 = ssub.s32 16, 16
          %461 = vsyncadd [#allocation20], %s460
          %s463 = sshll.u32 [#allocation21], 4
          %s464 = int_to_ptr.vmem [resolvable:$true] %s463
          %466 = dma.hbm_to_vmem [thread:$0]  %s6, 16, %s464, [#allocation20]
        $region36: #{forward.1} parent=11 // pred_fallthru
          _
        // Predicated region
        $region37: #{forward.1} parent=11 // pred_check
          %p467 = pneg %p207
        $region38: #{forward.1} parent=11 // pred_check_branch
          %469 = sbr.rel (%p467) target = $region40
        $region39: #{forward.1} parent=11 // pred_region
          %s471 = ssub.s32 3072, 3072
          %472 = vsyncadd [#allocation23], %s471
          %s473 = sshll.u32 [#allocation22], 4
          %s474 = int_to_ptr.vmem [resolvable:$true] %s473
          %479 = dma.hbm_to_vmem [thread:$0]  %s7, 3072, %s474, [#allocation23], 128, 128, 8
        $region40: #{forward.1} parent=11 // pred_fallthru
          _
        // Predicated region
        $region41: #{forward.1} parent=11 // pred_check
          %p480 = pneg %p228
        $region42: #{forward.1} parent=11 // pred_check_branch
          %482 = sbr.rel (%p480) target = $region44
        $region43: #{forward.1} parent=11 // pred_region
          %s484 = ssub.s32 16, 16
          %485 = vsyncadd [#allocation23], %s484
          %s487 = sshll.u32 [#allocation24], 4
          %s488 = int_to_ptr.vmem [resolvable:$true] %s487
          %490 = dma.hbm_to_vmem [thread:$0]  %s8, 16, %s488, [#allocation23]
        $region44: #{forward.1} parent=11 // pred_fallthru
          _
        // Predicated region
        $region45: #{forward.1} parent=11 // pred_check
          %p491 = pneg %p249
        $region46: #{forward.1} parent=11 // pred_check_branch
          %493 = sbr.rel (%p491) target = $region48
        $region47: #{forward.1} parent=11 // pred_region
          %s495 = ssub.s32 32768, 32768
          %496 = vsyncadd [#allocation26], %s495
          %s497 = sshll.u32 [#allocation25], 4
          %s498 = int_to_ptr.vmem [resolvable:$true] %s497
          %503 = dma.hbm_to_vmem [thread:$0]  %s9, 32768, %s498, [#allocation26], 256, 256, 16
        $region48: #{forward.1} parent=11 // pred_fallthru
          _
        // Predicated region
        $region49: #{forward.1} parent=11 // pred_check
          %p504 = pneg %p270
        $region50: #{forward.1} parent=11 // pred_check_branch
          %506 = sbr.rel (%p504) target = $region52
        $region51: #{forward.1} parent=11 // pred_region
          %s508 = ssub.s32 32, 32
          %509 = vsyncadd [#allocation26], %s508
          %s511 = sshll.u32 [#allocation27], 4
          %s512 = int_to_ptr.vmem [resolvable:$true] %s511
          %514 = dma.hbm_to_vmem [thread:$0]  %s10, 32, %s512, [#allocation26]
        $region52: #{forward.1} parent=11 // pred_fallthru
          _
        // Predicated region
        $region53: #{forward.1} parent=11 // pred_check
          %p515 = pneg %p291
        $region54: #{forward.1} parent=11 // pred_check_branch
          %517 = sbr.rel (%p515) target = $region56
        $region55: #{forward.1} parent=11 // pred_region
          %s519 = ssub.s32 4096, 4096
          %520 = vsyncadd [#allocation29], %s519
          %s521 = sshll.u32 [#allocation28], 4
          %s522 = int_to_ptr.vmem [resolvable:$true] %s521
          %527 = dma.hbm_to_vmem [thread:$0]  %s11, 4096, %s522, [#allocation29], 128, 128, 8
        $region56: #{forward.1} parent=11 // pred_fallthru
          _
        // Predicated region
        $region57: #{forward.1} parent=11 // pred_check
          %p528 = pneg %p312
        $region58: #{forward.1} parent=11 // pred_check_branch
          %530 = sbr.rel (%p528) target = $region60
        $region59: #{forward.1} parent=11 // pred_region
          %s532 = ssub.s32 16, 16
          %533 = vsyncadd [#allocation29], %s532
          %s535 = sshll.u32 [#allocation30], 4
          %s536 = int_to_ptr.vmem [resolvable:$true] %s535
          %538 = dma.hbm_to_vmem [thread:$0]  %s12, 16, %s536, [#allocation29]
        $region60: #{forward.1} parent=11 // pred_fallthru
          _
        // Predicated region
        $region61: #{forward.1} parent=11 // pred_check
          %p539 = pneg %p333
        $region62: #{forward.1} parent=11 // pred_check_branch
          %541 = sbr.rel (%p539) target = $region64
        $region63: #{forward.1} parent=11 // pred_region
          %s543 = ssub.s32 1024, 1024
          %544 = vsyncadd [#allocation32], %s543
          %s545 = sshll.u32 [#allocation31], 4
          %s546 = int_to_ptr.vmem [resolvable:$true] %s545
          %551 = dma.hbm_to_vmem [thread:$0]  %s13, 1024, %s546, [#allocation32], 128, 128, 8
        $region64: #{forward.1} parent=11 // pred_fallthru
          _
        // Predicated region
        $region65: #{forward.1} parent=11 // pred_check
          %p552 = pneg %p354
        $region66: #{forward.1} parent=11 // pred_check_branch
          %554 = sbr.rel (%p552) target = $region68
        $region67: #{forward.1} parent=11 // pred_region
          %s556 = ssub.s32 16, 16
          %557 = vsyncadd [#allocation32], %s556
          %s559 = sshll.u32 [#allocation33], 4
          %s560 = int_to_ptr.vmem [resolvable:$true] %s559
          %562 = dma.hbm_to_vmem [thread:$0]  %s14, 16, %s560, [#allocation32]
        $region68: #{forward.1} parent=11 // pred_fallthru
          _
      $region12: #{forward.1} parent=5 // pred_fallthru
        _
      %p563 = scmp.lt.s32.totalorder %s34, 2
      // Predicated region
      $region69: #{forward.1} parent=5 // pred_check
        %p564 = pneg %p563
      $region70: #{forward.1} parent=5 // pred_check_branch
        %566 = sbr.rel (%p564) target = $region72
      $region71: #{forward.1} parent=5 // pred_region
        // Predicated region
        $region73: #{forward.1} parent=71 // pred_check
          %p567 = pneg %p54
        $region74: #{forward.1} parent=71 // pred_check_branch
          %569 = sbr.rel (%p567) target = $region76
        $region75: #{forward.1} parent=71 // pred_region
          %s570 = sand.u32 %s44, 1
          %s571 = scalar_lea.sflag [#allocation11], %s570
          %s572 = sand.u32 %s44, 1
          %s573 = smul.addr %s572, 576
          %s574 = scalar_lea.vmem [#allocation10], %s573
          %s575 = smul.u32 72, %s34
          %s577 = ssub.s32 9216, 9216
          %578 = vsyncadd %s571, %s577
          %s579 = smul.addr %s575, 128
          %s580 = scalar_lea.hbm %s0, %s579
          %s581 = sshll.u32 %s574, 4
          %s582 = int_to_ptr.vmem [resolvable:$true] %s581
          %587 = dma.hbm_to_vmem [thread:$0]  %s580, 9216, %s582, %s571, 128, 128, 8
        $region76: #{forward.1} parent=71 // pred_fallthru
          _
      $region72: #{forward.1} parent=5 // pred_fallthru
        _
      %p588 = scmp.le.s32.totalorder 1, %s34
      %p589 = scmp.lt.s32.totalorder %s34, 3
      %p590 = pnand %p588, %p589
      %p591 = pneg %p590
      // Predicated region
      $region77: #{forward.1} parent=5 // pred_check
        _
      $region78: #{forward.1} parent=5 // pred_check_branch
        %593 = sbr.rel (%p590) target = $region80
      $region79: #{forward.1} parent=5 // pred_region
        %s594 = ssub.s32 %s34, 1
        %s595 = sand.u32 %s47, 1
        %s596 = scalar_lea.sflag [#allocation11], %s595
        %s597 = sand.u32 %s47, 1
        %s598 = smul.addr %s597, 576
        %s599 = scalar_lea.vmem [#allocation10], %s598
        // Predicated region
        $region81: #{forward.1} parent=79 // pred_check
          %p600 = pneg %p60
        $region82: #{forward.1} parent=79 // pred_check_branch
          %602 = sbr.rel (%p600) target = $region84
        $region83: #{forward.1} parent=79 // pred_region
          %603 = dma.done %s596, 9216
        $region84: #{forward.1} parent=79 // pred_fallthru
          _
        // Predicated region
        $region85: #{forward.1} parent=79 // pred_check
          %p604 = pneg %p81
        $region86: #{forward.1} parent=79 // pred_check_branch
          %606 = sbr.rel (%p604) target = $region88
        $region87: #{forward.1} parent=79 // pred_region
          %607 = dma.done [#allocation14], 4608
        $region88: #{forward.1} parent=79 // pred_fallthru
          _
        // Predicated region
        $region89: #{forward.1} parent=79 // pred_check
          %p608 = pneg %p102
        $region90: #{forward.1} parent=79 // pred_check_branch
          %610 = sbr.rel (%p608) target = $region92
        $region91: #{forward.1} parent=79 // pred_region
          %611 = dma.done [#allocation14], 2304
        $region92: #{forward.1} parent=79 // pred_fallthru
          _
        // Predicated region
        $region93: #{forward.1} parent=79 // pred_check
          %p612 = pneg %p123
        $region94: #{forward.1} parent=79 // pred_check_branch
          %614 = sbr.rel (%p612) target = $region96
        $region95: #{forward.1} parent=79 // pred_region
          %615 = dma.done [#allocation17], 128
        $region96: #{forward.1} parent=79 // pred_fallthru
          _
        // Predicated region
        $region97: #{forward.1} parent=79 // pred_check
          %p616 = pneg %p144
        $region98: #{forward.1} parent=79 // pred_check_branch
          %618 = sbr.rel (%p616) target = $region100
        $region99: #{forward.1} parent=79 // pred_region
          %619 = dma.done [#allocation17], 16
        $region100: #{forward.1} parent=79 // pred_fallthru
          _
        // Predicated region
        $region101: #{forward.1} parent=79 // pred_check
          %p620 = pneg %p165
        $region102: #{forward.1} parent=79 // pred_check_branch
          %622 = sbr.rel (%p620) target = $region104
        $region103: #{forward.1} parent=79 // pred_region
          %623 = dma.done [#allocation20], 2560
        $region104: #{forward.1} parent=79 // pred_fallthru
          _
        // Predicated region
        $region105: #{forward.1} parent=79 // pred_check
          %p624 = pneg %p186
        $region106: #{forward.1} parent=79 // pred_check_branch
          %626 = sbr.rel (%p624) target = $region108
        $region107: #{forward.1} parent=79 // pred_region
          %627 = dma.done [#allocation20], 16
        $region108: #{forward.1} parent=79 // pred_fallthru
          _
        // Predicated region
        $region109: #{forward.1} parent=79 // pred_check
          %p628 = pneg %p207
        $region110: #{forward.1} parent=79 // pred_check_branch
          %630 = sbr.rel (%p628) target = $region112
        $region111: #{forward.1} parent=79 // pred_region
          %631 = dma.done [#allocation23], 3072
        $region112: #{forward.1} parent=79 // pred_fallthru
          _
        // Predicated region
        $region113: #{forward.1} parent=79 // pred_check
          %p632 = pneg %p228
        $region114: #{forward.1} parent=79 // pred_check_branch
          %634 = sbr.rel (%p632) target = $region116
        $region115: #{forward.1} parent=79 // pred_region
          %635 = dma.done [#allocation23], 16
        $region116: #{forward.1} parent=79 // pred_fallthru
          _
        // Predicated region
        $region117: #{forward.1} parent=79 // pred_check
          %p636 = pneg %p249
        $region118: #{forward.1} parent=79 // pred_check_branch
          %638 = sbr.rel (%p636) target = $region120
        $region119: #{forward.1} parent=79 // pred_region
          %639 = dma.done [#allocation26], 32768
        $region120: #{forward.1} parent=79 // pred_fallthru
          _
        // Predicated region
        $region121: #{forward.1} parent=79 // pred_check
          %p640 = pneg %p270
        $region122: #{forward.1} parent=79 // pred_check_branch
          %642 = sbr.rel (%p640) target = $region124
        $region123: #{forward.1} parent=79 // pred_region
          %643 = dma.done [#allocation26], 32
        $region124: #{forward.1} parent=79 // pred_fallthru
          _
        // Predicated region
        $region125: #{forward.1} parent=79 // pred_check
          %p644 = pneg %p291
        $region126: #{forward.1} parent=79 // pred_check_branch
          %646 = sbr.rel (%p644) target = $region128
        $region127: #{forward.1} parent=79 // pred_region
          %647 = dma.done [#allocation29], 4096
        $region128: #{forward.1} parent=79 // pred_fallthru
          _
        // Predicated region
        $region129: #{forward.1} parent=79 // pred_check
          %p648 = pneg %p312
        $region130: #{forward.1} parent=79 // pred_check_branch
          %650 = sbr.rel (%p648) target = $region132
        $region131: #{forward.1} parent=79 // pred_region
          %651 = dma.done [#allocation29], 16
        $region132: #{forward.1} parent=79 // pred_fallthru
          _
        // Predicated region
        $region133: #{forward.1} parent=79 // pred_check
          %p652 = pneg %p333
        $region134: #{forward.1} parent=79 // pred_check_branch
          %654 = sbr.rel (%p652) target = $region136
        $region135: #{forward.1} parent=79 // pred_region
          %655 = dma.done [#allocation32], 1024
        $region136: #{forward.1} parent=79 // pred_fallthru
          _
        // Predicated region
        $region137: #{forward.1} parent=79 // pred_check
          %p656 = pneg %p354
        $region138: #{forward.1} parent=79 // pred_check_branch
          %658 = sbr.rel (%p656) target = $region140
        $region139: #{forward.1} parent=79 // pred_region
          %659 = dma.done [#allocation32], 16
        $region140: #{forward.1} parent=79 // pred_fallthru
          _
        %s660 = sand.u32 %s47, 1
        %s661 = scalar_lea.sflag [#allocation11], %s660
        %s662 = sand.u32 %s47, 1
        %s663 = smul.addr %s662, 576
        %s664 = scalar_lea.vmem [#allocation10], %s663
        %p665 = pneg %p60
        %p666 = pneg %p57
        %p667 = pneg %p81
        %p668 = pneg %p78
        %p669 = pneg %p102
        %p670 = pneg %p99
        %p671 = pneg %p123
        %p672 = pneg %p120
        %p673 = pneg %p144
        %p674 = pneg %p141
        %p675 = pneg %p165
        %p676 = pneg %p162
        %p677 = pneg %p186
        %p678 = pneg %p183
        %p679 = pneg %p207
        %p680 = pneg %p204
        %p681 = pneg %p228
        %p682 = pneg %p225
        %p683 = pneg %p249
        %p684 = pneg %p246
        %p685 = pneg %p270
        %p686 = pneg %p267
        %p687 = pneg %p291
        %p688 = pneg %p288
        %p689 = pneg %p312
        %p690 = pneg %p309
        %p691 = pneg %p333
        %p692 = pneg %p330
        %p693 = pneg %p354
        %p694 = pneg %p351
        %p695 = pneg %p380
        %p696 = pneg %p377
        %s697 = sand.u32 %s367, 1
        %s698 = scalar_lea.sflag [#allocation12], %s697
        %s699 = sand.u32 %s367, 1
        %s700 = smul.addr %s699, 8
        %s701 = scalar_lea.vmem [#allocation34], %s700
        %s702 = smul.u32 72, %s39
        %v703 = vld [vmem:[%s599] sm:$0xff]
        %v704 = vld [vmem:[%s599 + $0x8] sm:$0xff]
        %v705 = vld [vmem:[%s599 + $0x10] sm:$0xff]
        %v706 = vld [vmem:[%s599 + $0x18] sm:$0xff]
        %v707 = vld [vmem:[%s599 + $0x20] sm:$0xff]
        %v708 = vld [vmem:[%s599 + $0x28] sm:$0xff]
        %v709 = vld [vmem:[%s599 + $0x30] sm:$0xff]
        %v710 = vld [vmem:[%s599 + $0x38] sm:$0xff]
        %v711 = vld [vmem:[%s599 + $0x40] sm:$0xff]
        %v712 = vld [vmem:[%s599 + $0x48] sm:$0xff]
        %v713 = vld [vmem:[%s599 + $0x50] sm:$0xff]
        %v714 = vld [vmem:[%s599 + $0x58] sm:$0xff]
        %v715 = vld [vmem:[%s599 + $0x60] sm:$0xff]
        %v716 = vld [vmem:[%s599 + $0x68] sm:$0xff]
        %v717 = vld [vmem:[%s599 + $0x70] sm:$0xff]
        %v718 = vld [vmem:[%s599 + $0x78] sm:$0xff]
        %v719 = vld [vmem:[%s599 + $0x80] sm:$0xff]
        %v720 = vld [vmem:[%s599 + $0x88] sm:$0xff]
        %v721 = vld [vmem:[%s599 + $0x90] sm:$0xff]
        %v722 = vld [vmem:[%s599 + $0x98] sm:$0xff]
        %v723 = vld [vmem:[%s599 + $0xa0] sm:$0xff]
        %v724 = vld [vmem:[%s599 + $0xa8] sm:$0xff]
        %v725 = vld [vmem:[%s599 + $0xb0] sm:$0xff]
        %v726 = vld [vmem:[%s599 + $0xb8] sm:$0xff]
        %v727 = vld [vmem:[%s599 + $0xc0] sm:$0xff]
        %v728 = vld [vmem:[%s599 + $0xc8] sm:$0xff]
        %v729 = vld [vmem:[%s599 + $0xd0] sm:$0xff]
        %v730 = vld [vmem:[%s599 + $0xd8] sm:$0xff]
        %v731 = vld [vmem:[%s599 + $0xe0] sm:$0xff]
        %v732 = vld [vmem:[%s599 + $0xe8] sm:$0xff]
        %v733 = vld [vmem:[%s599 + $0xf0] sm:$0xff]
        %v734 = vld [vmem:[%s599 + $0xf8] sm:$0xff]
        %v735 = vld [vmem:[%s599 + $0x100] sm:$0xff]
        %v736 = vld [vmem:[%s599 + $0x108] sm:$0xff]
        %v737 = vld [vmem:[%s599 + $0x110] sm:$0xff]
        %v738 = vld [vmem:[%s599 + $0x118] sm:$0xff]
        %v739 = vld [vmem:[%s599 + $0x120] sm:$0xff]
        %v740 = vld [vmem:[%s599 + $0x128] sm:$0xff]
        %v741 = vld [vmem:[%s599 + $0x130] sm:$0xff]
        %v742 = vld [vmem:[%s599 + $0x138] sm:$0xff]
        %v743 = vld [vmem:[%s599 + $0x140] sm:$0xff]
        %v744 = vld [vmem:[%s599 + $0x148] sm:$0xff]
        %v745 = vld [vmem:[%s599 + $0x150] sm:$0xff]
        %v746 = vld [vmem:[%s599 + $0x158] sm:$0xff]
        %v747 = vld [vmem:[%s599 + $0x160] sm:$0xff]
        %v748 = vld [vmem:[%s599 + $0x168] sm:$0xff]
        %v749 = vld [vmem:[%s599 + $0x170] sm:$0xff]
        %v750 = vld [vmem:[%s599 + $0x178] sm:$0xff]
        %v751 = vld [vmem:[%s599 + $0x180] sm:$0xff]
        %v752 = vld [vmem:[%s599 + $0x188] sm:$0xff]
        %v753 = vld [vmem:[%s599 + $0x190] sm:$0xff]
        %v754 = vld [vmem:[%s599 + $0x198] sm:$0xff]
        %v755 = vld [vmem:[%s599 + $0x1a0] sm:$0xff]
        %v756 = vld [vmem:[%s599 + $0x1a8] sm:$0xff]
        %v757 = vld [vmem:[%s599 + $0x1b0] sm:$0xff]
        %v758 = vld [vmem:[%s599 + $0x1b8] sm:$0xff]
        %v759 = vld [vmem:[%s599 + $0x1c0] sm:$0xff]
        %v760 = vld [vmem:[%s599 + $0x1c8] sm:$0xff]
        %v761 = vld [vmem:[%s599 + $0x1d0] sm:$0xff]
        %v762 = vld [vmem:[%s599 + $0x1d8] sm:$0xff]
        %v763 = vld [vmem:[%s599 + $0x1e0] sm:$0xff]
        %v764 = vld [vmem:[%s599 + $0x1e8] sm:$0xff]
        %v765 = vld [vmem:[%s599 + $0x1f0] sm:$0xff]
        %v766 = vld [vmem:[%s599 + $0x1f8] sm:$0xff]
        %v767 = vld [vmem:[%s599 + $0x200] sm:$0xff]
        %v768 = vld [vmem:[%s599 + $0x208] sm:$0xff]
        %v769 = vld [vmem:[%s599 + $0x210] sm:$0xff]
        %v770 = vld [vmem:[%s599 + $0x218] sm:$0xff]
        %v771 = vld [vmem:[%s599 + $0x220] sm:$0xff]
        %v772 = vld [vmem:[%s599 + $0x228] sm:$0xff]
        %v773 = vld [vmem:[%s599 + $0x230] sm:$0xff]
        %v774 = vld [vmem:[%s599 + $0x238] sm:$0xff]
        %vm775 = vcmask 7168
        %776 = vst.msk [vmem:[#allocation2] sm:$0xff] %vm775, %v703
        %777 = vst.msk [vmem:[#allocation2 + $0x8] sm:$0xff] %vm775, %v704
        %778 = vst.msk [vmem:[#allocation2 + $0x10] sm:$0xff] %vm775, %v705
        %779 = vst.msk [vmem:[#allocation2 + $0x18] sm:$0xff] %vm775, %v706
        %780 = vst.msk [vmem:[#allocation2 + $0x20] sm:$0xff] %vm775, %v707
        %781 = vst.msk [vmem:[#allocation2 + $0x28] sm:$0xff] %vm775, %v708
        %782 = vst.msk [vmem:[#allocation2 + $0x30] sm:$0xff] %vm775, %v709
        %783 = vst.msk [vmem:[#allocation2 + $0x38] sm:$0xff] %vm775, %v710
        %784 = vst.msk [vmem:[#allocation2 + $0x40] sm:$0xff] %vm775, %v711
        %785 = vst.msk [vmem:[#allocation2 + $0x48] sm:$0xff] %vm775, %v712
        %786 = vst.msk [vmem:[#allocation2 + $0x50] sm:$0xff] %vm775, %v713
        %787 = vst.msk [vmem:[#allocation2 + $0x58] sm:$0xff] %vm775, %v714
        %788 = vst.msk [vmem:[#allocation2 + $0x60] sm:$0xff] %vm775, %v715
        %789 = vst.msk [vmem:[#allocation2 + $0x68] sm:$0xff] %vm775, %v716
        %790 = vst.msk [vmem:[#allocation2 + $0x70] sm:$0xff] %vm775, %v717
        %791 = vst.msk [vmem:[#allocation2 + $0x78] sm:$0xff] %vm775, %v718
        %792 = vst.msk [vmem:[#allocation2 + $0x80] sm:$0xff] %vm775, %v719
        %793 = vst.msk [vmem:[#allocation2 + $0x88] sm:$0xff] %vm775, %v720
        %794 = vst.msk [vmem:[#allocation2 + $0x90] sm:$0xff] %vm775, %v721
        %795 = vst.msk [vmem:[#allocation2 + $0x98] sm:$0xff] %vm775, %v722
        %796 = vst.msk [vmem:[#allocation2 + $0xa0] sm:$0xff] %vm775, %v723
        %797 = vst.msk [vmem:[#allocation2 + $0xa8] sm:$0xff] %vm775, %v724
        %798 = vst.msk [vmem:[#allocation2 + $0xb0] sm:$0xff] %vm775, %v725
        %799 = vst.msk [vmem:[#allocation2 + $0xb8] sm:$0xff] %vm775, %v726
        %800 = vst.msk [vmem:[#allocation2 + $0xc0] sm:$0xff] %vm775, %v727
        %801 = vst.msk [vmem:[#allocation2 + $0xc8] sm:$0xff] %vm775, %v728
        %802 = vst.msk [vmem:[#allocation2 + $0xd0] sm:$0xff] %vm775, %v729
        %803 = vst.msk [vmem:[#allocation2 + $0xd8] sm:$0xff] %vm775, %v730
        %804 = vst.msk [vmem:[#allocation2 + $0xe0] sm:$0xff] %vm775, %v731
        %805 = vst.msk [vmem:[#allocation2 + $0xe8] sm:$0xff] %vm775, %v732
        %806 = vst.msk [vmem:[#allocation2 + $0xf0] sm:$0xff] %vm775, %v733
        %807 = vst.msk [vmem:[#allocation2 + $0xf8] sm:$0xff] %vm775, %v734
        %808 = vst.msk [vmem:[#allocation2 + $0x100] sm:$0xff] %vm775, %v735
        %809 = vst.msk [vmem:[#allocation2 + $0x108] sm:$0xff] %vm775, %v736
        %810 = vst.msk [vmem:[#allocation2 + $0x110] sm:$0xff] %vm775, %v737
        %811 = vst.msk [vmem:[#allocation2 + $0x118] sm:$0xff] %vm775, %v738
        %812 = vst.msk [vmem:[#allocation2 + $0x120] sm:$0xff] %vm775, %v739
        %813 = vst.msk [vmem:[#allocation2 + $0x128] sm:$0xff] %vm775, %v740
        %814 = vst.msk [vmem:[#allocation2 + $0x130] sm:$0xff] %vm775, %v741
        %815 = vst.msk [vmem:[#allocation2 + $0x138] sm:$0xff] %vm775, %v742
        %816 = vst.msk [vmem:[#allocation2 + $0x140] sm:$0xff] %vm775, %v743
        %817 = vst.msk [vmem:[#allocation2 + $0x148] sm:$0xff] %vm775, %v744
        %818 = vst.msk [vmem:[#allocation2 + $0x150] sm:$0xff] %vm775, %v745
        %819 = vst.msk [vmem:[#allocation2 + $0x158] sm:$0xff] %vm775, %v746
        %820 = vst.msk [vmem:[#allocation2 + $0x160] sm:$0xff] %vm775, %v747
        %821 = vst.msk [vmem:[#allocation2 + $0x168] sm:$0xff] %vm775, %v748
        %822 = vst.msk [vmem:[#allocation2 + $0x170] sm:$0xff] %vm775, %v749
        %823 = vst.msk [vmem:[#allocation2 + $0x178] sm:$0xff] %vm775, %v750
        %824 = vst.msk [vmem:[#allocation2 + $0x180] sm:$0xff] %vm775, %v751
        %825 = vst.msk [vmem:[#allocation2 + $0x188] sm:$0xff] %vm775, %v752
        %826 = vst.msk [vmem:[#allocation2 + $0x190] sm:$0xff] %vm775, %v753
        %827 = vst.msk [vmem:[#allocation2 + $0x198] sm:$0xff] %vm775, %v754
        %828 = vst.msk [vmem:[#allocation2 + $0x1a0] sm:$0xff] %vm775, %v755
        %829 = vst.msk [vmem:[#allocation2 + $0x1a8] sm:$0xff] %vm775, %v756
        %830 = vst.msk [vmem:[#allocation2 + $0x1b0] sm:$0xff] %vm775, %v757
        %831 = vst.msk [vmem:[#allocation2 + $0x1b8] sm:$0xff] %vm775, %v758
        %832 = vst.msk [vmem:[#allocation2 + $0x1c0] sm:$0xff] %vm775, %v759
        %833 = vst.msk [vmem:[#allocation2 + $0x1c8] sm:$0xff] %vm775, %v760
        %834 = vst.msk [vmem:[#allocation2 + $0x1d0] sm:$0xff] %vm775, %v761
        %835 = vst.msk [vmem:[#allocation2 + $0x1d8] sm:$0xff] %vm775, %v762
        %836 = vst.msk [vmem:[#allocation2 + $0x1e0] sm:$0xff] %vm775, %v763
        %837 = vst.msk [vmem:[#allocation2 + $0x1e8] sm:$0xff] %vm775, %v764
        %838 = vst.msk [vmem:[#allocation2 + $0x1f0] sm:$0xff] %vm775, %v765
        %839 = vst.msk [vmem:[#allocation2 + $0x1f8] sm:$0xff] %vm775, %v766
        %840 = vst.msk [vmem:[#allocation2 + $0x200] sm:$0xff] %vm775, %v767
        %841 = vst.msk [vmem:[#allocation2 + $0x208] sm:$0xff] %vm775, %v768
        %842 = vst.msk [vmem:[#allocation2 + $0x210] sm:$0xff] %vm775, %v769
        %843 = vst.msk [vmem:[#allocation2 + $0x218] sm:$0xff] %vm775, %v770
        %844 = vst.msk [vmem:[#allocation2 + $0x220] sm:$0xff] %vm775, %v771
        %845 = vst.msk [vmem:[#allocation2 + $0x228] sm:$0xff] %vm775, %v772
        %846 = vst.msk [vmem:[#allocation2 + $0x230] sm:$0xff] %vm775, %v773
        %847 = vst.msk [vmem:[#allocation2 + $0x238] sm:$0xff] %vm775, %v774
        %v848 = vld [vmem:[%s599 + $0x1] sm:$0xff]
        %v849 = vld [vmem:[%s599 + $0x9] sm:$0xff]
        %v850 = vld [vmem:[%s599 + $0x11] sm:$0xff]
        %v851 = vld [vmem:[%s599 + $0x19] sm:$0xff]
        %v852 = vld [vmem:[%s599 + $0x21] sm:$0xff]
        %v853 = vld [vmem:[%s599 + $0x29] sm:$0xff]
        %v854 = vld [vmem:[%s599 + $0x31] sm:$0xff]
        %v855 = vld [vmem:[%s599 + $0x39] sm:$0xff]
        %v856 = vld [vmem:[%s599 + $0x41] sm:$0xff]
        %v857 = vld [vmem:[%s599 + $0x49] sm:$0xff]
        %v858 = vld [vmem:[%s599 + $0x51] sm:$0xff]
        %v859 = vld [vmem:[%s599 + $0x59] sm:$0xff]
        %v860 = vld [vmem:[%s599 + $0x61] sm:$0xff]
        %v861 = vld [vmem:[%s599 + $0x69] sm:$0xff]
        %v862 = vld [vmem:[%s599 + $0x71] sm:$0xff]
        %v863 = vld [vmem:[%s599 + $0x79] sm:$0xff]
        %v864 = vld [vmem:[%s599 + $0x81] sm:$0xff]
        %v865 = vld [vmem:[%s599 + $0x89] sm:$0xff]
        %v866 = vld [vmem:[%s599 + $0x91] sm:$0xff]
        %v867 = vld [vmem:[%s599 + $0x99] sm:$0xff]
        %v868 = vld [vmem:[%s599 + $0xa1] sm:$0xff]
        %v869 = vld [vmem:[%s599 + $0xa9] sm:$0xff]
        %v870 = vld [vmem:[%s599 + $0xb1] sm:$0xff]
        %v871 = vld [vmem:[%s599 + $0xb9] sm:$0xff]
        %v872 = vld [vmem:[%s599 + $0xc1] sm:$0xff]
        %v873 = vld [vmem:[%s599 + $0xc9] sm:$0xff]
        %v874 = vld [vmem:[%s599 + $0xd1] sm:$0xff]
        %v875 = vld [vmem:[%s599 + $0xd9] sm:$0xff]
        %v876 = vld [vmem:[%s599 + $0xe1] sm:$0xff]
        %v877 = vld [vmem:[%s599 + $0xe9] sm:$0xff]
        %v878 = vld [vmem:[%s599 + $0xf1] sm:$0xff]
        %v879 = vld [vmem:[%s599 + $0xf9] sm:$0xff]
        %v880 = vld [vmem:[%s599 + $0x101] sm:$0xff]
        %v881 = vld [vmem:[%s599 + $0x109] sm:$0xff]
        %v882 = vld [vmem:[%s599 + $0x111] sm:$0xff]
        %v883 = vld [vmem:[%s599 + $0x119] sm:$0xff]
        %v884 = vld [vmem:[%s599 + $0x121] sm:$0xff]
        %v885 = vld [vmem:[%s599 + $0x129] sm:$0xff]
        %v886 = vld [vmem:[%s599 + $0x131] sm:$0xff]
        %v887 = vld [vmem:[%s599 + $0x139] sm:$0xff]
        %v888 = vld [vmem:[%s599 + $0x141] sm:$0xff]
        %v889 = vld [vmem:[%s599 + $0x149] sm:$0xff]
        %v890 = vld [vmem:[%s599 + $0x151] sm:$0xff]
        %v891 = vld [vmem:[%s599 + $0x159] sm:$0xff]
        %v892 = vld [vmem:[%s599 + $0x161] sm:$0xff]
        %v893 = vld [vmem:[%s599 + $0x169] sm:$0xff]
        %v894 = vld [vmem:[%s599 + $0x171] sm:$0xff]
        %v895 = vld [vmem:[%s599 + $0x179] sm:$0xff]
        %v896 = vld [vmem:[%s599 + $0x181] sm:$0xff]
        %v897 = vld [vmem:[%s599 + $0x189] sm:$0xff]
        %v898 = vld [vmem:[%s599 + $0x191] sm:$0xff]
        %v899 = vld [vmem:[%s599 + $0x199] sm:$0xff]
        %v900 = vld [vmem:[%s599 + $0x1a1] sm:$0xff]
        %v901 = vld [vmem:[%s599 + $0x1a9] sm:$0xff]
        %v902 = vld [vmem:[%s599 + $0x1b1] sm:$0xff]
        %v903 = vld [vmem:[%s599 + $0x1b9] sm:$0xff]
        %v904 = vld [vmem:[%s599 + $0x1c1] sm:$0xff]
        %v905 = vld [vmem:[%s599 + $0x1c9] sm:$0xff]
        %v906 = vld [vmem:[%s599 + $0x1d1] sm:$0xff]
        %v907 = vld [vmem:[%s599 + $0x1d9] sm:$0xff]
        %v908 = vld [vmem:[%s599 + $0x1e1] sm:$0xff]
        %v909 = vld [vmem:[%s599 + $0x1e9] sm:$0xff]
        %v910 = vld [vmem:[%s599 + $0x1f1] sm:$0xff]
        %v911 = vld [vmem:[%s599 + $0x1f9] sm:$0xff]
        %v912 = vld [vmem:[%s599 + $0x201] sm:$0xff]
        %v913 = vld [vmem:[%s599 + $0x209] sm:$0xff]
        %v914 = vld [vmem:[%s599 + $0x211] sm:$0xff]
        %v915 = vld [vmem:[%s599 + $0x219] sm:$0xff]
        %v916 = vld [vmem:[%s599 + $0x221] sm:$0xff]
        %v917 = vld [vmem:[%s599 + $0x229] sm:$0xff]
        %v918 = vld [vmem:[%s599 + $0x231] sm:$0xff]
        %v919 = vld [vmem:[%s599 + $0x239] sm:$0x7f]
        %992 = vrot.lane.b32.xlu0 %v848, 1
        %v993 = vpop.permute.xlu0 %992
        %994 = vrot.lane.b32.xlu0 %v849, 1
        %v995 = vpop.permute.xlu0 %994
        %996 = vrot.lane.b32.xlu0 %v850, 1
        %v997 = vpop.permute.xlu0 %996
        %998 = vrot.lane.b32.xlu0 %v851, 1
        %v999 = vpop.permute.xlu0 %998
        %1000 = vrot.lane.b32.xlu0 %v852, 1
        %v1001 = vpop.permute.xlu0 %1000
        %1002 = vrot.lane.b32.xlu0 %v853, 1
        %v1003 = vpop.permute.xlu0 %1002
        %1004 = vrot.lane.b32.xlu0 %v854, 1
        %v1005 = vpop.permute.xlu0 %1004
        %1006 = vrot.lane.b32.xlu0 %v855, 1
        %v1007 = vpop.permute.xlu0 %1006
        %1008 = vrot.lane.b32.xlu0 %v856, 1
        %v1009 = vpop.permute.xlu0 %1008
        %1010 = vrot.lane.b32.xlu0 %v857, 1
        %v1011 = vpop.permute.xlu0 %1010
        %1012 = vrot.lane.b32.xlu0 %v858, 1
        %v1013 = vpop.permute.xlu0 %1012
        %1014 = vrot.lane.b32.xlu0 %v859, 1
        %v1015 = vpop.permute.xlu0 %1014
        %1016 = vrot.lane.b32.xlu0 %v860, 1
        %v1017 = vpop.permute.xlu0 %1016
        %1018 = vrot.lane.b32.xlu0 %v861, 1
        %v1019 = vpop.permute.xlu0 %1018
        %1020 = vrot.lane.b32.xlu0 %v862, 1
        %v1021 = vpop.permute.xlu0 %1020
        %1022 = vrot.lane.b32.xlu0 %v863, 1
        %v1023 = vpop.permute.xlu0 %1022
        %1024 = vrot.lane.b32.xlu0 %v864, 1
        %v1025 = vpop.permute.xlu0 %1024
        %1026 = vrot.lane.b32.xlu0 %v865, 1
        %v1027 = vpop.permute.xlu0 %1026
        %1028 = vrot.lane.b32.xlu0 %v866, 1
        %v1029 = vpop.permute.xlu0 %1028
        %1030 = vrot.lane.b32.xlu0 %v867, 1
        %v1031 = vpop.permute.xlu0 %1030
        %1032 = vrot.lane.b32.xlu0 %v868, 1
        %v1033 = vpop.permute.xlu0 %1032
        %1034 = vrot.lane.b32.xlu0 %v869, 1
        %v1035 = vpop.permute.xlu0 %1034
        %1036 = vrot.lane.b32.xlu0 %v870, 1
        %v1037 = vpop.permute.xlu0 %1036
        %1038 = vrot.lane.b32.xlu0 %v871, 1
        %v1039 = vpop.permute.xlu0 %1038
        %1040 = vrot.lane.b32.xlu0 %v872, 1
        %v1041 = vpop.permute.xlu0 %1040
        %1042 = vrot.lane.b32.xlu0 %v873, 1
        %v1043 = vpop.permute.xlu0 %1042
        %1044 = vrot.lane.b32.xlu0 %v874, 1
        %v1045 = vpop.permute.xlu0 %1044
        %1046 = vrot.lane.b32.xlu0 %v875, 1
        %v1047 = vpop.permute.xlu0 %1046
        %1048 = vrot.lane.b32.xlu0 %v876, 1
        %v1049 = vpop.permute.xlu0 %1048
        %1050 = vrot.lane.b32.xlu0 %v877, 1
        %v1051 = vpop.permute.xlu0 %1050
        %1052 = vrot.lane.b32.xlu0 %v878, 1
        %v1053 = vpop.permute.xlu0 %1052
        %1054 = vrot.lane.b32.xlu0 %v879, 1
        %v1055 = vpop.permute.xlu0 %1054
        %1056 = vrot.lane.b32.xlu0 %v880, 1
        %v1057 = vpop.permute.xlu0 %1056
        %1058 = vrot.lane.b32.xlu0 %v881, 1
        %v1059 = vpop.permute.xlu0 %1058
        %1060 = vrot.lane.b32.xlu0 %v882, 1
        %v1061 = vpop.permute.xlu0 %1060
        %1062 = vrot.lane.b32.xlu0 %v883, 1
        %v1063 = vpop.permute.xlu0 %1062
        %1064 = vrot.lane.b32.xlu0 %v884, 1
        %v1065 = vpop.permute.xlu0 %1064
        %1066 = vrot.lane.b32.xlu0 %v885, 1
        %v1067 = vpop.permute.xlu0 %1066
        %1068 = vrot.lane.b32.xlu0 %v886, 1
        %v1069 = vpop.permute.xlu0 %1068
        %1070 = vrot.lane.b32.xlu0 %v887, 1
        %v1071 = vpop.permute.xlu0 %1070
        %1072 = vrot.lane.b32.xlu0 %v888, 1
        %v1073 = vpop.permute.xlu0 %1072
        %1074 = vrot.lane.b32.xlu0 %v889, 1
        %v1075 = vpop.permute.xlu0 %1074
        %1076 = vrot.lane.b32.xlu0 %v890, 1
        %v1077 = vpop.permute.xlu0 %1076
        %1078 = vrot.lane.b32.xlu0 %v891, 1
        %v1079 = vpop.permute.xlu0 %1078
        %1080 = vrot.lane.b32.xlu0 %v892, 1
        %v1081 = vpop.permute.xlu0 %1080
        %1082 = vrot.lane.b32.xlu0 %v893, 1
        %v1083 = vpop.permute.xlu0 %1082
        %1084 = vrot.lane.b32.xlu0 %v894, 1
        %v1085 = vpop.permute.xlu0 %1084
        %1086 = vrot.lane.b32.xlu0 %v895, 1
        %v1087 = vpop.permute.xlu0 %1086
        %1088 = vrot.lane.b32.xlu0 %v896, 1
        %v1089 = vpop.permute.xlu0 %1088
        %1090 = vrot.lane.b32.xlu0 %v897, 1
        %v1091 = vpop.permute.xlu0 %1090
        %1092 = vrot.lane.b32.xlu0 %v898, 1
        %v1093 = vpop.permute.xlu0 %1092
        %1094 = vrot.lane.b32.xlu0 %v899, 1
        %v1095 = vpop.permute.xlu0 %1094
        %1096 = vrot.lane.b32.xlu0 %v900, 1
        %v1097 = vpop.permute.xlu0 %1096
        %1098 = vrot.lane.b32.xlu0 %v901, 1
        %v1099 = vpop.permute.xlu0 %1098
        %1100 = vrot.lane.b32.xlu0 %v902, 1
        %v1101 = vpop.permute.xlu0 %1100
        %1102 = vrot.lane.b32.xlu0 %v903, 1
        %v1103 = vpop.permute.xlu0 %1102
        %1104 = vrot.lane.b32.xlu0 %v904, 1
        %v1105 = vpop.permute.xlu0 %1104
        %1106 = vrot.lane.b32.xlu0 %v905, 1
        %v1107 = vpop.permute.xlu0 %1106
        %1108 = vrot.lane.b32.xlu0 %v906, 1
        %v1109 = vpop.permute.xlu0 %1108
        %1110 = vrot.lane.b32.xlu0 %v907, 1
        %v1111 = vpop.permute.xlu0 %1110
        %1112 = vrot.lane.b32.xlu0 %v908, 1
        %v1113 = vpop.permute.xlu0 %1112
        %1114 = vrot.lane.b32.xlu0 %v909, 1
        %v1115 = vpop.permute.xlu0 %1114
        %1116 = vrot.lane.b32.xlu0 %v910, 1
        %v1117 = vpop.permute.xlu0 %1116
        %1118 = vrot.lane.b32.xlu0 %v911, 1
        %v1119 = vpop.permute.xlu0 %1118
        %1120 = vrot.lane.b32.xlu0 %v912, 1
        %v1121 = vpop.permute.xlu0 %1120
        %1122 = vrot.lane.b32.xlu0 %v913, 1
        %v1123 = vpop.permute.xlu0 %1122
        %1124 = vrot.lane.b32.xlu0 %v914, 1
        %v1125 = vpop.permute.xlu0 %1124
        %1126 = vrot.lane.b32.xlu0 %v915, 1
        %v1127 = vpop.permute.xlu0 %1126
        %1128 = vrot.lane.b32.xlu0 %v916, 1
        %v1129 = vpop.permute.xlu0 %1128
        %1130 = vrot.lane.b32.xlu0 %v917, 1
        %v1131 = vpop.permute.xlu0 %1130
        %1132 = vrot.lane.b32.xlu0 %v918, 1
        %v1133 = vpop.permute.xlu0 %1132
        %1134 = vrot.lane.b32.xlu0 %v919, 1
        %v1135 = vpop.permute.xlu0 %1134
        %vm1208 = vcmask 15368
        %1209 = vst.msk [vmem:[#allocation2] sm:$0xff] %vm1208, %v993
        %1210 = vst.msk [vmem:[#allocation2 + $0x8] sm:$0xff] %vm1208, %v995
        %1211 = vst.msk [vmem:[#allocation2 + $0x10] sm:$0xff] %vm1208, %v997
        %1212 = vst.msk [vmem:[#allocation2 + $0x18] sm:$0xff] %vm1208, %v999
        %1213 = vst.msk [vmem:[#allocation2 + $0x20] sm:$0xff] %vm1208, %v1001
        %1214 = vst.msk [vmem:[#allocation2 + $0x28] sm:$0xff] %vm1208, %v1003
        %1215 = vst.msk [vmem:[#allocation2 + $0x30] sm:$0xff] %vm1208, %v1005
        %1216 = vst.msk [vmem:[#allocation2 + $0x38] sm:$0xff] %vm1208, %v1007
        %1217 = vst.msk [vmem:[#allocation2 + $0x40] sm:$0xff] %vm1208, %v1009
        %1218 = vst.msk [vmem:[#allocation2 + $0x48] sm:$0xff] %vm1208, %v1011
        %1219 = vst.msk [vmem:[#allocation2 + $0x50] sm:$0xff] %vm1208, %v1013
        %1220 = vst.msk [vmem:[#allocation2 + $0x58] sm:$0xff] %vm1208, %v1015
        %1221 = vst.msk [vmem:[#allocation2 + $0x60] sm:$0xff] %vm1208, %v1017
        %1222 = vst.msk [vmem:[#allocation2 + $0x68] sm:$0xff] %vm1208, %v1019
        %1223 = vst.msk [vmem:[#allocation2 + $0x70] sm:$0xff] %vm1208, %v1021
        %1224 = vst.msk [vmem:[#allocation2 + $0x78] sm:$0xff] %vm1208, %v1023
        %1225 = vst.msk [vmem:[#allocation2 + $0x80] sm:$0xff] %vm1208, %v1025
        %1226 = vst.msk [vmem:[#allocation2 + $0x88] sm:$0xff] %vm1208, %v1027
        %1227 = vst.msk [vmem:[#allocation2 + $0x90] sm:$0xff] %vm1208, %v1029
        %1228 = vst.msk [vmem:[#allocation2 + $0x98] sm:$0xff] %vm1208, %v1031
        %1229 = vst.msk [vmem:[#allocation2 + $0xa0] sm:$0xff] %vm1208, %v1033
        %1230 = vst.msk [vmem:[#allocation2 + $0xa8] sm:$0xff] %vm1208, %v1035
        %1231 = vst.msk [vmem:[#allocation2 + $0xb0] sm:$0xff] %vm1208, %v1037
        %1232 = vst.msk [vmem:[#allocation2 + $0xb8] sm:$0xff] %vm1208, %v1039
        %1233 = vst.msk [vmem:[#allocation2 + $0xc0] sm:$0xff] %vm1208, %v1041
        %1234 = vst.msk [vmem:[#allocation2 + $0xc8] sm:$0xff] %vm1208, %v1043
        %1235 = vst.msk [vmem:[#allocation2 + $0xd0] sm:$0xff] %vm1208, %v1045
        %1236 = vst.msk [vmem:[#allocation2 + $0xd8] sm:$0xff] %vm1208, %v1047
        %1237 = vst.msk [vmem:[#allocation2 + $0xe0] sm:$0xff] %vm1208, %v1049
        %1238 = vst.msk [vmem:[#allocation2 + $0xe8] sm:$0xff] %vm1208, %v1051
        %1239 = vst.msk [vmem:[#allocation2 + $0xf0] sm:$0xff] %vm1208, %v1053
        %1240 = vst.msk [vmem:[#allocation2 + $0xf8] sm:$0xff] %vm1208, %v1055
        %1241 = vst.msk [vmem:[#allocation2 + $0x100] sm:$0xff] %vm1208, %v1057
        %1242 = vst.msk [vmem:[#allocation2 + $0x108] sm:$0xff] %vm1208, %v1059
        %1243 = vst.msk [vmem:[#allocation2 + $0x110] sm:$0xff] %vm1208, %v1061
        %1244 = vst.msk [vmem:[#allocation2 + $0x118] sm:$0xff] %vm1208, %v1063
        %1245 = vst.msk [vmem:[#allocation2 + $0x120] sm:$0xff] %vm1208, %v1065
        %1246 = vst.msk [vmem:[#allocation2 + $0x128] sm:$0xff] %vm1208, %v1067
        %1247 = vst.msk [vmem:[#allocation2 + $0x130] sm:$0xff] %vm1208, %v1069
        %1248 = vst.msk [vmem:[#allocation2 + $0x138] sm:$0xff] %vm1208, %v1071
        %1249 = vst.msk [vmem:[#allocation2 + $0x140] sm:$0xff] %vm1208, %v1073
        %1250 = vst.msk [vmem:[#allocation2 + $0x148] sm:$0xff] %vm1208, %v1075
        %1251 = vst.msk [vmem:[#allocation2 + $0x150] sm:$0xff] %vm1208, %v1077
        %1252 = vst.msk [vmem:[#allocation2 + $0x158] sm:$0xff] %vm1208, %v1079
        %1253 = vst.msk [vmem:[#allocation2 + $0x160] sm:$0xff] %vm1208, %v1081
        %1254 = vst.msk [vmem:[#allocation2 + $0x168] sm:$0xff] %vm1208, %v1083
        %1255 = vst.msk [vmem:[#allocation2 + $0x170] sm:$0xff] %vm1208, %v1085
        %1256 = vst.msk [vmem:[#allocation2 + $0x178] sm:$0xff] %vm1208, %v1087
        %1257 = vst.msk [vmem:[#allocation2 + $0x180] sm:$0xff] %vm1208, %v1089
        %1258 = vst.msk [vmem:[#allocation2 + $0x188] sm:$0xff] %vm1208, %v1091
        %1259 = vst.msk [vmem:[#allocation2 + $0x190] sm:$0xff] %vm1208, %v1093
        %1260 = vst.msk [vmem:[#allocation2 + $0x198] sm:$0xff] %vm1208, %v1095
        %1261 = vst.msk [vmem:[#allocation2 + $0x1a0] sm:$0xff] %vm1208, %v1097
        %1262 = vst.msk [vmem:[#allocation2 + $0x1a8] sm:$0xff] %vm1208, %v1099
        %1263 = vst.msk [vmem:[#allocation2 + $0x1b0] sm:$0xff] %vm1208, %v1101
        %1264 = vst.msk [vmem:[#allocation2 + $0x1b8] sm:$0xff] %vm1208, %v1103
        %1265 = vst.msk [vmem:[#allocation2 + $0x1c0] sm:$0xff] %vm1208, %v1105
        %1266 = vst.msk [vmem:[#allocation2 + $0x1c8] sm:$0xff] %vm1208, %v1107
        %1267 = vst.msk [vmem:[#allocation2 + $0x1d0] sm:$0xff] %vm1208, %v1109
        %1268 = vst.msk [vmem:[#allocation2 + $0x1d8] sm:$0xff] %vm1208, %v1111
        %1269 = vst.msk [vmem:[#allocation2 + $0x1e0] sm:$0xff] %vm1208, %v1113
        %1270 = vst.msk [vmem:[#allocation2 + $0x1e8] sm:$0xff] %vm1208, %v1115
        %1271 = vst.msk [vmem:[#allocation2 + $0x1f0] sm:$0xff] %vm1208, %v1117
        %1272 = vst.msk [vmem:[#allocation2 + $0x1f8] sm:$0xff] %vm1208, %v1119
        %1273 = vst.msk [vmem:[#allocation2 + $0x200] sm:$0xff] %vm1208, %v1121
        %1274 = vst.msk [vmem:[#allocation2 + $0x208] sm:$0xff] %vm1208, %v1123
        %1275 = vst.msk [vmem:[#allocation2 + $0x210] sm:$0xff] %vm1208, %v1125
        %1276 = vst.msk [vmem:[#allocation2 + $0x218] sm:$0xff] %vm1208, %v1127
        %1277 = vst.msk [vmem:[#allocation2 + $0x220] sm:$0xff] %vm1208, %v1129
        %1278 = vst.msk [vmem:[#allocation2 + $0x228] sm:$0xff] %vm1208, %v1131
        %1279 = vst.msk [vmem:[#allocation2 + $0x230] sm:$0xff] %vm1208, %v1133
        %vm1280 = vcmask 14344
        %1281 = vst.msk [vmem:[#allocation2 + $0x238] sm:$0x7f] %vm1280, %v1135
        %v1282 = vld [vmem:[%s599 + $0x2] sm:$0xff]
        %v1283 = vld [vmem:[%s599 + $0xa] sm:$0xff]
        %v1284 = vld [vmem:[%s599 + $0x12] sm:$0xff]
        %v1285 = vld [vmem:[%s599 + $0x1a] sm:$0xff]
        %v1286 = vld [vmem:[%s599 + $0x22] sm:$0xff]
        %v1287 = vld [vmem:[%s599 + $0x2a] sm:$0xff]
        %v1288 = vld [vmem:[%s599 + $0x32] sm:$0xff]
        %v1289 = vld [vmem:[%s599 + $0x3a] sm:$0xff]
        %v1290 = vld [vmem:[%s599 + $0x42] sm:$0xff]
        %v1291 = vld [vmem:[%s599 + $0x4a] sm:$0xff]
        %v1292 = vld [vmem:[%s599 + $0x52] sm:$0xff]
        %v1293 = vld [vmem:[%s599 + $0x5a] sm:$0xff]
        %v1294 = vld [vmem:[%s599 + $0x62] sm:$0xff]
        %v1295 = vld [vmem:[%s599 + $0x6a] sm:$0xff]
        %v1296 = vld [vmem:[%s599 + $0x72] sm:$0xff]
        %v1297 = vld [vmem:[%s599 + $0x7a] sm:$0xff]
        %v1298 = vld [vmem:[%s599 + $0x82] sm:$0xff]
        %v1299 = vld [vmem:[%s599 + $0x8a] sm:$0xff]
        %v1300 = vld [vmem:[%s599 + $0x92] sm:$0xff]
        %v1301 = vld [vmem:[%s599 + $0x9a] sm:$0xff]
        %v1302 = vld [vmem:[%s599 + $0xa2] sm:$0xff]
        %v1303 = vld [vmem:[%s599 + $0xaa] sm:$0xff]
        %v1304 = vld [vmem:[%s599 + $0xb2] sm:$0xff]
        %v1305 = vld [vmem:[%s599 + $0xba] sm:$0xff]
        %v1306 = vld [vmem:[%s599 + $0xc2] sm:$0xff]
        %v1307 = vld [vmem:[%s599 + $0xca] sm:$0xff]
        %v1308 = vld [vmem:[%s599 + $0xd2] sm:$0xff]
        %v1309 = vld [vmem:[%s599 + $0xda] sm:$0xff]
        %v1310 = vld [vmem:[%s599 + $0xe2] sm:$0xff]
        %v1311 = vld [vmem:[%s599 + $0xea] sm:$0xff]
        %v1312 = vld [vmem:[%s599 + $0xf2] sm:$0xff]
        %v1313 = vld [vmem:[%s599 + $0xfa] sm:$0xff]
        %v1314 = vld [vmem:[%s599 + $0x102] sm:$0xff]
        %v1315 = vld [vmem:[%s599 + $0x10a] sm:$0xff]
        %v1316 = vld [vmem:[%s599 + $0x112] sm:$0xff]
        %v1317 = vld [vmem:[%s599 + $0x11a] sm:$0xff]
        %v1318 = vld [vmem:[%s599 + $0x122] sm:$0xff]
        %v1319 = vld [vmem:[%s599 + $0x12a] sm:$0xff]
        %v1320 = vld [vmem:[%s599 + $0x132] sm:$0xff]
        %v1321 = vld [vmem:[%s599 + $0x13a] sm:$0xff]
        %v1322 = vld [vmem:[%s599 + $0x142] sm:$0xff]
        %v1323 = vld [vmem:[%s599 + $0x14a] sm:$0xff]
        %v1324 = vld [vmem:[%s599 + $0x152] sm:$0xff]
        %v1325 = vld [vmem:[%s599 + $0x15a] sm:$0xff]
        %v1326 = vld [vmem:[%s599 + $0x162] sm:$0xff]
        %v1327 = vld [vmem:[%s599 + $0x16a] sm:$0xff]
        %v1328 = vld [vmem:[%s599 + $0x172] sm:$0xff]
        %v1329 = vld [vmem:[%s599 + $0x17a] sm:$0xff]
        %v1330 = vld [vmem:[%s599 + $0x182] sm:$0xff]
        %v1331 = vld [vmem:[%s599 + $0x18a] sm:$0xff]
        %v1332 = vld [vmem:[%s599 + $0x192] sm:$0xff]
        %v1333 = vld [vmem:[%s599 + $0x19a] sm:$0xff]
        %v1334 = vld [vmem:[%s599 + $0x1a2] sm:$0xff]
        %v1335 = vld [vmem:[%s599 + $0x1aa] sm:$0xff]
        %v1336 = vld [vmem:[%s599 + $0x1b2] sm:$0xff]
        %v1337 = vld [vmem:[%s599 + $0x1ba] sm:$0xff]
        %v1338 = vld [vmem:[%s599 + $0x1c2] sm:$0xff]
        %v1339 = vld [vmem:[%s599 + $0x1ca] sm:$0xff]
        %v1340 = vld [vmem:[%s599 + $0x1d2] sm:$0xff]
        %v1341 = vld [vmem:[%s599 + $0x1da] sm:$0xff]
        %v1342 = vld [vmem:[%s599 + $0x1e2] sm:$0xff]
        %v1343 = vld [vmem:[%s599 + $0x1ea] sm:$0xff]
        %v1344 = vld [vmem:[%s599 + $0x1f2] sm:$0xff]
        %v1345 = vld [vmem:[%s599 + $0x1fa] sm:$0xff]
        %v1346 = vld [vmem:[%s599 + $0x202] sm:$0xff]
        %v1347 = vld [vmem:[%s599 + $0x20a] sm:$0xff]
        %v1348 = vld [vmem:[%s599 + $0x212] sm:$0xff]
        %v1349 = vld [vmem:[%s599 + $0x21a] sm:$0xff]
        %v1350 = vld [vmem:[%s599 + $0x222] sm:$0xff]
        %v1351 = vld [vmem:[%s599 + $0x22a] sm:$0xff]
        %v1352 = vld [vmem:[%s599 + $0x232] sm:$0xff]
        %v1353 = vld [vmem:[%s599 + $0x23a] sm:$0x3f]
        %1426 = vrot.lane.b32.xlu0 %v1282, 2
        %v1427 = vpop.permute.xlu0 %1426
        %1428 = vrot.lane.b32.xlu0 %v1283, 2
        %v1429 = vpop.permute.xlu0 %1428
        %1430 = vrot.lane.b32.xlu0 %v1284, 2
        %v1431 = vpop.permute.xlu0 %1430
        %1432 = vrot.lane.b32.xlu0 %v1285, 2
        %v1433 = vpop.permute.xlu0 %1432
        %1434 = vrot.lane.b32.xlu0 %v1286, 2
        %v1435 = vpop.permute.xlu0 %1434
        %1436 = vrot.lane.b32.xlu0 %v1287, 2
        %v1437 = vpop.permute.xlu0 %1436
        %1438 = vrot.lane.b32.xlu0 %v1288, 2
        %v1439 = vpop.permute.xlu0 %1438
        %1440 = vrot.lane.b32.xlu0 %v1289, 2
        %v1441 = vpop.permute.xlu0 %1440
        %1442 = vrot.lane.b32.xlu0 %v1290, 2
        %v1443 = vpop.permute.xlu0 %1442
        %1444 = vrot.lane.b32.xlu0 %v1291, 2
        %v1445 = vpop.permute.xlu0 %1444
        %1446 = vrot.lane.b32.xlu0 %v1292, 2
        %v1447 = vpop.permute.xlu0 %1446
        %1448 = vrot.lane.b32.xlu0 %v1293, 2
        %v1449 = vpop.permute.xlu0 %1448
        %1450 = vrot.lane.b32.xlu0 %v1294, 2
        %v1451 = vpop.permute.xlu0 %1450
        %1452 = vrot.lane.b32.xlu0 %v1295, 2
        %v1453 = vpop.permute.xlu0 %1452
        %1454 = vrot.lane.b32.xlu0 %v1296, 2
        %v1455 = vpop.permute.xlu0 %1454
        %1456 = vrot.lane.b32.xlu0 %v1297, 2
        %v1457 = vpop.permute.xlu0 %1456
        %1458 = vrot.lane.b32.xlu0 %v1298, 2
        %v1459 = vpop.permute.xlu0 %1458
        %1460 = vrot.lane.b32.xlu0 %v1299, 2
        %v1461 = vpop.permute.xlu0 %1460
        %1462 = vrot.lane.b32.xlu0 %v1300, 2
        %v1463 = vpop.permute.xlu0 %1462
        %1464 = vrot.lane.b32.xlu0 %v1301, 2
        %v1465 = vpop.permute.xlu0 %1464
        %1466 = vrot.lane.b32.xlu0 %v1302, 2
        %v1467 = vpop.permute.xlu0 %1466
        %1468 = vrot.lane.b32.xlu0 %v1303, 2
        %v1469 = vpop.permute.xlu0 %1468
        %1470 = vrot.lane.b32.xlu0 %v1304, 2
        %v1471 = vpop.permute.xlu0 %1470
        %1472 = vrot.lane.b32.xlu0 %v1305, 2
        %v1473 = vpop.permute.xlu0 %1472
        %1474 = vrot.lane.b32.xlu0 %v1306, 2
        %v1475 = vpop.permute.xlu0 %1474
        %1476 = vrot.lane.b32.xlu0 %v1307, 2
        %v1477 = vpop.permute.xlu0 %1476
        %1478 = vrot.lane.b32.xlu0 %v1308, 2
        %v1479 = vpop.permute.xlu0 %1478
        %1480 = vrot.lane.b32.xlu0 %v1309, 2
        %v1481 = vpop.permute.xlu0 %1480
        %1482 = vrot.lane.b32.xlu0 %v1310, 2
        %v1483 = vpop.permute.xlu0 %1482
        %1484 = vrot.lane.b32.xlu0 %v1311, 2
        %v1485 = vpop.permute.xlu0 %1484
        %1486 = vrot.lane.b32.xlu0 %v1312, 2
        %v1487 = vpop.permute.xlu0 %1486
        %1488 = vrot.lane.b32.xlu0 %v1313, 2
        %v1489 = vpop.permute.xlu0 %1488
        %1490 = vrot.lane.b32.xlu0 %v1314, 2
        %v1491 = vpop.permute.xlu0 %1490
        %1492 = vrot.lane.b32.xlu0 %v1315, 2
        %v1493 = vpop.permute.xlu0 %1492
        %1494 = vrot.lane.b32.xlu0 %v1316, 2
        %v1495 = vpop.permute.xlu0 %1494
        %1496 = vrot.lane.b32.xlu0 %v1317, 2
        %v1497 = vpop.permute.xlu0 %1496
        %1498 = vrot.lane.b32.xlu0 %v1318, 2
        %v1499 = vpop.permute.xlu0 %1498
        %1500 = vrot.lane.b32.xlu0 %v1319, 2
        %v1501 = vpop.permute.xlu0 %1500
        %1502 = vrot.lane.b32.xlu0 %v1320, 2
        %v1503 = vpop.permute.xlu0 %1502
        %1504 = vrot.lane.b32.xlu0 %v1321, 2
        %v1505 = vpop.permute.xlu0 %1504
        %1506 = vrot.lane.b32.xlu0 %v1322, 2
        %v1507 = vpop.permute.xlu0 %1506
        %1508 = vrot.lane.b32.xlu0 %v1323, 2
        %v1509 = vpop.permute.xlu0 %1508
        %1510 = vrot.lane.b32.xlu0 %v1324, 2
        %v1511 = vpop.permute.xlu0 %1510
        %1512 = vrot.lane.b32.xlu0 %v1325, 2
        %v1513 = vpop.permute.xlu0 %1512
        %1514 = vrot.lane.b32.xlu0 %v1326, 2
        %v1515 = vpop.permute.xlu0 %1514
        %1516 = vrot.lane.b32.xlu0 %v1327, 2
        %v1517 = vpop.permute.xlu0 %1516
        %1518 = vrot.lane.b32.xlu0 %v1328, 2
        %v1519 = vpop.permute.xlu0 %1518
        %1520 = vrot.lane.b32.xlu0 %v1329, 2
        %v1521 = vpop.permute.xlu0 %1520
        %1522 = vrot.lane.b32.xlu0 %v1330, 2
        %v1523 = vpop.permute.xlu0 %1522
        %1524 = vrot.lane.b32.xlu0 %v1331, 2
        %v1525 = vpop.permute.xlu0 %1524
        %1526 = vrot.lane.b32.xlu0 %v1332, 2
        %v1527 = vpop.permute.xlu0 %1526
        %1528 = vrot.lane.b32.xlu0 %v1333, 2
        %v1529 = vpop.permute.xlu0 %1528
        %1530 = vrot.lane.b32.xlu0 %v1334, 2
        %v1531 = vpop.permute.xlu0 %1530
        %1532 = vrot.lane.b32.xlu0 %v1335, 2
        %v1533 = vpop.permute.xlu0 %1532
        %1534 = vrot.lane.b32.xlu0 %v1336, 2
        %v1535 = vpop.permute.xlu0 %1534
        %1536 = vrot.lane.b32.xlu0 %v1337, 2
        %v1537 = vpop.permute.xlu0 %1536
        %1538 = vrot.lane.b32.xlu0 %v1338, 2
        %v1539 = vpop.permute.xlu0 %1538
        %1540 = vrot.lane.b32.xlu0 %v1339, 2
        %v1541 = vpop.permute.xlu0 %1540
        %1542 = vrot.lane.b32.xlu0 %v1340, 2
        %v1543 = vpop.permute.xlu0 %1542
        %1544 = vrot.lane.b32.xlu0 %v1341, 2
        %v1545 = vpop.permute.xlu0 %1544
        %1546 = vrot.lane.b32.xlu0 %v1342, 2
        %v1547 = vpop.permute.xlu0 %1546
        %1548 = vrot.lane.b32.xlu0 %v1343, 2
        %v1549 = vpop.permute.xlu0 %1548
        %1550 = vrot.lane.b32.xlu0 %v1344, 2
        %v1551 = vpop.permute.xlu0 %1550
        %1552 = vrot.lane.b32.xlu0 %v1345, 2
        %v1553 = vpop.permute.xlu0 %1552
        %1554 = vrot.lane.b32.xlu0 %v1346, 2
        %v1555 = vpop.permute.xlu0 %1554
        %1556 = vrot.lane.b32.xlu0 %v1347, 2
        %v1557 = vpop.permute.xlu0 %1556
        %1558 = vrot.lane.b32.xlu0 %v1348, 2
        %v1559 = vpop.permute.xlu0 %1558
        %1560 = vrot.lane.b32.xlu0 %v1349, 2
        %v1561 = vpop.permute.xlu0 %1560
        %1562 = vrot.lane.b32.xlu0 %v1350, 2
        %v1563 = vpop.permute.xlu0 %1562
        %1564 = vrot.lane.b32.xlu0 %v1351, 2
        %v1565 = vpop.permute.xlu0 %1564
        %1566 = vrot.lane.b32.xlu0 %v1352, 2
        %v1567 = vpop.permute.xlu0 %1566
        %1568 = vrot.lane.b32.xlu0 %v1353, 2
        %v1569 = vpop.permute.xlu0 %1568
        %vm1642 = vcmask 23568
        %1643 = vst.msk [vmem:[#allocation2] sm:$0xff] %vm1642, %v1427
        %1644 = vst.msk [vmem:[#allocation2 + $0x8] sm:$0xff] %vm1642, %v1429
        %1645 = vst.msk [vmem:[#allocation2 + $0x10] sm:$0xff] %vm1642, %v1431
        %1646 = vst.msk [vmem:[#allocation2 + $0x18] sm:$0xff] %vm1642, %v1433
        %1647 = vst.msk [vmem:[#allocation2 + $0x20] sm:$0xff] %vm1642, %v1435
        %1648 = vst.msk [vmem:[#allocation2 + $0x28] sm:$0xff] %vm1642, %v1437
        %1649 = vst.msk [vmem:[#allocation2 + $0x30] sm:$0xff] %vm1642, %v1439
        %1650 = vst.msk [vmem:[#allocation2 + $0x38] sm:$0xff] %vm1642, %v1441
        %1651 = vst.msk [vmem:[#allocation2 + $0x40] sm:$0xff] %vm1642, %v1443
        %1652 = vst.msk [vmem:[#allocation2 + $0x48] sm:$0xff] %vm1642, %v1445
        %1653 = vst.msk [vmem:[#allocation2 + $0x50] sm:$0xff] %vm1642, %v1447
        %1654 = vst.msk [vmem:[#allocation2 + $0x58] sm:$0xff] %vm1642, %v1449
        %1655 = vst.msk [vmem:[#allocation2 + $0x60] sm:$0xff] %vm1642, %v1451
        %1656 = vst.msk [vmem:[#allocation2 + $0x68] sm:$0xff] %vm1642, %v1453
        %1657 = vst.msk [vmem:[#allocation2 + $0x70] sm:$0xff] %vm1642, %v1455
        %1658 = vst.msk [vmem:[#allocation2 + $0x78] sm:$0xff] %vm1642, %v1457
        %1659 = vst.msk [vmem:[#allocation2 + $0x80] sm:$0xff] %vm1642, %v1459
        %1660 = vst.msk [vmem:[#allocation2 + $0x88] sm:$0xff] %vm1642, %v1461
        %1661 = vst.msk [vmem:[#allocation2 + $0x90] sm:$0xff] %vm1642, %v1463
        %1662 = vst.msk [vmem:[#allocation2 + $0x98] sm:$0xff] %vm1642, %v1465
        %1663 = vst.msk [vmem:[#allocation2 + $0xa0] sm:$0xff] %vm1642, %v1467
        %1664 = vst.msk [vmem:[#allocation2 + $0xa8] sm:$0xff] %vm1642, %v1469
        %1665 = vst.msk [vmem:[#allocation2 + $0xb0] sm:$0xff] %vm1642, %v1471
        %1666 = vst.msk [vmem:[#allocation2 + $0xb8] sm:$0xff] %vm1642, %v1473
        %1667 = vst.msk [vmem:[#allocation2 + $0xc0] sm:$0xff] %vm1642, %v1475
        %1668 = vst.msk [vmem:[#allocation2 + $0xc8] sm:$0xff] %vm1642, %v1477
        %1669 = vst.msk [vmem:[#allocation2 + $0xd0] sm:$0xff] %vm1642, %v1479
        %1670 = vst.msk [vmem:[#allocation2 + $0xd8] sm:$0xff] %vm1642, %v1481
        %1671 = vst.msk [vmem:[#allocation2 + $0xe0] sm:$0xff] %vm1642, %v1483
        %1672 = vst.msk [vmem:[#allocation2 + $0xe8] sm:$0xff] %vm1642, %v1485
        %1673 = vst.msk [vmem:[#allocation2 + $0xf0] sm:$0xff] %vm1642, %v1487
        %1674 = vst.msk [vmem:[#allocation2 + $0xf8] sm:$0xff] %vm1642, %v1489
        %1675 = vst.msk [vmem:[#allocation2 + $0x100] sm:$0xff] %vm1642, %v1491
        %1676 = vst.msk [vmem:[#allocation2 + $0x108] sm:$0xff] %vm1642, %v1493
        %1677 = vst.msk [vmem:[#allocation2 + $0x110] sm:$0xff] %vm1642, %v1495
        %1678 = vst.msk [vmem:[#allocation2 + $0x118] sm:$0xff] %vm1642, %v1497
        %1679 = vst.msk [vmem:[#allocation2 + $0x120] sm:$0xff] %vm1642, %v1499
        %1680 = vst.msk [vmem:[#allocation2 + $0x128] sm:$0xff] %vm1642, %v1501
        %1681 = vst.msk [vmem:[#allocation2 + $0x130] sm:$0xff] %vm1642, %v1503
        %1682 = vst.msk [vmem:[#allocation2 + $0x138] sm:$0xff] %vm1642, %v1505
        %1683 = vst.msk [vmem:[#allocation2 + $0x140] sm:$0xff] %vm1642, %v1507
        %1684 = vst.msk [vmem:[#allocation2 + $0x148] sm:$0xff] %vm1642, %v1509
        %1685 = vst.msk [vmem:[#allocation2 + $0x150] sm:$0xff] %vm1642, %v1511
        %1686 = vst.msk [vmem:[#allocation2 + $0x158] sm:$0xff] %vm1642, %v1513
        %1687 = vst.msk [vmem:[#allocation2 + $0x160] sm:$0xff] %vm1642, %v1515
        %1688 = vst.msk [vmem:[#allocation2 + $0x168] sm:$0xff] %vm1642, %v1517
        %1689 = vst.msk [vmem:[#allocation2 + $0x170] sm:$0xff] %vm1642, %v1519
        %1690 = vst.msk [vmem:[#allocation2 + $0x178] sm:$0xff] %vm1642, %v1521
        %1691 = vst.msk [vmem:[#allocation2 + $0x180] sm:$0xff] %vm1642, %v1523
        %1692 = vst.msk [vmem:[#allocation2 + $0x188] sm:$0xff] %vm1642, %v1525
        %1693 = vst.msk [vmem:[#allocation2 + $0x190] sm:$0xff] %vm1642, %v1527
        %1694 = vst.msk [vmem:[#allocation2 + $0x198] sm:$0xff] %vm1642, %v1529
        %1695 = vst.msk [vmem:[#allocation2 + $0x1a0] sm:$0xff] %vm1642, %v1531
        %1696 = vst.msk [vmem:[#allocation2 + $0x1a8] sm:$0xff] %vm1642, %v1533
        %1697 = vst.msk [vmem:[#allocation2 + $0x1b0] sm:$0xff] %vm1642, %v1535
        %1698 = vst.msk [vmem:[#allocation2 + $0x1b8] sm:$0xff] %vm1642, %v1537
        %1699 = vst.msk [vmem:[#allocation2 + $0x1c0] sm:$0xff] %vm1642, %v1539
        %1700 = vst.msk [vmem:[#allocation2 + $0x1c8] sm:$0xff] %vm1642, %v1541
        %1701 = vst.msk [vmem:[#allocation2 + $0x1d0] sm:$0xff] %vm1642, %v1543
        %1702 = vst.msk [vmem:[#allocation2 + $0x1d8] sm:$0xff] %vm1642, %v1545
        %1703 = vst.msk [vmem:[#allocation2 + $0x1e0] sm:$0xff] %vm1642, %v1547
        %1704 = vst.msk [vmem:[#allocation2 + $0x1e8] sm:$0xff] %vm1642, %v1549
        %1705 = vst.msk [vmem:[#allocation2 + $0x1f0] sm:$0xff] %vm1642, %v1551
        %1706 = vst.msk [vmem:[#allocation2 + $0x1f8] sm:$0xff] %vm1642, %v1553
        %1707 = vst.msk [vmem:[#allocation2 + $0x200] sm:$0xff] %vm1642, %v1555
        %1708 = vst.msk [vmem:[#allocation2 + $0x208] sm:$0xff] %vm1642, %v1557
        %1709 = vst.msk [vmem:[#allocation2 + $0x210] sm:$0xff] %vm1642, %v1559
        %1710 = vst.msk [vmem:[#allocation2 + $0x218] sm:$0xff] %vm1642, %v1561
        %1711 = vst.msk [vmem:[#allocation2 + $0x220] sm:$0xff] %vm1642, %v1563
        %1712 = vst.msk [vmem:[#allocation2 + $0x228] sm:$0xff] %vm1642, %v1565
        %1713 = vst.msk [vmem:[#allocation2 + $0x230] sm:$0xff] %vm1642, %v1567
        %vm1714 = vcmask 21520
        %1715 = vst.msk [vmem:[#allocation2 + $0x238] sm:$0x3f] %vm1714, %v1569
        %v1716 = vld [vmem:[%s599 + $0x3] sm:$0xff]
        %v1717 = vld [vmem:[%s599 + $0xb] sm:$0xff]
        %v1718 = vld [vmem:[%s599 + $0x13] sm:$0xff]
        %v1719 = vld [vmem:[%s599 + $0x1b] sm:$0xff]
        %v1720 = vld [vmem:[%s599 + $0x23] sm:$0xff]
        %v1721 = vld [vmem:[%s599 + $0x2b] sm:$0xff]
        %v1722 = vld [vmem:[%s599 + $0x33] sm:$0xff]
        %v1723 = vld [vmem:[%s599 + $0x3b] sm:$0xff]
        %v1724 = vld [vmem:[%s599 + $0x43] sm:$0xff]
        %v1725 = vld [vmem:[%s599 + $0x4b] sm:$0xff]
        %v1726 = vld [vmem:[%s599 + $0x53] sm:$0xff]
        %v1727 = vld [vmem:[%s599 + $0x5b] sm:$0xff]
        %v1728 = vld [vmem:[%s599 + $0x63] sm:$0xff]
        %v1729 = vld [vmem:[%s599 + $0x6b] sm:$0xff]
        %v1730 = vld [vmem:[%s599 + $0x73] sm:$0xff]
        %v1731 = vld [vmem:[%s599 + $0x7b] sm:$0xff]
        %v1732 = vld [vmem:[%s599 + $0x83] sm:$0xff]
        %v1733 = vld [vmem:[%s599 + $0x8b] sm:$0xff]
        %v1734 = vld [vmem:[%s599 + $0x93] sm:$0xff]
        %v1735 = vld [vmem:[%s599 + $0x9b] sm:$0xff]
        %v1736 = vld [vmem:[%s599 + $0xa3] sm:$0xff]
        %v1737 = vld [vmem:[%s599 + $0xab] sm:$0xff]
        %v1738 = vld [vmem:[%s599 + $0xb3] sm:$0xff]
        %v1739 = vld [vmem:[%s599 + $0xbb] sm:$0xff]
        %v1740 = vld [vmem:[%s599 + $0xc3] sm:$0xff]
        %v1741 = vld [vmem:[%s599 + $0xcb] sm:$0xff]
        %v1742 = vld [vmem:[%s599 + $0xd3] sm:$0xff]
        %v1743 = vld [vmem:[%s599 + $0xdb] sm:$0xff]
        %v1744 = vld [vmem:[%s599 + $0xe3] sm:$0xff]
        %v1745 = vld [vmem:[%s599 + $0xeb] sm:$0xff]
        %v1746 = vld [vmem:[%s599 + $0xf3] sm:$0xff]
        %v1747 = vld [vmem:[%s599 + $0xfb] sm:$0xff]
        %v1748 = vld [vmem:[%s599 + $0x103] sm:$0xff]
        %v1749 = vld [vmem:[%s599 + $0x10b] sm:$0xff]
        %v1750 = vld [vmem:[%s599 + $0x113] sm:$0xff]
        %v1751 = vld [vmem:[%s599 + $0x11b] sm:$0xff]
        %v1752 = vld [vmem:[%s599 + $0x123] sm:$0xff]
        %v1753 = vld [vmem:[%s599 + $0x12b] sm:$0xff]
        %v1754 = vld [vmem:[%s599 + $0x133] sm:$0xff]
        %v1755 = vld [vmem:[%s599 + $0x13b] sm:$0xff]
        %v1756 = vld [vmem:[%s599 + $0x143] sm:$0xff]
        %v1757 = vld [vmem:[%s599 + $0x14b] sm:$0xff]
        %v1758 = vld [vmem:[%s599 + $0x153] sm:$0xff]
        %v1759 = vld [vmem:[%s599 + $0x15b] sm:$0xff]
        %v1760 = vld [vmem:[%s599 + $0x163] sm:$0xff]
        %v1761 = vld [vmem:[%s599 + $0x16b] sm:$0xff]
        %v1762 = vld [vmem:[%s599 + $0x173] sm:$0xff]
        %v1763 = vld [vmem:[%s599 + $0x17b] sm:$0xff]
        %v1764 = vld [vmem:[%s599 + $0x183] sm:$0xff]
        %v1765 = vld [vmem:[%s599 + $0x18b] sm:$0xff]
        %v1766 = vld [vmem:[%s599 + $0x193] sm:$0xff]
        %v1767 = vld [vmem:[%s599 + $0x19b] sm:$0xff]
        %v1768 = vld [vmem:[%s599 + $0x1a3] sm:$0xff]
        %v1769 = vld [vmem:[%s599 + $0x1ab] sm:$0xff]
        %v1770 = vld [vmem:[%s599 + $0x1b3] sm:$0xff]
        %v1771 = vld [vmem:[%s599 + $0x1bb] sm:$0xff]
        %v1772 = vld [vmem:[%s599 + $0x1c3] sm:$0xff]
        %v1773 = vld [vmem:[%s599 + $0x1cb] sm:$0xff]
        %v1774 = vld [vmem:[%s599 + $0x1d3] sm:$0xff]
        %v1775 = vld [vmem:[%s599 + $0x1db] sm:$0xff]
        %v1776 = vld [vmem:[%s599 + $0x1e3] sm:$0xff]
        %v1777 = vld [vmem:[%s599 + $0x1eb] sm:$0xff]
        %v1778 = vld [vmem:[%s599 + $0x1f3] sm:$0xff]
        %v1779 = vld [vmem:[%s599 + $0x1fb] sm:$0xff]
        %v1780 = vld [vmem:[%s599 + $0x203] sm:$0xff]
        %v1781 = vld [vmem:[%s599 + $0x20b] sm:$0xff]
        %v1782 = vld [vmem:[%s599 + $0x213] sm:$0xff]
        %v1783 = vld [vmem:[%s599 + $0x21b] sm:$0xff]
        %v1784 = vld [vmem:[%s599 + $0x223] sm:$0xff]
        %v1785 = vld [vmem:[%s599 + $0x22b] sm:$0xff]
        %v1786 = vld [vmem:[%s599 + $0x233] sm:$0xff]
        %v1787 = vld [vmem:[%s599 + $0x23b] sm:$0x1f]
        %1860 = vrot.lane.b32.xlu0 %v1716, 3
        %v1861 = vpop.permute.xlu0 %1860
        %1862 = vrot.lane.b32.xlu0 %v1717, 3
        %v1863 = vpop.permute.xlu0 %1862
        %1864 = vrot.lane.b32.xlu0 %v1718, 3
        %v1865 = vpop.permute.xlu0 %1864
        %1866 = vrot.lane.b32.xlu0 %v1719, 3
        %v1867 = vpop.permute.xlu0 %1866
        %1868 = vrot.lane.b32.xlu0 %v1720, 3
        %v1869 = vpop.permute.xlu0 %1868
        %1870 = vrot.lane.b32.xlu0 %v1721, 3
        %v1871 = vpop.permute.xlu0 %1870
        %1872 = vrot.lane.b32.xlu0 %v1722, 3
        %v1873 = vpop.permute.xlu0 %1872
        %1874 = vrot.lane.b32.xlu0 %v1723, 3
        %v1875 = vpop.permute.xlu0 %1874
        %1876 = vrot.lane.b32.xlu0 %v1724, 3
        %v1877 = vpop.permute.xlu0 %1876
        %1878 = vrot.lane.b32.xlu0 %v1725, 3
        %v1879 = vpop.permute.xlu0 %1878
        %1880 = vrot.lane.b32.xlu0 %v1726, 3
        %v1881 = vpop.permute.xlu0 %1880
        %1882 = vrot.lane.b32.xlu0 %v1727, 3
        %v1883 = vpop.permute.xlu0 %1882
        %1884 = vrot.lane.b32.xlu0 %v1728, 3
        %v1885 = vpop.permute.xlu0 %1884
        %1886 = vrot.lane.b32.xlu0 %v1729, 3
        %v1887 = vpop.permute.xlu0 %1886
        %1888 = vrot.lane.b32.xlu0 %v1730, 3
        %v1889 = vpop.permute.xlu0 %1888
        %1890 = vrot.lane.b32.xlu0 %v1731, 3
        %v1891 = vpop.permute.xlu0 %1890
        %1892 = vrot.lane.b32.xlu0 %v1732, 3
        %v1893 = vpop.permute.xlu0 %1892
        %1894 = vrot.lane.b32.xlu0 %v1733, 3
        %v1895 = vpop.permute.xlu0 %1894
        %1896 = vrot.lane.b32.xlu0 %v1734, 3
        %v1897 = vpop.permute.xlu0 %1896
        %1898 = vrot.lane.b32.xlu0 %v1735, 3
        %v1899 = vpop.permute.xlu0 %1898
        %1900 = vrot.lane.b32.xlu0 %v1736, 3
        %v1901 = vpop.permute.xlu0 %1900
        %1902 = vrot.lane.b32.xlu0 %v1737, 3
        %v1903 = vpop.permute.xlu0 %1902
        %1904 = vrot.lane.b32.xlu0 %v1738, 3
        %v1905 = vpop.permute.xlu0 %1904
        %1906 = vrot.lane.b32.xlu0 %v1739, 3
        %v1907 = vpop.permute.xlu0 %1906
        %1908 = vrot.lane.b32.xlu0 %v1740, 3
        %v1909 = vpop.permute.xlu0 %1908
        %1910 = vrot.lane.b32.xlu0 %v1741, 3
        %v1911 = vpop.permute.xlu0 %1910
        %1912 = vrot.lane.b32.xlu0 %v1742, 3
        %v1913 = vpop.permute.xlu0 %1912
        %1914 = vrot.lane.b32.xlu0 %v1743, 3
        %v1915 = vpop.permute.xlu0 %1914
        %1916 = vrot.lane.b32.xlu0 %v1744, 3
        %v1917 = vpop.permute.xlu0 %1916
        %1918 = vrot.lane.b32.xlu0 %v1745, 3
        %v1919 = vpop.permute.xlu0 %1918
        %1920 = vrot.lane.b32.xlu0 %v1746, 3
        %v1921 = vpop.permute.xlu0 %1920
        %1922 = vrot.lane.b32.xlu0 %v1747, 3
        %v1923 = vpop.permute.xlu0 %1922
        %1924 = vrot.lane.b32.xlu0 %v1748, 3
        %v1925 = vpop.permute.xlu0 %1924
        %1926 = vrot.lane.b32.xlu0 %v1749, 3
        %v1927 = vpop.permute.xlu0 %1926
        %1928 = vrot.lane.b32.xlu0 %v1750, 3
        %v1929 = vpop.permute.xlu0 %1928
        %1930 = vrot.lane.b32.xlu0 %v1751, 3
        %v1931 = vpop.permute.xlu0 %1930
        %1932 = vrot.lane.b32.xlu0 %v1752, 3
        %v1933 = vpop.permute.xlu0 %1932
        %1934 = vrot.lane.b32.xlu0 %v1753, 3
        %v1935 = vpop.permute.xlu0 %1934
        %1936 = vrot.lane.b32.xlu0 %v1754, 3
        %v1937 = vpop.permute.xlu0 %1936
        %1938 = vrot.lane.b32.xlu0 %v1755, 3
        %v1939 = vpop.permute.xlu0 %1938
        %1940 = vrot.lane.b32.xlu0 %v1756, 3
        %v1941 = vpop.permute.xlu0 %1940
        %1942 = vrot.lane.b32.xlu0 %v1757, 3
        %v1943 = vpop.permute.xlu0 %1942
        %1944 = vrot.lane.b32.xlu0 %v1758, 3
        %v1945 = vpop.permute.xlu0 %1944
        %1946 = vrot.lane.b32.xlu0 %v1759, 3
        %v1947 = vpop.permute.xlu0 %1946
        %1948 = vrot.lane.b32.xlu0 %v1760, 3
        %v1949 = vpop.permute.xlu0 %1948
        %1950 = vrot.lane.b32.xlu0 %v1761, 3
        %v1951 = vpop.permute.xlu0 %1950
        %1952 = vrot.lane.b32.xlu0 %v1762, 3
        %v1953 = vpop.permute.xlu0 %1952
        %1954 = vrot.lane.b32.xlu0 %v1763, 3
        %v1955 = vpop.permute.xlu0 %1954
        %1956 = vrot.lane.b32.xlu0 %v1764, 3
        %v1957 = vpop.permute.xlu0 %1956
        %1958 = vrot.lane.b32.xlu0 %v1765, 3
        %v1959 = vpop.permute.xlu0 %1958
        %1960 = vrot.lane.b32.xlu0 %v1766, 3
        %v1961 = vpop.permute.xlu0 %1960
        %1962 = vrot.lane.b32.xlu0 %v1767, 3
        %v1963 = vpop.permute.xlu0 %1962
        %1964 = vrot.lane.b32.xlu0 %v1768, 3
        %v1965 = vpop.permute.xlu0 %1964
        %1966 = vrot.lane.b32.xlu0 %v1769, 3
        %v1967 = vpop.permute.xlu0 %1966
        %1968 = vrot.lane.b32.xlu0 %v1770, 3
        %v1969 = vpop.permute.xlu0 %1968
        %1970 = vrot.lane.b32.xlu0 %v1771, 3
        %v1971 = vpop.permute.xlu0 %1970
        %1972 = vrot.lane.b32.xlu0 %v1772, 3
        %v1973 = vpop.permute.xlu0 %1972
        %1974 = vrot.lane.b32.xlu0 %v1773, 3
        %v1975 = vpop.permute.xlu0 %1974
        %1976 = vrot.lane.b32.xlu0 %v1774, 3
        %v1977 = vpop.permute.xlu0 %1976
        %1978 = vrot.lane.b32.xlu0 %v1775, 3
        %v1979 = vpop.permute.xlu0 %1978
        %1980 = vrot.lane.b32.xlu0 %v1776, 3
        %v1981 = vpop.permute.xlu0 %1980
        %1982 = vrot.lane.b32.xlu0 %v1777, 3
        %v1983 = vpop.permute.xlu0 %1982
        %1984 = vrot.lane.b32.xlu0 %v1778, 3
        %v1985 = vpop.permute.xlu0 %1984
        %1986 = vrot.lane.b32.xlu0 %v1779, 3
        %v1987 = vpop.permute.xlu0 %1986
        %1988 = vrot.lane.b32.xlu0 %v1780, 3
        %v1989 = vpop.permute.xlu0 %1988
        %1990 = vrot.lane.b32.xlu0 %v1781, 3
        %v1991 = vpop.permute.xlu0 %1990
        %1992 = vrot.lane.b32.xlu0 %v1782, 3
        %v1993 = vpop.permute.xlu0 %1992
        %1994 = vrot.lane.b32.xlu0 %v1783, 3
        %v1995 = vpop.permute.xlu0 %1994
        %1996 = vrot.lane.b32.xlu0 %v1784, 3
        %v1997 = vpop.permute.xlu0 %1996
        %1998 = vrot.lane.b32.xlu0 %v1785, 3
        %v1999 = vpop.permute.xlu0 %1998
        %2000 = vrot.lane.b32.xlu0 %v1786, 3
        %v2001 = vpop.permute.xlu0 %2000
        %2002 = vrot.lane.b32.xlu0 %v1787, 3
        %v2003 = vpop.permute.xlu0 %2002
        %vm2076 = vcmask 31768
        %2077 = vst.msk [vmem:[#allocation2] sm:$0xff] %vm2076, %v1861
        %2078 = vst.msk [vmem:[#allocation2 + $0x8] sm:$0xff] %vm2076, %v1863
        %2079 = vst.msk [vmem:[#allocation2 + $0x10] sm:$0xff] %vm2076, %v1865
        %2080 = vst.msk [vmem:[#allocation2 + $0x18] sm:$0xff] %vm2076, %v1867
        %2081 = vst.msk [vmem:[#allocation2 + $0x20] sm:$0xff] %vm2076, %v1869
        %2082 = vst.msk [vmem:[#allocation2 + $0x28] sm:$0xff] %vm2076, %v1871
        %2083 = vst.msk [vmem:[#allocation2 + $0x30] sm:$0xff] %vm2076, %v1873
        %2084 = vst.msk [vmem:[#allocation2 + $0x38] sm:$0xff] %vm2076, %v1875
        %2085 = vst.msk [vmem:[#allocation2 + $0x40] sm:$0xff] %vm2076, %v1877
        %2086 = vst.msk [vmem:[#allocation2 + $0x48] sm:$0xff] %vm2076, %v1879
        %2087 = vst.msk [vmem:[#allocation2 + $0x50] sm:$0xff] %vm2076, %v1881
        %2088 = vst.msk [vmem:[#allocation2 + $0x58] sm:$0xff] %vm2076, %v1883
        %2089 = vst.msk [vmem:[#allocation2 + $0x60] sm:$0xff] %vm2076, %v1885
        %2090 = vst.msk [vmem:[#allocation2 + $0x68] sm:$0xff] %vm2076, %v1887
        %2091 = vst.msk [vmem:[#allocation2 + $0x70] sm:$0xff] %vm2076, %v1889
        %2092 = vst.msk [vmem:[#allocation2 + $0x78] sm:$0xff] %vm2076, %v1891
        %2093 = vst.msk [vmem:[#allocation2 + $0x80] sm:$0xff] %vm2076, %v1893
        %2094 = vst.msk [vmem:[#allocation2 + $0x88] sm:$0xff] %vm2076, %v1895
        %2095 = vst.msk [vmem:[#allocation2 + $0x90] sm:$0xff] %vm2076, %v1897
        %2096 = vst.msk [vmem:[#allocation2 + $0x98] sm:$0xff] %vm2076, %v1899
        %2097 = vst.msk [vmem:[#allocation2 + $0xa0] sm:$0xff] %vm2076, %v1901
        %2098 = vst.msk [vmem:[#allocation2 + $0xa8] sm:$0xff] %vm2076, %v1903
        %2099 = vst.msk [vmem:[#allocation2 + $0xb0] sm:$0xff] %vm2076, %v1905
        %2100 = vst.msk [vmem:[#allocation2 + $0xb8] sm:$0xff] %vm2076, %v1907
        %2101 = vst.msk [vmem:[#allocation2 + $0xc0] sm:$0xff] %vm2076, %v1909
        %2102 = vst.msk [vmem:[#allocation2 + $0xc8] sm:$0xff] %vm2076, %v1911
        %2103 = vst.msk [vmem:[#allocation2 + $0xd0] sm:$0xff] %vm2076, %v1913
        %2104 = vst.msk [vmem:[#allocation2 + $0xd8] sm:$0xff] %vm2076, %v1915
        %2105 = vst.msk [vmem:[#allocation2 + $0xe0] sm:$0xff] %vm2076, %v1917
        %2106 = vst.msk [vmem:[#allocation2 + $0xe8] sm:$0xff] %vm2076, %v1919
        %2107 = vst.msk [vmem:[#allocation2 + $0xf0] sm:$0xff] %vm2076, %v1921
        %2108 = vst.msk [vmem:[#allocation2 + $0xf8] sm:$0xff] %vm2076, %v1923
        %2109 = vst.msk [vmem:[#allocation2 + $0x100] sm:$0xff] %vm2076, %v1925
        %2110 = vst.msk [vmem:[#allocation2 + $0x108] sm:$0xff] %vm2076, %v1927
        %2111 = vst.msk [vmem:[#allocation2 + $0x110] sm:$0xff] %vm2076, %v1929
        %2112 = vst.msk [vmem:[#allocation2 + $0x118] sm:$0xff] %vm2076, %v1931
        %2113 = vst.msk [vmem:[#allocation2 + $0x120] sm:$0xff] %vm2076, %v1933
        %2114 = vst.msk [vmem:[#allocation2 + $0x128] sm:$0xff] %vm2076, %v1935
        %2115 = vst.msk [vmem:[#allocation2 + $0x130] sm:$0xff] %vm2076, %v1937
        %2116 = vst.msk [vmem:[#allocation2 + $0x138] sm:$0xff] %vm2076, %v1939
        %2117 = vst.msk [vmem:[#allocation2 + $0x140] sm:$0xff] %vm2076, %v1941
        %2118 = vst.msk [vmem:[#allocation2 + $0x148] sm:$0xff] %vm2076, %v1943
        %2119 = vst.msk [vmem:[#allocation2 + $0x150] sm:$0xff] %vm2076, %v1945
        %2120 = vst.msk [vmem:[#allocation2 + $0x158] sm:$0xff] %vm2076, %v1947
        %2121 = vst.msk [vmem:[#allocation2 + $0x160] sm:$0xff] %vm2076, %v1949
        %2122 = vst.msk [vmem:[#allocation2 + $0x168] sm:$0xff] %vm2076, %v1951
        %2123 = vst.msk [vmem:[#allocation2 + $0x170] sm:$0xff] %vm2076, %v1953
        %2124 = vst.msk [vmem:[#allocation2 + $0x178] sm:$0xff] %vm2076, %v1955
        %2125 = vst.msk [vmem:[#allocation2 + $0x180] sm:$0xff] %vm2076, %v1957
        %2126 = vst.msk [vmem:[#allocation2 + $0x188] sm:$0xff] %vm2076, %v1959
        %2127 = vst.msk [vmem:[#allocation2 + $0x190] sm:$0xff] %vm2076, %v1961
        %2128 = vst.msk [vmem:[#allocation2 + $0x198] sm:$0xff] %vm2076, %v1963
        %2129 = vst.msk [vmem:[#allocation2 + $0x1a0] sm:$0xff] %vm2076, %v1965
        %2130 = vst.msk [vmem:[#allocation2 + $0x1a8] sm:$0xff] %vm2076, %v1967
        %2131 = vst.msk [vmem:[#allocation2 + $0x1b0] sm:$0xff] %vm2076, %v1969
        %2132 = vst.msk [vmem:[#allocation2 + $0x1b8] sm:$0xff] %vm2076, %v1971
        %2133 = vst.msk [vmem:[#allocation2 + $0x1c0] sm:$0xff] %vm2076, %v1973
        %2134 = vst.msk [vmem:[#allocation2 + $0x1c8] sm:$0xff] %vm2076, %v1975
        %2135 = vst.msk [vmem:[#allocation2 + $0x1d0] sm:$0xff] %vm2076, %v1977
        %2136 = vst.msk [vmem:[#allocation2 + $0x1d8] sm:$0xff] %vm2076, %v1979
        %2137 = vst.msk [vmem:[#allocation2 + $0x1e0] sm:$0xff] %vm2076, %v1981
        %2138 = vst.msk [vmem:[#allocation2 + $0x1e8] sm:$0xff] %vm2076, %v1983
        %2139 = vst.msk [vmem:[#allocation2 + $0x1f0] sm:$0xff] %vm2076, %v1985
        %2140 = vst.msk [vmem:[#allocation2 + $0x1f8] sm:$0xff] %vm2076, %v1987
        %2141 = vst.msk [vmem:[#allocation2 + $0x200] sm:$0xff] %vm2076, %v1989
        %2142 = vst.msk [vmem:[#allocation2 + $0x208] sm:$0xff] %vm2076, %v1991
        %2143 = vst.msk [vmem:[#allocation2 + $0x210] sm:$0xff] %vm2076, %v1993
        %2144 = vst.msk [vmem:[#allocation2 + $0x218] sm:$0xff] %vm2076, %v1995
        %2145 = vst.msk [vmem:[#allocation2 + $0x220] sm:$0xff] %vm2076, %v1997
        %2146 = vst.msk [vmem:[#allocation2 + $0x228] sm:$0xff] %vm2076, %v1999
        %2147 = vst.msk [vmem:[#allocation2 + $0x230] sm:$0xff] %vm2076, %v2001
        %vm2148 = vcmask 28696
        %2149 = vst.msk [vmem:[#allocation2 + $0x238] sm:$0x1f] %vm2148, %v2003
        %v2150 = vld [vmem:[%s599 + $0x4] sm:$0xff]
        %v2151 = vld [vmem:[%s599 + $0xc] sm:$0xff]
        %v2152 = vld [vmem:[%s599 + $0x14] sm:$0xff]
        %v2153 = vld [vmem:[%s599 + $0x1c] sm:$0xff]
        %v2154 = vld [vmem:[%s599 + $0x24] sm:$0xff]
        %v2155 = vld [vmem:[%s599 + $0x2c] sm:$0xff]
        %v2156 = vld [vmem:[%s599 + $0x34] sm:$0xff]
        %v2157 = vld [vmem:[%s599 + $0x3c] sm:$0xff]
        %v2158 = vld [vmem:[%s599 + $0x44] sm:$0xff]
        %v2159 = vld [vmem:[%s599 + $0x4c] sm:$0xff]
        %v2160 = vld [vmem:[%s599 + $0x54] sm:$0xff]
        %v2161 = vld [vmem:[%s599 + $0x5c] sm:$0xff]
        %v2162 = vld [vmem:[%s599 + $0x64] sm:$0xff]
        %v2163 = vld [vmem:[%s599 + $0x6c] sm:$0xff]
        %v2164 = vld [vmem:[%s599 + $0x74] sm:$0xff]
        %v2165 = vld [vmem:[%s599 + $0x7c] sm:$0xff]
        %v2166 = vld [vmem:[%s599 + $0x84] sm:$0xff]
        %v2167 = vld [vmem:[%s599 + $0x8c] sm:$0xff]
        %v2168 = vld [vmem:[%s599 + $0x94] sm:$0xff]
        %v2169 = vld [vmem:[%s599 + $0x9c] sm:$0xff]
        %v2170 = vld [vmem:[%s599 + $0xa4] sm:$0xff]
        %v2171 = vld [vmem:[%s599 + $0xac] sm:$0xff]
        %v2172 = vld [vmem:[%s599 + $0xb4] sm:$0xff]
        %v2173 = vld [vmem:[%s599 + $0xbc] sm:$0xff]
        %v2174 = vld [vmem:[%s599 + $0xc4] sm:$0xff]
        %v2175 = vld [vmem:[%s599 + $0xcc] sm:$0xff]
        %v2176 = vld [vmem:[%s599 + $0xd4] sm:$0xff]
        %v2177 = vld [vmem:[%s599 + $0xdc] sm:$0xff]
        %v2178 = vld [vmem:[%s599 + $0xe4] sm:$0xff]
        %v2179 = vld [vmem:[%s599 + $0xec] sm:$0xff]
        %v2180 = vld [vmem:[%s599 + $0xf4] sm:$0xff]
        %v2181 = vld [vmem:[%s599 + $0xfc] sm:$0xff]
        %v2182 = vld [vmem:[%s599 + $0x104] sm:$0xff]
        %v2183 = vld [vmem:[%s599 + $0x10c] sm:$0xff]
        %v2184 = vld [vmem:[%s599 + $0x114] sm:$0xff]
        %v2185 = vld [vmem:[%s599 + $0x11c] sm:$0xff]
        %v2186 = vld [vmem:[%s599 + $0x124] sm:$0xff]
        %v2187 = vld [vmem:[%s599 + $0x12c] sm:$0xff]
        %v2188 = vld [vmem:[%s599 + $0x134] sm:$0xff]
        %v2189 = vld [vmem:[%s599 + $0x13c] sm:$0xff]
        %v2190 = vld [vmem:[%s599 + $0x144] sm:$0xff]
        %v2191 = vld [vmem:[%s599 + $0x14c] sm:$0xff]
        %v2192 = vld [vmem:[%s599 + $0x154] sm:$0xff]
        %v2193 = vld [vmem:[%s599 + $0x15c] sm:$0xff]
        %v2194 = vld [vmem:[%s599 + $0x164] sm:$0xff]
        %v2195 = vld [vmem:[%s599 + $0x16c] sm:$0xff]
        %v2196 = vld [vmem:[%s599 + $0x174] sm:$0xff]
        %v2197 = vld [vmem:[%s599 + $0x17c] sm:$0xff]
        %v2198 = vld [vmem:[%s599 + $0x184] sm:$0xff]
        %v2199 = vld [vmem:[%s599 + $0x18c] sm:$0xff]
        %v2200 = vld [vmem:[%s599 + $0x194] sm:$0xff]
        %v2201 = vld [vmem:[%s599 + $0x19c] sm:$0xff]
        %v2202 = vld [vmem:[%s599 + $0x1a4] sm:$0xff]
        %v2203 = vld [vmem:[%s599 + $0x1ac] sm:$0xff]
        %v2204 = vld [vmem:[%s599 + $0x1b4] sm:$0xff]
        %v2205 = vld [vmem:[%s599 + $0x1bc] sm:$0xff]
        %v2206 = vld [vmem:[%s599 + $0x1c4] sm:$0xff]
        %v2207 = vld [vmem:[%s599 + $0x1cc] sm:$0xff]
        %v2208 = vld [vmem:[%s599 + $0x1d4] sm:$0xff]
        %v2209 = vld [vmem:[%s599 + $0x1dc] sm:$0xff]
        %v2210 = vld [vmem:[%s599 + $0x1e4] sm:$0xff]
        %v2211 = vld [vmem:[%s599 + $0x1ec] sm:$0xff]
        %v2212 = vld [vmem:[%s599 + $0x1f4] sm:$0xff]
        %v2213 = vld [vmem:[%s599 + $0x1fc] sm:$0xff]
        %v2214 = vld [vmem:[%s599 + $0x204] sm:$0xff]
        %v2215 = vld [vmem:[%s599 + $0x20c] sm:$0xff]
        %v2216 = vld [vmem:[%s599 + $0x214] sm:$0xff]
        %v2217 = vld [vmem:[%s599 + $0x21c] sm:$0xff]
        %v2218 = vld [vmem:[%s599 + $0x224] sm:$0xff]
        %v2219 = vld [vmem:[%s599 + $0x22c] sm:$0xff]
        %v2220 = vld [vmem:[%s599 + $0x234] sm:$0xff]
        %v2221 = vld [vmem:[%s599 + $0x23c] sm:$0xf]
        %2294 = vrot.lane.b32.xlu0 %v2150, 4
        %v2295 = vpop.permute.xlu0 %2294
        %2296 = vrot.lane.b32.xlu0 %v2151, 4
        %v2297 = vpop.permute.xlu0 %2296
        %2298 = vrot.lane.b32.xlu0 %v2152, 4
        %v2299 = vpop.permute.xlu0 %2298
        %2300 = vrot.lane.b32.xlu0 %v2153, 4
        %v2301 = vpop.permute.xlu0 %2300
        %2302 = vrot.lane.b32.xlu0 %v2154, 4
        %v2303 = vpop.permute.xlu0 %2302
        %2304 = vrot.lane.b32.xlu0 %v2155, 4
        %v2305 = vpop.permute.xlu0 %2304
        %2306 = vrot.lane.b32.xlu0 %v2156, 4
        %v2307 = vpop.permute.xlu0 %2306
        %2308 = vrot.lane.b32.xlu0 %v2157, 4
        %v2309 = vpop.permute.xlu0 %2308
        %2310 = vrot.lane.b32.xlu0 %v2158, 4
        %v2311 = vpop.permute.xlu0 %2310
        %2312 = vrot.lane.b32.xlu0 %v2159, 4
        %v2313 = vpop.permute.xlu0 %2312
        %2314 = vrot.lane.b32.xlu0 %v2160, 4
        %v2315 = vpop.permute.xlu0 %2314
        %2316 = vrot.lane.b32.xlu0 %v2161, 4
        %v2317 = vpop.permute.xlu0 %2316
        %2318 = vrot.lane.b32.xlu0 %v2162, 4
        %v2319 = vpop.permute.xlu0 %2318
        %2320 = vrot.lane.b32.xlu0 %v2163, 4
        %v2321 = vpop.permute.xlu0 %2320
        %2322 = vrot.lane.b32.xlu0 %v2164, 4
        %v2323 = vpop.permute.xlu0 %2322
        %2324 = vrot.lane.b32.xlu0 %v2165, 4
        %v2325 = vpop.permute.xlu0 %2324
        %2326 = vrot.lane.b32.xlu0 %v2166, 4
        %v2327 = vpop.permute.xlu0 %2326
        %2328 = vrot.lane.b32.xlu0 %v2167, 4
        %v2329 = vpop.permute.xlu0 %2328
        %2330 = vrot.lane.b32.xlu0 %v2168, 4
        %v2331 = vpop.permute.xlu0 %2330
        %2332 = vrot.lane.b32.xlu0 %v2169, 4
        %v2333 = vpop.permute.xlu0 %2332
        %2334 = vrot.lane.b32.xlu0 %v2170, 4
        %v2335 = vpop.permute.xlu0 %2334
        %2336 = vrot.lane.b32.xlu0 %v2171, 4
        %v2337 = vpop.permute.xlu0 %2336
        %2338 = vrot.lane.b32.xlu0 %v2172, 4
        %v2339 = vpop.permute.xlu0 %2338
        %2340 = vrot.lane.b32.xlu0 %v2173, 4
        %v2341 = vpop.permute.xlu0 %2340
        %2342 = vrot.lane.b32.xlu0 %v2174, 4
        %v2343 = vpop.permute.xlu0 %2342
        %2344 = vrot.lane.b32.xlu0 %v2175, 4
        %v2345 = vpop.permute.xlu0 %2344
        %2346 = vrot.lane.b32.xlu0 %v2176, 4
        %v2347 = vpop.permute.xlu0 %2346
        %2348 = vrot.lane.b32.xlu0 %v2177, 4
        %v2349 = vpop.permute.xlu0 %2348
        %2350 = vrot.lane.b32.xlu0 %v2178, 4
        %v2351 = vpop.permute.xlu0 %2350
        %2352 = vrot.lane.b32.xlu0 %v2179, 4
        %v2353 = vpop.permute.xlu0 %2352
        %2354 = vrot.lane.b32.xlu0 %v2180, 4
        %v2355 = vpop.permute.xlu0 %2354
        %2356 = vrot.lane.b32.xlu0 %v2181, 4
        %v2357 = vpop.permute.xlu0 %2356
        %2358 = vrot.lane.b32.xlu0 %v2182, 4
        %v2359 = vpop.permute.xlu0 %2358
        %2360 = vrot.lane.b32.xlu0 %v2183, 4
        %v2361 = vpop.permute.xlu0 %2360
        %2362 = vrot.lane.b32.xlu0 %v2184, 4
        %v2363 = vpop.permute.xlu0 %2362
        %2364 = vrot.lane.b32.xlu0 %v2185, 4
        %v2365 = vpop.permute.xlu0 %2364
        %2366 = vrot.lane.b32.xlu0 %v2186, 4
        %v2367 = vpop.permute.xlu0 %2366
        %2368 = vrot.lane.b32.xlu0 %v2187, 4
        %v2369 = vpop.permute.xlu0 %2368
        %2370 = vrot.lane.b32.xlu0 %v2188, 4
        %v2371 = vpop.permute.xlu0 %2370
        %2372 = vrot.lane.b32.xlu0 %v2189, 4
        %v2373 = vpop.permute.xlu0 %2372
        %2374 = vrot.lane.b32.xlu0 %v2190, 4
        %v2375 = vpop.permute.xlu0 %2374
        %2376 = vrot.lane.b32.xlu0 %v2191, 4
        %v2377 = vpop.permute.xlu0 %2376
        %2378 = vrot.lane.b32.xlu0 %v2192, 4
        %v2379 = vpop.permute.xlu0 %2378
        %2380 = vrot.lane.b32.xlu0 %v2193, 4
        %v2381 = vpop.permute.xlu0 %2380
        %2382 = vrot.lane.b32.xlu0 %v2194, 4
        %v2383 = vpop.permute.xlu0 %2382
        %2384 = vrot.lane.b32.xlu0 %v2195, 4
        %v2385 = vpop.permute.xlu0 %2384
        %2386 = vrot.lane.b32.xlu0 %v2196, 4
        %v2387 = vpop.permute.xlu0 %2386
        %2388 = vrot.lane.b32.xlu0 %v2197, 4
        %v2389 = vpop.permute.xlu0 %2388
        %2390 = vrot.lane.b32.xlu0 %v2198, 4
        %v2391 = vpop.permute.xlu0 %2390
        %2392 = vrot.lane.b32.xlu0 %v2199, 4
        %v2393 = vpop.permute.xlu0 %2392
        %2394 = vrot.lane.b32.xlu0 %v2200, 4
        %v2395 = vpop.permute.xlu0 %2394
        %2396 = vrot.lane.b32.xlu0 %v2201, 4
        %v2397 = vpop.permute.xlu0 %2396
        %2398 = vrot.lane.b32.xlu0 %v2202, 4
        %v2399 = vpop.permute.xlu0 %2398
        %2400 = vrot.lane.b32.xlu0 %v2203, 4
        %v2401 = vpop.permute.xlu0 %2400
        %2402 = vrot.lane.b32.xlu0 %v2204, 4
        %v2403 = vpop.permute.xlu0 %2402
        %2404 = vrot.lane.b32.xlu0 %v2205, 4
        %v2405 = vpop.permute.xlu0 %2404
        %2406 = vrot.lane.b32.xlu0 %v2206, 4
        %v2407 = vpop.permute.xlu0 %2406
        %2408 = vrot.lane.b32.xlu0 %v2207, 4
        %v2409 = vpop.permute.xlu0 %2408
        %2410 = vrot.lane.b32.xlu0 %v2208, 4
        %v2411 = vpop.permute.xlu0 %2410
        %2412 = vrot.lane.b32.xlu0 %v2209, 4
        %v2413 = vpop.permute.xlu0 %2412
        %2414 = vrot.lane.b32.xlu0 %v2210, 4
        %v2415 = vpop.permute.xlu0 %2414
        %2416 = vrot.lane.b32.xlu0 %v2211, 4
        %v2417 = vpop.permute.xlu0 %2416
        %2418 = vrot.lane.b32.xlu0 %v2212, 4
        %v2419 = vpop.permute.xlu0 %2418
        %2420 = vrot.lane.b32.xlu0 %v2213, 4
        %v2421 = vpop.permute.xlu0 %2420
        %2422 = vrot.lane.b32.xlu0 %v2214, 4
        %v2423 = vpop.permute.xlu0 %2422
        %2424 = vrot.lane.b32.xlu0 %v2215, 4
        %v2425 = vpop.permute.xlu0 %2424
        %2426 = vrot.lane.b32.xlu0 %v2216, 4
        %v2427 = vpop.permute.xlu0 %2426
        %2428 = vrot.lane.b32.xlu0 %v2217, 4
        %v2429 = vpop.permute.xlu0 %2428
        %2430 = vrot.lane.b32.xlu0 %v2218, 4
        %v2431 = vpop.permute.xlu0 %2430
        %2432 = vrot.lane.b32.xlu0 %v2219, 4
        %v2433 = vpop.permute.xlu0 %2432
        %2434 = vrot.lane.b32.xlu0 %v2220, 4
        %v2435 = vpop.permute.xlu0 %2434
        %2436 = vrot.lane.b32.xlu0 %v2221, 4
        %v2437 = vpop.permute.xlu0 %2436
        %vm2510 = vcmask 39968
        %2511 = vst.msk [vmem:[#allocation2] sm:$0xff] %vm2510, %v2295
        %2512 = vst.msk [vmem:[#allocation2 + $0x8] sm:$0xff] %vm2510, %v2297
        %2513 = vst.msk [vmem:[#allocation2 + $0x10] sm:$0xff] %vm2510, %v2299
        %2514 = vst.msk [vmem:[#allocation2 + $0x18] sm:$0xff] %vm2510, %v2301
        %2515 = vst.msk [vmem:[#allocation2 + $0x20] sm:$0xff] %vm2510, %v2303
        %2516 = vst.msk [vmem:[#allocation2 + $0x28] sm:$0xff] %vm2510, %v2305
        %2517 = vst.msk [vmem:[#allocation2 + $0x30] sm:$0xff] %vm2510, %v2307
        %2518 = vst.msk [vmem:[#allocation2 + $0x38] sm:$0xff] %vm2510, %v2309
        %2519 = vst.msk [vmem:[#allocation2 + $0x40] sm:$0xff] %vm2510, %v2311
        %2520 = vst.msk [vmem:[#allocation2 + $0x48] sm:$0xff] %vm2510, %v2313
        %2521 = vst.msk [vmem:[#allocation2 + $0x50] sm:$0xff] %vm2510, %v2315
        %2522 = vst.msk [vmem:[#allocation2 + $0x58] sm:$0xff] %vm2510, %v2317
        %2523 = vst.msk [vmem:[#allocation2 + $0x60] sm:$0xff] %vm2510, %v2319
        %2524 = vst.msk [vmem:[#allocation2 + $0x68] sm:$0xff] %vm2510, %v2321
        %2525 = vst.msk [vmem:[#allocation2 + $0x70] sm:$0xff] %vm2510, %v2323
        %2526 = vst.msk [vmem:[#allocation2 + $0x78] sm:$0xff] %vm2510, %v2325
        %2527 = vst.msk [vmem:[#allocation2 + $0x80] sm:$0xff] %vm2510, %v2327
        %2528 = vst.msk [vmem:[#allocation2 + $0x88] sm:$0xff] %vm2510, %v2329
        %2529 = vst.msk [vmem:[#allocation2 + $0x90] sm:$0xff] %vm2510, %v2331
        %2530 = vst.msk [vmem:[#allocation2 + $0x98] sm:$0xff] %vm2510, %v2333
        %2531 = vst.msk [vmem:[#allocation2 + $0xa0] sm:$0xff] %vm2510, %v2335
        %2532 = vst.msk [vmem:[#allocation2 + $0xa8] sm:$0xff] %vm2510, %v2337
        %2533 = vst.msk [vmem:[#allocation2 + $0xb0] sm:$0xff] %vm2510, %v2339
        %2534 = vst.msk [vmem:[#allocation2 + $0xb8] sm:$0xff] %vm2510, %v2341
        %2535 = vst.msk [vmem:[#allocation2 + $0xc0] sm:$0xff] %vm2510, %v2343
        %2536 = vst.msk [vmem:[#allocation2 + $0xc8] sm:$0xff] %vm2510, %v2345
        %2537 = vst.msk [vmem:[#allocation2 + $0xd0] sm:$0xff] %vm2510, %v2347
        %2538 = vst.msk [vmem:[#allocation2 + $0xd8] sm:$0xff] %vm2510, %v2349
        %2539 = vst.msk [vmem:[#allocation2 + $0xe0] sm:$0xff] %vm2510, %v2351
        %2540 = vst.msk [vmem:[#allocation2 + $0xe8] sm:$0xff] %vm2510, %v2353
        %2541 = vst.msk [vmem:[#allocation2 + $0xf0] sm:$0xff] %vm2510, %v2355
        %2542 = vst.msk [vmem:[#allocation2 + $0xf8] sm:$0xff] %vm2510, %v2357
        %2543 = vst.msk [vmem:[#allocation2 + $0x100] sm:$0xff] %vm2510, %v2359
        %2544 = vst.msk [vmem:[#allocation2 + $0x108] sm:$0xff] %vm2510, %v2361
        %2545 = vst.msk [vmem:[#allocation2 + $0x110] sm:$0xff] %vm2510, %v2363
        %2546 = vst.msk [vmem:[#allocation2 + $0x118] sm:$0xff] %vm2510, %v2365
        %2547 = vst.msk [vmem:[#allocation2 + $0x120] sm:$0xff] %vm2510, %v2367
        %2548 = vst.msk [vmem:[#allocation2 + $0x128] sm:$0xff] %vm2510, %v2369
        %2549 = vst.msk [vmem:[#allocation2 + $0x130] sm:$0xff] %vm2510, %v2371
        %2550 = vst.msk [vmem:[#allocation2 + $0x138] sm:$0xff] %vm2510, %v2373
        %2551 = vst.msk [vmem:[#allocation2 + $0x140] sm:$0xff] %vm2510, %v2375
        %2552 = vst.msk [vmem:[#allocation2 + $0x148] sm:$0xff] %vm2510, %v2377
        %2553 = vst.msk [vmem:[#allocation2 + $0x150] sm:$0xff] %vm2510, %v2379
        %2554 = vst.msk [vmem:[#allocation2 + $0x158] sm:$0xff] %vm2510, %v2381
        %2555 = vst.msk [vmem:[#allocation2 + $0x160] sm:$0xff] %vm2510, %v2383
        %2556 = vst.msk [vmem:[#allocation2 + $0x168] sm:$0xff] %vm2510, %v2385
        %2557 = vst.msk [vmem:[#allocation2 + $0x170] sm:$0xff] %vm2510, %v2387
        %2558 = vst.msk [vmem:[#allocation2 + $0x178] sm:$0xff] %vm2510, %v2389
        %2559 = vst.msk [vmem:[#allocation2 + $0x180] sm:$0xff] %vm2510, %v2391
        %2560 = vst.msk [vmem:[#allocation2 + $0x188] sm:$0xff] %vm2510, %v2393
        %2561 = vst.msk [vmem:[#allocation2 + $0x190] sm:$0xff] %vm2510, %v2395
        %2562 = vst.msk [vmem:[#allocation2 + $0x198] sm:$0xff] %vm2510, %v2397
        %2563 = vst.msk [vmem:[#allocation2 + $0x1a0] sm:$0xff] %vm2510, %v2399
        %2564 = vst.msk [vmem:[#allocation2 + $0x1a8] sm:$0xff] %vm2510, %v2401
        %2565 = vst.msk [vmem:[#allocation2 + $0x1b0] sm:$0xff] %vm2510, %v2403
        %2566 = vst.msk [vmem:[#allocation2 + $0x1b8] sm:$0xff] %vm2510, %v2405
        %2567 = vst.msk [vmem:[#allocation2 + $0x1c0] sm:$0xff] %vm2510, %v2407
        %2568 = vst.msk [vmem:[#allocation2 + $0x1c8] sm:$0xff] %vm2510, %v2409
        %2569 = vst.msk [vmem:[#allocation2 + $0x1d0] sm:$0xff] %vm2510, %v2411
        %2570 = vst.msk [vmem:[#allocation2 + $0x1d8] sm:$0xff] %vm2510, %v2413
        %2571 = vst.msk [vmem:[#allocation2 + $0x1e0] sm:$0xff] %vm2510, %v2415
        %2572 = vst.msk [vmem:[#allocation2 + $0x1e8] sm:$0xff] %vm2510, %v2417
        %2573 = vst.msk [vmem:[#allocation2 + $0x1f0] sm:$0xff] %vm2510, %v2419
        %2574 = vst.msk [vmem:[#allocation2 + $0x1f8] sm:$0xff] %vm2510, %v2421
        %2575 = vst.msk [vmem:[#allocation2 + $0x200] sm:$0xff] %vm2510, %v2423
        %2576 = vst.msk [vmem:[#allocation2 + $0x208] sm:$0xff] %vm2510, %v2425
        %2577 = vst.msk [vmem:[#allocation2 + $0x210] sm:$0xff] %vm2510, %v2427
        %2578 = vst.msk [vmem:[#allocation2 + $0x218] sm:$0xff] %vm2510, %v2429
        %2579 = vst.msk [vmem:[#allocation2 + $0x220] sm:$0xff] %vm2510, %v2431
        %2580 = vst.msk [vmem:[#allocation2 + $0x228] sm:$0xff] %vm2510, %v2433
        %2581 = vst.msk [vmem:[#allocation2 + $0x230] sm:$0xff] %vm2510, %v2435
        %vm2582 = vcmask 35872
        %2583 = vst.msk [vmem:[#allocation2 + $0x238] sm:$0xf] %vm2582, %v2437
        %v2584 = vld [vmem:[%s599 + $0x5] sm:$0xff]
        %v2585 = vld [vmem:[%s599 + $0xd] sm:$0xff]
        %v2586 = vld [vmem:[%s599 + $0x15] sm:$0xff]
        %v2587 = vld [vmem:[%s599 + $0x1d] sm:$0xff]
        %v2588 = vld [vmem:[%s599 + $0x25] sm:$0xff]
        %v2589 = vld [vmem:[%s599 + $0x2d] sm:$0xff]
        %v2590 = vld [vmem:[%s599 + $0x35] sm:$0xff]
        %v2591 = vld [vmem:[%s599 + $0x3d] sm:$0xff]
        %v2592 = vld [vmem:[%s599 + $0x45] sm:$0xff]
        %v2593 = vld [vmem:[%s599 + $0x4d] sm:$0xff]
        %v2594 = vld [vmem:[%s599 + $0x55] sm:$0xff]
        %v2595 = vld [vmem:[%s599 + $0x5d] sm:$0xff]
        %v2596 = vld [vmem:[%s599 + $0x65] sm:$0xff]
        %v2597 = vld [vmem:[%s599 + $0x6d] sm:$0xff]
        %v2598 = vld [vmem:[%s599 + $0x75] sm:$0xff]
        %v2599 = vld [vmem:[%s599 + $0x7d] sm:$0xff]
        %v2600 = vld [vmem:[%s599 + $0x85] sm:$0xff]
        %v2601 = vld [vmem:[%s599 + $0x8d] sm:$0xff]
        %v2602 = vld [vmem:[%s599 + $0x95] sm:$0xff]
        %v2603 = vld [vmem:[%s599 + $0x9d] sm:$0xff]
        %v2604 = vld [vmem:[%s599 + $0xa5] sm:$0xff]
        %v2605 = vld [vmem:[%s599 + $0xad] sm:$0xff]
        %v2606 = vld [vmem:[%s599 + $0xb5] sm:$0xff]
        %v2607 = vld [vmem:[%s599 + $0xbd] sm:$0xff]
        %v2608 = vld [vmem:[%s599 + $0xc5] sm:$0xff]
        %v2609 = vld [vmem:[%s599 + $0xcd] sm:$0xff]
        %v2610 = vld [vmem:[%s599 + $0xd5] sm:$0xff]
        %v2611 = vld [vmem:[%s599 + $0xdd] sm:$0xff]
        %v2612 = vld [vmem:[%s599 + $0xe5] sm:$0xff]
        %v2613 = vld [vmem:[%s599 + $0xed] sm:$0xff]
        %v2614 = vld [vmem:[%s599 + $0xf5] sm:$0xff]
        %v2615 = vld [vmem:[%s599 + $0xfd] sm:$0xff]
        %v2616 = vld [vmem:[%s599 + $0x105] sm:$0xff]
        %v2617 = vld [vmem:[%s599 + $0x10d] sm:$0xff]
        %v2618 = vld [vmem:[%s599 + $0x115] sm:$0xff]
        %v2619 = vld [vmem:[%s599 + $0x11d] sm:$0xff]
        %v2620 = vld [vmem:[%s599 + $0x125] sm:$0xff]
        %v2621 = vld [vmem:[%s599 + $0x12d] sm:$0xff]
        %v2622 = vld [vmem:[%s599 + $0x135] sm:$0xff]
        %v2623 = vld [vmem:[%s599 + $0x13d] sm:$0xff]
        %v2624 = vld [vmem:[%s599 + $0x145] sm:$0xff]
        %v2625 = vld [vmem:[%s599 + $0x14d] sm:$0xff]
        %v2626 = vld [vmem:[%s599 + $0x155] sm:$0xff]
        %v2627 = vld [vmem:[%s599 + $0x15d] sm:$0xff]
        %v2628 = vld [vmem:[%s599 + $0x165] sm:$0xff]
        %v2629 = vld [vmem:[%s599 + $0x16d] sm:$0xff]
        %v2630 = vld [vmem:[%s599 + $0x175] sm:$0xff]
        %v2631 = vld [vmem:[%s599 + $0x17d] sm:$0xff]
        %v2632 = vld [vmem:[%s599 + $0x185] sm:$0xff]
        %v2633 = vld [vmem:[%s599 + $0x18d] sm:$0xff]
        %v2634 = vld [vmem:[%s599 + $0x195] sm:$0xff]
        %v2635 = vld [vmem:[%s599 + $0x19d] sm:$0xff]
        %v2636 = vld [vmem:[%s599 + $0x1a5] sm:$0xff]
        %v2637 = vld [vmem:[%s599 + $0x1ad] sm:$0xff]
        %v2638 = vld [vmem:[%s599 + $0x1b5] sm:$0xff]
        %v2639 = vld [vmem:[%s599 + $0x1bd] sm:$0xff]
        %v2640 = vld [vmem:[%s599 + $0x1c5] sm:$0xff]
        %v2641 = vld [vmem:[%s599 + $0x1cd] sm:$0xff]
        %v2642 = vld [vmem:[%s599 + $0x1d5] sm:$0xff]
        %v2643 = vld [vmem:[%s599 + $0x1dd] sm:$0xff]
        %v2644 = vld [vmem:[%s599 + $0x1e5] sm:$0xff]
        %v2645 = vld [vmem:[%s599 + $0x1ed] sm:$0xff]
        %v2646 = vld [vmem:[%s599 + $0x1f5] sm:$0xff]
        %v2647 = vld [vmem:[%s599 + $0x1fd] sm:$0xff]
        %v2648 = vld [vmem:[%s599 + $0x205] sm:$0xff]
        %v2649 = vld [vmem:[%s599 + $0x20d] sm:$0xff]
        %v2650 = vld [vmem:[%s599 + $0x215] sm:$0xff]
        %v2651 = vld [vmem:[%s599 + $0x21d] sm:$0xff]
        %v2652 = vld [vmem:[%s599 + $0x225] sm:$0xff]
        %v2653 = vld [vmem:[%s599 + $0x22d] sm:$0xff]
        %v2654 = vld [vmem:[%s599 + $0x235] sm:$0xff]
        %v2655 = vld [vmem:[%s599 + $0x23d] sm:$0x7]
        %2728 = vrot.lane.b32.xlu0 %v2584, 5
        %v2729 = vpop.permute.xlu0 %2728
        %2730 = vrot.lane.b32.xlu0 %v2585, 5
        %v2731 = vpop.permute.xlu0 %2730
        %2732 = vrot.lane.b32.xlu0 %v2586, 5
        %v2733 = vpop.permute.xlu0 %2732
        %2734 = vrot.lane.b32.xlu0 %v2587, 5
        %v2735 = vpop.permute.xlu0 %2734
        %2736 = vrot.lane.b32.xlu0 %v2588, 5
        %v2737 = vpop.permute.xlu0 %2736
        %2738 = vrot.lane.b32.xlu0 %v2589, 5
        %v2739 = vpop.permute.xlu0 %2738
        %2740 = vrot.lane.b32.xlu0 %v2590, 5
        %v2741 = vpop.permute.xlu0 %2740
        %2742 = vrot.lane.b32.xlu0 %v2591, 5
        %v2743 = vpop.permute.xlu0 %2742
        %2744 = vrot.lane.b32.xlu0 %v2592, 5
        %v2745 = vpop.permute.xlu0 %2744
        %2746 = vrot.lane.b32.xlu0 %v2593, 5
        %v2747 = vpop.permute.xlu0 %2746
        %2748 = vrot.lane.b32.xlu0 %v2594, 5
        %v2749 = vpop.permute.xlu0 %2748
        %2750 = vrot.lane.b32.xlu0 %v2595, 5
        %v2751 = vpop.permute.xlu0 %2750
        %2752 = vrot.lane.b32.xlu0 %v2596, 5
        %v2753 = vpop.permute.xlu0 %2752
        %2754 = vrot.lane.b32.xlu0 %v2597, 5
        %v2755 = vpop.permute.xlu0 %2754
        %2756 = vrot.lane.b32.xlu0 %v2598, 5
        %v2757 = vpop.permute.xlu0 %2756
        %2758 = vrot.lane.b32.xlu0 %v2599, 5
        %v2759 = vpop.permute.xlu0 %2758
        %2760 = vrot.lane.b32.xlu0 %v2600, 5
        %v2761 = vpop.permute.xlu0 %2760
        %2762 = vrot.lane.b32.xlu0 %v2601, 5
        %v2763 = vpop.permute.xlu0 %2762
        %2764 = vrot.lane.b32.xlu0 %v2602, 5
        %v2765 = vpop.permute.xlu0 %2764
        %2766 = vrot.lane.b32.xlu0 %v2603, 5
        %v2767 = vpop.permute.xlu0 %2766
        %2768 = vrot.lane.b32.xlu0 %v2604, 5
        %v2769 = vpop.permute.xlu0 %2768
        %2770 = vrot.lane.b32.xlu0 %v2605, 5
        %v2771 = vpop.permute.xlu0 %2770
        %2772 = vrot.lane.b32.xlu0 %v2606, 5
        %v2773 = vpop.permute.xlu0 %2772
        %2774 = vrot.lane.b32.xlu0 %v2607, 5
        %v2775 = vpop.permute.xlu0 %2774
        %2776 = vrot.lane.b32.xlu0 %v2608, 5
        %v2777 = vpop.permute.xlu0 %2776
        %2778 = vrot.lane.b32.xlu0 %v2609, 5
        %v2779 = vpop.permute.xlu0 %2778
        %2780 = vrot.lane.b32.xlu0 %v2610, 5
        %v2781 = vpop.permute.xlu0 %2780
        %2782 = vrot.lane.b32.xlu0 %v2611, 5
        %v2783 = vpop.permute.xlu0 %2782
        %2784 = vrot.lane.b32.xlu0 %v2612, 5
        %v2785 = vpop.permute.xlu0 %2784
        %2786 = vrot.lane.b32.xlu0 %v2613, 5
        %v2787 = vpop.permute.xlu0 %2786
        %2788 = vrot.lane.b32.xlu0 %v2614, 5
        %v2789 = vpop.permute.xlu0 %2788
        %2790 = vrot.lane.b32.xlu0 %v2615, 5
        %v2791 = vpop.permute.xlu0 %2790
        %2792 = vrot.lane.b32.xlu0 %v2616, 5
        %v2793 = vpop.permute.xlu0 %2792
        %2794 = vrot.lane.b32.xlu0 %v2617, 5
        %v2795 = vpop.permute.xlu0 %2794
        %2796 = vrot.lane.b32.xlu0 %v2618, 5
        %v2797 = vpop.permute.xlu0 %2796
        %2798 = vrot.lane.b32.xlu0 %v2619, 5
        %v2799 = vpop.permute.xlu0 %2798
        %2800 = vrot.lane.b32.xlu0 %v2620, 5
        %v2801 = vpop.permute.xlu0 %2800
        %2802 = vrot.lane.b32.xlu0 %v2621, 5
        %v2803 = vpop.permute.xlu0 %2802
        %2804 = vrot.lane.b32.xlu0 %v2622, 5
        %v2805 = vpop.permute.xlu0 %2804
        %2806 = vrot.lane.b32.xlu0 %v2623, 5
        %v2807 = vpop.permute.xlu0 %2806
        %2808 = vrot.lane.b32.xlu0 %v2624, 5
        %v2809 = vpop.permute.xlu0 %2808
        %2810 = vrot.lane.b32.xlu0 %v2625, 5
        %v2811 = vpop.permute.xlu0 %2810
        %2812 = vrot.lane.b32.xlu0 %v2626, 5
        %v2813 = vpop.permute.xlu0 %2812
        %2814 = vrot.lane.b32.xlu0 %v2627, 5
        %v2815 = vpop.permute.xlu0 %2814
        %2816 = vrot.lane.b32.xlu0 %v2628, 5
        %v2817 = vpop.permute.xlu0 %2816
        %2818 = vrot.lane.b32.xlu0 %v2629, 5
        %v2819 = vpop.permute.xlu0 %2818
        %2820 = vrot.lane.b32.xlu0 %v2630, 5
        %v2821 = vpop.permute.xlu0 %2820
        %2822 = vrot.lane.b32.xlu0 %v2631, 5
        %v2823 = vpop.permute.xlu0 %2822
        %2824 = vrot.lane.b32.xlu0 %v2632, 5
        %v2825 = vpop.permute.xlu0 %2824
        %2826 = vrot.lane.b32.xlu0 %v2633, 5
        %v2827 = vpop.permute.xlu0 %2826
        %2828 = vrot.lane.b32.xlu0 %v2634, 5
        %v2829 = vpop.permute.xlu0 %2828
        %2830 = vrot.lane.b32.xlu0 %v2635, 5
        %v2831 = vpop.permute.xlu0 %2830
        %2832 = vrot.lane.b32.xlu0 %v2636, 5
        %v2833 = vpop.permute.xlu0 %2832
        %2834 = vrot.lane.b32.xlu0 %v2637, 5
        %v2835 = vpop.permute.xlu0 %2834
        %2836 = vrot.lane.b32.xlu0 %v2638, 5
        %v2837 = vpop.permute.xlu0 %2836
        %2838 = vrot.lane.b32.xlu0 %v2639, 5
        %v2839 = vpop.permute.xlu0 %2838
        %2840 = vrot.lane.b32.xlu0 %v2640, 5
        %v2841 = vpop.permute.xlu0 %2840
        %2842 = vrot.lane.b32.xlu0 %v2641, 5
        %v2843 = vpop.permute.xlu0 %2842
        %2844 = vrot.lane.b32.xlu0 %v2642, 5
        %v2845 = vpop.permute.xlu0 %2844
        %2846 = vrot.lane.b32.xlu0 %v2643, 5
        %v2847 = vpop.permute.xlu0 %2846
        %2848 = vrot.lane.b32.xlu0 %v2644, 5
        %v2849 = vpop.permute.xlu0 %2848
        %2850 = vrot.lane.b32.xlu0 %v2645, 5
        %v2851 = vpop.permute.xlu0 %2850
        %2852 = vrot.lane.b32.xlu0 %v2646, 5
        %v2853 = vpop.permute.xlu0 %2852
        %2854 = vrot.lane.b32.xlu0 %v2647, 5
        %v2855 = vpop.permute.xlu0 %2854
        %2856 = vrot.lane.b32.xlu0 %v2648, 5
        %v2857 = vpop.permute.xlu0 %2856
        %2858 = vrot.lane.b32.xlu0 %v2649, 5
        %v2859 = vpop.permute.xlu0 %2858
        %2860 = vrot.lane.b32.xlu0 %v2650, 5
        %v2861 = vpop.permute.xlu0 %2860
        %2862 = vrot.lane.b32.xlu0 %v2651, 5
        %v2863 = vpop.permute.xlu0 %2862
        %2864 = vrot.lane.b32.xlu0 %v2652, 5
        %v2865 = vpop.permute.xlu0 %2864
        %2866 = vrot.lane.b32.xlu0 %v2653, 5
        %v2867 = vpop.permute.xlu0 %2866
        %2868 = vrot.lane.b32.xlu0 %v2654, 5
        %v2869 = vpop.permute.xlu0 %2868
        %2870 = vrot.lane.b32.xlu0 %v2655, 5
        %v2871 = vpop.permute.xlu0 %2870
        %vm2944 = vcmask 48168
        %2945 = vst.msk [vmem:[#allocation2] sm:$0xff] %vm2944, %v2729
        %2946 = vst.msk [vmem:[#allocation2 + $0x8] sm:$0xff] %vm2944, %v2731
        %2947 = vst.msk [vmem:[#allocation2 + $0x10] sm:$0xff] %vm2944, %v2733
        %2948 = vst.msk [vmem:[#allocation2 + $0x18] sm:$0xff] %vm2944, %v2735
        %2949 = vst.msk [vmem:[#allocation2 + $0x20] sm:$0xff] %vm2944, %v2737
        %2950 = vst.msk [vmem:[#allocation2 + $0x28] sm:$0xff] %vm2944, %v2739
        %2951 = vst.msk [vmem:[#allocation2 + $0x30] sm:$0xff] %vm2944, %v2741
        %2952 = vst.msk [vmem:[#allocation2 + $0x38] sm:$0xff] %vm2944, %v2743
        %2953 = vst.msk [vmem:[#allocation2 + $0x40] sm:$0xff] %vm2944, %v2745
        %2954 = vst.msk [vmem:[#allocation2 + $0x48] sm:$0xff] %vm2944, %v2747
        %2955 = vst.msk [vmem:[#allocation2 + $0x50] sm:$0xff] %vm2944, %v2749
        %2956 = vst.msk [vmem:[#allocation2 + $0x58] sm:$0xff] %vm2944, %v2751
        %2957 = vst.msk [vmem:[#allocation2 + $0x60] sm:$0xff] %vm2944, %v2753
        %2958 = vst.msk [vmem:[#allocation2 + $0x68] sm:$0xff] %vm2944, %v2755
        %2959 = vst.msk [vmem:[#allocation2 + $0x70] sm:$0xff] %vm2944, %v2757
        %2960 = vst.msk [vmem:[#allocation2 + $0x78] sm:$0xff] %vm2944, %v2759
        %2961 = vst.msk [vmem:[#allocation2 + $0x80] sm:$0xff] %vm2944, %v2761
        %2962 = vst.msk [vmem:[#allocation2 + $0x88] sm:$0xff] %vm2944, %v2763
        %2963 = vst.msk [vmem:[#allocation2 + $0x90] sm:$0xff] %vm2944, %v2765
        %2964 = vst.msk [vmem:[#allocation2 + $0x98] sm:$0xff] %vm2944, %v2767
        %2965 = vst.msk [vmem:[#allocation2 + $0xa0] sm:$0xff] %vm2944, %v2769
        %2966 = vst.msk [vmem:[#allocation2 + $0xa8] sm:$0xff] %vm2944, %v2771
        %2967 = vst.msk [vmem:[#allocation2 + $0xb0] sm:$0xff] %vm2944, %v2773
        %2968 = vst.msk [vmem:[#allocation2 + $0xb8] sm:$0xff] %vm2944, %v2775
        %2969 = vst.msk [vmem:[#allocation2 + $0xc0] sm:$0xff] %vm2944, %v2777
        %2970 = vst.msk [vmem:[#allocation2 + $0xc8] sm:$0xff] %vm2944, %v2779
        %2971 = vst.msk [vmem:[#allocation2 + $0xd0] sm:$0xff] %vm2944, %v2781
        %2972 = vst.msk [vmem:[#allocation2 + $0xd8] sm:$0xff] %vm2944, %v2783
        %2973 = vst.msk [vmem:[#allocation2 + $0xe0] sm:$0xff] %vm2944, %v2785
        %2974 = vst.msk [vmem:[#allocation2 + $0xe8] sm:$0xff] %vm2944, %v2787
        %2975 = vst.msk [vmem:[#allocation2 + $0xf0] sm:$0xff] %vm2944, %v2789
        %2976 = vst.msk [vmem:[#allocation2 + $0xf8] sm:$0xff] %vm2944, %v2791
        %2977 = vst.msk [vmem:[#allocation2 + $0x100] sm:$0xff] %vm2944, %v2793
        %2978 = vst.msk [vmem:[#allocation2 + $0x108] sm:$0xff] %vm2944, %v2795
        %2979 = vst.msk [vmem:[#allocation2 + $0x110] sm:$0xff] %vm2944, %v2797
        %2980 = vst.msk [vmem:[#allocation2 + $0x118] sm:$0xff] %vm2944, %v2799
        %2981 = vst.msk [vmem:[#allocation2 + $0x120] sm:$0xff] %vm2944, %v2801
        %2982 = vst.msk [vmem:[#allocation2 + $0x128] sm:$0xff] %vm2944, %v2803
        %2983 = vst.msk [vmem:[#allocation2 + $0x130] sm:$0xff] %vm2944, %v2805
        %2984 = vst.msk [vmem:[#allocation2 + $0x138] sm:$0xff] %vm2944, %v2807
        %2985 = vst.msk [vmem:[#allocation2 + $0x140] sm:$0xff] %vm2944, %v2809
        %2986 = vst.msk [vmem:[#allocation2 + $0x148] sm:$0xff] %vm2944, %v2811
        %2987 = vst.msk [vmem:[#allocation2 + $0x150] sm:$0xff] %vm2944, %v2813
        %2988 = vst.msk [vmem:[#allocation2 + $0x158] sm:$0xff] %vm2944, %v2815
        %2989 = vst.msk [vmem:[#allocation2 + $0x160] sm:$0xff] %vm2944, %v2817
        %2990 = vst.msk [vmem:[#allocation2 + $0x168] sm:$0xff] %vm2944, %v2819
        %2991 = vst.msk [vmem:[#allocation2 + $0x170] sm:$0xff] %vm2944, %v2821
        %2992 = vst.msk [vmem:[#allocation2 + $0x178] sm:$0xff] %vm2944, %v2823
        %2993 = vst.msk [vmem:[#allocation2 + $0x180] sm:$0xff] %vm2944, %v2825
        %2994 = vst.msk [vmem:[#allocation2 + $0x188] sm:$0xff] %vm2944, %v2827
        %2995 = vst.msk [vmem:[#allocation2 + $0x190] sm:$0xff] %vm2944, %v2829
        %2996 = vst.msk [vmem:[#allocation2 + $0x198] sm:$0xff] %vm2944, %v2831
        %2997 = vst.msk [vmem:[#allocation2 + $0x1a0] sm:$0xff] %vm2944, %v2833
        %2998 = vst.msk [vmem:[#allocation2 + $0x1a8] sm:$0xff] %vm2944, %v2835
        %2999 = vst.msk [vmem:[#allocation2 + $0x1b0] sm:$0xff] %vm2944, %v2837
        %3000 = vst.msk [vmem:[#allocation2 + $0x1b8] sm:$0xff] %vm2944, %v2839
        %3001 = vst.msk [vmem:[#allocation2 + $0x1c0] sm:$0xff] %vm2944, %v2841
        %3002 = vst.msk [vmem:[#allocation2 + $0x1c8] sm:$0xff] %vm2944, %v2843
        %3003 = vst.msk [vmem:[#allocation2 + $0x1d0] sm:$0xff] %vm2944, %v2845
        %3004 = vst.msk [vmem:[#allocation2 + $0x1d8] sm:$0xff] %vm2944, %v2847
        %3005 = vst.msk [vmem:[#allocation2 + $0x1e0] sm:$0xff] %vm2944, %v2849
        %3006 = vst.msk [vmem:[#allocation2 + $0x1e8] sm:$0xff] %vm2944, %v2851
        %3007 = vst.msk [vmem:[#allocation2 + $0x1f0] sm:$0xff] %vm2944, %v2853
        %3008 = vst.msk [vmem:[#allocation2 + $0x1f8] sm:$0xff] %vm2944, %v2855
        %3009 = vst.msk [vmem:[#allocation2 + $0x200] sm:$0xff] %vm2944, %v2857
        %3010 = vst.msk [vmem:[#allocation2 + $0x208] sm:$0xff] %vm2944, %v2859
        %3011 = vst.msk [vmem:[#allocation2 + $0x210] sm:$0xff] %vm2944, %v2861
        %3012 = vst.msk [vmem:[#allocation2 + $0x218] sm:$0xff] %vm2944, %v2863
        %3013 = vst.msk [vmem:[#allocation2 + $0x220] sm:$0xff] %vm2944, %v2865
        %3014 = vst.msk [vmem:[#allocation2 + $0x228] sm:$0xff] %vm2944, %v2867
        %3015 = vst.msk [vmem:[#allocation2 + $0x230] sm:$0xff] %vm2944, %v2869
        %vm3016 = vcmask 43048
        %3017 = vst.msk [vmem:[#allocation2 + $0x238] sm:$0x7] %vm3016, %v2871
        %v3018 = vld [vmem:[%s599 + $0x6] sm:$0xff]
        %v3019 = vld [vmem:[%s599 + $0xe] sm:$0xff]
        %v3020 = vld [vmem:[%s599 + $0x16] sm:$0xff]
        %v3021 = vld [vmem:[%s599 + $0x1e] sm:$0xff]
        %v3022 = vld [vmem:[%s599 + $0x26] sm:$0xff]
        %v3023 = vld [vmem:[%s599 + $0x2e] sm:$0xff]
        %v3024 = vld [vmem:[%s599 + $0x36] sm:$0xff]
        %v3025 = vld [vmem:[%s599 + $0x3e] sm:$0xff]
        %v3026 = vld [vmem:[%s599 + $0x46] sm:$0xff]
        %v3027 = vld [vmem:[%s599 + $0x4e] sm:$0xff]
        %v3028 = vld [vmem:[%s599 + $0x56] sm:$0xff]
        %v3029 = vld [vmem:[%s599 + $0x5e] sm:$0xff]
        %v3030 = vld [vmem:[%s599 + $0x66] sm:$0xff]
        %v3031 = vld [vmem:[%s599 + $0x6e] sm:$0xff]
        %v3032 = vld [vmem:[%s599 + $0x76] sm:$0xff]
        %v3033 = vld [vmem:[%s599 + $0x7e] sm:$0xff]
        %v3034 = vld [vmem:[%s599 + $0x86] sm:$0xff]
        %v3035 = vld [vmem:[%s599 + $0x8e] sm:$0xff]
        %v3036 = vld [vmem:[%s599 + $0x96] sm:$0xff]
        %v3037 = vld [vmem:[%s599 + $0x9e] sm:$0xff]
        %v3038 = vld [vmem:[%s599 + $0xa6] sm:$0xff]
        %v3039 = vld [vmem:[%s599 + $0xae] sm:$0xff]
        %v3040 = vld [vmem:[%s599 + $0xb6] sm:$0xff]
        %v3041 = vld [vmem:[%s599 + $0xbe] sm:$0xff]
        %v3042 = vld [vmem:[%s599 + $0xc6] sm:$0xff]
        %v3043 = vld [vmem:[%s599 + $0xce] sm:$0xff]
        %v3044 = vld [vmem:[%s599 + $0xd6] sm:$0xff]
        %v3045 = vld [vmem:[%s599 + $0xde] sm:$0xff]
        %v3046 = vld [vmem:[%s599 + $0xe6] sm:$0xff]
        %v3047 = vld [vmem:[%s599 + $0xee] sm:$0xff]
        %v3048 = vld [vmem:[%s599 + $0xf6] sm:$0xff]
        %v3049 = vld [vmem:[%s599 + $0xfe] sm:$0xff]
        %v3050 = vld [vmem:[%s599 + $0x106] sm:$0xff]
        %v3051 = vld [vmem:[%s599 + $0x10e] sm:$0xff]
        %v3052 = vld [vmem:[%s599 + $0x116] sm:$0xff]
        %v3053 = vld [vmem:[%s599 + $0x11e] sm:$0xff]
        %v3054 = vld [vmem:[%s599 + $0x126] sm:$0xff]
        %v3055 = vld [vmem:[%s599 + $0x12e] sm:$0xff]
        %v3056 = vld [vmem:[%s599 + $0x136] sm:$0xff]
        %v3057 = vld [vmem:[%s599 + $0x13e] sm:$0xff]
        %v3058 = vld [vmem:[%s599 + $0x146] sm:$0xff]
        %v3059 = vld [vmem:[%s599 + $0x14e] sm:$0xff]
        %v3060 = vld [vmem:[%s599 + $0x156] sm:$0xff]
        %v3061 = vld [vmem:[%s599 + $0x15e] sm:$0xff]
        %v3062 = vld [vmem:[%s599 + $0x166] sm:$0xff]
        %v3063 = vld [vmem:[%s599 + $0x16e] sm:$0xff]
        %v3064 = vld [vmem:[%s599 + $0x176] sm:$0xff]
        %v3065 = vld [vmem:[%s599 + $0x17e] sm:$0xff]
        %v3066 = vld [vmem:[%s599 + $0x186] sm:$0xff]
        %v3067 = vld [vmem:[%s599 + $0x18e] sm:$0xff]
        %v3068 = vld [vmem:[%s599 + $0x196] sm:$0xff]
        %v3069 = vld [vmem:[%s599 + $0x19e] sm:$0xff]
        %v3070 = vld [vmem:[%s599 + $0x1a6] sm:$0xff]
        %v3071 = vld [vmem:[%s599 + $0x1ae] sm:$0xff]
        %v3072 = vld [vmem:[%s599 + $0x1b6] sm:$0xff]
        %v3073 = vld [vmem:[%s599 + $0x1be] sm:$0xff]
        %v3074 = vld [vmem:[%s599 + $0x1c6] sm:$0xff]
        %v3075 = vld [vmem:[%s599 + $0x1ce] sm:$0xff]
        %v3076 = vld [vmem:[%s599 + $0x1d6] sm:$0xff]
        %v3077 = vld [vmem:[%s599 + $0x1de] sm:$0xff]
        %v3078 = vld [vmem:[%s599 + $0x1e6] sm:$0xff]
        %v3079 = vld [vmem:[%s599 + $0x1ee] sm:$0xff]
        %v3080 = vld [vmem:[%s599 + $0x1f6] sm:$0xff]
        %v3081 = vld [vmem:[%s599 + $0x1fe] sm:$0xff]
        %v3082 = vld [vmem:[%s599 + $0x206] sm:$0xff]
        %v3083 = vld [vmem:[%s599 + $0x20e] sm:$0xff]
        %v3084 = vld [vmem:[%s599 + $0x216] sm:$0xff]
        %v3085 = vld [vmem:[%s599 + $0x21e] sm:$0xff]
        %v3086 = vld [vmem:[%s599 + $0x226] sm:$0xff]
        %v3087 = vld [vmem:[%s599 + $0x22e] sm:$0xff]
        %v3088 = vld [vmem:[%s599 + $0x236] sm:$0xff]
        %v3089 = vld [vmem:[%s599 + $0x23e] sm:$0x3]
        %3162 = vrot.lane.b32.xlu0 %v3018, 6
        %v3163 = vpop.permute.xlu0 %3162
        %3164 = vrot.lane.b32.xlu0 %v3019, 6
        %v3165 = vpop.permute.xlu0 %3164
        %3166 = vrot.lane.b32.xlu0 %v3020, 6
        %v3167 = vpop.permute.xlu0 %3166
        %3168 = vrot.lane.b32.xlu0 %v3021, 6
        %v3169 = vpop.permute.xlu0 %3168
        %3170 = vrot.lane.b32.xlu0 %v3022, 6
        %v3171 = vpop.permute.xlu0 %3170
        %3172 = vrot.lane.b32.xlu0 %v3023, 6
        %v3173 = vpop.permute.xlu0 %3172
        %3174 = vrot.lane.b32.xlu0 %v3024, 6
        %v3175 = vpop.permute.xlu0 %3174
        %3176 = vrot.lane.b32.xlu0 %v3025, 6
        %v3177 = vpop.permute.xlu0 %3176
        %3178 = vrot.lane.b32.xlu0 %v3026, 6
        %v3179 = vpop.permute.xlu0 %3178
        %3180 = vrot.lane.b32.xlu0 %v3027, 6
        %v3181 = vpop.permute.xlu0 %3180
        %3182 = vrot.lane.b32.xlu0 %v3028, 6
        %v3183 = vpop.permute.xlu0 %3182
        %3184 = vrot.lane.b32.xlu0 %v3029, 6
        %v3185 = vpop.permute.xlu0 %3184
        %3186 = vrot.lane.b32.xlu0 %v3030, 6
        %v3187 = vpop.permute.xlu0 %3186
        %3188 = vrot.lane.b32.xlu0 %v3031, 6
        %v3189 = vpop.permute.xlu0 %3188
        %3190 = vrot.lane.b32.xlu0 %v3032, 6
        %v3191 = vpop.permute.xlu0 %3190
        %3192 = vrot.lane.b32.xlu0 %v3033, 6
        %v3193 = vpop.permute.xlu0 %3192
        %3194 = vrot.lane.b32.xlu0 %v3034, 6
        %v3195 = vpop.permute.xlu0 %3194
        %3196 = vrot.lane.b32.xlu0 %v3035, 6
        %v3197 = vpop.permute.xlu0 %3196
        %3198 = vrot.lane.b32.xlu0 %v3036, 6
        %v3199 = vpop.permute.xlu0 %3198
        %3200 = vrot.lane.b32.xlu0 %v3037, 6
        %v3201 = vpop.permute.xlu0 %3200
        %3202 = vrot.lane.b32.xlu0 %v3038, 6
        %v3203 = vpop.permute.xlu0 %3202
        %3204 = vrot.lane.b32.xlu0 %v3039, 6
        %v3205 = vpop.permute.xlu0 %3204
        %3206 = vrot.lane.b32.xlu0 %v3040, 6
        %v3207 = vpop.permute.xlu0 %3206
        %3208 = vrot.lane.b32.xlu0 %v3041, 6
        %v3209 = vpop.permute.xlu0 %3208
        %3210 = vrot.lane.b32.xlu0 %v3042, 6
        %v3211 = vpop.permute.xlu0 %3210
        %3212 = vrot.lane.b32.xlu0 %v3043, 6
        %v3213 = vpop.permute.xlu0 %3212
        %3214 = vrot.lane.b32.xlu0 %v3044, 6
        %v3215 = vpop.permute.xlu0 %3214
        %3216 = vrot.lane.b32.xlu0 %v3045, 6
        %v3217 = vpop.permute.xlu0 %3216
        %3218 = vrot.lane.b32.xlu0 %v3046, 6
        %v3219 = vpop.permute.xlu0 %3218
        %3220 = vrot.lane.b32.xlu0 %v3047, 6
        %v3221 = vpop.permute.xlu0 %3220
        %3222 = vrot.lane.b32.xlu0 %v3048, 6
        %v3223 = vpop.permute.xlu0 %3222
        %3224 = vrot.lane.b32.xlu0 %v3049, 6
        %v3225 = vpop.permute.xlu0 %3224
        %3226 = vrot.lane.b32.xlu0 %v3050, 6
        %v3227 = vpop.permute.xlu0 %3226
        %3228 = vrot.lane.b32.xlu0 %v3051, 6
        %v3229 = vpop.permute.xlu0 %3228
        %3230 = vrot.lane.b32.xlu0 %v3052, 6
        %v3231 = vpop.permute.xlu0 %3230
        %3232 = vrot.lane.b32.xlu0 %v3053, 6
        %v3233 = vpop.permute.xlu0 %3232
        %3234 = vrot.lane.b32.xlu0 %v3054, 6
        %v3235 = vpop.permute.xlu0 %3234
        %3236 = vrot.lane.b32.xlu0 %v3055, 6
        %v3237 = vpop.permute.xlu0 %3236
        %3238 = vrot.lane.b32.xlu0 %v3056, 6
        %v3239 = vpop.permute.xlu0 %3238
        %3240 = vrot.lane.b32.xlu0 %v3057, 6
        %v3241 = vpop.permute.xlu0 %3240
        %3242 = vrot.lane.b32.xlu0 %v3058, 6
        %v3243 = vpop.permute.xlu0 %3242
        %3244 = vrot.lane.b32.xlu0 %v3059, 6
        %v3245 = vpop.permute.xlu0 %3244
        %3246 = vrot.lane.b32.xlu0 %v3060, 6
        %v3247 = vpop.permute.xlu0 %3246
        %3248 = vrot.lane.b32.xlu0 %v3061, 6
        %v3249 = vpop.permute.xlu0 %3248
        %3250 = vrot.lane.b32.xlu0 %v3062, 6
        %v3251 = vpop.permute.xlu0 %3250
        %3252 = vrot.lane.b32.xlu0 %v3063, 6
        %v3253 = vpop.permute.xlu0 %3252
        %3254 = vrot.lane.b32.xlu0 %v3064, 6
        %v3255 = vpop.permute.xlu0 %3254
        %3256 = vrot.lane.b32.xlu0 %v3065, 6
        %v3257 = vpop.permute.xlu0 %3256
        %3258 = vrot.lane.b32.xlu0 %v3066, 6
        %v3259 = vpop.permute.xlu0 %3258
        %3260 = vrot.lane.b32.xlu0 %v3067, 6
        %v3261 = vpop.permute.xlu0 %3260
        %3262 = vrot.lane.b32.xlu0 %v3068, 6
        %v3263 = vpop.permute.xlu0 %3262
        %3264 = vrot.lane.b32.xlu0 %v3069, 6
        %v3265 = vpop.permute.xlu0 %3264
        %3266 = vrot.lane.b32.xlu0 %v3070, 6
        %v3267 = vpop.permute.xlu0 %3266
        %3268 = vrot.lane.b32.xlu0 %v3071, 6
        %v3269 = vpop.permute.xlu0 %3268
        %3270 = vrot.lane.b32.xlu0 %v3072, 6
        %v3271 = vpop.permute.xlu0 %3270
        %3272 = vrot.lane.b32.xlu0 %v3073, 6
        %v3273 = vpop.permute.xlu0 %3272
        %3274 = vrot.lane.b32.xlu0 %v3074, 6
        %v3275 = vpop.permute.xlu0 %3274
        %3276 = vrot.lane.b32.xlu0 %v3075, 6
        %v3277 = vpop.permute.xlu0 %3276
        %3278 = vrot.lane.b32.xlu0 %v3076, 6
        %v3279 = vpop.permute.xlu0 %3278
        %3280 = vrot.lane.b32.xlu0 %v3077, 6
        %v3281 = vpop.permute.xlu0 %3280
        %3282 = vrot.lane.b32.xlu0 %v3078, 6
        %v3283 = vpop.permute.xlu0 %3282
        %3284 = vrot.lane.b32.xlu0 %v3079, 6
        %v3285 = vpop.permute.xlu0 %3284
        %3286 = vrot.lane.b32.xlu0 %v3080, 6
        %v3287 = vpop.permute.xlu0 %3286
        %3288 = vrot.lane.b32.xlu0 %v3081, 6
        %v3289 = vpop.permute.xlu0 %3288
        %3290 = vrot.lane.b32.xlu0 %v3082, 6
        %v3291 = vpop.permute.xlu0 %3290
        %3292 = vrot.lane.b32.xlu0 %v3083, 6
        %v3293 = vpop.permute.xlu0 %3292
        %3294 = vrot.lane.b32.xlu0 %v3084, 6
        %v3295 = vpop.permute.xlu0 %3294
        %3296 = vrot.lane.b32.xlu0 %v3085, 6
        %v3297 = vpop.permute.xlu0 %3296
        %3298 = vrot.lane.b32.xlu0 %v3086, 6
        %v3299 = vpop.permute.xlu0 %3298
        %3300 = vrot.lane.b32.xlu0 %v3087, 6
        %v3301 = vpop.permute.xlu0 %3300
        %3302 = vrot.lane.b32.xlu0 %v3088, 6
        %v3303 = vpop.permute.xlu0 %3302
        %3304 = vrot.lane.b32.xlu0 %v3089, 6
        %v3305 = vpop.permute.xlu0 %3304
        %vm3378 = vcmask 56368
        %3379 = vst.msk [vmem:[#allocation2] sm:$0xff] %vm3378, %v3163
        %3380 = vst.msk [vmem:[#allocation2 + $0x8] sm:$0xff] %vm3378, %v3165
        %3381 = vst.msk [vmem:[#allocation2 + $0x10] sm:$0xff] %vm3378, %v3167
        %3382 = vst.msk [vmem:[#allocation2 + $0x18] sm:$0xff] %vm3378, %v3169
        %3383 = vst.msk [vmem:[#allocation2 + $0x20] sm:$0xff] %vm3378, %v3171
        %3384 = vst.msk [vmem:[#allocation2 + $0x28] sm:$0xff] %vm3378, %v3173
        %3385 = vst.msk [vmem:[#allocation2 + $0x30] sm:$0xff] %vm3378, %v3175
        %3386 = vst.msk [vmem:[#allocation2 + $0x38] sm:$0xff] %vm3378, %v3177
        %3387 = vst.msk [vmem:[#allocation2 + $0x40] sm:$0xff] %vm3378, %v3179
        %3388 = vst.msk [vmem:[#allocation2 + $0x48] sm:$0xff] %vm3378, %v3181
        %3389 = vst.msk [vmem:[#allocation2 + $0x50] sm:$0xff] %vm3378, %v3183
        %3390 = vst.msk [vmem:[#allocation2 + $0x58] sm:$0xff] %vm3378, %v3185
        %3391 = vst.msk [vmem:[#allocation2 + $0x60] sm:$0xff] %vm3378, %v3187
        %3392 = vst.msk [vmem:[#allocation2 + $0x68] sm:$0xff] %vm3378, %v3189
        %3393 = vst.msk [vmem:[#allocation2 + $0x70] sm:$0xff] %vm3378, %v3191
        %3394 = vst.msk [vmem:[#allocation2 + $0x78] sm:$0xff] %vm3378, %v3193
        %3395 = vst.msk [vmem:[#allocation2 + $0x80] sm:$0xff] %vm3378, %v3195
        %3396 = vst.msk [vmem:[#allocation2 + $0x88] sm:$0xff] %vm3378, %v3197
        %3397 = vst.msk [vmem:[#allocation2 + $0x90] sm:$0xff] %vm3378, %v3199
        %3398 = vst.msk [vmem:[#allocation2 + $0x98] sm:$0xff] %vm3378, %v3201
        %3399 = vst.msk [vmem:[#allocation2 + $0xa0] sm:$0xff] %vm3378, %v3203
        %3400 = vst.msk [vmem:[#allocation2 + $0xa8] sm:$0xff] %vm3378, %v3205
        %3401 = vst.msk [vmem:[#allocation2 + $0xb0] sm:$0xff] %vm3378, %v3207
        %3402 = vst.msk [vmem:[#allocation2 + $0xb8] sm:$0xff] %vm3378, %v3209
        %3403 = vst.msk [vmem:[#allocation2 + $0xc0] sm:$0xff] %vm3378, %v3211
        %3404 = vst.msk [vmem:[#allocation2 + $0xc8] sm:$0xff] %vm3378, %v3213
        %3405 = vst.msk [vmem:[#allocation2 + $0xd0] sm:$0xff] %vm3378, %v3215
        %3406 = vst.msk [vmem:[#allocation2 + $0xd8] sm:$0xff] %vm3378, %v3217
        %3407 = vst.msk [vmem:[#allocation2 + $0xe0] sm:$0xff] %vm3378, %v3219
        %3408 = vst.msk [vmem:[#allocation2 + $0xe8] sm:$0xff] %vm3378, %v3221
        %3409 = vst.msk [vmem:[#allocation2 + $0xf0] sm:$0xff] %vm3378, %v3223
        %3410 = vst.msk [vmem:[#allocation2 + $0xf8] sm:$0xff] %vm3378, %v3225
        %3411 = vst.msk [vmem:[#allocation2 + $0x100] sm:$0xff] %vm3378, %v3227
        %3412 = vst.msk [vmem:[#allocation2 + $0x108] sm:$0xff] %vm3378, %v3229
        %3413 = vst.msk [vmem:[#allocation2 + $0x110] sm:$0xff] %vm3378, %v3231
        %3414 = vst.msk [vmem:[#allocation2 + $0x118] sm:$0xff] %vm3378, %v3233
        %3415 = vst.msk [vmem:[#allocation2 + $0x120] sm:$0xff] %vm3378, %v3235
        %3416 = vst.msk [vmem:[#allocation2 + $0x128] sm:$0xff] %vm3378, %v3237
        %3417 = vst.msk [vmem:[#allocation2 + $0x130] sm:$0xff] %vm3378, %v3239
        %3418 = vst.msk [vmem:[#allocation2 + $0x138] sm:$0xff] %vm3378, %v3241
        %3419 = vst.msk [vmem:[#allocation2 + $0x140] sm:$0xff] %vm3378, %v3243
        %3420 = vst.msk [vmem:[#allocation2 + $0x148] sm:$0xff] %vm3378, %v3245
        %3421 = vst.msk [vmem:[#allocation2 + $0x150] sm:$0xff] %vm3378, %v3247
        %3422 = vst.msk [vmem:[#allocation2 + $0x158] sm:$0xff] %vm3378, %v3249
        %3423 = vst.msk [vmem:[#allocation2 + $0x160] sm:$0xff] %vm3378, %v3251
        %3424 = vst.msk [vmem:[#allocation2 + $0x168] sm:$0xff] %vm3378, %v3253
        %3425 = vst.msk [vmem:[#allocation2 + $0x170] sm:$0xff] %vm3378, %v3255
        %3426 = vst.msk [vmem:[#allocation2 + $0x178] sm:$0xff] %vm3378, %v3257
        %3427 = vst.msk [vmem:[#allocation2 + $0x180] sm:$0xff] %vm3378, %v3259
        %3428 = vst.msk [vmem:[#allocation2 + $0x188] sm:$0xff] %vm3378, %v3261
        %3429 = vst.msk [vmem:[#allocation2 + $0x190] sm:$0xff] %vm3378, %v3263
        %3430 = vst.msk [vmem:[#allocation2 + $0x198] sm:$0xff] %vm3378, %v3265
        %3431 = vst.msk [vmem:[#allocation2 + $0x1a0] sm:$0xff] %vm3378, %v3267
        %3432 = vst.msk [vmem:[#allocation2 + $0x1a8] sm:$0xff] %vm3378, %v3269
        %3433 = vst.msk [vmem:[#allocation2 + $0x1b0] sm:$0xff] %vm3378, %v3271
        %3434 = vst.msk [vmem:[#allocation2 + $0x1b8] sm:$0xff] %vm3378, %v3273
        %3435 = vst.msk [vmem:[#allocation2 + $0x1c0] sm:$0xff] %vm3378, %v3275
        %3436 = vst.msk [vmem:[#allocation2 + $0x1c8] sm:$0xff] %vm3378, %v3277
        %3437 = vst.msk [vmem:[#allocation2 + $0x1d0] sm:$0xff] %vm3378, %v3279
        %3438 = vst.msk [vmem:[#allocation2 + $0x1d8] sm:$0xff] %vm3378, %v3281
        %3439 = vst.msk [vmem:[#allocation2 + $0x1e0] sm:$0xff] %vm3378, %v3283
        %3440 = vst.msk [vmem:[#allocation2 + $0x1e8] sm:$0xff] %vm3378, %v3285
        %3441 = vst.msk [vmem:[#allocation2 + $0x1f0] sm:$0xff] %vm3378, %v3287
        %3442 = vst.msk [vmem:[#allocation2 + $0x1f8] sm:$0xff] %vm3378, %v3289
        %3443 = vst.msk [vmem:[#allocation2 + $0x200] sm:$0xff] %vm3378, %v3291
        %3444 = vst.msk [vmem:[#allocation2 + $0x208] sm:$0xff] %vm3378, %v3293
        %3445 = vst.msk [vmem:[#allocation2 + $0x210] sm:$0xff] %vm3378, %v3295
        %3446 = vst.msk [vmem:[#allocation2 + $0x218] sm:$0xff] %vm3378, %v3297
        %3447 = vst.msk [vmem:[#allocation2 + $0x220] sm:$0xff] %vm3378, %v3299
        %3448 = vst.msk [vmem:[#allocation2 + $0x228] sm:$0xff] %vm3378, %v3301
        %3449 = vst.msk [vmem:[#allocation2 + $0x230] sm:$0xff] %vm3378, %v3303
        %vm3450 = vcmask 50224
        %3451 = vst.msk [vmem:[#allocation2 + $0x238] sm:$0x3] %vm3450, %v3305
        %v3452 = vld [vmem:[#allocation2] sm:$0xff]
        %v3453 = vld [vmem:[#allocation2 + $0x8] sm:$0xff]
        %v3454 = vld [vmem:[#allocation2 + $0x10] sm:$0xff]
        %v3455 = vld [vmem:[#allocation2 + $0x18] sm:$0xff]
        %v3456 = vld [vmem:[#allocation2 + $0x20] sm:$0xff]
        %v3457 = vld [vmem:[#allocation2 + $0x28] sm:$0xff]
        %v3458 = vld [vmem:[#allocation2 + $0x30] sm:$0xff]
        %v3459 = vld [vmem:[#allocation2 + $0x38] sm:$0xff]
        %v3460 = vld [vmem:[#allocation2 + $0x40] sm:$0xff]
        %v3461 = vld [vmem:[#allocation2 + $0x48] sm:$0xff]
        %v3462 = vld [vmem:[#allocation2 + $0x50] sm:$0xff]
        %v3463 = vld [vmem:[#allocation2 + $0x58] sm:$0xff]
        %v3464 = vld [vmem:[#allocation2 + $0x60] sm:$0xff]
        %v3465 = vld [vmem:[#allocation2 + $0x68] sm:$0xff]
        %v3466 = vld [vmem:[#allocation2 + $0x70] sm:$0xff]
        %v3467 = vld [vmem:[#allocation2 + $0x78] sm:$0xff]
        %v3468 = vld [vmem:[#allocation2 + $0x80] sm:$0xff]
        %v3469 = vld [vmem:[#allocation2 + $0x88] sm:$0xff]
        %v3470 = vld [vmem:[#allocation2 + $0x90] sm:$0xff]
        %v3471 = vld [vmem:[#allocation2 + $0x98] sm:$0xff]
        %v3472 = vld [vmem:[#allocation2 + $0xa0] sm:$0xff]
        %v3473 = vld [vmem:[#allocation2 + $0xa8] sm:$0xff]
        %v3474 = vld [vmem:[#allocation2 + $0xb0] sm:$0xff]
        %v3475 = vld [vmem:[#allocation2 + $0xb8] sm:$0xff]
        %v3476 = vld [vmem:[#allocation2 + $0xc0] sm:$0xff]
        %v3477 = vld [vmem:[#allocation2 + $0xc8] sm:$0xff]
        %v3478 = vld [vmem:[#allocation2 + $0xd0] sm:$0xff]
        %v3479 = vld [vmem:[#allocation2 + $0xd8] sm:$0xff]
        %v3480 = vld [vmem:[#allocation2 + $0xe0] sm:$0xff]
        %v3481 = vld [vmem:[#allocation2 + $0xe8] sm:$0xff]
        %v3482 = vld [vmem:[#allocation2 + $0xf0] sm:$0xff]
        %v3483 = vld [vmem:[#allocation2 + $0xf8] sm:$0xff]
        %v3484 = vld [vmem:[#allocation2 + $0x100] sm:$0xff]
        %v3485 = vld [vmem:[#allocation2 + $0x108] sm:$0xff]
        %v3486 = vld [vmem:[#allocation2 + $0x110] sm:$0xff]
        %v3487 = vld [vmem:[#allocation2 + $0x118] sm:$0xff]
        %v3488 = vld [vmem:[#allocation2 + $0x120] sm:$0xff]
        %v3489 = vld [vmem:[#allocation2 + $0x128] sm:$0xff]
        %v3490 = vld [vmem:[#allocation2 + $0x130] sm:$0xff]
        %v3491 = vld [vmem:[#allocation2 + $0x138] sm:$0xff]
        %v3492 = vld [vmem:[#allocation2 + $0x140] sm:$0xff]
        %v3493 = vld [vmem:[#allocation2 + $0x148] sm:$0xff]
        %v3494 = vld [vmem:[#allocation2 + $0x150] sm:$0xff]
        %v3495 = vld [vmem:[#allocation2 + $0x158] sm:$0xff]
        %v3496 = vld [vmem:[#allocation2 + $0x160] sm:$0xff]
        %v3497 = vld [vmem:[#allocation2 + $0x168] sm:$0xff]
        %v3498 = vld [vmem:[#allocation2 + $0x170] sm:$0xff]
        %v3499 = vld [vmem:[#allocation2 + $0x178] sm:$0xff]
        %v3500 = vld [vmem:[#allocation2 + $0x180] sm:$0xff]
        %v3501 = vld [vmem:[#allocation2 + $0x188] sm:$0xff]
        %v3502 = vld [vmem:[#allocation2 + $0x190] sm:$0xff]
        %v3503 = vld [vmem:[#allocation2 + $0x198] sm:$0xff]
        %v3504 = vld [vmem:[#allocation2 + $0x1a0] sm:$0xff]
        %v3505 = vld [vmem:[#allocation2 + $0x1a8] sm:$0xff]
        %v3506 = vld [vmem:[#allocation2 + $0x1b0] sm:$0xff]
        %v3507 = vld [vmem:[#allocation2 + $0x1b8] sm:$0xff]
        %v3508 = vld [vmem:[#allocation2 + $0x1c0] sm:$0xff]
        %v3509 = vld [vmem:[#allocation2 + $0x1c8] sm:$0xff]
        %v3510 = vld [vmem:[#allocation2 + $0x1d0] sm:$0xff]
        %v3511 = vld [vmem:[#allocation2 + $0x1d8] sm:$0xff]
        %v3512 = vld [vmem:[#allocation2 + $0x1e0] sm:$0xff]
        %v3513 = vld [vmem:[#allocation2 + $0x1e8] sm:$0xff]
        %v3514 = vld [vmem:[#allocation2 + $0x1f0] sm:$0xff]
        %v3515 = vld [vmem:[#allocation2 + $0x1f8] sm:$0xff]
        %v3516 = vld [vmem:[#allocation2 + $0x200] sm:$0xff]
        %v3517 = vld [vmem:[#allocation2 + $0x208] sm:$0xff]
        %v3518 = vld [vmem:[#allocation2 + $0x210] sm:$0xff]
        %v3519 = vld [vmem:[#allocation2 + $0x218] sm:$0xff]
        %v3520 = vld [vmem:[#allocation2 + $0x220] sm:$0xff]
        %v3521 = vld [vmem:[#allocation2 + $0x228] sm:$0xff]
        %v3522 = vld [vmem:[#allocation2 + $0x230] sm:$0xff]
        %v3523 = vld [vmem:[#allocation2 + $0x238] sm:$0xff]
        %v3524 = vld [vmem:[#allocation16] sm:$0x7f]
        %vm3525 = vcmask 56320
        %v3527 = vsel %vm3525, %v3452, 0
        %v3530 = vsel %vm3525, %v3453, 0
        %v3533 = vsel %vm3525, %v3454, 0
        %v3536 = vsel %vm3525, %v3455, 0
        %v3539 = vsel %vm3525, %v3456, 0
        %v3542 = vsel %vm3525, %v3457, 0
        %v3545 = vsel %vm3525, %v3458, 0
        %v3548 = vsel %vm3525, %v3459, 0
        %v3551 = vsel %vm3525, %v3460, 0
        %v3554 = vsel %vm3525, %v3461, 0
        %v3557 = vsel %vm3525, %v3462, 0
        %v3560 = vsel %vm3525, %v3463, 0
        %v3563 = vsel %vm3525, %v3464, 0
        %v3566 = vsel %vm3525, %v3465, 0
        %v3569 = vsel %vm3525, %v3466, 0
        %v3572 = vsel %vm3525, %v3467, 0
        %v3575 = vsel %vm3525, %v3468, 0
        %v3578 = vsel %vm3525, %v3469, 0
        %v3581 = vsel %vm3525, %v3470, 0
        %v3584 = vsel %vm3525, %v3471, 0
        %v3587 = vsel %vm3525, %v3472, 0
        %v3590 = vsel %vm3525, %v3473, 0
        %v3593 = vsel %vm3525, %v3474, 0
        %v3596 = vsel %vm3525, %v3475, 0
        %v3599 = vsel %vm3525, %v3476, 0
        %v3602 = vsel %vm3525, %v3477, 0
        %v3605 = vsel %vm3525, %v3478, 0
        %v3608 = vsel %vm3525, %v3479, 0
        %v3611 = vsel %vm3525, %v3480, 0
        %v3614 = vsel %vm3525, %v3481, 0
        %v3617 = vsel %vm3525, %v3482, 0
        %v3620 = vsel %vm3525, %v3483, 0
        %v3623 = vsel %vm3525, %v3484, 0
        %v3626 = vsel %vm3525, %v3485, 0
        %v3629 = vsel %vm3525, %v3486, 0
        %v3632 = vsel %vm3525, %v3487, 0
        %v3635 = vsel %vm3525, %v3488, 0
        %v3638 = vsel %vm3525, %v3489, 0
        %v3641 = vsel %vm3525, %v3490, 0
        %v3644 = vsel %vm3525, %v3491, 0
        %v3647 = vsel %vm3525, %v3492, 0
        %v3650 = vsel %vm3525, %v3493, 0
        %v3653 = vsel %vm3525, %v3494, 0
        %v3656 = vsel %vm3525, %v3495, 0
        %v3659 = vsel %vm3525, %v3496, 0
        %v3662 = vsel %vm3525, %v3497, 0
        %v3665 = vsel %vm3525, %v3498, 0
        %v3668 = vsel %vm3525, %v3499, 0
        %v3671 = vsel %vm3525, %v3500, 0
        %v3674 = vsel %vm3525, %v3501, 0
        %v3677 = vsel %vm3525, %v3502, 0
        %v3680 = vsel %vm3525, %v3503, 0
        %v3683 = vsel %vm3525, %v3504, 0
        %v3686 = vsel %vm3525, %v3505, 0
        %v3689 = vsel %vm3525, %v3506, 0
        %v3692 = vsel %vm3525, %v3507, 0
        %v3695 = vsel %vm3525, %v3508, 0
        %v3698 = vsel %vm3525, %v3509, 0
        %v3701 = vsel %vm3525, %v3510, 0
        %v3704 = vsel %vm3525, %v3511, 0
        %v3707 = vsel %vm3525, %v3512, 0
        %v3710 = vsel %vm3525, %v3513, 0
        %v3713 = vsel %vm3525, %v3514, 0
        %v3716 = vsel %vm3525, %v3515, 0
        %v3719 = vsel %vm3525, %v3516, 0
        %v3722 = vsel %vm3525, %v3517, 0
        %v3725 = vsel %vm3525, %v3518, 0
        %v3728 = vsel %vm3525, %v3519, 0
        %v3731 = vsel %vm3525, %v3520, 0
        %v3734 = vsel %vm3525, %v3521, 0
        %v3737 = vsel %vm3525, %v3522, 0
        %v3740 = vsel %vm3525, %v3523, 0
        %vm3742 = vcmask 1046528
        %v3744 = vsel %vm3742, %v3524, 0
        %3746 = vmatprep.subr.mxu0 0.0
        %3747 = vmatpush1.msra.mxu0 %v3744
        %3748 = vmatprep.subr.mxu0 0.0
        %3749 = vmatpush1.msra.mxu0 0.0
        %3750 = vmatprep.subr.mxu0 0.0
        %3751 = vmatpush1.msra.mxu0 0.0
        %3752 = vmatprep.subr.mxu0 0.0
        %3753 = vmatpush1.msra.mxu0 0.0
        %3754 = vmatprep.subr.mxu0 0.0
        %3755 = vmatpush1.msra.mxu0 0.0
        %3756 = vmatprep.subr.mxu0 0.0
        %3757 = vmatpush1.msra.mxu0 0.0
        %3758 = vmatprep.subr.mxu0 0.0
        %3759 = vmatpush1.msra.mxu0 0.0
        %3760 = vmatprep.subr.mxu0 0.0
        %3761 = vmatpush1.msra.mxu0 0.0
        %3762 = vmatprep.subr.mxu0 0.0
        %3763 = vmatpush1.msra.mxu0 0.0
        %3764 = vmatprep.subr.mxu0 0.0
        %3765 = vmatpush1.msra.mxu0 0.0
        %3766 = vmatprep.subr.mxu0 0.0
        %3767 = vmatpush1.msra.mxu0 0.0
        %3768 = vmatprep.subr.mxu0 0.0
        %3769 = vmatpush1.msra.mxu0 0.0
        %3770 = vmatprep.subr.mxu0 0.0
        %3771 = vmatpush1.msra.mxu0 0.0
        %3772 = vmatprep.subr.mxu0 0.0
        %3773 = vmatpush1.msra.mxu0 0.0
        %3774 = vmatprep.subr.mxu0 0.0
        %3775 = vmatpush1.msra.mxu0 0.0
        %3776 = vmatprep.subr.mxu0 0.0
        %3777 = vmatpush1.msra.mxu0 0.0
        %3778 = vmatprep.subr.mxu0 0.0
        %3779 = vmatpush1.msra.mxu0 0.0
        %3780 = vmatprep.subr.mxu0 0.0
        %3781 = vmatpush1.msra.mxu0 0.0
        %3782 = vmatprep.subr.mxu0 0.0
        %3783 = vmatpush1.msra.mxu0 0.0
        %3784 = vmatprep.subr.mxu0 0.0
        %3785 = vmatpush1.msra.mxu0 0.0
        %3786 = vmatprep.subr.mxu0 0.0
        %3787 = vmatpush1.msra.mxu0 0.0
        %3788 = vmatprep.subr.mxu0 0.0
        %3789 = vmatpush1.msra.mxu0 0.0
        %3790 = vmatprep.subr.mxu0 0.0
        %3791 = vmatpush1.msra.mxu0 0.0
        %3792 = vmatprep.subr.mxu0 0.0
        %3793 = vmatpush1.msra.mxu0 0.0
        %3794 = vmatprep.subr.mxu0 0.0
        %3795 = vmatpush1.msra.mxu0 0.0
        %3796 = vmatprep.subr.mxu0 0.0
        %3797 = vmatpush1.msra.mxu0 0.0
        %3798 = vmatprep.subr.mxu0 0.0
        %3799 = vmatpush1.msra.mxu0 0.0
        %3800 = vmatprep.subr.mxu0 0.0
        %3801 = vmatpush1.msra.mxu0 0.0
        %3802 = vmatprep.subr.mxu0 0.0
        %3803 = vmatpush1.msra.mxu0 0.0
        %3804 = vmatprep.subr.mxu0 0.0
        %3805 = vmatpush1.msra.mxu0 0.0
        %3806 = vmatprep.subr.mxu0 0.0
        %3807 = vmatpush1.msra.mxu0 0.0
        %3808 = vmatprep.subr.mxu0 0.0
        %3809 = vmatpush1.msra.mxu0 0.0
        %3810 = vmatprep.mubr.f32.mxu0 0.0
        %3811 = vmatmul.mubr.f32.gmra.mrb[0].mxu0 %v3527
        %v3812 = vpop.f32.mrb[0].mxu0
        %v3813 = vadd.f32 0.0, %v3812
        %v3814 = vpop.f32.mrb[0].mxu0
        %3815 = vmatprep.mubr.f32.mxu0 0.0
        %3816 = vmatmul.mubr.f32.gmra.mrb[0].mxu0 %v3530
        %v3817 = vpop.f32.mrb[0].mxu0
        %v3818 = vadd.f32 0.0, %v3817
        %v3819 = vpop.f32.mrb[0].mxu0
        %3820 = vmatprep.mubr.f32.mxu0 0.0
        %3821 = vmatmul.mubr.f32.gmra.mrb[0].mxu0 %v3533
        %v3822 = vpop.f32.mrb[0].mxu0
        %v3823 = vadd.f32 0.0, %v3822
        %v3824 = vpop.f32.mrb[0].mxu0
        %3825 = vmatprep.mubr.f32.mxu0 0.0
        %3826 = vmatmul.mubr.f32.gmra.mrb[0].mxu0 %v3536
        %v3827 = vpop.f32.mrb[0].mxu0
        %v3828 = vadd.f32 0.0, %v3827
        %v3829 = vpop.f32.mrb[0].mxu0
        %3830 = vmatprep.mubr.f32.mxu0 0.0
        %3831 = vmatmul.mubr.f32.gmra.mrb[0].mxu0 %v3539
        %v3832 = vpop.f32.mrb[0].mxu0
        %v3833 = vadd.f32 0.0, %v3832
        %v3834 = vpop.f32.mrb[0].mxu0
        %3835 = vmatprep.mubr.f32.mxu0 0.0
        %3836 = vmatmul.mubr.f32.gmra.mrb[0].mxu0 %v3542
        %v3837 = vpop.f32.mrb[0].mxu0
        %v3838 = vadd.f32 0.0, %v3837
        %v3839 = vpop.f32.mrb[0].mxu0
        %3840 = vmatprep.mubr.f32.mxu0 0.0
        %3841 = vmatmul.mubr.f32.gmra.mrb[0].mxu0 %v3545
        %v3842 = vpop.f32.mrb[0].mxu0
        %v3843 = vadd.f32 0.0, %v3842
        %v3844 = vpop.f32.mrb[0].mxu0
        %3845 = vmatprep.mubr.f32.mxu0 0.0
        %3846 = vmatmul.mubr.f32.gmra.mrb[0].mxu0 %v3548
        %v3847 = vpop.f32.mrb[0].mxu0
        %v3848 = vadd.f32 0.0, %v3847
        %v3849 = vpop.f32.mrb[0].mxu0
        %3850 = vmatprep.mubr.f32.mxu0 0.0
        %3851 = vmatmul.mubr.f32.gmra.mrb[0].mxu0 %v3551
        %v3852 = vpop.f32.mrb[0].mxu0
        %v3853 = vadd.f32 0.0, %v3852
        %v3854 = vpop.f32.mrb[0].mxu0
        %3855 = vmatprep.mubr.f32.mxu0 0.0
        %3856 = vmatmul.mubr.f32.gmra.mrb[0].mxu0 %v3554
        %v3857 = vpop.f32.mrb[0].mxu0
        %v3858 = vadd.f32 0.0, %v3857
        %v3859 = vpop.f32.mrb[0].mxu0
        %3860 = vmatprep.mubr.f32.mxu0 0.0
        %3861 = vmatmul.mubr.f32.gmra.mrb[0].mxu0 %v3557
        %v3862 = vpop.f32.mrb[0].mxu0
        %v3863 = vadd.f32 0.0, %v3862
        %v3864 = vpop.f32.mrb[0].mxu0
        %3865 = vmatprep.mubr.f32.mxu0 0.0
        %3866 = vmatmul.mubr.f32.gmra.mrb[0].mxu0 %v3560
        %v3867 = vpop.f32.mrb[0].mxu0
        %v3868 = vadd.f32 0.0, %v3867
        %v3869 = vpop.f32.mrb[0].mxu0
        %3870 = vmatprep.mubr.f32.mxu0 0.0
        %3871 = vmatmul.mubr.f32.gmra.mrb[0].mxu0 %v3563
        %v3872 = vpop.f32.mrb[0].mxu0
        %v3873 = vadd.f32 0.0, %v3872
        %v3874 = vpop.f32.mrb[0].mxu0
        %3875 = vmatprep.mubr.f32.mxu0 0.0
        %3876 = vmatmul.mubr.f32.gmra.mrb[0].mxu0 %v3566
        %v3877 = vpop.f32.mrb[0].mxu0
        %v3878 = vadd.f32 0.0, %v3877
        %v3879 = vpop.f32.mrb[0].mxu0
        %3880 = vmatprep.mubr.f32.mxu0 0.0
        %3881 = vmatmul.mubr.f32.gmra.mrb[0].mxu0 %v3569
        %v3882 = vpop.f32.mrb[0].mxu0
        %v3883 = vadd.f32 0.0, %v3882
        %v3884 = vpop.f32.mrb[0].mxu0
        %3885 = vmatprep.mubr.f32.mxu0 0.0
        %3886 = vmatmul.mubr.f32.gmra.mrb[0].mxu0 %v3572
        %v3887 = vpop.f32.mrb[0].mxu0
        %v3888 = vadd.f32 0.0, %v3887
        %v3889 = vpop.f32.mrb[0].mxu0
        %3890 = vmatprep.mubr.f32.mxu0 0.0
        %3891 = vmatmul.mubr.f32.gmra.mrb[0].mxu0 %v3575
        %v3892 = vpop.f32.mrb[0].mxu0
        %v3893 = vadd.f32 0.0, %v3892
        %v3894 = vpop.f32.mrb[0].mxu0
        %3895 = vmatprep.mubr.f32.mxu0 0.0
        %3896 = vmatmul.mubr.f32.gmra.mrb[0].mxu0 %v3578
        %v3897 = vpop.f32.mrb[0].mxu0
        %v3898 = vadd.f32 0.0, %v3897
        %v3899 = vpop.f32.mrb[0].mxu0
        %3900 = vmatprep.mubr.f32.mxu0 0.0
        %3901 = vmatmul.mubr.f32.gmra.mrb[0].mxu0 %v3581
        %v3902 = vpop.f32.mrb[0].mxu0
        %v3903 = vadd.f32 0.0, %v3902
        %v3904 = vpop.f32.mrb[0].mxu0
        %3905 = vmatprep.mubr.f32.mxu0 0.0
        %3906 = vmatmul.mubr.f32.gmra.mrb[0].mxu0 %v3584
        %v3907 = vpop.f32.mrb[0].mxu0
        %v3908 = vadd.f32 0.0, %v3907
        %v3909 = vpop.f32.mrb[0].mxu0
        %3910 = vmatprep.mubr.f32.mxu0 0.0
        %3911 = vmatmul.mubr.f32.gmra.mrb[0].mxu0 %v3587
        %v3912 = vpop.f32.mrb[0].mxu0
        %v3913 = vadd.f32 0.0, %v3912
        %v3914 = vpop.f32.mrb[0].mxu0
        %3915 = vmatprep.mubr.f32.mxu0 0.0
        %3916 = vmatmul.mubr.f32.gmra.mrb[0].mxu0 %v3590
        %v3917 = vpop.f32.mrb[0].mxu0
        %v3918 = vadd.f32 0.0, %v3917
        %v3919 = vpop.f32.mrb[0].mxu0
        %3920 = vmatprep.mubr.f32.mxu0 0.0
        %3921 = vmatmul.mubr.f32.gmra.mrb[0].mxu0 %v3593
        %v3922 = vpop.f32.mrb[0].mxu0
        %v3923 = vadd.f32 0.0, %v3922
        %v3924 = vpop.f32.mrb[0].mxu0
        %3925 = vmatprep.mubr.f32.mxu0 0.0
        %3926 = vmatmul.mubr.f32.gmra.mrb[0].mxu0 %v3596
        %v3927 = vpop.f32.mrb[0].mxu0
        %v3928 = vadd.f32 0.0, %v3927
        %v3929 = vpop.f32.mrb[0].mxu0
        %3930 = vmatprep.mubr.f32.mxu0 0.0
        %3931 = vmatmul.mubr.f32.gmra.mrb[0].mxu0 %v3599
        %v3932 = vpop.f32.mrb[0].mxu0
        %v3933 = vadd.f32 0.0, %v3932
        %v3934 = vpop.f32.mrb[0].mxu0
        %3935 = vmatprep.mubr.f32.mxu0 0.0
        %3936 = vmatmul.mubr.f32.gmra.mrb[0].mxu0 %v3602
        %v3937 = vpop.f32.mrb[0].mxu0
        %v3938 = vadd.f32 0.0, %v3937
        %v3939 = vpop.f32.mrb[0].mxu0
        %3940 = vmatprep.mubr.f32.mxu0 0.0
        %3941 = vmatmul.mubr.f32.gmra.mrb[0].mxu0 %v3605
        %v3942 = vpop.f32.mrb[0].mxu0
        %v3943 = vadd.f32 0.0, %v3942
        %v3944 = vpop.f32.mrb[0].mxu0
        %3945 = vmatprep.mubr.f32.mxu0 0.0
        %3946 = vmatmul.mubr.f32.gmra.mrb[0].mxu0 %v3608
        %v3947 = vpop.f32.mrb[0].mxu0
        %v3948 = vadd.f32 0.0, %v3947
        %v3949 = vpop.f32.mrb[0].mxu0
        %3950 = vmatprep.mubr.f32.mxu0 0.0
        %3951 = vmatmul.mubr.f32.gmra.mrb[0].mxu0 %v3611
        %v3952 = vpop.f32.mrb[0].mxu0
        %v3953 = vadd.f32 0.0, %v3952
        %v3954 = vpop.f32.mrb[0].mxu0
        %3955 = vmatprep.mubr.f32.mxu0 0.0
        %3956 = vmatmul.mubr.f32.gmra.mrb[0].mxu0 %v3614
        %v3957 = vpop.f32.mrb[0].mxu0
        %v3958 = vadd.f32 0.0, %v3957
        %v3959 = vpop.f32.mrb[0].mxu0
        %3960 = vmatprep.mubr.f32.mxu0 0.0
        %3961 = vmatmul.mubr.f32.gmra.mrb[0].mxu0 %v3617
        %v3962 = vpop.f32.mrb[0].mxu0
        %v3963 = vadd.f32 0.0, %v3962
        %v3964 = vpop.f32.mrb[0].mxu0
        %3965 = vmatprep.mubr.f32.mxu0 0.0
        %3966 = vmatmul.mubr.f32.gmra.mrb[0].mxu0 %v3620
        %v3967 = vpop.f32.mrb[0].mxu0
        %v3968 = vadd.f32 0.0, %v3967
        %v3969 = vpop.f32.mrb[0].mxu0
        %3970 = vmatprep.mubr.f32.mxu0 0.0
        %3971 = vmatmul.mubr.f32.gmra.mrb[0].mxu0 %v3623
        %v3972 = vpop.f32.mrb[0].mxu0
        %v3973 = vadd.f32 0.0, %v3972
        %v3974 = vpop.f32.mrb[0].mxu0
        %3975 = vmatprep.mubr.f32.mxu0 0.0
        %3976 = vmatmul.mubr.f32.gmra.mrb[0].mxu0 %v3626
        %v3977 = vpop.f32.mrb[0].mxu0
        %v3978 = vadd.f32 0.0, %v3977
        %v3979 = vpop.f32.mrb[0].mxu0
        %3980 = vmatprep.mubr.f32.mxu0 0.0
        %3981 = vmatmul.mubr.f32.gmra.mrb[0].mxu0 %v3629
        %v3982 = vpop.f32.mrb[0].mxu0
        %v3983 = vadd.f32 0.0, %v3982
        %v3984 = vpop.f32.mrb[0].mxu0
        %3985 = vmatprep.mubr.f32.mxu0 0.0
        %3986 = vmatmul.mubr.f32.gmra.mrb[0].mxu0 %v3632
        %v3987 = vpop.f32.mrb[0].mxu0
        %v3988 = vadd.f32 0.0, %v3987
        %v3989 = vpop.f32.mrb[0].mxu0
        %3990 = vmatprep.mubr.f32.mxu0 0.0
        %3991 = vmatmul.mubr.f32.gmra.mrb[0].mxu0 %v3635
        %v3992 = vpop.f32.mrb[0].mxu0
        %v3993 = vadd.f32 0.0, %v3992
        %v3994 = vpop.f32.mrb[0].mxu0
        %3995 = vmatprep.mubr.f32.mxu0 0.0
        %3996 = vmatmul.mubr.f32.gmra.mrb[0].mxu0 %v3638
        %v3997 = vpop.f32.mrb[0].mxu0
        %v3998 = vadd.f32 0.0, %v3997
        %v3999 = vpop.f32.mrb[0].mxu0
        %4000 = vmatprep.mubr.f32.mxu0 0.0
        %4001 = vmatmul.mubr.f32.gmra.mrb[0].mxu0 %v3641
        %v4002 = vpop.f32.mrb[0].mxu0
        %v4003 = vadd.f32 0.0, %v4002
        %v4004 = vpop.f32.mrb[0].mxu0
        %4005 = vmatprep.mubr.f32.mxu0 0.0
        %4006 = vmatmul.mubr.f32.gmra.mrb[0].mxu0 %v3644
        %v4007 = vpop.f32.mrb[0].mxu0
        %v4008 = vadd.f32 0.0, %v4007
        %v4009 = vpop.f32.mrb[0].mxu0
        %4010 = vmatprep.mubr.f32.mxu0 0.0
        %4011 = vmatmul.mubr.f32.gmra.mrb[0].mxu0 %v3647
        %v4012 = vpop.f32.mrb[0].mxu0
        %v4013 = vadd.f32 0.0, %v4012
        %v4014 = vpop.f32.mrb[0].mxu0
        %4015 = vmatprep.mubr.f32.mxu0 0.0
        %4016 = vmatmul.mubr.f32.gmra.mrb[0].mxu0 %v3650
        %v4017 = vpop.f32.mrb[0].mxu0
        %v4018 = vadd.f32 0.0, %v4017
        %v4019 = vpop.f32.mrb[0].mxu0
        %4020 = vmatprep.mubr.f32.mxu0 0.0
        %4021 = vmatmul.mubr.f32.gmra.mrb[0].mxu0 %v3653
        %v4022 = vpop.f32.mrb[0].mxu0
        %v4023 = vadd.f32 0.0, %v4022
        %v4024 = vpop.f32.mrb[0].mxu0
        %4025 = vmatprep.mubr.f32.mxu0 0.0
        %4026 = vmatmul.mubr.f32.gmra.mrb[0].mxu0 %v3656
        %v4027 = vpop.f32.mrb[0].mxu0
        %v4028 = vadd.f32 0.0, %v4027
        %v4029 = vpop.f32.mrb[0].mxu0
        %4030 = vmatprep.mubr.f32.mxu0 0.0
        %4031 = vmatmul.mubr.f32.gmra.mrb[0].mxu0 %v3659
        %v4032 = vpop.f32.mrb[0].mxu0
        %v4033 = vadd.f32 0.0, %v4032
        %v4034 = vpop.f32.mrb[0].mxu0
        %4035 = vmatprep.mubr.f32.mxu0 0.0
        %4036 = vmatmul.mubr.f32.gmra.mrb[0].mxu0 %v3662
        %v4037 = vpop.f32.mrb[0].mxu0
        %v4038 = vadd.f32 0.0, %v4037
        %v4039 = vpop.f32.mrb[0].mxu0
        %4040 = vmatprep.mubr.f32.mxu0 0.0
        %4041 = vmatmul.mubr.f32.gmra.mrb[0].mxu0 %v3665
        %v4042 = vpop.f32.mrb[0].mxu0
        %v4043 = vadd.f32 0.0, %v4042
        %v4044 = vpop.f32.mrb[0].mxu0
        %4045 = vmatprep.mubr.f32.mxu0 0.0
        %4046 = vmatmul.mubr.f32.gmra.mrb[0].mxu0 %v3668
        %v4047 = vpop.f32.mrb[0].mxu0
        %v4048 = vadd.f32 0.0, %v4047
        %v4049 = vpop.f32.mrb[0].mxu0
        %4050 = vmatprep.mubr.f32.mxu0 0.0
        %4051 = vmatmul.mubr.f32.gmra.mrb[0].mxu0 %v3671
        %v4052 = vpop.f32.mrb[0].mxu0
        %v4053 = vadd.f32 0.0, %v4052
        %v4054 = vpop.f32.mrb[0].mxu0
        %4055 = vmatprep.mubr.f32.mxu0 0.0
        %4056 = vmatmul.mubr.f32.gmra.mrb[0].mxu0 %v3674
        %v4057 = vpop.f32.mrb[0].mxu0
        %v4058 = vadd.f32 0.0, %v4057
        %v4059 = vpop.f32.mrb[0].mxu0
        %4060 = vmatprep.mubr.f32.mxu0 0.0
        %4061 = vmatmul.mubr.f32.gmra.mrb[0].mxu0 %v3677
        %v4062 = vpop.f32.mrb[0].mxu0
        %v4063 = vadd.f32 0.0, %v4062
        %v4064 = vpop.f32.mrb[0].mxu0
        %4065 = vmatprep.mubr.f32.mxu0 0.0
        %4066 = vmatmul.mubr.f32.gmra.mrb[0].mxu0 %v3680
        %v4067 = vpop.f32.mrb[0].mxu0
        %v4068 = vadd.f32 0.0, %v4067
        %v4069 = vpop.f32.mrb[0].mxu0
        %4070 = vmatprep.mubr.f32.mxu0 0.0
        %4071 = vmatmul.mubr.f32.gmra.mrb[0].mxu0 %v3683
        %v4072 = vpop.f32.mrb[0].mxu0
        %v4073 = vadd.f32 0.0, %v4072
        %v4074 = vpop.f32.mrb[0].mxu0
        %4075 = vmatprep.mubr.f32.mxu0 0.0
        %4076 = vmatmul.mubr.f32.gmra.mrb[0].mxu0 %v3686
        %v4077 = vpop.f32.mrb[0].mxu0
        %v4078 = vadd.f32 0.0, %v4077
        %v4079 = vpop.f32.mrb[0].mxu0
        %4080 = vmatprep.mubr.f32.mxu0 0.0
        %4081 = vmatmul.mubr.f32.gmra.mrb[0].mxu0 %v3689
        %v4082 = vpop.f32.mrb[0].mxu0
        %v4083 = vadd.f32 0.0, %v4082
        %v4084 = vpop.f32.mrb[0].mxu0
        %4085 = vmatprep.mubr.f32.mxu0 0.0
        %4086 = vmatmul.mubr.f32.gmra.mrb[0].mxu0 %v3692
        %v4087 = vpop.f32.mrb[0].mxu0
        %v4088 = vadd.f32 0.0, %v4087
        %v4089 = vpop.f32.mrb[0].mxu0
        %4090 = vmatprep.mubr.f32.mxu0 0.0
        %4091 = vmatmul.mubr.f32.gmra.mrb[0].mxu0 %v3695
        %v4092 = vpop.f32.mrb[0].mxu0
        %v4093 = vadd.f32 0.0, %v4092
        %v4094 = vpop.f32.mrb[0].mxu0
        %4095 = vmatprep.mubr.f32.mxu0 0.0
        %4096 = vmatmul.mubr.f32.gmra.mrb[0].mxu0 %v3698
        %v4097 = vpop.f32.mrb[0].mxu0
        %v4098 = vadd.f32 0.0, %v4097
        %v4099 = vpop.f32.mrb[0].mxu0
        %4100 = vmatprep.mubr.f32.mxu0 0.0
        %4101 = vmatmul.mubr.f32.gmra.mrb[0].mxu0 %v3701
        %v4102 = vpop.f32.mrb[0].mxu0
        %v4103 = vadd.f32 0.0, %v4102
        %v4104 = vpop.f32.mrb[0].mxu0
        %4105 = vmatprep.mubr.f32.mxu0 0.0
        %4106 = vmatmul.mubr.f32.gmra.mrb[0].mxu0 %v3704
        %v4107 = vpop.f32.mrb[0].mxu0
        %v4108 = vadd.f32 0.0, %v4107
        %v4109 = vpop.f32.mrb[0].mxu0
        %4110 = vmatprep.mubr.f32.mxu0 0.0
        %4111 = vmatmul.mubr.f32.gmra.mrb[0].mxu0 %v3707
        %v4112 = vpop.f32.mrb[0].mxu0
        %v4113 = vadd.f32 0.0, %v4112
        %v4114 = vpop.f32.mrb[0].mxu0
        %4115 = vmatprep.mubr.f32.mxu0 0.0
        %4116 = vmatmul.mubr.f32.gmra.mrb[0].mxu0 %v3710
        %v4117 = vpop.f32.mrb[0].mxu0
        %v4118 = vadd.f32 0.0, %v4117
        %v4119 = vpop.f32.mrb[0].mxu0
        %4120 = vmatprep.mubr.f32.mxu0 0.0
        %4121 = vmatmul.mubr.f32.gmra.mrb[0].mxu0 %v3713
        %v4122 = vpop.f32.mrb[0].mxu0
        %v4123 = vadd.f32 0.0, %v4122
        %v4124 = vpop.f32.mrb[0].mxu0
        %4125 = vmatprep.mubr.f32.mxu0 0.0
        %4126 = vmatmul.mubr.f32.gmra.mrb[0].mxu0 %v3716
        %v4127 = vpop.f32.mrb[0].mxu0
        %v4128 = vadd.f32 0.0, %v4127
        %v4129 = vpop.f32.mrb[0].mxu0
        %4130 = vmatprep.mubr.f32.mxu0 0.0
        %4131 = vmatmul.mubr.f32.gmra.mrb[0].mxu0 %v3719
        %v4132 = vpop.f32.mrb[0].mxu0
        %v4133 = vadd.f32 0.0, %v4132
        %v4134 = vpop.f32.mrb[0].mxu0
        %4135 = vmatprep.mubr.f32.mxu0 0.0
        %4136 = vmatmul.mubr.f32.gmra.mrb[0].mxu0 %v3722
        %v4137 = vpop.f32.mrb[0].mxu0
        %v4138 = vadd.f32 0.0, %v4137
        %v4139 = vpop.f32.mrb[0].mxu0
        %4140 = vmatprep.mubr.f32.mxu0 0.0
        %4141 = vmatmul.mubr.f32.gmra.mrb[0].mxu0 %v3725
        %v4142 = vpop.f32.mrb[0].mxu0
        %v4143 = vadd.f32 0.0, %v4142
        %v4144 = vpop.f32.mrb[0].mxu0
        %4145 = vmatprep.mubr.f32.mxu0 0.0
        %4146 = vmatmul.mubr.f32.gmra.mrb[0].mxu0 %v3728
        %v4147 = vpop.f32.mrb[0].mxu0
        %v4148 = vadd.f32 0.0, %v4147
        %v4149 = vpop.f32.mrb[0].mxu0
        %4150 = vmatprep.mubr.f32.mxu0 0.0
        %4151 = vmatmul.mubr.f32.gmra.mrb[0].mxu0 %v3731
        %v4152 = vpop.f32.mrb[0].mxu0
        %v4153 = vadd.f32 0.0, %v4152
        %v4154 = vpop.f32.mrb[0].mxu0
        %4155 = vmatprep.mubr.f32.mxu0 0.0
        %4156 = vmatmul.mubr.f32.gmra.mrb[0].mxu0 %v3734
        %v4157 = vpop.f32.mrb[0].mxu0
        %v4158 = vadd.f32 0.0, %v4157
        %v4159 = vpop.f32.mrb[0].mxu0
        %4160 = vmatprep.mubr.f32.mxu0 0.0
        %4161 = vmatmul.mubr.f32.gmra.mrb[0].mxu0 %v3737
        %v4162 = vpop.f32.mrb[0].mxu0
        %v4163 = vadd.f32 0.0, %v4162
        %v4164 = vpop.f32.mrb[0].mxu0
        %4165 = vmatprep.mubr.f32.mxu0 0.0
        %4166 = vmatmul.mubr.f32.gmra.mrb[0].mxu0 %v3740
        %v4167 = vpop.f32.mrb[0].mxu0
        %v4168 = vadd.f32 0.0, %v4167
        %v4169 = vpop.f32.mrb[0].mxu0
        %4170 = vdwg.mxu0
        %vm4171 = vcmask 261120
        %4172 = vst.msk [vmem:[#allocation3] sm:$0xff] %vm4171, %v3813
        %4173 = vst.msk [vmem:[#allocation3 + $0x8] sm:$0xff] %vm4171, %v3818
        %4174 = vst.msk [vmem:[#allocation3 + $0x10] sm:$0xff] %vm4171, %v3823
        %4175 = vst.msk [vmem:[#allocation3 + $0x18] sm:$0xff] %vm4171, %v3828
        %4176 = vst.msk [vmem:[#allocation3 + $0x20] sm:$0xff] %vm4171, %v3833
        %4177 = vst.msk [vmem:[#allocation3 + $0x28] sm:$0xff] %vm4171, %v3838
        %4178 = vst.msk [vmem:[#allocation3 + $0x30] sm:$0xff] %vm4171, %v3843
        %4179 = vst.msk [vmem:[#allocation3 + $0x38] sm:$0xff] %vm4171, %v3848
        %4180 = vst.msk [vmem:[#allocation3 + $0x40] sm:$0xff] %vm4171, %v3853
        %4181 = vst.msk [vmem:[#allocation3 + $0x48] sm:$0xff] %vm4171, %v3858
        %4182 = vst.msk [vmem:[#allocation3 + $0x50] sm:$0xff] %vm4171, %v3863
        %4183 = vst.msk [vmem:[#allocation3 + $0x58] sm:$0xff] %vm4171, %v3868
        %4184 = vst.msk [vmem:[#allocation3 + $0x60] sm:$0xff] %vm4171, %v3873
        %4185 = vst.msk [vmem:[#allocation3 + $0x68] sm:$0xff] %vm4171, %v3878
        %4186 = vst.msk [vmem:[#allocation3 + $0x70] sm:$0xff] %vm4171, %v3883
        %4187 = vst.msk [vmem:[#allocation3 + $0x78] sm:$0xff] %vm4171, %v3888
        %4188 = vst.msk [vmem:[#allocation3 + $0x80] sm:$0xff] %vm4171, %v3893
        %4189 = vst.msk [vmem:[#allocation3 + $0x88] sm:$0xff] %vm4171, %v3898
        %4190 = vst.msk [vmem:[#allocation3 + $0x90] sm:$0xff] %vm4171, %v3903
        %4191 = vst.msk [vmem:[#allocation3 + $0x98] sm:$0xff] %vm4171, %v3908
        %4192 = vst.msk [vmem:[#allocation3 + $0xa0] sm:$0xff] %vm4171, %v3913
        %4193 = vst.msk [vmem:[#allocation3 + $0xa8] sm:$0xff] %vm4171, %v3918
        %4194 = vst.msk [vmem:[#allocation3 + $0xb0] sm:$0xff] %vm4171, %v3923
        %4195 = vst.msk [vmem:[#allocation3 + $0xb8] sm:$0xff] %vm4171, %v3928
        %4196 = vst.msk [vmem:[#allocation3 + $0xc0] sm:$0xff] %vm4171, %v3933
        %4197 = vst.msk [vmem:[#allocation3 + $0xc8] sm:$0xff] %vm4171, %v3938
        %4198 = vst.msk [vmem:[#allocation3 + $0xd0] sm:$0xff] %vm4171, %v3943
        %4199 = vst.msk [vmem:[#allocation3 + $0xd8] sm:$0xff] %vm4171, %v3948
        %4200 = vst.msk [vmem:[#allocation3 + $0xe0] sm:$0xff] %vm4171, %v3953
        %4201 = vst.msk [vmem:[#allocation3 + $0xe8] sm:$0xff] %vm4171, %v3958
        %4202 = vst.msk [vmem:[#allocation3 + $0xf0] sm:$0xff] %vm4171, %v3963
        %4203 = vst.msk [vmem:[#allocation3 + $0xf8] sm:$0xff] %vm4171, %v3968
        %4204 = vst.msk [vmem:[#allocation3 + $0x100] sm:$0xff] %vm4171, %v3973
        %4205 = vst.msk [vmem:[#allocation3 + $0x108] sm:$0xff] %vm4171, %v3978
        %4206 = vst.msk [vmem:[#allocation3 + $0x110] sm:$0xff] %vm4171, %v3983
        %4207 = vst.msk [vmem:[#allocation3 + $0x118] sm:$0xff] %vm4171, %v3988
        %4208 = vst.msk [vmem:[#allocation3 + $0x120] sm:$0xff] %vm4171, %v3993
        %4209 = vst.msk [vmem:[#allocation3 + $0x128] sm:$0xff] %vm4171, %v3998
        %4210 = vst.msk [vmem:[#allocation3 + $0x130] sm:$0xff] %vm4171, %v4003
        %4211 = vst.msk [vmem:[#allocation3 + $0x138] sm:$0xff] %vm4171, %v4008
        %4212 = vst.msk [vmem:[#allocation3 + $0x140] sm:$0xff] %vm4171, %v4013
        %4213 = vst.msk [vmem:[#allocation3 + $0x148] sm:$0xff] %vm4171, %v4018
        %4214 = vst.msk [vmem:[#allocation3 + $0x150] sm:$0xff] %vm4171, %v4023
        %4215 = vst.msk [vmem:[#allocation3 + $0x158] sm:$0xff] %vm4171, %v4028
        %4216 = vst.msk [vmem:[#allocation3 + $0x160] sm:$0xff] %vm4171, %v4033
        %4217 = vst.msk [vmem:[#allocation3 + $0x168] sm:$0xff] %vm4171, %v4038
        %4218 = vst.msk [vmem:[#allocation3 + $0x170] sm:$0xff] %vm4171, %v4043
        %4219 = vst.msk [vmem:[#allocation3 + $0x178] sm:$0xff] %vm4171, %v4048
        %4220 = vst.msk [vmem:[#allocation3 + $0x180] sm:$0xff] %vm4171, %v4053
        %4221 = vst.msk [vmem:[#allocation3 + $0x188] sm:$0xff] %vm4171, %v4058
        %4222 = vst.msk [vmem:[#allocation3 + $0x190] sm:$0xff] %vm4171, %v4063
        %4223 = vst.msk [vmem:[#allocation3 + $0x198] sm:$0xff] %vm4171, %v4068
        %4224 = vst.msk [vmem:[#allocation3 + $0x1a0] sm:$0xff] %vm4171, %v4073
        %4225 = vst.msk [vmem:[#allocation3 + $0x1a8] sm:$0xff] %vm4171, %v4078
        %4226 = vst.msk [vmem:[#allocation3 + $0x1b0] sm:$0xff] %vm4171, %v4083
        %4227 = vst.msk [vmem:[#allocation3 + $0x1b8] sm:$0xff] %vm4171, %v4088
        %4228 = vst.msk [vmem:[#allocation3 + $0x1c0] sm:$0xff] %vm4171, %v4093
        %4229 = vst.msk [vmem:[#allocation3 + $0x1c8] sm:$0xff] %vm4171, %v4098
        %4230 = vst.msk [vmem:[#allocation3 + $0x1d0] sm:$0xff] %vm4171, %v4103
        %4231 = vst.msk [vmem:[#allocation3 + $0x1d8] sm:$0xff] %vm4171, %v4108
        %4232 = vst.msk [vmem:[#allocation3 + $0x1e0] sm:$0xff] %vm4171, %v4113
        %4233 = vst.msk [vmem:[#allocation3 + $0x1e8] sm:$0xff] %vm4171, %v4118
        %4234 = vst.msk [vmem:[#allocation3 + $0x1f0] sm:$0xff] %vm4171, %v4123
        %4235 = vst.msk [vmem:[#allocation3 + $0x1f8] sm:$0xff] %vm4171, %v4128
        %4236 = vst.msk [vmem:[#allocation3 + $0x200] sm:$0xff] %vm4171, %v4133
        %4237 = vst.msk [vmem:[#allocation3 + $0x208] sm:$0xff] %vm4171, %v4138
        %4238 = vst.msk [vmem:[#allocation3 + $0x210] sm:$0xff] %vm4171, %v4143
        %4239 = vst.msk [vmem:[#allocation3 + $0x218] sm:$0xff] %vm4171, %v4148
        %4240 = vst.msk [vmem:[#allocation3 + $0x220] sm:$0xff] %vm4171, %v4153
        %4241 = vst.msk [vmem:[#allocation3 + $0x228] sm:$0xff] %vm4171, %v4158
        %4242 = vst.msk [vmem:[#allocation3 + $0x230] sm:$0xff] %vm4171, %v4163
        %4243 = vst.msk [vmem:[#allocation3 + $0x238] sm:$0xff] %vm4171, %v4168
        %v4244 = vld [vmem:[#allocation3] ss:$2 sm:$0xff]
        %s4245 = scalar_lea.vmem [#allocation3], 16
        %v4246 = vld [vmem:[%s4245] ss:$2 sm:$0xff]
        %s4247 = scalar_lea.vmem [#allocation3], 32
        %v4248 = vld [vmem:[%s4247] ss:$2 sm:$0xff]
        %s4249 = scalar_lea.vmem [#allocation3], 48
        %v4250 = vld [vmem:[%s4249] ss:$2 sm:$0xff]
        %s4251 = scalar_lea.vmem [#allocation3], 64
        %v4252 = vld [vmem:[%s4251] ss:$2 sm:$0xff]
        %s4253 = scalar_lea.vmem [#allocation3], 80
        %v4254 = vld [vmem:[%s4253] ss:$2 sm:$0xff]
        %s4255 = scalar_lea.vmem [#allocation3], 96
        %v4256 = vld [vmem:[%s4255] ss:$2 sm:$0xff]
        %s4257 = scalar_lea.vmem [#allocation3], 112
        %v4258 = vld [vmem:[%s4257] ss:$2 sm:$0xff]
        %s4259 = scalar_lea.vmem [#allocation3], 128
        %v4260 = vld [vmem:[%s4259] ss:$2 sm:$0xff]
        %s4261 = scalar_lea.vmem [#allocation3], 144
        %v4262 = vld [vmem:[%s4261] ss:$2 sm:$0xff]
        %s4263 = scalar_lea.vmem [#allocation3], 160
        %v4264 = vld [vmem:[%s4263] ss:$2 sm:$0xff]
        %s4265 = scalar_lea.vmem [#allocation3], 176
        %v4266 = vld [vmem:[%s4265] ss:$2 sm:$0xff]
        %s4267 = scalar_lea.vmem [#allocation3], 192
        %v4268 = vld [vmem:[%s4267] ss:$2 sm:$0xff]
        %s4269 = scalar_lea.vmem [#allocation3], 208
        %v4270 = vld [vmem:[%s4269] ss:$2 sm:$0xff]
        %s4271 = scalar_lea.vmem [#allocation3], 224
        %v4272 = vld [vmem:[%s4271] ss:$2 sm:$0xff]
        %s4273 = scalar_lea.vmem [#allocation3], 240
        %v4274 = vld [vmem:[%s4273] ss:$2 sm:$0xff]
        %s4275 = scalar_lea.vmem [#allocation3], 256
        %v4276 = vld [vmem:[%s4275] ss:$2 sm:$0xff]
        %s4277 = scalar_lea.vmem [#allocation3], 272
        %v4278 = vld [vmem:[%s4277] ss:$2 sm:$0xff]
        %s4279 = scalar_lea.vmem [#allocation3], 288
        %v4280 = vld [vmem:[%s4279] ss:$2 sm:$0xff]
        %s4281 = scalar_lea.vmem [#allocation3], 304
        %v4282 = vld [vmem:[%s4281] ss:$2 sm:$0xff]
        %s4283 = scalar_lea.vmem [#allocation3], 320
        %v4284 = vld [vmem:[%s4283] ss:$2 sm:$0xff]
        %s4285 = scalar_lea.vmem [#allocation3], 336
        %v4286 = vld [vmem:[%s4285] ss:$2 sm:$0xff]
        %s4287 = scalar_lea.vmem [#allocation3], 352
        %v4288 = vld [vmem:[%s4287] ss:$2 sm:$0xff]
        %s4289 = scalar_lea.vmem [#allocation3], 368
        %v4290 = vld [vmem:[%s4289] ss:$2 sm:$0xff]
        %s4291 = scalar_lea.vmem [#allocation3], 384
        %v4292 = vld [vmem:[%s4291] ss:$2 sm:$0xff]
        %s4293 = scalar_lea.vmem [#allocation3], 400
        %v4294 = vld [vmem:[%s4293] ss:$2 sm:$0xff]
        %s4295 = scalar_lea.vmem [#allocation3], 416
        %v4296 = vld [vmem:[%s4295] ss:$2 sm:$0xff]
        %s4297 = scalar_lea.vmem [#allocation3], 432
        %v4298 = vld [vmem:[%s4297] ss:$2 sm:$0xff]
        %s4299 = scalar_lea.vmem [#allocation3], 448
        %v4300 = vld [vmem:[%s4299] ss:$2 sm:$0xff]
        %s4301 = scalar_lea.vmem [#allocation3], 464
        %v4302 = vld [vmem:[%s4301] ss:$2 sm:$0xff]
        %s4303 = scalar_lea.vmem [#allocation3], 480
        %v4304 = vld [vmem:[%s4303] ss:$2 sm:$0xff]
        %s4305 = scalar_lea.vmem [#allocation3], 496
        %v4306 = vld [vmem:[%s4305] ss:$2 sm:$0xff]
        %s4307 = scalar_lea.vmem [#allocation3], 512
        %v4308 = vld [vmem:[%s4307] ss:$2 sm:$0xff]
        %s4309 = scalar_lea.vmem [#allocation3], 528
        %v4310 = vld [vmem:[%s4309] ss:$2 sm:$0xff]
        %s4311 = scalar_lea.vmem [#allocation3], 544
        %v4312 = vld [vmem:[%s4311] ss:$2 sm:$0xff]
        %s4313 = scalar_lea.vmem [#allocation3], 560
        %v4314 = vld [vmem:[%s4313] ss:$2 sm:$0xff]
        %s4315 = scalar_lea.vmem [#allocation3], 1
        %v4316 = vld [vmem:[%s4315] ss:$2 sm:$0xff]
        %s4317 = scalar_lea.vmem [#allocation3], 17
        %v4318 = vld [vmem:[%s4317] ss:$2 sm:$0xff]
        %s4319 = scalar_lea.vmem [#allocation3], 33
        %v4320 = vld [vmem:[%s4319] ss:$2 sm:$0xff]
        %s4321 = scalar_lea.vmem [#allocation3], 49
        %v4322 = vld [vmem:[%s4321] ss:$2 sm:$0xff]
        %s4323 = scalar_lea.vmem [#allocation3], 65
        %v4324 = vld [vmem:[%s4323] ss:$2 sm:$0xff]
        %s4325 = scalar_lea.vmem [#allocation3], 81
        %v4326 = vld [vmem:[%s4325] ss:$2 sm:$0xff]
        %s4327 = scalar_lea.vmem [#allocation3], 97
        %v4328 = vld [vmem:[%s4327] ss:$2 sm:$0xff]
        %s4329 = scalar_lea.vmem [#allocation3], 113
        %v4330 = vld [vmem:[%s4329] ss:$2 sm:$0xff]
        %s4331 = scalar_lea.vmem [#allocation3], 129
        %v4332 = vld [vmem:[%s4331] ss:$2 sm:$0xff]
        %s4333 = scalar_lea.vmem [#allocation3], 145
        %v4334 = vld [vmem:[%s4333] ss:$2 sm:$0xff]
        %s4335 = scalar_lea.vmem [#allocation3], 161
        %v4336 = vld [vmem:[%s4335] ss:$2 sm:$0xff]
        %s4337 = scalar_lea.vmem [#allocation3], 177
        %v4338 = vld [vmem:[%s4337] ss:$2 sm:$0xff]
        %s4339 = scalar_lea.vmem [#allocation3], 193
        %v4340 = vld [vmem:[%s4339] ss:$2 sm:$0xff]
        %s4341 = scalar_lea.vmem [#allocation3], 209
        %v4342 = vld [vmem:[%s4341] ss:$2 sm:$0xff]
        %s4343 = scalar_lea.vmem [#allocation3], 225
        %v4344 = vld [vmem:[%s4343] ss:$2 sm:$0xff]
        %s4345 = scalar_lea.vmem [#allocation3], 241
        %v4346 = vld [vmem:[%s4345] ss:$2 sm:$0xff]
        %s4347 = scalar_lea.vmem [#allocation3], 257
        %v4348 = vld [vmem:[%s4347] ss:$2 sm:$0xff]
        %s4349 = scalar_lea.vmem [#allocation3], 273
        %v4350 = vld [vmem:[%s4349] ss:$2 sm:$0xff]
        %s4351 = scalar_lea.vmem [#allocation3], 289
        %v4352 = vld [vmem:[%s4351] ss:$2 sm:$0xff]
        %s4353 = scalar_lea.vmem [#allocation3], 305
        %v4354 = vld [vmem:[%s4353] ss:$2 sm:$0xff]
        %s4355 = scalar_lea.vmem [#allocation3], 321
        %v4356 = vld [vmem:[%s4355] ss:$2 sm:$0xff]
        %s4357 = scalar_lea.vmem [#allocation3], 337
        %v4358 = vld [vmem:[%s4357] ss:$2 sm:$0xff]
        %s4359 = scalar_lea.vmem [#allocation3], 353
        %v4360 = vld [vmem:[%s4359] ss:$2 sm:$0xff]
        %s4361 = scalar_lea.vmem [#allocation3], 369
        %v4362 = vld [vmem:[%s4361] ss:$2 sm:$0xff]
        %s4363 = scalar_lea.vmem [#allocation3], 385
        %v4364 = vld [vmem:[%s4363] ss:$2 sm:$0xff]
        %s4365 = scalar_lea.vmem [#allocation3], 401
        %v4366 = vld [vmem:[%s4365] ss:$2 sm:$0xff]
        %s4367 = scalar_lea.vmem [#allocation3], 417
        %v4368 = vld [vmem:[%s4367] ss:$2 sm:$0xff]
        %s4369 = scalar_lea.vmem [#allocation3], 433
        %v4370 = vld [vmem:[%s4369] ss:$2 sm:$0xff]
        %s4371 = scalar_lea.vmem [#allocation3], 449
        %v4372 = vld [vmem:[%s4371] ss:$2 sm:$0xff]
        %s4373 = scalar_lea.vmem [#allocation3], 465
        %v4374 = vld [vmem:[%s4373] ss:$2 sm:$0xff]
        %s4375 = scalar_lea.vmem [#allocation3], 481
        %v4376 = vld [vmem:[%s4375] ss:$2 sm:$0xff]
        %s4377 = scalar_lea.vmem [#allocation3], 497
        %v4378 = vld [vmem:[%s4377] ss:$2 sm:$0xff]
        %s4379 = scalar_lea.vmem [#allocation3], 513
        %v4380 = vld [vmem:[%s4379] ss:$2 sm:$0xff]
        %s4381 = scalar_lea.vmem [#allocation3], 529
        %v4382 = vld [vmem:[%s4381] ss:$2 sm:$0xff]
        %s4383 = scalar_lea.vmem [#allocation3], 545
        %v4384 = vld [vmem:[%s4383] ss:$2 sm:$0xff]
        %s4385 = scalar_lea.vmem [#allocation3], 561
        %v4386 = vld [vmem:[%s4385] ss:$2 sm:$0xff]
        %v4387 = vmax.f32 %v4244, %v4316
        %v4388 = vmax.f32 %v4246, %v4318
        %v4389 = vmax.f32 %v4248, %v4320
        %v4390 = vmax.f32 %v4250, %v4322
        %v4391 = vmax.f32 %v4252, %v4324
        %v4392 = vmax.f32 %v4254, %v4326
        %v4393 = vmax.f32 %v4256, %v4328
        %v4394 = vmax.f32 %v4258, %v4330
        %v4395 = vmax.f32 %v4260, %v4332
        %v4396 = vmax.f32 %v4262, %v4334
        %v4397 = vmax.f32 %v4264, %v4336
        %v4398 = vmax.f32 %v4266, %v4338
        %v4399 = vmax.f32 %v4268, %v4340
        %v4400 = vmax.f32 %v4270, %v4342
        %v4401 = vmax.f32 %v4272, %v4344
        %v4402 = vmax.f32 %v4274, %v4346
        %v4403 = vmax.f32 %v4276, %v4348
        %v4404 = vmax.f32 %v4278, %v4350
        %v4405 = vmax.f32 %v4280, %v4352
        %v4406 = vmax.f32 %v4282, %v4354
        %v4407 = vmax.f32 %v4284, %v4356
        %v4408 = vmax.f32 %v4286, %v4358
        %v4409 = vmax.f32 %v4288, %v4360
        %v4410 = vmax.f32 %v4290, %v4362
        %v4411 = vmax.f32 %v4292, %v4364
        %v4412 = vmax.f32 %v4294, %v4366
        %v4413 = vmax.f32 %v4296, %v4368
        %v4414 = vmax.f32 %v4298, %v4370
        %v4415 = vmax.f32 %v4300, %v4372
        %v4416 = vmax.f32 %v4302, %v4374
        %v4417 = vmax.f32 %v4304, %v4376
        %v4418 = vmax.f32 %v4306, %v4378
        %v4419 = vmax.f32 %v4308, %v4380
        %v4420 = vmax.f32 %v4310, %v4382
        %v4421 = vmax.f32 %v4312, %v4384
        %v4422 = vmax.f32 %v4314, %v4386
        %v4423 = vld [vmem:[#allocation18] sm:$0x1]
        %v4425 = vlaneseq
        %v4426 = vshrl.u32 %v4425, 7
        %v4427 = vsub.s32 0, %v4426
        %v4428 = vrot.slane %v4423, %v4427
        %v4430 = vadd.f32 %v4387, %v4428
        %v4431 = vadd.f32 %v4388, %v4428
        %v4432 = vadd.f32 %v4389, %v4428
        %v4433 = vadd.f32 %v4390, %v4428
        %v4434 = vadd.f32 %v4391, %v4428
        %v4435 = vadd.f32 %v4392, %v4428
        %v4436 = vadd.f32 %v4393, %v4428
        %v4437 = vadd.f32 %v4394, %v4428
        %v4438 = vadd.f32 %v4395, %v4428
        %v4439 = vadd.f32 %v4396, %v4428
        %v4440 = vadd.f32 %v4397, %v4428
        %v4441 = vadd.f32 %v4398, %v4428
        %v4442 = vadd.f32 %v4399, %v4428
        %v4443 = vadd.f32 %v4400, %v4428
        %v4444 = vadd.f32 %v4401, %v4428
        %v4445 = vadd.f32 %v4402, %v4428
        %v4446 = vadd.f32 %v4403, %v4428
        %v4447 = vadd.f32 %v4404, %v4428
        %v4448 = vadd.f32 %v4405, %v4428
        %v4449 = vadd.f32 %v4406, %v4428
        %v4450 = vadd.f32 %v4407, %v4428
        %v4451 = vadd.f32 %v4408, %v4428
        %v4452 = vadd.f32 %v4409, %v4428
        %v4453 = vadd.f32 %v4410, %v4428
        %v4454 = vadd.f32 %v4411, %v4428
        %v4455 = vadd.f32 %v4412, %v4428
        %v4456 = vadd.f32 %v4413, %v4428
        %v4457 = vadd.f32 %v4414, %v4428
        %v4458 = vadd.f32 %v4415, %v4428
        %v4459 = vadd.f32 %v4416, %v4428
        %v4460 = vadd.f32 %v4417, %v4428
        %v4461 = vadd.f32 %v4418, %v4428
        %v4462 = vadd.f32 %v4419, %v4428
        %v4463 = vadd.f32 %v4420, %v4428
        %v4464 = vadd.f32 %v4421, %v4428
        %v4465 = vadd.f32 %v4422, %v4428
        %v4466 = vmax.f32 %v4430, 0.0
        %v4467 = vmax.f32 %v4431, 0.0
        %v4468 = vmax.f32 %v4432, 0.0
        %v4469 = vmax.f32 %v4433, 0.0
        %v4470 = vmax.f32 %v4434, 0.0
        %v4471 = vmax.f32 %v4435, 0.0
        %v4472 = vmax.f32 %v4436, 0.0
        %v4473 = vmax.f32 %v4437, 0.0
        %v4474 = vmax.f32 %v4438, 0.0
        %v4475 = vmax.f32 %v4439, 0.0
        %v4476 = vmax.f32 %v4440, 0.0
        %v4477 = vmax.f32 %v4441, 0.0
        %v4478 = vmax.f32 %v4442, 0.0
        %v4479 = vmax.f32 %v4443, 0.0
        %v4480 = vmax.f32 %v4444, 0.0
        %v4481 = vmax.f32 %v4445, 0.0
        %v4482 = vmax.f32 %v4446, 0.0
        %v4483 = vmax.f32 %v4447, 0.0
        %v4484 = vmax.f32 %v4448, 0.0
        %v4485 = vmax.f32 %v4449, 0.0
        %v4486 = vmax.f32 %v4450, 0.0
        %v4487 = vmax.f32 %v4451, 0.0
        %v4488 = vmax.f32 %v4452, 0.0
        %v4489 = vmax.f32 %v4453, 0.0
        %v4490 = vmax.f32 %v4454, 0.0
        %v4491 = vmax.f32 %v4455, 0.0
        %v4492 = vmax.f32 %v4456, 0.0
        %v4493 = vmax.f32 %v4457, 0.0
        %v4494 = vmax.f32 %v4458, 0.0
        %v4495 = vmax.f32 %v4459, 0.0
        %v4496 = vmax.f32 %v4460, 0.0
        %v4497 = vmax.f32 %v4461, 0.0
        %v4498 = vmax.f32 %v4462, 0.0
        %v4499 = vmax.f32 %v4463, 0.0
        %v4500 = vmax.f32 %v4464, 0.0
        %v4501 = vmax.f32 %v4465, 0.0
        %v4502 = vld [vmem:[#allocation13] sm:$0xff]
        %v4503 = vld [vmem:[#allocation13 + $0x8] sm:$0xff]
        %v4504 = vld [vmem:[#allocation13 + $0x10] sm:$0xff]
        %v4505 = vld [vmem:[#allocation13 + $0x18] sm:$0xff]
        %v4506 = vld [vmem:[#allocation13 + $0x20] sm:$0xff]
        %v4507 = vld [vmem:[#allocation13 + $0x28] sm:$0xff]
        %v4508 = vld [vmem:[#allocation13 + $0x30] sm:$0xff]
        %v4509 = vld [vmem:[#allocation13 + $0x38] sm:$0xff]
        %v4510 = vld [vmem:[#allocation13 + $0x40] sm:$0xff]
        %v4511 = vld [vmem:[#allocation13 + $0x48] sm:$0xff]
        %v4512 = vld [vmem:[#allocation13 + $0x50] sm:$0xff]
        %v4513 = vld [vmem:[#allocation13 + $0x58] sm:$0xff]
        %v4514 = vld [vmem:[#allocation13 + $0x60] sm:$0xff]
        %v4515 = vld [vmem:[#allocation13 + $0x68] sm:$0xff]
        %v4516 = vld [vmem:[#allocation13 + $0x70] sm:$0xff]
        %v4517 = vld [vmem:[#allocation13 + $0x78] sm:$0xff]
        %v4518 = vld [vmem:[#allocation13 + $0x80] sm:$0xff]
        %v4519 = vld [vmem:[#allocation13 + $0x88] sm:$0xff]
        %v4520 = vld [vmem:[#allocation13 + $0x90] sm:$0xff]
        %v4521 = vld [vmem:[#allocation13 + $0x98] sm:$0xff]
        %v4522 = vld [vmem:[#allocation13 + $0xa0] sm:$0xff]
        %v4523 = vld [vmem:[#allocation13 + $0xa8] sm:$0xff]
        %v4524 = vld [vmem:[#allocation13 + $0xb0] sm:$0xff]
        %v4525 = vld [vmem:[#allocation13 + $0xb8] sm:$0xff]
        %v4526 = vld [vmem:[#allocation13 + $0xc0] sm:$0xff]
        %v4527 = vld [vmem:[#allocation13 + $0xc8] sm:$0xff]
        %v4528 = vld [vmem:[#allocation13 + $0xd0] sm:$0xff]
        %v4529 = vld [vmem:[#allocation13 + $0xd8] sm:$0xff]
        %v4530 = vld [vmem:[#allocation13 + $0xe0] sm:$0xff]
        %v4531 = vld [vmem:[#allocation13 + $0xe8] sm:$0xff]
        %v4532 = vld [vmem:[#allocation13 + $0xf0] sm:$0xff]
        %v4533 = vld [vmem:[#allocation13 + $0xf8] sm:$0xff]
        %v4534 = vld [vmem:[#allocation13 + $0x100] sm:$0xff]
        %v4535 = vld [vmem:[#allocation13 + $0x108] sm:$0xff]
        %v4536 = vld [vmem:[#allocation13 + $0x110] sm:$0xff]
        %v4537 = vld [vmem:[#allocation13 + $0x118] sm:$0xff]
        %vm4538 = vcmp.gt.f32.partialorder %v4502, 0.5
        %vm4539 = vcmp.gt.f32.partialorder %v4503, 0.5
        %vm4540 = vcmp.gt.f32.partialorder %v4504, 0.5
        %vm4541 = vcmp.gt.f32.partialorder %v4505, 0.5
        %vm4542 = vcmp.gt.f32.partialorder %v4506, 0.5
        %vm4543 = vcmp.gt.f32.partialorder %v4507, 0.5
        %vm4544 = vcmp.gt.f32.partialorder %v4508, 0.5
        %vm4545 = vcmp.gt.f32.partialorder %v4509, 0.5
        %vm4546 = vcmp.gt.f32.partialorder %v4510, 0.5
        %vm4547 = vcmp.gt.f32.partialorder %v4511, 0.5
        %vm4548 = vcmp.gt.f32.partialorder %v4512, 0.5
        %vm4549 = vcmp.gt.f32.partialorder %v4513, 0.5
        %vm4550 = vcmp.gt.f32.partialorder %v4514, 0.5
        %vm4551 = vcmp.gt.f32.partialorder %v4515, 0.5
        %vm4552 = vcmp.gt.f32.partialorder %v4516, 0.5
        %vm4553 = vcmp.gt.f32.partialorder %v4517, 0.5
        %vm4554 = vcmp.gt.f32.partialorder %v4518, 0.5
        %vm4555 = vcmp.gt.f32.partialorder %v4519, 0.5
        %vm4556 = vcmp.gt.f32.partialorder %v4520, 0.5
        %vm4557 = vcmp.gt.f32.partialorder %v4521, 0.5
        %vm4558 = vcmp.gt.f32.partialorder %v4522, 0.5
        %vm4559 = vcmp.gt.f32.partialorder %v4523, 0.5
        %vm4560 = vcmp.gt.f32.partialorder %v4524, 0.5
        %vm4561 = vcmp.gt.f32.partialorder %v4525, 0.5
        %vm4562 = vcmp.gt.f32.partialorder %v4526, 0.5
        %vm4563 = vcmp.gt.f32.partialorder %v4527, 0.5
        %vm4564 = vcmp.gt.f32.partialorder %v4528, 0.5
        %vm4565 = vcmp.gt.f32.partialorder %v4529, 0.5
        %vm4566 = vcmp.gt.f32.partialorder %v4530, 0.5
        %vm4567 = vcmp.gt.f32.partialorder %v4531, 0.5
        %vm4568 = vcmp.gt.f32.partialorder %v4532, 0.5
        %vm4569 = vcmp.gt.f32.partialorder %v4533, 0.5
        %vm4570 = vcmp.gt.f32.partialorder %v4534, 0.5
        %vm4571 = vcmp.gt.f32.partialorder %v4535, 0.5
        %vm4572 = vcmp.gt.f32.partialorder %v4536, 0.5
        %vm4573 = vcmp.gt.f32.partialorder %v4537, 0.5
        %v4574 = vsel %vm4538, %v4466, 0.0
        %v4575 = vsel %vm4539, %v4467, 0.0
        %v4576 = vsel %vm4540, %v4468, 0.0
        %v4577 = vsel %vm4541, %v4469, 0.0
        %v4578 = vsel %vm4542, %v4470, 0.0
        %v4579 = vsel %vm4543, %v4471, 0.0
        %v4580 = vsel %vm4544, %v4472, 0.0
        %v4581 = vsel %vm4545, %v4473, 0.0
        %v4582 = vsel %vm4546, %v4474, 0.0
        %v4583 = vsel %vm4547, %v4475, 0.0
        %v4584 = vsel %vm4548, %v4476, 0.0
        %v4585 = vsel %vm4549, %v4477, 0.0
        %v4586 = vsel %vm4550, %v4478, 0.0
        %v4587 = vsel %vm4551, %v4479, 0.0
        %v4588 = vsel %vm4552, %v4480, 0.0
        %v4589 = vsel %vm4553, %v4481, 0.0
        %v4590 = vsel %vm4554, %v4482, 0.0
        %v4591 = vsel %vm4555, %v4483, 0.0
        %v4592 = vsel %vm4556, %v4484, 0.0
        %v4593 = vsel %vm4557, %v4485, 0.0
        %v4594 = vsel %vm4558, %v4486, 0.0
        %v4595 = vsel %vm4559, %v4487, 0.0
        %v4596 = vsel %vm4560, %v4488, 0.0
        %v4597 = vsel %vm4561, %v4489, 0.0
        %v4598 = vsel %vm4562, %v4490, 0.0
        %v4599 = vsel %vm4563, %v4491, 0.0
        %v4600 = vsel %vm4564, %v4492, 0.0
        %v4601 = vsel %vm4565, %v4493, 0.0
        %v4602 = vsel %vm4566, %v4494, 0.0
        %v4603 = vsel %vm4567, %v4495, 0.0
        %v4604 = vsel %vm4568, %v4496, 0.0
        %v4605 = vsel %vm4569, %v4497, 0.0
        %v4606 = vsel %vm4570, %v4498, 0.0
        %v4607 = vsel %vm4571, %v4499, 0.0
        %v4608 = vsel %vm4572, %v4500, 0.0
        %v4609 = vsel %vm4573, %v4501, 0.0
        %vm4610 = vcmask 254976
        %4611 = vst.msk [vmem:[#allocation4] sm:$0x3] %vm4610, 0.0
        %4612 = vst.msk [vmem:[#allocation4 + $0x2] sm:$0xff] %vm4171, %v4574
        %4613 = vst.msk [vmem:[#allocation4 + $0xa] sm:$0xff] %vm4171, %v4575
        %4614 = vst.msk [vmem:[#allocation4 + $0x12] sm:$0xff] %vm4171, %v4576
        %4615 = vst.msk [vmem:[#allocation4 + $0x1a] sm:$0xff] %vm4171, %v4577
        %4616 = vst.msk [vmem:[#allocation4 + $0x22] sm:$0xff] %vm4171, %v4578
        %4617 = vst.msk [vmem:[#allocation4 + $0x2a] sm:$0xff] %vm4171, %v4579
        %4618 = vst.msk [vmem:[#allocation4 + $0x32] sm:$0xff] %vm4171, %v4580
        %4619 = vst.msk [vmem:[#allocation4 + $0x3a] sm:$0xff] %vm4171, %v4581
        %4620 = vst.msk [vmem:[#allocation4 + $0x42] sm:$0xff] %vm4171, %v4582
        %4621 = vst.msk [vmem:[#allocation4 + $0x4a] sm:$0xff] %vm4171, %v4583
        %4622 = vst.msk [vmem:[#allocation4 + $0x52] sm:$0xff] %vm4171, %v4584
        %4623 = vst.msk [vmem:[#allocation4 + $0x5a] sm:$0xff] %vm4171, %v4585
        %4624 = vst.msk [vmem:[#allocation4 + $0x62] sm:$0xff] %vm4171, %v4586
        %4625 = vst.msk [vmem:[#allocation4 + $0x6a] sm:$0xff] %vm4171, %v4587
        %4626 = vst.msk [vmem:[#allocation4 + $0x72] sm:$0xff] %vm4171, %v4588
        %4627 = vst.msk [vmem:[#allocation4 + $0x7a] sm:$0xff] %vm4171, %v4589
        %4628 = vst.msk [vmem:[#allocation4 + $0x82] sm:$0xff] %vm4171, %v4590
        %4629 = vst.msk [vmem:[#allocation4 + $0x8a] sm:$0xff] %vm4171, %v4591
        %4630 = vst.msk [vmem:[#allocation4 + $0x92] sm:$0xff] %vm4171, %v4592
        %4631 = vst.msk [vmem:[#allocation4 + $0x9a] sm:$0xff] %vm4171, %v4593
        %4632 = vst.msk [vmem:[#allocation4 + $0xa2] sm:$0xff] %vm4171, %v4594
        %4633 = vst.msk [vmem:[#allocation4 + $0xaa] sm:$0xff] %vm4171, %v4595
        %4634 = vst.msk [vmem:[#allocation4 + $0xb2] sm:$0xff] %vm4171, %v4596
        %4635 = vst.msk [vmem:[#allocation4 + $0xba] sm:$0xff] %vm4171, %v4597
        %4636 = vst.msk [vmem:[#allocation4 + $0xc2] sm:$0xff] %vm4171, %v4598
        %4637 = vst.msk [vmem:[#allocation4 + $0xca] sm:$0xff] %vm4171, %v4599
        %4638 = vst.msk [vmem:[#allocation4 + $0xd2] sm:$0xff] %vm4171, %v4600
        %4639 = vst.msk [vmem:[#allocation4 + $0xda] sm:$0xff] %vm4171, %v4601
        %4640 = vst.msk [vmem:[#allocation4 + $0xe2] sm:$0xff] %vm4171, %v4602
        %4641 = vst.msk [vmem:[#allocation4 + $0xea] sm:$0xff] %vm4171, %v4603
        %4642 = vst.msk [vmem:[#allocation4 + $0xf2] sm:$0xff] %vm4171, %v4604
        %4643 = vst.msk [vmem:[#allocation4 + $0xfa] sm:$0xff] %vm4171, %v4605
        %4644 = vst.msk [vmem:[#allocation4 + $0x102] sm:$0xff] %vm4171, %v4606
        %4645 = vst.msk [vmem:[#allocation4 + $0x10a] sm:$0xff] %vm4171, %v4607
        %4646 = vst.msk [vmem:[#allocation4 + $0x112] sm:$0xff] %vm4171, %v4608
        %vm4647 = vcmask 259072
        %4648 = vst.msk [vmem:[#allocation4 + $0x11a] sm:$0x3f] %vm4647, %v4609
        %v4649 = vld [vmem:[#allocation4] sm:$0xff]
        %v4650 = vld [vmem:[#allocation4 + $0x8] sm:$0xff]
        %v4651 = vld [vmem:[#allocation4 + $0x10] sm:$0xff]
        %v4652 = vld [vmem:[#allocation4 + $0x18] sm:$0xff]
        %v4653 = vld [vmem:[#allocation4 + $0x20] sm:$0xff]
        %v4654 = vld [vmem:[#allocation4 + $0x28] sm:$0xff]
        %v4655 = vld [vmem:[#allocation4 + $0x30] sm:$0xff]
        %v4656 = vld [vmem:[#allocation4 + $0x38] sm:$0xff]
        %v4657 = vld [vmem:[#allocation4 + $0x40] sm:$0xff]
        %v4658 = vld [vmem:[#allocation4 + $0x48] sm:$0xff]
        %v4659 = vld [vmem:[#allocation4 + $0x50] sm:$0xff]
        %v4660 = vld [vmem:[#allocation4 + $0x58] sm:$0xff]
        %v4661 = vld [vmem:[#allocation4 + $0x60] sm:$0xff]
        %v4662 = vld [vmem:[#allocation4 + $0x68] sm:$0xff]
        %v4663 = vld [vmem:[#allocation4 + $0x70] sm:$0xff]
        %v4664 = vld [vmem:[#allocation4 + $0x78] sm:$0xff]
        %v4665 = vld [vmem:[#allocation4 + $0x80] sm:$0xff]
        %v4666 = vld [vmem:[#allocation4 + $0x88] sm:$0xff]
        %v4667 = vld [vmem:[#allocation4 + $0x90] sm:$0xff]
        %v4668 = vld [vmem:[#allocation4 + $0x98] sm:$0xff]
        %v4669 = vld [vmem:[#allocation4 + $0xa0] sm:$0xff]
        %v4670 = vld [vmem:[#allocation4 + $0xa8] sm:$0xff]
        %v4671 = vld [vmem:[#allocation4 + $0xb0] sm:$0xff]
        %v4672 = vld [vmem:[#allocation4 + $0xb8] sm:$0xff]
        %v4673 = vld [vmem:[#allocation4 + $0xc0] sm:$0xff]
        %v4674 = vld [vmem:[#allocation4 + $0xc8] sm:$0xff]
        %v4675 = vld [vmem:[#allocation4 + $0xd0] sm:$0xff]
        %v4676 = vld [vmem:[#allocation4 + $0xd8] sm:$0xff]
        %v4677 = vld [vmem:[#allocation4 + $0xe0] sm:$0xff]
        %v4678 = vld [vmem:[#allocation4 + $0xe8] sm:$0xff]
        %v4679 = vld [vmem:[#allocation4 + $0xf0] sm:$0xff]
        %v4680 = vld [vmem:[#allocation4 + $0xf8] sm:$0xff]
        %v4681 = vld [vmem:[#allocation4 + $0x100] sm:$0xff]
        %v4682 = vld [vmem:[#allocation4 + $0x108] sm:$0xff]
        %v4683 = vld [vmem:[#allocation4 + $0x110] sm:$0xff]
        %v4684 = vld [vmem:[#allocation4 + $0x118] sm:$0xff]
        %4685 = vst.msk [vmem:[#allocation5] sm:$0xff] %vm4171, %v4649
        %4686 = vst.msk [vmem:[#allocation5 + $0x10] sm:$0xff] %vm4171, %v4650
        %4687 = vst.msk [vmem:[#allocation5 + $0x20] sm:$0xff] %vm4171, %v4651
        %4688 = vst.msk [vmem:[#allocation5 + $0x30] sm:$0xff] %vm4171, %v4652
        %4689 = vst.msk [vmem:[#allocation5 + $0x40] sm:$0xff] %vm4171, %v4653
        %4690 = vst.msk [vmem:[#allocation5 + $0x50] sm:$0xff] %vm4171, %v4654
        %4691 = vst.msk [vmem:[#allocation5 + $0x60] sm:$0xff] %vm4171, %v4655
        %4692 = vst.msk [vmem:[#allocation5 + $0x70] sm:$0xff] %vm4171, %v4656
        %4693 = vst.msk [vmem:[#allocation5 + $0x80] sm:$0xff] %vm4171, %v4657
        %4694 = vst.msk [vmem:[#allocation5 + $0x90] sm:$0xff] %vm4171, %v4658
        %4695 = vst.msk [vmem:[#allocation5 + $0xa0] sm:$0xff] %vm4171, %v4659
        %4696 = vst.msk [vmem:[#allocation5 + $0xb0] sm:$0xff] %vm4171, %v4660
        %4697 = vst.msk [vmem:[#allocation5 + $0xc0] sm:$0xff] %vm4171, %v4661
        %4698 = vst.msk [vmem:[#allocation5 + $0xd0] sm:$0xff] %vm4171, %v4662
        %4699 = vst.msk [vmem:[#allocation5 + $0xe0] sm:$0xff] %vm4171, %v4663
        %4700 = vst.msk [vmem:[#allocation5 + $0xf0] sm:$0xff] %vm4171, %v4664
        %4701 = vst.msk [vmem:[#allocation5 + $0x100] sm:$0xff] %vm4171, %v4665
        %4702 = vst.msk [vmem:[#allocation5 + $0x110] sm:$0xff] %vm4171, %v4666
        %4703 = vst.msk [vmem:[#allocation5 + $0x120] sm:$0xff] %vm4171, %v4667
        %4704 = vst.msk [vmem:[#allocation5 + $0x130] sm:$0xff] %vm4171, %v4668
        %4705 = vst.msk [vmem:[#allocation5 + $0x140] sm:$0xff] %vm4171, %v4669
        %4706 = vst.msk [vmem:[#allocation5 + $0x150] sm:$0xff] %vm4171, %v4670
        %4707 = vst.msk [vmem:[#allocation5 + $0x160] sm:$0xff] %vm4171, %v4671
        %4708 = vst.msk [vmem:[#allocation5 + $0x170] sm:$0xff] %vm4171, %v4672
        %4709 = vst.msk [vmem:[#allocation5 + $0x180] sm:$0xff] %vm4171, %v4673
        %4710 = vst.msk [vmem:[#allocation5 + $0x190] sm:$0xff] %vm4171, %v4674
        %4711 = vst.msk [vmem:[#allocation5 + $0x1a0] sm:$0xff] %vm4171, %v4675
        %4712 = vst.msk [vmem:[#allocation5 + $0x1b0] sm:$0xff] %vm4171, %v4676
        %4713 = vst.msk [vmem:[#allocation5 + $0x1c0] sm:$0xff] %vm4171, %v4677
        %4714 = vst.msk [vmem:[#allocation5 + $0x1d0] sm:$0xff] %vm4171, %v4678
        %4715 = vst.msk [vmem:[#allocation5 + $0x1e0] sm:$0xff] %vm4171, %v4679
        %4716 = vst.msk [vmem:[#allocation5 + $0x1f0] sm:$0xff] %vm4171, %v4680
        %4717 = vst.msk [vmem:[#allocation5 + $0x200] sm:$0xff] %vm4171, %v4681
        %4718 = vst.msk [vmem:[#allocation5 + $0x210] sm:$0xff] %vm4171, %v4682
        %4719 = vst.msk [vmem:[#allocation5 + $0x220] sm:$0xff] %vm4171, %v4683
        %4720 = vst.msk [vmem:[#allocation5 + $0x230] sm:$0xff] %vm4171, %v4684
        %v4721 = vld [vmem:[#allocation4 + $0x1] sm:$0xff]
        %v4722 = vld [vmem:[#allocation4 + $0x9] sm:$0xff]
        %v4723 = vld [vmem:[#allocation4 + $0x11] sm:$0xff]
        %v4724 = vld [vmem:[#allocation4 + $0x19] sm:$0xff]
        %v4725 = vld [vmem:[#allocation4 + $0x21] sm:$0xff]
        %v4726 = vld [vmem:[#allocation4 + $0x29] sm:$0xff]
        %v4727 = vld [vmem:[#allocation4 + $0x31] sm:$0xff]
        %v4728 = vld [vmem:[#allocation4 + $0x39] sm:$0xff]
        %v4729 = vld [vmem:[#allocation4 + $0x41] sm:$0xff]
        %v4730 = vld [vmem:[#allocation4 + $0x49] sm:$0xff]
        %v4731 = vld [vmem:[#allocation4 + $0x51] sm:$0xff]
        %v4732 = vld [vmem:[#allocation4 + $0x59] sm:$0xff]
        %v4733 = vld [vmem:[#allocation4 + $0x61] sm:$0xff]
        %v4734 = vld [vmem:[#allocation4 + $0x69] sm:$0xff]
        %v4735 = vld [vmem:[#allocation4 + $0x71] sm:$0xff]
        %v4736 = vld [vmem:[#allocation4 + $0x79] sm:$0xff]
        %v4737 = vld [vmem:[#allocation4 + $0x81] sm:$0xff]
        %v4738 = vld [vmem:[#allocation4 + $0x89] sm:$0xff]
        %v4739 = vld [vmem:[#allocation4 + $0x91] sm:$0xff]
        %v4740 = vld [vmem:[#allocation4 + $0x99] sm:$0xff]
        %v4741 = vld [vmem:[#allocation4 + $0xa1] sm:$0xff]
        %v4742 = vld [vmem:[#allocation4 + $0xa9] sm:$0xff]
        %v4743 = vld [vmem:[#allocation4 + $0xb1] sm:$0xff]
        %v4744 = vld [vmem:[#allocation4 + $0xb9] sm:$0xff]
        %v4745 = vld [vmem:[#allocation4 + $0xc1] sm:$0xff]
        %v4746 = vld [vmem:[#allocation4 + $0xc9] sm:$0xff]
        %v4747 = vld [vmem:[#allocation4 + $0xd1] sm:$0xff]
        %v4748 = vld [vmem:[#allocation4 + $0xd9] sm:$0xff]
        %v4749 = vld [vmem:[#allocation4 + $0xe1] sm:$0xff]
        %v4750 = vld [vmem:[#allocation4 + $0xe9] sm:$0xff]
        %v4751 = vld [vmem:[#allocation4 + $0xf1] sm:$0xff]
        %v4752 = vld [vmem:[#allocation4 + $0xf9] sm:$0xff]
        %v4753 = vld [vmem:[#allocation4 + $0x101] sm:$0xff]
        %v4754 = vld [vmem:[#allocation4 + $0x109] sm:$0xff]
        %v4755 = vld [vmem:[#allocation4 + $0x111] sm:$0xff]
        %v4756 = vld [vmem:[#allocation4 + $0x119] sm:$0x7f]
        %4793 = vrot.lane.b32.xlu0 %v4721, 32
        %v4794 = vpop.permute.xlu0 %4793
        %4795 = vrot.lane.b32.xlu0 %v4722, 32
        %v4796 = vpop.permute.xlu0 %4795
        %4797 = vrot.lane.b32.xlu0 %v4723, 32
        %v4798 = vpop.permute.xlu0 %4797
        %4799 = vrot.lane.b32.xlu0 %v4724, 32
        %v4800 = vpop.permute.xlu0 %4799
        %4801 = vrot.lane.b32.xlu0 %v4725, 32
        %v4802 = vpop.permute.xlu0 %4801
        %4803 = vrot.lane.b32.xlu0 %v4726, 32
        %v4804 = vpop.permute.xlu0 %4803
        %4805 = vrot.lane.b32.xlu0 %v4727, 32
        %v4806 = vpop.permute.xlu0 %4805
        %4807 = vrot.lane.b32.xlu0 %v4728, 32
        %v4808 = vpop.permute.xlu0 %4807
        %4809 = vrot.lane.b32.xlu0 %v4729, 32
        %v4810 = vpop.permute.xlu0 %4809
        %4811 = vrot.lane.b32.xlu0 %v4730, 32
        %v4812 = vpop.permute.xlu0 %4811
        %4813 = vrot.lane.b32.xlu0 %v4731, 32
        %v4814 = vpop.permute.xlu0 %4813
        %4815 = vrot.lane.b32.xlu0 %v4732, 32
        %v4816 = vpop.permute.xlu0 %4815
        %4817 = vrot.lane.b32.xlu0 %v4733, 32
        %v4818 = vpop.permute.xlu0 %4817
        %4819 = vrot.lane.b32.xlu0 %v4734, 32
        %v4820 = vpop.permute.xlu0 %4819
        %4821 = vrot.lane.b32.xlu0 %v4735, 32
        %v4822 = vpop.permute.xlu0 %4821
        %4823 = vrot.lane.b32.xlu0 %v4736, 32
        %v4824 = vpop.permute.xlu0 %4823
        %4825 = vrot.lane.b32.xlu0 %v4737, 32
        %v4826 = vpop.permute.xlu0 %4825
        %4827 = vrot.lane.b32.xlu0 %v4738, 32
        %v4828 = vpop.permute.xlu0 %4827
        %4829 = vrot.lane.b32.xlu0 %v4739, 32
        %v4830 = vpop.permute.xlu0 %4829
        %4831 = vrot.lane.b32.xlu0 %v4740, 32
        %v4832 = vpop.permute.xlu0 %4831
        %4833 = vrot.lane.b32.xlu0 %v4741, 32
        %v4834 = vpop.permute.xlu0 %4833
        %4835 = vrot.lane.b32.xlu0 %v4742, 32
        %v4836 = vpop.permute.xlu0 %4835
        %4837 = vrot.lane.b32.xlu0 %v4743, 32
        %v4838 = vpop.permute.xlu0 %4837
        %4839 = vrot.lane.b32.xlu0 %v4744, 32
        %v4840 = vpop.permute.xlu0 %4839
        %4841 = vrot.lane.b32.xlu0 %v4745, 32
        %v4842 = vpop.permute.xlu0 %4841
        %4843 = vrot.lane.b32.xlu0 %v4746, 32
        %v4844 = vpop.permute.xlu0 %4843
        %4845 = vrot.lane.b32.xlu0 %v4747, 32
        %v4846 = vpop.permute.xlu0 %4845
        %4847 = vrot.lane.b32.xlu0 %v4748, 32
        %v4848 = vpop.permute.xlu0 %4847
        %4849 = vrot.lane.b32.xlu0 %v4749, 32
        %v4850 = vpop.permute.xlu0 %4849
        %4851 = vrot.lane.b32.xlu0 %v4750, 32
        %v4852 = vpop.permute.xlu0 %4851
        %4853 = vrot.lane.b32.xlu0 %v4751, 32
        %v4854 = vpop.permute.xlu0 %4853
        %4855 = vrot.lane.b32.xlu0 %v4752, 32
        %v4856 = vpop.permute.xlu0 %4855
        %4857 = vrot.lane.b32.xlu0 %v4753, 32
        %v4858 = vpop.permute.xlu0 %4857
        %4859 = vrot.lane.b32.xlu0 %v4754, 32
        %v4860 = vpop.permute.xlu0 %4859
        %4861 = vrot.lane.b32.xlu0 %v4755, 32
        %v4862 = vpop.permute.xlu0 %4861
        %4863 = vrot.lane.b32.xlu0 %v4756, 32
        %v4864 = vpop.permute.xlu0 %4863
        %vm4901 = vcmask 523520
        %4902 = vst.msk [vmem:[#allocation5] sm:$0xff] %vm4901, %v4794
        %4903 = vst.msk [vmem:[#allocation5 + $0x10] sm:$0xff] %vm4901, %v4796
        %4904 = vst.msk [vmem:[#allocation5 + $0x20] sm:$0xff] %vm4901, %v4798
        %4905 = vst.msk [vmem:[#allocation5 + $0x30] sm:$0xff] %vm4901, %v4800
        %4906 = vst.msk [vmem:[#allocation5 + $0x40] sm:$0xff] %vm4901, %v4802
        %4907 = vst.msk [vmem:[#allocation5 + $0x50] sm:$0xff] %vm4901, %v4804
        %4908 = vst.msk [vmem:[#allocation5 + $0x60] sm:$0xff] %vm4901, %v4806
        %4909 = vst.msk [vmem:[#allocation5 + $0x70] sm:$0xff] %vm4901, %v4808
        %4910 = vst.msk [vmem:[#allocation5 + $0x80] sm:$0xff] %vm4901, %v4810
        %4911 = vst.msk [vmem:[#allocation5 + $0x90] sm:$0xff] %vm4901, %v4812
        %4912 = vst.msk [vmem:[#allocation5 + $0xa0] sm:$0xff] %vm4901, %v4814
        %4913 = vst.msk [vmem:[#allocation5 + $0xb0] sm:$0xff] %vm4901, %v4816
        %4914 = vst.msk [vmem:[#allocation5 + $0xc0] sm:$0xff] %vm4901, %v4818
        %4915 = vst.msk [vmem:[#allocation5 + $0xd0] sm:$0xff] %vm4901, %v4820
        %4916 = vst.msk [vmem:[#allocation5 + $0xe0] sm:$0xff] %vm4901, %v4822
        %4917 = vst.msk [vmem:[#allocation5 + $0xf0] sm:$0xff] %vm4901, %v4824
        %4918 = vst.msk [vmem:[#allocation5 + $0x100] sm:$0xff] %vm4901, %v4826
        %4919 = vst.msk [vmem:[#allocation5 + $0x110] sm:$0xff] %vm4901, %v4828
        %4920 = vst.msk [vmem:[#allocation5 + $0x120] sm:$0xff] %vm4901, %v4830
        %4921 = vst.msk [vmem:[#allocation5 + $0x130] sm:$0xff] %vm4901, %v4832
        %4922 = vst.msk [vmem:[#allocation5 + $0x140] sm:$0xff] %vm4901, %v4834
        %4923 = vst.msk [vmem:[#allocation5 + $0x150] sm:$0xff] %vm4901, %v4836
        %4924 = vst.msk [vmem:[#allocation5 + $0x160] sm:$0xff] %vm4901, %v4838
        %4925 = vst.msk [vmem:[#allocation5 + $0x170] sm:$0xff] %vm4901, %v4840
        %4926 = vst.msk [vmem:[#allocation5 + $0x180] sm:$0xff] %vm4901, %v4842
        %4927 = vst.msk [vmem:[#allocation5 + $0x190] sm:$0xff] %vm4901, %v4844
        %4928 = vst.msk [vmem:[#allocation5 + $0x1a0] sm:$0xff] %vm4901, %v4846
        %4929 = vst.msk [vmem:[#allocation5 + $0x1b0] sm:$0xff] %vm4901, %v4848
        %4930 = vst.msk [vmem:[#allocation5 + $0x1c0] sm:$0xff] %vm4901, %v4850
        %4931 = vst.msk [vmem:[#allocation5 + $0x1d0] sm:$0xff] %vm4901, %v4852
        %4932 = vst.msk [vmem:[#allocation5 + $0x1e0] sm:$0xff] %vm4901, %v4854
        %4933 = vst.msk [vmem:[#allocation5 + $0x1f0] sm:$0xff] %vm4901, %v4856
        %4934 = vst.msk [vmem:[#allocation5 + $0x200] sm:$0xff] %vm4901, %v4858
        %4935 = vst.msk [vmem:[#allocation5 + $0x210] sm:$0xff] %vm4901, %v4860
        %4936 = vst.msk [vmem:[#allocation5 + $0x220] sm:$0xff] %vm4901, %v4862
        %vm4937 = vcmask 522496
        %4938 = vst.msk [vmem:[#allocation5 + $0x230] sm:$0x7f] %vm4937, %v4864
        %v4939 = vld [vmem:[#allocation4 + $0x2] sm:$0xff]
        %v4940 = vld [vmem:[#allocation4 + $0xa] sm:$0xff]
        %v4941 = vld [vmem:[#allocation4 + $0x12] sm:$0xff]
        %v4942 = vld [vmem:[#allocation4 + $0x1a] sm:$0xff]
        %v4943 = vld [vmem:[#allocation4 + $0x22] sm:$0xff]
        %v4944 = vld [vmem:[#allocation4 + $0x2a] sm:$0xff]
        %v4945 = vld [vmem:[#allocation4 + $0x32] sm:$0xff]
        %v4946 = vld [vmem:[#allocation4 + $0x3a] sm:$0xff]
        %v4947 = vld [vmem:[#allocation4 + $0x42] sm:$0xff]
        %v4948 = vld [vmem:[#allocation4 + $0x4a] sm:$0xff]
        %v4949 = vld [vmem:[#allocation4 + $0x52] sm:$0xff]
        %v4950 = vld [vmem:[#allocation4 + $0x5a] sm:$0xff]
        %v4951 = vld [vmem:[#allocation4 + $0x62] sm:$0xff]
        %v4952 = vld [vmem:[#allocation4 + $0x6a] sm:$0xff]
        %v4953 = vld [vmem:[#allocation4 + $0x72] sm:$0xff]
        %v4954 = vld [vmem:[#allocation4 + $0x7a] sm:$0xff]
        %v4955 = vld [vmem:[#allocation4 + $0x82] sm:$0xff]
        %v4956 = vld [vmem:[#allocation4 + $0x8a] sm:$0xff]
        %v4957 = vld [vmem:[#allocation4 + $0x92] sm:$0xff]
        %v4958 = vld [vmem:[#allocation4 + $0x9a] sm:$0xff]
        %v4959 = vld [vmem:[#allocation4 + $0xa2] sm:$0xff]
        %v4960 = vld [vmem:[#allocation4 + $0xaa] sm:$0xff]
        %v4961 = vld [vmem:[#allocation4 + $0xb2] sm:$0xff]
        %v4962 = vld [vmem:[#allocation4 + $0xba] sm:$0xff]
        %v4963 = vld [vmem:[#allocation4 + $0xc2] sm:$0xff]
        %v4964 = vld [vmem:[#allocation4 + $0xca] sm:$0xff]
        %v4965 = vld [vmem:[#allocation4 + $0xd2] sm:$0xff]
        %v4966 = vld [vmem:[#allocation4 + $0xda] sm:$0xff]
        %v4967 = vld [vmem:[#allocation4 + $0xe2] sm:$0xff]
        %v4968 = vld [vmem:[#allocation4 + $0xea] sm:$0xff]
        %v4969 = vld [vmem:[#allocation4 + $0xf2] sm:$0xff]
        %v4970 = vld [vmem:[#allocation4 + $0xfa] sm:$0xff]
        %v4971 = vld [vmem:[#allocation4 + $0x102] sm:$0xff]
        %v4972 = vld [vmem:[#allocation4 + $0x10a] sm:$0xff]
        %v4973 = vld [vmem:[#allocation4 + $0x112] sm:$0xff]
        %v4974 = vld [vmem:[#allocation4 + $0x11a] sm:$0x3f]
        %5011 = vrot.lane.b32.xlu0 %v4939, 64
        %v5012 = vpop.permute.xlu0 %5011
        %5013 = vrot.lane.b32.xlu0 %v4940, 64
        %v5014 = vpop.permute.xlu0 %5013
        %5015 = vrot.lane.b32.xlu0 %v4941, 64
        %v5016 = vpop.permute.xlu0 %5015
        %5017 = vrot.lane.b32.xlu0 %v4942, 64
        %v5018 = vpop.permute.xlu0 %5017
        %5019 = vrot.lane.b32.xlu0 %v4943, 64
        %v5020 = vpop.permute.xlu0 %5019
        %5021 = vrot.lane.b32.xlu0 %v4944, 64
        %v5022 = vpop.permute.xlu0 %5021
        %5023 = vrot.lane.b32.xlu0 %v4945, 64
        %v5024 = vpop.permute.xlu0 %5023
        %5025 = vrot.lane.b32.xlu0 %v4946, 64
        %v5026 = vpop.permute.xlu0 %5025
        %5027 = vrot.lane.b32.xlu0 %v4947, 64
        %v5028 = vpop.permute.xlu0 %5027
        %5029 = vrot.lane.b32.xlu0 %v4948, 64
        %v5030 = vpop.permute.xlu0 %5029
        %5031 = vrot.lane.b32.xlu0 %v4949, 64
        %v5032 = vpop.permute.xlu0 %5031
        %5033 = vrot.lane.b32.xlu0 %v4950, 64
        %v5034 = vpop.permute.xlu0 %5033
        %5035 = vrot.lane.b32.xlu0 %v4951, 64
        %v5036 = vpop.permute.xlu0 %5035
        %5037 = vrot.lane.b32.xlu0 %v4952, 64
        %v5038 = vpop.permute.xlu0 %5037
        %5039 = vrot.lane.b32.xlu0 %v4953, 64
        %v5040 = vpop.permute.xlu0 %5039
        %5041 = vrot.lane.b32.xlu0 %v4954, 64
        %v5042 = vpop.permute.xlu0 %5041
        %5043 = vrot.lane.b32.xlu0 %v4955, 64
        %v5044 = vpop.permute.xlu0 %5043
        %5045 = vrot.lane.b32.xlu0 %v4956, 64
        %v5046 = vpop.permute.xlu0 %5045
        %5047 = vrot.lane.b32.xlu0 %v4957, 64
        %v5048 = vpop.permute.xlu0 %5047
        %5049 = vrot.lane.b32.xlu0 %v4958, 64
        %v5050 = vpop.permute.xlu0 %5049
        %5051 = vrot.lane.b32.xlu0 %v4959, 64
        %v5052 = vpop.permute.xlu0 %5051
        %5053 = vrot.lane.b32.xlu0 %v4960, 64
        %v5054 = vpop.permute.xlu0 %5053
        %5055 = vrot.lane.b32.xlu0 %v4961, 64
        %v5056 = vpop.permute.xlu0 %5055
        %5057 = vrot.lane.b32.xlu0 %v4962, 64
        %v5058 = vpop.permute.xlu0 %5057
        %5059 = vrot.lane.b32.xlu0 %v4963, 64
        %v5060 = vpop.permute.xlu0 %5059
        %5061 = vrot.lane.b32.xlu0 %v4964, 64
        %v5062 = vpop.permute.xlu0 %5061
        %5063 = vrot.lane.b32.xlu0 %v4965, 64
        %v5064 = vpop.permute.xlu0 %5063
        %5065 = vrot.lane.b32.xlu0 %v4966, 64
        %v5066 = vpop.permute.xlu0 %5065
        %5067 = vrot.lane.b32.xlu0 %v4967, 64
        %v5068 = vpop.permute.xlu0 %5067
        %5069 = vrot.lane.b32.xlu0 %v4968, 64
        %v5070 = vpop.permute.xlu0 %5069
        %5071 = vrot.lane.b32.xlu0 %v4969, 64
        %v5072 = vpop.permute.xlu0 %5071
        %5073 = vrot.lane.b32.xlu0 %v4970, 64
        %v5074 = vpop.permute.xlu0 %5073
        %5075 = vrot.lane.b32.xlu0 %v4971, 64
        %v5076 = vpop.permute.xlu0 %5075
        %5077 = vrot.lane.b32.xlu0 %v4972, 64
        %v5078 = vpop.permute.xlu0 %5077
        %5079 = vrot.lane.b32.xlu0 %v4973, 64
        %v5080 = vpop.permute.xlu0 %5079
        %5081 = vrot.lane.b32.xlu0 %v4974, 64
        %v5082 = vpop.permute.xlu0 %5081
        %vm5119 = vcmask 785920
        %5120 = vst.msk [vmem:[#allocation5] sm:$0xff] %vm5119, %v5012
        %5121 = vst.msk [vmem:[#allocation5 + $0x10] sm:$0xff] %vm5119, %v5014
        %5122 = vst.msk [vmem:[#allocation5 + $0x20] sm:$0xff] %vm5119, %v5016
        %5123 = vst.msk [vmem:[#allocation5 + $0x30] sm:$0xff] %vm5119, %v5018
        %5124 = vst.msk [vmem:[#allocation5 + $0x40] sm:$0xff] %vm5119, %v5020
        %5125 = vst.msk [vmem:[#allocation5 + $0x50] sm:$0xff] %vm5119, %v5022
        %5126 = vst.msk [vmem:[#allocation5 + $0x60] sm:$0xff] %vm5119, %v5024
        %5127 = vst.msk [vmem:[#allocation5 + $0x70] sm:$0xff] %vm5119, %v5026
        %5128 = vst.msk [vmem:[#allocation5 + $0x80] sm:$0xff] %vm5119, %v5028
        %5129 = vst.msk [vmem:[#allocation5 + $0x90] sm:$0xff] %vm5119, %v5030
        %5130 = vst.msk [vmem:[#allocation5 + $0xa0] sm:$0xff] %vm5119, %v5032
        %5131 = vst.msk [vmem:[#allocation5 + $0xb0] sm:$0xff] %vm5119, %v5034
        %5132 = vst.msk [vmem:[#allocation5 + $0xc0] sm:$0xff] %vm5119, %v5036
        %5133 = vst.msk [vmem:[#allocation5 + $0xd0] sm:$0xff] %vm5119, %v5038
        %5134 = vst.msk [vmem:[#allocation5 + $0xe0] sm:$0xff] %vm5119, %v5040
        %5135 = vst.msk [vmem:[#allocation5 + $0xf0] sm:$0xff] %vm5119, %v5042
        %5136 = vst.msk [vmem:[#allocation5 + $0x100] sm:$0xff] %vm5119, %v5044
        %5137 = vst.msk [vmem:[#allocation5 + $0x110] sm:$0xff] %vm5119, %v5046
        %5138 = vst.msk [vmem:[#allocation5 + $0x120] sm:$0xff] %vm5119, %v5048
        %5139 = vst.msk [vmem:[#allocation5 + $0x130] sm:$0xff] %vm5119, %v5050
        %5140 = vst.msk [vmem:[#allocation5 + $0x140] sm:$0xff] %vm5119, %v5052
        %5141 = vst.msk [vmem:[#allocation5 + $0x150] sm:$0xff] %vm5119, %v5054
        %5142 = vst.msk [vmem:[#allocation5 + $0x160] sm:$0xff] %vm5119, %v5056
        %5143 = vst.msk [vmem:[#allocation5 + $0x170] sm:$0xff] %vm5119, %v5058
        %5144 = vst.msk [vmem:[#allocation5 + $0x180] sm:$0xff] %vm5119, %v5060
        %5145 = vst.msk [vmem:[#allocation5 + $0x190] sm:$0xff] %vm5119, %v5062
        %5146 = vst.msk [vmem:[#allocation5 + $0x1a0] sm:$0xff] %vm5119, %v5064
        %5147 = vst.msk [vmem:[#allocation5 + $0x1b0] sm:$0xff] %vm5119, %v5066
        %5148 = vst.msk [vmem:[#allocation5 + $0x1c0] sm:$0xff] %vm5119, %v5068
        %5149 = vst.msk [vmem:[#allocation5 + $0x1d0] sm:$0xff] %vm5119, %v5070
        %5150 = vst.msk [vmem:[#allocation5 + $0x1e0] sm:$0xff] %vm5119, %v5072
        %5151 = vst.msk [vmem:[#allocation5 + $0x1f0] sm:$0xff] %vm5119, %v5074
        %5152 = vst.msk [vmem:[#allocation5 + $0x200] sm:$0xff] %vm5119, %v5076
        %5153 = vst.msk [vmem:[#allocation5 + $0x210] sm:$0xff] %vm5119, %v5078
        %5154 = vst.msk [vmem:[#allocation5 + $0x220] sm:$0xff] %vm5119, %v5080
        %vm5155 = vcmask 783872
        %5156 = vst.msk [vmem:[#allocation5 + $0x230] sm:$0x3f] %vm5155, %v5082
        %v5157 = vld [vmem:[#allocation4 + $0x3] sm:$0xff]
        %v5158 = vld [vmem:[#allocation4 + $0xb] sm:$0xff]
        %v5159 = vld [vmem:[#allocation4 + $0x13] sm:$0xff]
        %v5160 = vld [vmem:[#allocation4 + $0x1b] sm:$0xff]
        %v5161 = vld [vmem:[#allocation4 + $0x23] sm:$0xff]
        %v5162 = vld [vmem:[#allocation4 + $0x2b] sm:$0xff]
        %v5163 = vld [vmem:[#allocation4 + $0x33] sm:$0xff]
        %v5164 = vld [vmem:[#allocation4 + $0x3b] sm:$0xff]
        %v5165 = vld [vmem:[#allocation4 + $0x43] sm:$0xff]
        %v5166 = vld [vmem:[#allocation4 + $0x4b] sm:$0xff]
        %v5167 = vld [vmem:[#allocation4 + $0x53] sm:$0xff]
        %v5168 = vld [vmem:[#allocation4 + $0x5b] sm:$0xff]
        %v5169 = vld [vmem:[#allocation4 + $0x63] sm:$0xff]
        %v5170 = vld [vmem:[#allocation4 + $0x6b] sm:$0xff]
        %v5171 = vld [vmem:[#allocation4 + $0x73] sm:$0xff]
        %v5172 = vld [vmem:[#allocation4 + $0x7b] sm:$0xff]
        %v5173 = vld [vmem:[#allocation4 + $0x83] sm:$0xff]
        %v5174 = vld [vmem:[#allocation4 + $0x8b] sm:$0xff]
        %v5175 = vld [vmem:[#allocation4 + $0x93] sm:$0xff]
        %v5176 = vld [vmem:[#allocation4 + $0x9b] sm:$0xff]
        %v5177 = vld [vmem:[#allocation4 + $0xa3] sm:$0xff]
        %v5178 = vld [vmem:[#allocation4 + $0xab] sm:$0xff]
        %v5179 = vld [vmem:[#allocation4 + $0xb3] sm:$0xff]
        %v5180 = vld [vmem:[#allocation4 + $0xbb] sm:$0xff]
        %v5181 = vld [vmem:[#allocation4 + $0xc3] sm:$0xff]
        %v5182 = vld [vmem:[#allocation4 + $0xcb] sm:$0xff]
        %v5183 = vld [vmem:[#allocation4 + $0xd3] sm:$0xff]
        %v5184 = vld [vmem:[#allocation4 + $0xdb] sm:$0xff]
        %v5185 = vld [vmem:[#allocation4 + $0xe3] sm:$0xff]
        %v5186 = vld [vmem:[#allocation4 + $0xeb] sm:$0xff]
        %v5187 = vld [vmem:[#allocation4 + $0xf3] sm:$0xff]
        %v5188 = vld [vmem:[#allocation4 + $0xfb] sm:$0xff]
        %v5189 = vld [vmem:[#allocation4 + $0x103] sm:$0xff]
        %v5190 = vld [vmem:[#allocation4 + $0x10b] sm:$0xff]
        %v5191 = vld [vmem:[#allocation4 + $0x113] sm:$0xff]
        %v5192 = vld [vmem:[#allocation4 + $0x11b] sm:$0x1f]
        %5229 = vrot.lane.b32.xlu0 %v5157, 96
        %v5230 = vpop.permute.xlu0 %5229
        %5231 = vrot.lane.b32.xlu0 %v5158, 96
        %v5232 = vpop.permute.xlu0 %5231
        %5233 = vrot.lane.b32.xlu0 %v5159, 96
        %v5234 = vpop.permute.xlu0 %5233
        %5235 = vrot.lane.b32.xlu0 %v5160, 96
        %v5236 = vpop.permute.xlu0 %5235
        %5237 = vrot.lane.b32.xlu0 %v5161, 96
        %v5238 = vpop.permute.xlu0 %5237
        %5239 = vrot.lane.b32.xlu0 %v5162, 96
        %v5240 = vpop.permute.xlu0 %5239
        %5241 = vrot.lane.b32.xlu0 %v5163, 96
        %v5242 = vpop.permute.xlu0 %5241
        %5243 = vrot.lane.b32.xlu0 %v5164, 96
        %v5244 = vpop.permute.xlu0 %5243
        %5245 = vrot.lane.b32.xlu0 %v5165, 96
        %v5246 = vpop.permute.xlu0 %5245
        %5247 = vrot.lane.b32.xlu0 %v5166, 96
        %v5248 = vpop.permute.xlu0 %5247
        %5249 = vrot.lane.b32.xlu0 %v5167, 96
        %v5250 = vpop.permute.xlu0 %5249
        %5251 = vrot.lane.b32.xlu0 %v5168, 96
        %v5252 = vpop.permute.xlu0 %5251
        %5253 = vrot.lane.b32.xlu0 %v5169, 96
        %v5254 = vpop.permute.xlu0 %5253
        %5255 = vrot.lane.b32.xlu0 %v5170, 96
        %v5256 = vpop.permute.xlu0 %5255
        %5257 = vrot.lane.b32.xlu0 %v5171, 96
        %v5258 = vpop.permute.xlu0 %5257
        %5259 = vrot.lane.b32.xlu0 %v5172, 96
        %v5260 = vpop.permute.xlu0 %5259
        %5261 = vrot.lane.b32.xlu0 %v5173, 96
        %v5262 = vpop.permute.xlu0 %5261
        %5263 = vrot.lane.b32.xlu0 %v5174, 96
        %v5264 = vpop.permute.xlu0 %5263
        %5265 = vrot.lane.b32.xlu0 %v5175, 96
        %v5266 = vpop.permute.xlu0 %5265
        %5267 = vrot.lane.b32.xlu0 %v5176, 96
        %v5268 = vpop.permute.xlu0 %5267
        %5269 = vrot.lane.b32.xlu0 %v5177, 96
        %v5270 = vpop.permute.xlu0 %5269
        %5271 = vrot.lane.b32.xlu0 %v5178, 96
        %v5272 = vpop.permute.xlu0 %5271
        %5273 = vrot.lane.b32.xlu0 %v5179, 96
        %v5274 = vpop.permute.xlu0 %5273
        %5275 = vrot.lane.b32.xlu0 %v5180, 96
        %v5276 = vpop.permute.xlu0 %5275
        %5277 = vrot.lane.b32.xlu0 %v5181, 96
        %v5278 = vpop.permute.xlu0 %5277
        %5279 = vrot.lane.b32.xlu0 %v5182, 96
        %v5280 = vpop.permute.xlu0 %5279
        %5281 = vrot.lane.b32.xlu0 %v5183, 96
        %v5282 = vpop.permute.xlu0 %5281
        %5283 = vrot.lane.b32.xlu0 %v5184, 96
        %v5284 = vpop.permute.xlu0 %5283
        %5285 = vrot.lane.b32.xlu0 %v5185, 96
        %v5286 = vpop.permute.xlu0 %5285
        %5287 = vrot.lane.b32.xlu0 %v5186, 96
        %v5288 = vpop.permute.xlu0 %5287
        %5289 = vrot.lane.b32.xlu0 %v5187, 96
        %v5290 = vpop.permute.xlu0 %5289
        %5291 = vrot.lane.b32.xlu0 %v5188, 96
        %v5292 = vpop.permute.xlu0 %5291
        %5293 = vrot.lane.b32.xlu0 %v5189, 96
        %v5294 = vpop.permute.xlu0 %5293
        %5295 = vrot.lane.b32.xlu0 %v5190, 96
        %v5296 = vpop.permute.xlu0 %5295
        %5297 = vrot.lane.b32.xlu0 %v5191, 96
        %v5298 = vpop.permute.xlu0 %5297
        %5299 = vrot.lane.b32.xlu0 %v5192, 96
        %v5300 = vpop.permute.xlu0 %5299
        %vm5337 = vcmask 1048320
        %5338 = vst.msk [vmem:[#allocation5] sm:$0xff] %vm5337, %v5230
        %5339 = vst.msk [vmem:[#allocation5 + $0x10] sm:$0xff] %vm5337, %v5232
        %5340 = vst.msk [vmem:[#allocation5 + $0x20] sm:$0xff] %vm5337, %v5234
        %5341 = vst.msk [vmem:[#allocation5 + $0x30] sm:$0xff] %vm5337, %v5236
        %5342 = vst.msk [vmem:[#allocation5 + $0x40] sm:$0xff] %vm5337, %v5238
        %5343 = vst.msk [vmem:[#allocation5 + $0x50] sm:$0xff] %vm5337, %v5240
        %5344 = vst.msk [vmem:[#allocation5 + $0x60] sm:$0xff] %vm5337, %v5242
        %5345 = vst.msk [vmem:[#allocation5 + $0x70] sm:$0xff] %vm5337, %v5244
        %5346 = vst.msk [vmem:[#allocation5 + $0x80] sm:$0xff] %vm5337, %v5246
        %5347 = vst.msk [vmem:[#allocation5 + $0x90] sm:$0xff] %vm5337, %v5248
        %5348 = vst.msk [vmem:[#allocation5 + $0xa0] sm:$0xff] %vm5337, %v5250
        %5349 = vst.msk [vmem:[#allocation5 + $0xb0] sm:$0xff] %vm5337, %v5252
        %5350 = vst.msk [vmem:[#allocation5 + $0xc0] sm:$0xff] %vm5337, %v5254
        %5351 = vst.msk [vmem:[#allocation5 + $0xd0] sm:$0xff] %vm5337, %v5256
        %5352 = vst.msk [vmem:[#allocation5 + $0xe0] sm:$0xff] %vm5337, %v5258
        %5353 = vst.msk [vmem:[#allocation5 + $0xf0] sm:$0xff] %vm5337, %v5260
        %5354 = vst.msk [vmem:[#allocation5 + $0x100] sm:$0xff] %vm5337, %v5262
        %5355 = vst.msk [vmem:[#allocation5 + $0x110] sm:$0xff] %vm5337, %v5264
        %5356 = vst.msk [vmem:[#allocation5 + $0x120] sm:$0xff] %vm5337, %v5266
        %5357 = vst.msk [vmem:[#allocation5 + $0x130] sm:$0xff] %vm5337, %v5268
        %5358 = vst.msk [vmem:[#allocation5 + $0x140] sm:$0xff] %vm5337, %v5270
        %5359 = vst.msk [vmem:[#allocation5 + $0x150] sm:$0xff] %vm5337, %v5272
        %5360 = vst.msk [vmem:[#allocation5 + $0x160] sm:$0xff] %vm5337, %v5274
        %5361 = vst.msk [vmem:[#allocation5 + $0x170] sm:$0xff] %vm5337, %v5276
        %5362 = vst.msk [vmem:[#allocation5 + $0x180] sm:$0xff] %vm5337, %v5278
        %5363 = vst.msk [vmem:[#allocation5 + $0x190] sm:$0xff] %vm5337, %v5280
        %5364 = vst.msk [vmem:[#allocation5 + $0x1a0] sm:$0xff] %vm5337, %v5282
        %5365 = vst.msk [vmem:[#allocation5 + $0x1b0] sm:$0xff] %vm5337, %v5284
        %5366 = vst.msk [vmem:[#allocation5 + $0x1c0] sm:$0xff] %vm5337, %v5286
        %5367 = vst.msk [vmem:[#allocation5 + $0x1d0] sm:$0xff] %vm5337, %v5288
        %5368 = vst.msk [vmem:[#allocation5 + $0x1e0] sm:$0xff] %vm5337, %v5290
        %5369 = vst.msk [vmem:[#allocation5 + $0x1f0] sm:$0xff] %vm5337, %v5292
        %5370 = vst.msk [vmem:[#allocation5 + $0x200] sm:$0xff] %vm5337, %v5294
        %5371 = vst.msk [vmem:[#allocation5 + $0x210] sm:$0xff] %vm5337, %v5296
        %5372 = vst.msk [vmem:[#allocation5 + $0x220] sm:$0xff] %vm5337, %v5298
        %vm5373 = vcmask 1045248
        %5374 = vst.msk [vmem:[#allocation5 + $0x230] sm:$0x1f] %vm5373, %v5300
        %v5375 = vld [vmem:[#allocation4 + $0x4] sm:$0xff]
        %v5376 = vld [vmem:[#allocation4 + $0xc] sm:$0xff]
        %v5377 = vld [vmem:[#allocation4 + $0x14] sm:$0xff]
        %v5378 = vld [vmem:[#allocation4 + $0x1c] sm:$0xff]
        %v5379 = vld [vmem:[#allocation4 + $0x24] sm:$0xff]
        %v5380 = vld [vmem:[#allocation4 + $0x2c] sm:$0xff]
        %v5381 = vld [vmem:[#allocation4 + $0x34] sm:$0xff]
        %v5382 = vld [vmem:[#allocation4 + $0x3c] sm:$0xff]
        %v5383 = vld [vmem:[#allocation4 + $0x44] sm:$0xff]
        %v5384 = vld [vmem:[#allocation4 + $0x4c] sm:$0xff]
        %v5385 = vld [vmem:[#allocation4 + $0x54] sm:$0xff]
        %v5386 = vld [vmem:[#allocation4 + $0x5c] sm:$0xff]
        %v5387 = vld [vmem:[#allocation4 + $0x64] sm:$0xff]
        %v5388 = vld [vmem:[#allocation4 + $0x6c] sm:$0xff]
        %v5389 = vld [vmem:[#allocation4 + $0x74] sm:$0xff]
        %v5390 = vld [vmem:[#allocation4 + $0x7c] sm:$0xff]
        %v5391 = vld [vmem:[#allocation4 + $0x84] sm:$0xff]
        %v5392 = vld [vmem:[#allocation4 + $0x8c] sm:$0xff]
        %v5393 = vld [vmem:[#allocation4 + $0x94] sm:$0xff]
        %v5394 = vld [vmem:[#allocation4 + $0x9c] sm:$0xff]
        %v5395 = vld [vmem:[#allocation4 + $0xa4] sm:$0xff]
        %v5396 = vld [vmem:[#allocation4 + $0xac] sm:$0xff]
        %v5397 = vld [vmem:[#allocation4 + $0xb4] sm:$0xff]
        %v5398 = vld [vmem:[#allocation4 + $0xbc] sm:$0xff]
        %v5399 = vld [vmem:[#allocation4 + $0xc4] sm:$0xff]
        %v5400 = vld [vmem:[#allocation4 + $0xcc] sm:$0xff]
        %v5401 = vld [vmem:[#allocation4 + $0xd4] sm:$0xff]
        %v5402 = vld [vmem:[#allocation4 + $0xdc] sm:$0xff]
        %v5403 = vld [vmem:[#allocation4 + $0xe4] sm:$0xff]
        %v5404 = vld [vmem:[#allocation4 + $0xec] sm:$0xff]
        %v5405 = vld [vmem:[#allocation4 + $0xf4] sm:$0xff]
        %v5406 = vld [vmem:[#allocation4 + $0xfc] sm:$0xff]
        %v5407 = vld [vmem:[#allocation4 + $0x104] sm:$0xff]
        %v5408 = vld [vmem:[#allocation4 + $0x10c] sm:$0xff]
        %v5409 = vld [vmem:[#allocation4 + $0x114] sm:$0xff]
        %v5410 = vld [vmem:[#allocation4 + $0x11c] sm:$0xf]
        %5411 = vst.msk [vmem:[#allocation5 + $0x8] sm:$0xff] %vm4171, %v5375
        %5412 = vst.msk [vmem:[#allocation5 + $0x18] sm:$0xff] %vm4171, %v5376
        %5413 = vst.msk [vmem:[#allocation5 + $0x28] sm:$0xff] %vm4171, %v5377
        %5414 = vst.msk [vmem:[#allocation5 + $0x38] sm:$0xff] %vm4171, %v5378
        %5415 = vst.msk [vmem:[#allocation5 + $0x48] sm:$0xff] %vm4171, %v5379
        %5416 = vst.msk [vmem:[#allocation5 + $0x58] sm:$0xff] %vm4171, %v5380
        %5417 = vst.msk [vmem:[#allocation5 + $0x68] sm:$0xff] %vm4171, %v5381
        %5418 = vst.msk [vmem:[#allocation5 + $0x78] sm:$0xff] %vm4171, %v5382
        %5419 = vst.msk [vmem:[#allocation5 + $0x88] sm:$0xff] %vm4171, %v5383
        %5420 = vst.msk [vmem:[#allocation5 + $0x98] sm:$0xff] %vm4171, %v5384
        %5421 = vst.msk [vmem:[#allocation5 + $0xa8] sm:$0xff] %vm4171, %v5385
        %5422 = vst.msk [vmem:[#allocation5 + $0xb8] sm:$0xff] %vm4171, %v5386
        %5423 = vst.msk [vmem:[#allocation5 + $0xc8] sm:$0xff] %vm4171, %v5387
        %5424 = vst.msk [vmem:[#allocation5 + $0xd8] sm:$0xff] %vm4171, %v5388
        %5425 = vst.msk [vmem:[#allocation5 + $0xe8] sm:$0xff] %vm4171, %v5389
        %5426 = vst.msk [vmem:[#allocation5 + $0xf8] sm:$0xff] %vm4171, %v5390
        %5427 = vst.msk [vmem:[#allocation5 + $0x108] sm:$0xff] %vm4171, %v5391
        %5428 = vst.msk [vmem:[#allocation5 + $0x118] sm:$0xff] %vm4171, %v5392
        %5429 = vst.msk [vmem:[#allocation5 + $0x128] sm:$0xff] %vm4171, %v5393
        %5430 = vst.msk [vmem:[#allocation5 + $0x138] sm:$0xff] %vm4171, %v5394
        %5431 = vst.msk [vmem:[#allocation5 + $0x148] sm:$0xff] %vm4171, %v5395
        %5432 = vst.msk [vmem:[#allocation5 + $0x158] sm:$0xff] %vm4171, %v5396
        %5433 = vst.msk [vmem:[#allocation5 + $0x168] sm:$0xff] %vm4171, %v5397
        %5434 = vst.msk [vmem:[#allocation5 + $0x178] sm:$0xff] %vm4171, %v5398
        %5435 = vst.msk [vmem:[#allocation5 + $0x188] sm:$0xff] %vm4171, %v5399
        %5436 = vst.msk [vmem:[#allocation5 + $0x198] sm:$0xff] %vm4171, %v5400
        %5437 = vst.msk [vmem:[#allocation5 + $0x1a8] sm:$0xff] %vm4171, %v5401
        %5438 = vst.msk [vmem:[#allocation5 + $0x1b8] sm:$0xff] %vm4171, %v5402
        %5439 = vst.msk [vmem:[#allocation5 + $0x1c8] sm:$0xff] %vm4171, %v5403
        %5440 = vst.msk [vmem:[#allocation5 + $0x1d8] sm:$0xff] %vm4171, %v5404
        %5441 = vst.msk [vmem:[#allocation5 + $0x1e8] sm:$0xff] %vm4171, %v5405
        %5442 = vst.msk [vmem:[#allocation5 + $0x1f8] sm:$0xff] %vm4171, %v5406
        %5443 = vst.msk [vmem:[#allocation5 + $0x208] sm:$0xff] %vm4171, %v5407
        %5444 = vst.msk [vmem:[#allocation5 + $0x218] sm:$0xff] %vm4171, %v5408
        %5445 = vst.msk [vmem:[#allocation5 + $0x228] sm:$0xff] %vm4171, %v5409
        %vm5446 = vcmask 257024
        %5447 = vst.msk [vmem:[#allocation5 + $0x238] sm:$0xf] %vm5446, %v5410
        %v5448 = vld [vmem:[#allocation5] sm:$0xff]
        %v5449 = vld [vmem:[#allocation5 + $0x8] sm:$0xff]
        %v5450 = vld [vmem:[#allocation5 + $0x10] sm:$0xff]
        %v5451 = vld [vmem:[#allocation5 + $0x18] sm:$0xff]
        %v5452 = vld [vmem:[#allocation5 + $0x20] sm:$0xff]
        %v5453 = vld [vmem:[#allocation5 + $0x28] sm:$0xff]
        %v5454 = vld [vmem:[#allocation5 + $0x30] sm:$0xff]
        %v5455 = vld [vmem:[#allocation5 + $0x38] sm:$0xff]
        %v5456 = vld [vmem:[#allocation5 + $0x40] sm:$0xff]
        %v5457 = vld [vmem:[#allocation5 + $0x48] sm:$0xff]
        %v5458 = vld [vmem:[#allocation5 + $0x50] sm:$0xff]
        %v5459 = vld [vmem:[#allocation5 + $0x58] sm:$0xff]
        %v5460 = vld [vmem:[#allocation5 + $0x60] sm:$0xff]
        %v5461 = vld [vmem:[#allocation5 + $0x68] sm:$0xff]
        %v5462 = vld [vmem:[#allocation5 + $0x70] sm:$0xff]
        %v5463 = vld [vmem:[#allocation5 + $0x78] sm:$0xff]
        %v5464 = vld [vmem:[#allocation5 + $0x80] sm:$0xff]
        %v5465 = vld [vmem:[#allocation5 + $0x88] sm:$0xff]
        %v5466 = vld [vmem:[#allocation5 + $0x90] sm:$0xff]
        %v5467 = vld [vmem:[#allocation5 + $0x98] sm:$0xff]
        %v5468 = vld [vmem:[#allocation5 + $0xa0] sm:$0xff]
        %v5469 = vld [vmem:[#allocation5 + $0xa8] sm:$0xff]
        %v5470 = vld [vmem:[#allocation5 + $0xb0] sm:$0xff]
        %v5471 = vld [vmem:[#allocation5 + $0xb8] sm:$0xff]
        %v5472 = vld [vmem:[#allocation5 + $0xc0] sm:$0xff]
        %v5473 = vld [vmem:[#allocation5 + $0xc8] sm:$0xff]
        %v5474 = vld [vmem:[#allocation5 + $0xd0] sm:$0xff]
        %v5475 = vld [vmem:[#allocation5 + $0xd8] sm:$0xff]
        %v5476 = vld [vmem:[#allocation5 + $0xe0] sm:$0xff]
        %v5477 = vld [vmem:[#allocation5 + $0xe8] sm:$0xff]
        %v5478 = vld [vmem:[#allocation5 + $0xf0] sm:$0xff]
        %v5479 = vld [vmem:[#allocation5 + $0xf8] sm:$0xff]
        %v5480 = vld [vmem:[#allocation5 + $0x100] sm:$0xff]
        %v5481 = vld [vmem:[#allocation5 + $0x108] sm:$0xff]
        %v5482 = vld [vmem:[#allocation5 + $0x110] sm:$0xff]
        %v5483 = vld [vmem:[#allocation5 + $0x118] sm:$0xff]
        %v5484 = vld [vmem:[#allocation5 + $0x120] sm:$0xff]
        %v5485 = vld [vmem:[#allocation5 + $0x128] sm:$0xff]
        %v5486 = vld [vmem:[#allocation5 + $0x130] sm:$0xff]
        %v5487 = vld [vmem:[#allocation5 + $0x138] sm:$0xff]
        %v5488 = vld [vmem:[#allocation5 + $0x140] sm:$0xff]
        %v5489 = vld [vmem:[#allocation5 + $0x148] sm:$0xff]
        %v5490 = vld [vmem:[#allocation5 + $0x150] sm:$0xff]
        %v5491 = vld [vmem:[#allocation5 + $0x158] sm:$0xff]
        %v5492 = vld [vmem:[#allocation5 + $0x160] sm:$0xff]
        %v5493 = vld [vmem:[#allocation5 + $0x168] sm:$0xff]
        %v5494 = vld [vmem:[#allocation5 + $0x170] sm:$0xff]
        %v5495 = vld [vmem:[#allocation5 + $0x178] sm:$0xff]
        %v5496 = vld [vmem:[#allocation5 + $0x180] sm:$0xff]
        %v5497 = vld [vmem:[#allocation5 + $0x188] sm:$0xff]
        %v5498 = vld [vmem:[#allocation5 + $0x190] sm:$0xff]
        %v5499 = vld [vmem:[#allocation5 + $0x198] sm:$0xff]
        %v5500 = vld [vmem:[#allocation5 + $0x1a0] sm:$0xff]
        %v5501 = vld [vmem:[#allocation5 + $0x1a8] sm:$0xff]
        %v5502 = vld [vmem:[#allocation5 + $0x1b0] sm:$0xff]
        %v5503 = vld [vmem:[#allocation5 + $0x1b8] sm:$0xff]
        %v5504 = vld [vmem:[#allocation5 + $0x1c0] sm:$0xff]
        %v5505 = vld [vmem:[#allocation5 + $0x1c8] sm:$0xff]
        %v5506 = vld [vmem:[#allocation5 + $0x1d0] sm:$0xff]
        %v5507 = vld [vmem:[#allocation5 + $0x1d8] sm:$0xff]
        %v5508 = vld [vmem:[#allocation5 + $0x1e0] sm:$0xff]
        %v5509 = vld [vmem:[#allocation5 + $0x1e8] sm:$0xff]
        %v5510 = vld [vmem:[#allocation5 + $0x1f0] sm:$0xff]
        %v5511 = vld [vmem:[#allocation5 + $0x1f8] sm:$0xff]
        %v5512 = vld [vmem:[#allocation5 + $0x200] sm:$0xff]
        %v5513 = vld [vmem:[#allocation5 + $0x208] sm:$0xff]
        %v5514 = vld [vmem:[#allocation5 + $0x210] sm:$0xff]
        %v5515 = vld [vmem:[#allocation5 + $0x218] sm:$0xff]
        %v5516 = vld [vmem:[#allocation5 + $0x220] sm:$0xff]
        %v5517 = vld [vmem:[#allocation5 + $0x228] sm:$0xff]
        %v5518 = vld [vmem:[#allocation5 + $0x230] sm:$0xff]
        %v5519 = vld [vmem:[#allocation5 + $0x238] sm:$0xff]
        %v5520 = vld [vmem:[#allocation19] sm:$0xff]
        %v5521 = vld [vmem:[#allocation19 + $0x8] sm:$0xff]
        %v5522 = vld [vmem:[#allocation19 + $0x10] sm:$0xff]
        %v5523 = vld [vmem:[#allocation19 + $0x18] sm:$0xff]
        %v5524 = vld [vmem:[#allocation19 + $0x20] sm:$0xff]
        %v5525 = vld [vmem:[#allocation19 + $0x28] sm:$0xff]
        %v5526 = vld [vmem:[#allocation19 + $0x30] sm:$0xff]
        %v5527 = vld [vmem:[#allocation19 + $0x38] sm:$0xff]
        %v5528 = vld [vmem:[#allocation19 + $0x40] sm:$0xff]
        %v5529 = vld [vmem:[#allocation19 + $0x48] sm:$0xff]
        %v5530 = vld [vmem:[#allocation19 + $0x50] sm:$0xff]
        %v5531 = vld [vmem:[#allocation19 + $0x58] sm:$0xff]
        %v5532 = vld [vmem:[#allocation19 + $0x60] sm:$0xff]
        %v5533 = vld [vmem:[#allocation19 + $0x68] sm:$0xff]
        %v5534 = vld [vmem:[#allocation19 + $0x70] sm:$0xff]
        %v5535 = vld [vmem:[#allocation19 + $0x78] sm:$0xff]
        %v5536 = vld [vmem:[#allocation19 + $0x80] sm:$0xff]
        %v5537 = vld [vmem:[#allocation19 + $0x88] sm:$0xff]
        %v5538 = vld [vmem:[#allocation19 + $0x90] sm:$0xff]
        %v5539 = vld [vmem:[#allocation19 + $0x98] sm:$0xff]
        %v5541 = vsel %vm4171, %v5449, 0
        %v5544 = vsel %vm4171, %v5451, 0
        %v5547 = vsel %vm4171, %v5453, 0
        %v5550 = vsel %vm4171, %v5455, 0
        %v5553 = vsel %vm4171, %v5457, 0
        %v5556 = vsel %vm4171, %v5459, 0
        %v5559 = vsel %vm4171, %v5461, 0
        %v5562 = vsel %vm4171, %v5463, 0
        %v5565 = vsel %vm4171, %v5465, 0
        %v5568 = vsel %vm4171, %v5467, 0
        %v5571 = vsel %vm4171, %v5469, 0
        %v5574 = vsel %vm4171, %v5471, 0
        %v5577 = vsel %vm4171, %v5473, 0
        %v5580 = vsel %vm4171, %v5475, 0
        %v5583 = vsel %vm4171, %v5477, 0
        %v5586 = vsel %vm4171, %v5479, 0
        %v5589 = vsel %vm4171, %v5481, 0
        %v5592 = vsel %vm4171, %v5483, 0
        %v5595 = vsel %vm4171, %v5485, 0
        %v5598 = vsel %vm4171, %v5487, 0
        %v5601 = vsel %vm4171, %v5489, 0
        %v5604 = vsel %vm4171, %v5491, 0
        %v5607 = vsel %vm4171, %v5493, 0
        %v5610 = vsel %vm4171, %v5495, 0
        %v5613 = vsel %vm4171, %v5497, 0
        %v5616 = vsel %vm4171, %v5499, 0
        %v5619 = vsel %vm4171, %v5501, 0
        %v5622 = vsel %vm4171, %v5503, 0
        %v5625 = vsel %vm4171, %v5505, 0
        %v5628 = vsel %vm4171, %v5507, 0
        %v5631 = vsel %vm4171, %v5509, 0
        %v5634 = vsel %vm4171, %v5511, 0
        %v5637 = vsel %vm4171, %v5513, 0
        %v5640 = vsel %vm4171, %v5515, 0
        %v5643 = vsel %vm4171, %v5517, 0
        %v5646 = vsel %vm4171, %v5519, 0
        %5648 = vmatprep.subr.mxu0 0.0
        %5649 = vmatpush1.msra.mxu0 %v5520
        %5650 = vmatprep.subr.mxu0 0.0
        %5651 = vmatpush1.msra.mxu0 %v5521
        %5652 = vmatprep.subr.mxu0 0.0
        %5653 = vmatpush1.msra.mxu0 %v5522
        %5654 = vmatprep.subr.mxu0 0.0
        %5655 = vmatpush1.msra.mxu0 %v5523
        %5656 = vmatprep.subr.mxu0 0.0
        %5657 = vmatpush1.msra.mxu0 %v5524
        %5658 = vmatprep.subr.mxu0 0.0
        %5659 = vmatpush1.msra.mxu0 %v5525
        %5660 = vmatprep.subr.mxu0 0.0
        %5661 = vmatpush1.msra.mxu0 %v5526
        %5662 = vmatprep.subr.mxu0 0.0
        %5663 = vmatpush1.msra.mxu0 %v5527
        %5664 = vmatprep.subr.mxu0 0.0
        %5665 = vmatpush1.msra.mxu0 %v5528
        %5666 = vmatprep.subr.mxu0 0.0
        %5667 = vmatpush1.msra.mxu0 %v5529
        %5668 = vmatprep.subr.mxu0 0.0
        %5669 = vmatpush1.msra.mxu0 %v5530
        %5670 = vmatprep.subr.mxu0 0.0
        %5671 = vmatpush1.msra.mxu0 %v5531
        %5672 = vmatprep.subr.mxu0 0.0
        %5673 = vmatpush1.msra.mxu0 %v5532
        %5674 = vmatprep.subr.mxu0 0.0
        %5675 = vmatpush1.msra.mxu0 %v5533
        %5676 = vmatprep.subr.mxu0 0.0
        %5677 = vmatpush1.msra.mxu0 %v5534
        %5678 = vmatprep.subr.mxu0 0.0
        %5679 = vmatpush1.msra.mxu0 %v5535
        %5680 = vmatprep.subr.mxu0 0.0
        %5681 = vmatpush1.msra.mxu0 %v5536
        %5682 = vmatprep.subr.mxu0 0.0
        %5683 = vmatpush1.msra.mxu0 %v5537
        %5684 = vmatprep.subr.mxu0 0.0
        %5685 = vmatpush1.msra.mxu0 %v5538
        %5686 = vmatprep.subr.mxu0 0.0
        %5687 = vmatpush1.msra.mxu0 %v5539
        %5688 = vmatprep.subr.mxu0 0.0
        %5689 = vmatpush1.msra.mxu0 0.0
        %5690 = vmatprep.subr.mxu0 0.0
        %5691 = vmatpush1.msra.mxu0 0.0
        %5692 = vmatprep.subr.mxu0 0.0
        %5693 = vmatpush1.msra.mxu0 0.0
        %5694 = vmatprep.subr.mxu0 0.0
        %5695 = vmatpush1.msra.mxu0 0.0
        %5696 = vmatprep.subr.mxu0 0.0
        %5697 = vmatpush1.msra.mxu0 0.0
        %5698 = vmatprep.subr.mxu0 0.0
        %5699 = vmatpush1.msra.mxu0 0.0
        %5700 = vmatprep.subr.mxu0 0.0
        %5701 = vmatpush1.msra.mxu0 0.0
        %5702 = vmatprep.subr.mxu0 0.0
        %5703 = vmatpush1.msra.mxu0 0.0
        %5704 = vmatprep.subr.mxu0 0.0
        %5705 = vmatpush1.msra.mxu0 0.0
        %5706 = vmatprep.subr.mxu0 0.0
        %5707 = vmatpush1.msra.mxu0 0.0
        %5708 = vmatprep.subr.mxu0 0.0
        %5709 = vmatpush1.msra.mxu0 0.0
        %5710 = vmatprep.subr.mxu0 0.0
        %5711 = vmatpush1.msra.mxu0 0.0
        %5712 = vmatprep.mubr.f32.mxu0 %v5541
        %5713 = vmatmul.mubr.f32.gmra.mrb[0].mxu0 %v5448
        %v5714 = vpop.f32.mrb[0].mxu0
        %v5715 = vadd.f32 0.0, %v5714
        %v5716 = vpop.f32.mrb[0].mxu0
        %5717 = vmatprep.mubr.f32.mxu0 %v5544
        %5718 = vmatmul.mubr.f32.gmra.mrb[0].mxu0 %v5450
        %v5719 = vpop.f32.mrb[0].mxu0
        %v5720 = vadd.f32 0.0, %v5719
        %v5721 = vpop.f32.mrb[0].mxu0
        %5722 = vmatprep.mubr.f32.mxu0 %v5547
        %5723 = vmatmul.mubr.f32.gmra.mrb[0].mxu0 %v5452
        %v5724 = vpop.f32.mrb[0].mxu0
        %v5725 = vadd.f32 0.0, %v5724
        %v5726 = vpop.f32.mrb[0].mxu0
        %5727 = vmatprep.mubr.f32.mxu0 %v5550
        %5728 = vmatmul.mubr.f32.gmra.mrb[0].mxu0 %v5454
        %v5729 = vpop.f32.mrb[0].mxu0
        %v5730 = vadd.f32 0.0, %v5729
        %v5731 = vpop.f32.mrb[0].mxu0
        %5732 = vmatprep.mubr.f32.mxu0 %v5553
        %5733 = vmatmul.mubr.f32.gmra.mrb[0].mxu0 %v5456
        %v5734 = vpop.f32.mrb[0].mxu0
        %v5735 = vadd.f32 0.0, %v5734
        %v5736 = vpop.f32.mrb[0].mxu0
        %5737 = vmatprep.mubr.f32.mxu0 %v5556
        %5738 = vmatmul.mubr.f32.gmra.mrb[0].mxu0 %v5458
        %v5739 = vpop.f32.mrb[0].mxu0
        %v5740 = vadd.f32 0.0, %v5739
        %v5741 = vpop.f32.mrb[0].mxu0
        %5742 = vmatprep.mubr.f32.mxu0 %v5559
        %5743 = vmatmul.mubr.f32.gmra.mrb[0].mxu0 %v5460
        %v5744 = vpop.f32.mrb[0].mxu0
        %v5745 = vadd.f32 0.0, %v5744
        %v5746 = vpop.f32.mrb[0].mxu0
        %5747 = vmatprep.mubr.f32.mxu0 %v5562
        %5748 = vmatmul.mubr.f32.gmra.mrb[0].mxu0 %v5462
        %v5749 = vpop.f32.mrb[0].mxu0
        %v5750 = vadd.f32 0.0, %v5749
        %v5751 = vpop.f32.mrb[0].mxu0
        %5752 = vmatprep.mubr.f32.mxu0 %v5565
        %5753 = vmatmul.mubr.f32.gmra.mrb[0].mxu0 %v5464
        %v5754 = vpop.f32.mrb[0].mxu0
        %v5755 = vadd.f32 0.0, %v5754
        %v5756 = vpop.f32.mrb[0].mxu0
        %5757 = vmatprep.mubr.f32.mxu0 %v5568
        %5758 = vmatmul.mubr.f32.gmra.mrb[0].mxu0 %v5466
        %v5759 = vpop.f32.mrb[0].mxu0
        %v5760 = vadd.f32 0.0, %v5759
        %v5761 = vpop.f32.mrb[0].mxu0
        %5762 = vmatprep.mubr.f32.mxu0 %v5571
        %5763 = vmatmul.mubr.f32.gmra.mrb[0].mxu0 %v5468
        %v5764 = vpop.f32.mrb[0].mxu0
        %v5765 = vadd.f32 0.0, %v5764
        %v5766 = vpop.f32.mrb[0].mxu0
        %5767 = vmatprep.mubr.f32.mxu0 %v5574
        %5768 = vmatmul.mubr.f32.gmra.mrb[0].mxu0 %v5470
        %v5769 = vpop.f32.mrb[0].mxu0
        %v5770 = vadd.f32 0.0, %v5769
        %v5771 = vpop.f32.mrb[0].mxu0
        %5772 = vmatprep.mubr.f32.mxu0 %v5577
        %5773 = vmatmul.mubr.f32.gmra.mrb[0].mxu0 %v5472
        %v5774 = vpop.f32.mrb[0].mxu0
        %v5775 = vadd.f32 0.0, %v5774
        %v5776 = vpop.f32.mrb[0].mxu0
        %5777 = vmatprep.mubr.f32.mxu0 %v5580
        %5778 = vmatmul.mubr.f32.gmra.mrb[0].mxu0 %v5474
        %v5779 = vpop.f32.mrb[0].mxu0
        %v5780 = vadd.f32 0.0, %v5779
        %v5781 = vpop.f32.mrb[0].mxu0
        %5782 = vmatprep.mubr.f32.mxu0 %v5583
        %5783 = vmatmul.mubr.f32.gmra.mrb[0].mxu0 %v5476
        %v5784 = vpop.f32.mrb[0].mxu0
        %v5785 = vadd.f32 0.0, %v5784
        %v5786 = vpop.f32.mrb[0].mxu0
        %5787 = vmatprep.mubr.f32.mxu0 %v5586
        %5788 = vmatmul.mubr.f32.gmra.mrb[0].mxu0 %v5478
        %v5789 = vpop.f32.mrb[0].mxu0
        %v5790 = vadd.f32 0.0, %v5789
        %v5791 = vpop.f32.mrb[0].mxu0
        %5792 = vmatprep.mubr.f32.mxu0 %v5589
        %5793 = vmatmul.mubr.f32.gmra.mrb[0].mxu0 %v5480
        %v5794 = vpop.f32.mrb[0].mxu0
        %v5795 = vadd.f32 0.0, %v5794
        %v5796 = vpop.f32.mrb[0].mxu0
        %5797 = vmatprep.mubr.f32.mxu0 %v5592
        %5798 = vmatmul.mubr.f32.gmra.mrb[0].mxu0 %v5482
        %v5799 = vpop.f32.mrb[0].mxu0
        %v5800 = vadd.f32 0.0, %v5799
        %v5801 = vpop.f32.mrb[0].mxu0
        %5802 = vmatprep.mubr.f32.mxu0 %v5595
        %5803 = vmatmul.mubr.f32.gmra.mrb[0].mxu0 %v5484
        %v5804 = vpop.f32.mrb[0].mxu0
        %v5805 = vadd.f32 0.0, %v5804
        %v5806 = vpop.f32.mrb[0].mxu0
        %5807 = vmatprep.mubr.f32.mxu0 %v5598
        %5808 = vmatmul.mubr.f32.gmra.mrb[0].mxu0 %v5486
        %v5809 = vpop.f32.mrb[0].mxu0
        %v5810 = vadd.f32 0.0, %v5809
        %v5811 = vpop.f32.mrb[0].mxu0
        %5812 = vmatprep.mubr.f32.mxu0 %v5601
        %5813 = vmatmul.mubr.f32.gmra.mrb[0].mxu0 %v5488
        %v5814 = vpop.f32.mrb[0].mxu0
        %v5815 = vadd.f32 0.0, %v5814
        %v5816 = vpop.f32.mrb[0].mxu0
        %5817 = vmatprep.mubr.f32.mxu0 %v5604
        %5818 = vmatmul.mubr.f32.gmra.mrb[0].mxu0 %v5490
        %v5819 = vpop.f32.mrb[0].mxu0
        %v5820 = vadd.f32 0.0, %v5819
        %v5821 = vpop.f32.mrb[0].mxu0
        %5822 = vmatprep.mubr.f32.mxu0 %v5607
        %5823 = vmatmul.mubr.f32.gmra.mrb[0].mxu0 %v5492
        %v5824 = vpop.f32.mrb[0].mxu0
        %v5825 = vadd.f32 0.0, %v5824
        %v5826 = vpop.f32.mrb[0].mxu0
        %5827 = vmatprep.mubr.f32.mxu0 %v5610
        %5828 = vmatmul.mubr.f32.gmra.mrb[0].mxu0 %v5494
        %v5829 = vpop.f32.mrb[0].mxu0
        %v5830 = vadd.f32 0.0, %v5829
        %v5831 = vpop.f32.mrb[0].mxu0
        %5832 = vmatprep.mubr.f32.mxu0 %v5613
        %5833 = vmatmul.mubr.f32.gmra.mrb[0].mxu0 %v5496
        %v5834 = vpop.f32.mrb[0].mxu0
        %v5835 = vadd.f32 0.0, %v5834
        %v5836 = vpop.f32.mrb[0].mxu0
        %5837 = vmatprep.mubr.f32.mxu0 %v5616
        %5838 = vmatmul.mubr.f32.gmra.mrb[0].mxu0 %v5498
        %v5839 = vpop.f32.mrb[0].mxu0
        %v5840 = vadd.f32 0.0, %v5839
        %v5841 = vpop.f32.mrb[0].mxu0
        %5842 = vmatprep.mubr.f32.mxu0 %v5619
        %5843 = vmatmul.mubr.f32.gmra.mrb[0].mxu0 %v5500
        %v5844 = vpop.f32.mrb[0].mxu0
        %v5845 = vadd.f32 0.0, %v5844
        %v5846 = vpop.f32.mrb[0].mxu0
        %5847 = vmatprep.mubr.f32.mxu0 %v5622
        %5848 = vmatmul.mubr.f32.gmra.mrb[0].mxu0 %v5502
        %v5849 = vpop.f32.mrb[0].mxu0
        %v5850 = vadd.f32 0.0, %v5849
        %v5851 = vpop.f32.mrb[0].mxu0
        %5852 = vmatprep.mubr.f32.mxu0 %v5625
        %5853 = vmatmul.mubr.f32.gmra.mrb[0].mxu0 %v5504
        %v5854 = vpop.f32.mrb[0].mxu0
        %v5855 = vadd.f32 0.0, %v5854
        %v5856 = vpop.f32.mrb[0].mxu0
        %5857 = vmatprep.mubr.f32.mxu0 %v5628
        %5858 = vmatmul.mubr.f32.gmra.mrb[0].mxu0 %v5506
        %v5859 = vpop.f32.mrb[0].mxu0
        %v5860 = vadd.f32 0.0, %v5859
        %v5861 = vpop.f32.mrb[0].mxu0
        %5862 = vmatprep.mubr.f32.mxu0 %v5631
        %5863 = vmatmul.mubr.f32.gmra.mrb[0].mxu0 %v5508
        %v5864 = vpop.f32.mrb[0].mxu0
        %v5865 = vadd.f32 0.0, %v5864
        %v5866 = vpop.f32.mrb[0].mxu0
        %5867 = vmatprep.mubr.f32.mxu0 %v5634
        %5868 = vmatmul.mubr.f32.gmra.mrb[0].mxu0 %v5510
        %v5869 = vpop.f32.mrb[0].mxu0
        %v5870 = vadd.f32 0.0, %v5869
        %v5871 = vpop.f32.mrb[0].mxu0
        %5872 = vmatprep.mubr.f32.mxu0 %v5637
        %5873 = vmatmul.mubr.f32.gmra.mrb[0].mxu0 %v5512
        %v5874 = vpop.f32.mrb[0].mxu0
        %v5875 = vadd.f32 0.0, %v5874
        %v5876 = vpop.f32.mrb[0].mxu0
        %5877 = vmatprep.mubr.f32.mxu0 %v5640
        %5878 = vmatmul.mubr.f32.gmra.mrb[0].mxu0 %v5514
        %v5879 = vpop.f32.mrb[0].mxu0
        %v5880 = vadd.f32 0.0, %v5879
        %v5881 = vpop.f32.mrb[0].mxu0
        %5882 = vmatprep.mubr.f32.mxu0 %v5643
        %5883 = vmatmul.mubr.f32.gmra.mrb[0].mxu0 %v5516
        %v5884 = vpop.f32.mrb[0].mxu0
        %v5885 = vadd.f32 0.0, %v5884
        %v5886 = vpop.f32.mrb[0].mxu0
        %5887 = vmatprep.mubr.f32.mxu0 %v5646
        %5888 = vmatmul.mubr.f32.gmra.mrb[0].mxu0 %v5518
        %v5889 = vpop.f32.mrb[0].mxu0
        %v5890 = vadd.f32 0.0, %v5889
        %v5891 = vpop.f32.mrb[0].mxu0
        %5892 = vdwg.mxu0
        %vm5893 = vcmask 523264
        %5894 = vst.msk [vmem:[#allocation6] sm:$0xff] %vm5893, %v5715
        %5895 = vst.msk [vmem:[#allocation6 + $0x8] sm:$0xff] %vm5893, %v5720
        %5896 = vst.msk [vmem:[#allocation6 + $0x10] sm:$0xff] %vm5893, %v5725
        %5897 = vst.msk [vmem:[#allocation6 + $0x18] sm:$0xff] %vm5893, %v5730
        %5898 = vst.msk [vmem:[#allocation6 + $0x20] sm:$0xff] %vm5893, %v5735
        %5899 = vst.msk [vmem:[#allocation6 + $0x28] sm:$0xff] %vm5893, %v5740
        %5900 = vst.msk [vmem:[#allocation6 + $0x30] sm:$0xff] %vm5893, %v5745
        %5901 = vst.msk [vmem:[#allocation6 + $0x38] sm:$0xff] %vm5893, %v5750
        %5902 = vst.msk [vmem:[#allocation6 + $0x40] sm:$0xff] %vm5893, %v5755
        %5903 = vst.msk [vmem:[#allocation6 + $0x48] sm:$0xff] %vm5893, %v5760
        %5904 = vst.msk [vmem:[#allocation6 + $0x50] sm:$0xff] %vm5893, %v5765
        %5905 = vst.msk [vmem:[#allocation6 + $0x58] sm:$0xff] %vm5893, %v5770
        %5906 = vst.msk [vmem:[#allocation6 + $0x60] sm:$0xff] %vm5893, %v5775
        %5907 = vst.msk [vmem:[#allocation6 + $0x68] sm:$0xff] %vm5893, %v5780
        %5908 = vst.msk [vmem:[#allocation6 + $0x70] sm:$0xff] %vm5893, %v5785
        %5909 = vst.msk [vmem:[#allocation6 + $0x78] sm:$0xff] %vm5893, %v5790
        %5910 = vst.msk [vmem:[#allocation6 + $0x80] sm:$0xff] %vm5893, %v5795
        %5911 = vst.msk [vmem:[#allocation6 + $0x88] sm:$0xff] %vm5893, %v5800
        %5912 = vst.msk [vmem:[#allocation6 + $0x90] sm:$0xff] %vm5893, %v5805
        %5913 = vst.msk [vmem:[#allocation6 + $0x98] sm:$0xff] %vm5893, %v5810
        %5914 = vst.msk [vmem:[#allocation6 + $0xa0] sm:$0xff] %vm5893, %v5815
        %5915 = vst.msk [vmem:[#allocation6 + $0xa8] sm:$0xff] %vm5893, %v5820
        %5916 = vst.msk [vmem:[#allocation6 + $0xb0] sm:$0xff] %vm5893, %v5825
        %5917 = vst.msk [vmem:[#allocation6 + $0xb8] sm:$0xff] %vm5893, %v5830
        %5918 = vst.msk [vmem:[#allocation6 + $0xc0] sm:$0xff] %vm5893, %v5835
        %5919 = vst.msk [vmem:[#allocation6 + $0xc8] sm:$0xff] %vm5893, %v5840
        %5920 = vst.msk [vmem:[#allocation6 + $0xd0] sm:$0xff] %vm5893, %v5845
        %5921 = vst.msk [vmem:[#allocation6 + $0xd8] sm:$0xff] %vm5893, %v5850
        %5922 = vst.msk [vmem:[#allocation6 + $0xe0] sm:$0xff] %vm5893, %v5855
        %5923 = vst.msk [vmem:[#allocation6 + $0xe8] sm:$0xff] %vm5893, %v5860
        %5924 = vst.msk [vmem:[#allocation6 + $0xf0] sm:$0xff] %vm5893, %v5865
        %5925 = vst.msk [vmem:[#allocation6 + $0xf8] sm:$0xff] %vm5893, %v5870
        %5926 = vst.msk [vmem:[#allocation6 + $0x100] sm:$0xff] %vm5893, %v5875
        %5927 = vst.msk [vmem:[#allocation6 + $0x108] sm:$0xff] %vm5893, %v5880
        %5928 = vst.msk [vmem:[#allocation6 + $0x110] sm:$0xff] %vm5893, %v5885
        %5929 = vst.msk [vmem:[#allocation6 + $0x118] sm:$0xff] %vm5893, %v5890
        %v5930 = vld [vmem:[#allocation6] ss:$2 sm:$0xff]
        %s5931 = scalar_lea.vmem [#allocation6], 16
        %v5932 = vld [vmem:[%s5931] ss:$2 sm:$0xff]
        %s5933 = scalar_lea.vmem [#allocation6], 32
        %v5934 = vld [vmem:[%s5933] ss:$2 sm:$0xff]
        %s5935 = scalar_lea.vmem [#allocation6], 48
        %v5936 = vld [vmem:[%s5935] ss:$2 sm:$0xff]
        %s5937 = scalar_lea.vmem [#allocation6], 64
        %v5938 = vld [vmem:[%s5937] ss:$2 sm:$0xff]
        %s5939 = scalar_lea.vmem [#allocation6], 80
        %v5940 = vld [vmem:[%s5939] ss:$2 sm:$0xff]
        %s5941 = scalar_lea.vmem [#allocation6], 96
        %v5942 = vld [vmem:[%s5941] ss:$2 sm:$0xff]
        %s5943 = scalar_lea.vmem [#allocation6], 112
        %v5944 = vld [vmem:[%s5943] ss:$2 sm:$0xff]
        %s5945 = scalar_lea.vmem [#allocation6], 128
        %v5946 = vld [vmem:[%s5945] ss:$2 sm:$0xff]
        %s5947 = scalar_lea.vmem [#allocation6], 144
        %v5948 = vld [vmem:[%s5947] ss:$2 sm:$0xff]
        %s5949 = scalar_lea.vmem [#allocation6], 160
        %v5950 = vld [vmem:[%s5949] ss:$2 sm:$0xff]
        %s5951 = scalar_lea.vmem [#allocation6], 176
        %v5952 = vld [vmem:[%s5951] ss:$2 sm:$0xff]
        %s5953 = scalar_lea.vmem [#allocation6], 192
        %v5954 = vld [vmem:[%s5953] ss:$2 sm:$0xff]
        %s5955 = scalar_lea.vmem [#allocation6], 208
        %v5956 = vld [vmem:[%s5955] ss:$2 sm:$0xff]
        %s5957 = scalar_lea.vmem [#allocation6], 224
        %v5958 = vld [vmem:[%s5957] ss:$2 sm:$0xff]
        %s5959 = scalar_lea.vmem [#allocation6], 240
        %v5960 = vld [vmem:[%s5959] ss:$2 sm:$0xff]
        %s5961 = scalar_lea.vmem [#allocation6], 256
        %v5962 = vld [vmem:[%s5961] ss:$2 sm:$0xff]
        %s5963 = scalar_lea.vmem [#allocation6], 272
        %v5964 = vld [vmem:[%s5963] ss:$2 sm:$0xff]
        %s5965 = scalar_lea.vmem [#allocation6], 1
        %v5966 = vld [vmem:[%s5965] ss:$2 sm:$0xff]
        %s5967 = scalar_lea.vmem [#allocation6], 17
        %v5968 = vld [vmem:[%s5967] ss:$2 sm:$0xff]
        %s5969 = scalar_lea.vmem [#allocation6], 33
        %v5970 = vld [vmem:[%s5969] ss:$2 sm:$0xff]
        %s5971 = scalar_lea.vmem [#allocation6], 49
        %v5972 = vld [vmem:[%s5971] ss:$2 sm:$0xff]
        %s5973 = scalar_lea.vmem [#allocation6], 65
        %v5974 = vld [vmem:[%s5973] ss:$2 sm:$0xff]
        %s5975 = scalar_lea.vmem [#allocation6], 81
        %v5976 = vld [vmem:[%s5975] ss:$2 sm:$0xff]
        %s5977 = scalar_lea.vmem [#allocation6], 97
        %v5978 = vld [vmem:[%s5977] ss:$2 sm:$0xff]
        %s5979 = scalar_lea.vmem [#allocation6], 113
        %v5980 = vld [vmem:[%s5979] ss:$2 sm:$0xff]
        %s5981 = scalar_lea.vmem [#allocation6], 129
        %v5982 = vld [vmem:[%s5981] ss:$2 sm:$0xff]
        %s5983 = scalar_lea.vmem [#allocation6], 145
        %v5984 = vld [vmem:[%s5983] ss:$2 sm:$0xff]
        %s5985 = scalar_lea.vmem [#allocation6], 161
        %v5986 = vld [vmem:[%s5985] ss:$2 sm:$0xff]
        %s5987 = scalar_lea.vmem [#allocation6], 177
        %v5988 = vld [vmem:[%s5987] ss:$2 sm:$0xff]
        %s5989 = scalar_lea.vmem [#allocation6], 193
        %v5990 = vld [vmem:[%s5989] ss:$2 sm:$0xff]
        %s5991 = scalar_lea.vmem [#allocation6], 209
        %v5992 = vld [vmem:[%s5991] ss:$2 sm:$0xff]
        %s5993 = scalar_lea.vmem [#allocation6], 225
        %v5994 = vld [vmem:[%s5993] ss:$2 sm:$0xff]
        %s5995 = scalar_lea.vmem [#allocation6], 241
        %v5996 = vld [vmem:[%s5995] ss:$2 sm:$0xff]
        %s5997 = scalar_lea.vmem [#allocation6], 257
        %v5998 = vld [vmem:[%s5997] ss:$2 sm:$0xff]
        %s5999 = scalar_lea.vmem [#allocation6], 273
        %v6000 = vld [vmem:[%s5999] ss:$2 sm:$0xff]
        %v6001 = vmax.f32 %v5930, %v5966
        %v6002 = vmax.f32 %v5932, %v5968
        %v6003 = vmax.f32 %v5934, %v5970
        %v6004 = vmax.f32 %v5936, %v5972
        %v6005 = vmax.f32 %v5938, %v5974
        %v6006 = vmax.f32 %v5940, %v5976
        %v6007 = vmax.f32 %v5942, %v5978
        %v6008 = vmax.f32 %v5944, %v5980
        %v6009 = vmax.f32 %v5946, %v5982
        %v6010 = vmax.f32 %v5948, %v5984
        %v6011 = vmax.f32 %v5950, %v5986
        %v6012 = vmax.f32 %v5952, %v5988
        %v6013 = vmax.f32 %v5954, %v5990
        %v6014 = vmax.f32 %v5956, %v5992
        %v6015 = vmax.f32 %v5958, %v5994
        %v6016 = vmax.f32 %v5960, %v5996
        %v6017 = vmax.f32 %v5962, %v5998
        %v6018 = vmax.f32 %v5964, %v6000
        %v6019 = vld [vmem:[#allocation21] sm:$0x1]
        %v6021 = vlaneseq
        %v6022 = vshrl.u32 %v6021, 7
        %v6023 = vsub.s32 0, %v6022
        %v6024 = vrot.slane %v6019, %v6023
        %v6026 = vadd.f32 %v6001, %v6024
        %v6027 = vadd.f32 %v6002, %v6024
        %v6028 = vadd.f32 %v6003, %v6024
        %v6029 = vadd.f32 %v6004, %v6024
        %v6030 = vadd.f32 %v6005, %v6024
        %v6031 = vadd.f32 %v6006, %v6024
        %v6032 = vadd.f32 %v6007, %v6024
        %v6033 = vadd.f32 %v6008, %v6024
        %v6034 = vadd.f32 %v6009, %v6024
        %v6035 = vadd.f32 %v6010, %v6024
        %v6036 = vadd.f32 %v6011, %v6024
        %v6037 = vadd.f32 %v6012, %v6024
        %v6038 = vadd.f32 %v6013, %v6024
        %v6039 = vadd.f32 %v6014, %v6024
        %v6040 = vadd.f32 %v6015, %v6024
        %v6041 = vadd.f32 %v6016, %v6024
        %v6042 = vadd.f32 %v6017, %v6024
        %v6043 = vadd.f32 %v6018, %v6024
        %v6044 = vmax.f32 %v6026, 0.0
        %v6045 = vmax.f32 %v6027, 0.0
        %v6046 = vmax.f32 %v6028, 0.0
        %v6047 = vmax.f32 %v6029, 0.0
        %v6048 = vmax.f32 %v6030, 0.0
        %v6049 = vmax.f32 %v6031, 0.0
        %v6050 = vmax.f32 %v6032, 0.0
        %v6051 = vmax.f32 %v6033, 0.0
        %v6052 = vmax.f32 %v6034, 0.0
        %v6053 = vmax.f32 %v6035, 0.0
        %v6054 = vmax.f32 %v6036, 0.0
        %v6055 = vmax.f32 %v6037, 0.0
        %v6056 = vmax.f32 %v6038, 0.0
        %v6057 = vmax.f32 %v6039, 0.0
        %v6058 = vmax.f32 %v6040, 0.0
        %v6059 = vmax.f32 %v6041, 0.0
        %v6060 = vmax.f32 %v6042, 0.0
        %v6061 = vmax.f32 %v6043, 0.0
        %v6062 = vld [vmem:[#allocation15] sm:$0xff]
        %v6063 = vld [vmem:[#allocation15 + $0x8] sm:$0xff]
        %v6064 = vld [vmem:[#allocation15 + $0x10] sm:$0xff]
        %v6065 = vld [vmem:[#allocation15 + $0x18] sm:$0xff]
        %v6066 = vld [vmem:[#allocation15 + $0x20] sm:$0xff]
        %v6067 = vld [vmem:[#allocation15 + $0x28] sm:$0xff]
        %v6068 = vld [vmem:[#allocation15 + $0x30] sm:$0xff]
        %v6069 = vld [vmem:[#allocation15 + $0x38] sm:$0xff]
        %v6070 = vld [vmem:[#allocation15 + $0x40] sm:$0xff]
        %v6071 = vld [vmem:[#allocation15 + $0x48] sm:$0xff]
        %v6072 = vld [vmem:[#allocation15 + $0x50] sm:$0xff]
        %v6073 = vld [vmem:[#allocation15 + $0x58] sm:$0xff]
        %v6074 = vld [vmem:[#allocation15 + $0x60] sm:$0xff]
        %v6075 = vld [vmem:[#allocation15 + $0x68] sm:$0xff]
        %v6076 = vld [vmem:[#allocation15 + $0x70] sm:$0xff]
        %v6077 = vld [vmem:[#allocation15 + $0x78] sm:$0xff]
        %v6078 = vld [vmem:[#allocation15 + $0x80] sm:$0xff]
        %v6079 = vld [vmem:[#allocation15 + $0x88] sm:$0xff]
        %vm6080 = vcmp.gt.f32.partialorder %v6062, 0.5
        %vm6081 = vcmp.gt.f32.partialorder %v6063, 0.5
        %vm6082 = vcmp.gt.f32.partialorder %v6064, 0.5
        %vm6083 = vcmp.gt.f32.partialorder %v6065, 0.5
        %vm6084 = vcmp.gt.f32.partialorder %v6066, 0.5
        %vm6085 = vcmp.gt.f32.partialorder %v6067, 0.5
        %vm6086 = vcmp.gt.f32.partialorder %v6068, 0.5
        %vm6087 = vcmp.gt.f32.partialorder %v6069, 0.5
        %vm6088 = vcmp.gt.f32.partialorder %v6070, 0.5
        %vm6089 = vcmp.gt.f32.partialorder %v6071, 0.5
        %vm6090 = vcmp.gt.f32.partialorder %v6072, 0.5
        %vm6091 = vcmp.gt.f32.partialorder %v6073, 0.5
        %vm6092 = vcmp.gt.f32.partialorder %v6074, 0.5
        %vm6093 = vcmp.gt.f32.partialorder %v6075, 0.5
        %vm6094 = vcmp.gt.f32.partialorder %v6076, 0.5
        %vm6095 = vcmp.gt.f32.partialorder %v6077, 0.5
        %vm6096 = vcmp.gt.f32.partialorder %v6078, 0.5
        %vm6097 = vcmp.gt.f32.partialorder %v6079, 0.5
        %v6098 = vsel %vm6080, %v6044, 0.0
        %v6099 = vsel %vm6081, %v6045, 0.0
        %v6100 = vsel %vm6082, %v6046, 0.0
        %v6101 = vsel %vm6083, %v6047, 0.0
        %v6102 = vsel %vm6084, %v6048, 0.0
        %v6103 = vsel %vm6085, %v6049, 0.0
        %v6104 = vsel %vm6086, %v6050, 0.0
        %v6105 = vsel %vm6087, %v6051, 0.0
        %v6106 = vsel %vm6088, %v6052, 0.0
        %v6107 = vsel %vm6089, %v6053, 0.0
        %v6108 = vsel %vm6090, %v6054, 0.0
        %v6109 = vsel %vm6091, %v6055, 0.0
        %v6110 = vsel %vm6092, %v6056, 0.0
        %v6111 = vsel %vm6093, %v6057, 0.0
        %v6112 = vsel %vm6094, %v6058, 0.0
        %v6113 = vsel %vm6095, %v6059, 0.0
        %v6114 = vsel %vm6096, %v6060, 0.0
        %v6115 = vsel %vm6097, %v6061, 0.0
        %vm6116 = vcmask 516096
        %6117 = vst.msk [vmem:[#allocation7] sm:$0x1] %vm6116, 0.0
        %6118 = vst.msk [vmem:[#allocation7 + $0x1] sm:$0xff] %vm5893, %v6098
        %6119 = vst.msk [vmem:[#allocation7 + $0x9] sm:$0xff] %vm5893, %v6099
        %6120 = vst.msk [vmem:[#allocation7 + $0x11] sm:$0xff] %vm5893, %v6100
        %6121 = vst.msk [vmem:[#allocation7 + $0x19] sm:$0xff] %vm5893, %v6101
        %6122 = vst.msk [vmem:[#allocation7 + $0x21] sm:$0xff] %vm5893, %v6102
        %6123 = vst.msk [vmem:[#allocation7 + $0x29] sm:$0xff] %vm5893, %v6103
        %6124 = vst.msk [vmem:[#allocation7 + $0x31] sm:$0xff] %vm5893, %v6104
        %6125 = vst.msk [vmem:[#allocation7 + $0x39] sm:$0xff] %vm5893, %v6105
        %6126 = vst.msk [vmem:[#allocation7 + $0x41] sm:$0xff] %vm5893, %v6106
        %6127 = vst.msk [vmem:[#allocation7 + $0x49] sm:$0xff] %vm5893, %v6107
        %6128 = vst.msk [vmem:[#allocation7 + $0x51] sm:$0xff] %vm5893, %v6108
        %6129 = vst.msk [vmem:[#allocation7 + $0x59] sm:$0xff] %vm5893, %v6109
        %6130 = vst.msk [vmem:[#allocation7 + $0x61] sm:$0xff] %vm5893, %v6110
        %6131 = vst.msk [vmem:[#allocation7 + $0x69] sm:$0xff] %vm5893, %v6111
        %6132 = vst.msk [vmem:[#allocation7 + $0x71] sm:$0xff] %vm5893, %v6112
        %6133 = vst.msk [vmem:[#allocation7 + $0x79] sm:$0xff] %vm5893, %v6113
        %6134 = vst.msk [vmem:[#allocation7 + $0x81] sm:$0xff] %vm5893, %v6114
        %vm6135 = vcmask 522240
        %6136 = vst.msk [vmem:[#allocation7 + $0x89] sm:$0x7f] %vm6135, %v6115
        %v6137 = vld [vmem:[#allocation7] sm:$0xff]
        %v6138 = vld [vmem:[#allocation7 + $0x8] sm:$0xff]
        %v6139 = vld [vmem:[#allocation7 + $0x10] sm:$0xff]
        %v6140 = vld [vmem:[#allocation7 + $0x18] sm:$0xff]
        %v6141 = vld [vmem:[#allocation7 + $0x20] sm:$0xff]
        %v6142 = vld [vmem:[#allocation7 + $0x28] sm:$0xff]
        %v6143 = vld [vmem:[#allocation7 + $0x30] sm:$0xff]
        %v6144 = vld [vmem:[#allocation7 + $0x38] sm:$0xff]
        %v6145 = vld [vmem:[#allocation7 + $0x40] sm:$0xff]
        %v6146 = vld [vmem:[#allocation7 + $0x48] sm:$0xff]
        %v6147 = vld [vmem:[#allocation7 + $0x50] sm:$0xff]
        %v6148 = vld [vmem:[#allocation7 + $0x58] sm:$0xff]
        %v6149 = vld [vmem:[#allocation7 + $0x60] sm:$0xff]
        %v6150 = vld [vmem:[#allocation7 + $0x68] sm:$0xff]
        %v6151 = vld [vmem:[#allocation7 + $0x70] sm:$0xff]
        %v6152 = vld [vmem:[#allocation7 + $0x78] sm:$0xff]
        %v6153 = vld [vmem:[#allocation7 + $0x80] sm:$0xff]
        %v6154 = vld [vmem:[#allocation7 + $0x88] sm:$0xff]
        %6155 = vst.msk [vmem:[#allocation8] sm:$0xff] %vm5893, %v6137
        %6156 = vst.msk [vmem:[#allocation8 + $0x10] sm:$0xff] %vm5893, %v6138
        %6157 = vst.msk [vmem:[#allocation8 + $0x20] sm:$0xff] %vm5893, %v6139
        %6158 = vst.msk [vmem:[#allocation8 + $0x30] sm:$0xff] %vm5893, %v6140
        %6159 = vst.msk [vmem:[#allocation8 + $0x40] sm:$0xff] %vm5893, %v6141
        %6160 = vst.msk [vmem:[#allocation8 + $0x50] sm:$0xff] %vm5893, %v6142
        %6161 = vst.msk [vmem:[#allocation8 + $0x60] sm:$0xff] %vm5893, %v6143
        %6162 = vst.msk [vmem:[#allocation8 + $0x70] sm:$0xff] %vm5893, %v6144
        %6163 = vst.msk [vmem:[#allocation8 + $0x80] sm:$0xff] %vm5893, %v6145
        %6164 = vst.msk [vmem:[#allocation8 + $0x90] sm:$0xff] %vm5893, %v6146
        %6165 = vst.msk [vmem:[#allocation8 + $0xa0] sm:$0xff] %vm5893, %v6147
        %6166 = vst.msk [vmem:[#allocation8 + $0xb0] sm:$0xff] %vm5893, %v6148
        %6167 = vst.msk [vmem:[#allocation8 + $0xc0] sm:$0xff] %vm5893, %v6149
        %6168 = vst.msk [vmem:[#allocation8 + $0xd0] sm:$0xff] %vm5893, %v6150
        %6169 = vst.msk [vmem:[#allocation8 + $0xe0] sm:$0xff] %vm5893, %v6151
        %6170 = vst.msk [vmem:[#allocation8 + $0xf0] sm:$0xff] %vm5893, %v6152
        %6171 = vst.msk [vmem:[#allocation8 + $0x100] sm:$0xff] %vm5893, %v6153
        %6172 = vst.msk [vmem:[#allocation8 + $0x110] sm:$0xff] %vm5893, %v6154
        %v6173 = vld [vmem:[#allocation7 + $0x1] sm:$0xff]
        %v6174 = vld [vmem:[#allocation7 + $0x9] sm:$0xff]
        %v6175 = vld [vmem:[#allocation7 + $0x11] sm:$0xff]
        %v6176 = vld [vmem:[#allocation7 + $0x19] sm:$0xff]
        %v6177 = vld [vmem:[#allocation7 + $0x21] sm:$0xff]
        %v6178 = vld [vmem:[#allocation7 + $0x29] sm:$0xff]
        %v6179 = vld [vmem:[#allocation7 + $0x31] sm:$0xff]
        %v6180 = vld [vmem:[#allocation7 + $0x39] sm:$0xff]
        %v6181 = vld [vmem:[#allocation7 + $0x41] sm:$0xff]
        %v6182 = vld [vmem:[#allocation7 + $0x49] sm:$0xff]
        %v6183 = vld [vmem:[#allocation7 + $0x51] sm:$0xff]
        %v6184 = vld [vmem:[#allocation7 + $0x59] sm:$0xff]
        %v6185 = vld [vmem:[#allocation7 + $0x61] sm:$0xff]
        %v6186 = vld [vmem:[#allocation7 + $0x69] sm:$0xff]
        %v6187 = vld [vmem:[#allocation7 + $0x71] sm:$0xff]
        %v6188 = vld [vmem:[#allocation7 + $0x79] sm:$0xff]
        %v6189 = vld [vmem:[#allocation7 + $0x81] sm:$0xff]
        %v6190 = vld [vmem:[#allocation7 + $0x89] sm:$0x7f]
        %6209 = vrot.lane.b32.xlu0 %v6173, 64
        %v6210 = vpop.permute.xlu0 %6209
        %6211 = vrot.lane.b32.xlu0 %v6174, 64
        %v6212 = vpop.permute.xlu0 %6211
        %6213 = vrot.lane.b32.xlu0 %v6175, 64
        %v6214 = vpop.permute.xlu0 %6213
        %6215 = vrot.lane.b32.xlu0 %v6176, 64
        %v6216 = vpop.permute.xlu0 %6215
        %6217 = vrot.lane.b32.xlu0 %v6177, 64
        %v6218 = vpop.permute.xlu0 %6217
        %6219 = vrot.lane.b32.xlu0 %v6178, 64
        %v6220 = vpop.permute.xlu0 %6219
        %6221 = vrot.lane.b32.xlu0 %v6179, 64
        %v6222 = vpop.permute.xlu0 %6221
        %6223 = vrot.lane.b32.xlu0 %v6180, 64
        %v6224 = vpop.permute.xlu0 %6223
        %6225 = vrot.lane.b32.xlu0 %v6181, 64
        %v6226 = vpop.permute.xlu0 %6225
        %6227 = vrot.lane.b32.xlu0 %v6182, 64
        %v6228 = vpop.permute.xlu0 %6227
        %6229 = vrot.lane.b32.xlu0 %v6183, 64
        %v6230 = vpop.permute.xlu0 %6229
        %6231 = vrot.lane.b32.xlu0 %v6184, 64
        %v6232 = vpop.permute.xlu0 %6231
        %6233 = vrot.lane.b32.xlu0 %v6185, 64
        %v6234 = vpop.permute.xlu0 %6233
        %6235 = vrot.lane.b32.xlu0 %v6186, 64
        %v6236 = vpop.permute.xlu0 %6235
        %6237 = vrot.lane.b32.xlu0 %v6187, 64
        %v6238 = vpop.permute.xlu0 %6237
        %6239 = vrot.lane.b32.xlu0 %v6188, 64
        %v6240 = vpop.permute.xlu0 %6239
        %6241 = vrot.lane.b32.xlu0 %v6189, 64
        %v6242 = vpop.permute.xlu0 %6241
        %6243 = vrot.lane.b32.xlu0 %v6190, 64
        %v6244 = vpop.permute.xlu0 %6243
        %vm6263 = vcmask 1048064
        %6264 = vst.msk [vmem:[#allocation8] sm:$0xff] %vm6263, %v6210
        %6265 = vst.msk [vmem:[#allocation8 + $0x10] sm:$0xff] %vm6263, %v6212
        %6266 = vst.msk [vmem:[#allocation8 + $0x20] sm:$0xff] %vm6263, %v6214
        %6267 = vst.msk [vmem:[#allocation8 + $0x30] sm:$0xff] %vm6263, %v6216
        %6268 = vst.msk [vmem:[#allocation8 + $0x40] sm:$0xff] %vm6263, %v6218
        %6269 = vst.msk [vmem:[#allocation8 + $0x50] sm:$0xff] %vm6263, %v6220
        %6270 = vst.msk [vmem:[#allocation8 + $0x60] sm:$0xff] %vm6263, %v6222
        %6271 = vst.msk [vmem:[#allocation8 + $0x70] sm:$0xff] %vm6263, %v6224
        %6272 = vst.msk [vmem:[#allocation8 + $0x80] sm:$0xff] %vm6263, %v6226
        %6273 = vst.msk [vmem:[#allocation8 + $0x90] sm:$0xff] %vm6263, %v6228
        %6274 = vst.msk [vmem:[#allocation8 + $0xa0] sm:$0xff] %vm6263, %v6230
        %6275 = vst.msk [vmem:[#allocation8 + $0xb0] sm:$0xff] %vm6263, %v6232
        %6276 = vst.msk [vmem:[#allocation8 + $0xc0] sm:$0xff] %vm6263, %v6234
        %6277 = vst.msk [vmem:[#allocation8 + $0xd0] sm:$0xff] %vm6263, %v6236
        %6278 = vst.msk [vmem:[#allocation8 + $0xe0] sm:$0xff] %vm6263, %v6238
        %6279 = vst.msk [vmem:[#allocation8 + $0xf0] sm:$0xff] %vm6263, %v6240
        %6280 = vst.msk [vmem:[#allocation8 + $0x100] sm:$0xff] %vm6263, %v6242
        %vm6281 = vcmask 1047040
        %6282 = vst.msk [vmem:[#allocation8 + $0x110] sm:$0x7f] %vm6281, %v6244
        %v6283 = vld [vmem:[#allocation7 + $0x2] sm:$0xff]
        %v6284 = vld [vmem:[#allocation7 + $0xa] sm:$0xff]
        %v6285 = vld [vmem:[#allocation7 + $0x12] sm:$0xff]
        %v6286 = vld [vmem:[#allocation7 + $0x1a] sm:$0xff]
        %v6287 = vld [vmem:[#allocation7 + $0x22] sm:$0xff]
        %v6288 = vld [vmem:[#allocation7 + $0x2a] sm:$0xff]
        %v6289 = vld [vmem:[#allocation7 + $0x32] sm:$0xff]
        %v6290 = vld [vmem:[#allocation7 + $0x3a] sm:$0xff]
        %v6291 = vld [vmem:[#allocation7 + $0x42] sm:$0xff]
        %v6292 = vld [vmem:[#allocation7 + $0x4a] sm:$0xff]
        %v6293 = vld [vmem:[#allocation7 + $0x52] sm:$0xff]
        %v6294 = vld [vmem:[#allocation7 + $0x5a] sm:$0xff]
        %v6295 = vld [vmem:[#allocation7 + $0x62] sm:$0xff]
        %v6296 = vld [vmem:[#allocation7 + $0x6a] sm:$0xff]
        %v6297 = vld [vmem:[#allocation7 + $0x72] sm:$0xff]
        %v6298 = vld [vmem:[#allocation7 + $0x7a] sm:$0xff]
        %v6299 = vld [vmem:[#allocation7 + $0x82] sm:$0xff]
        %v6300 = vld [vmem:[#allocation7 + $0x8a] sm:$0x3f]
        %6301 = vst.msk [vmem:[#allocation8 + $0x8] sm:$0xff] %vm5893, %v6283
        %6302 = vst.msk [vmem:[#allocation8 + $0x18] sm:$0xff] %vm5893, %v6284
        %6303 = vst.msk [vmem:[#allocation8 + $0x28] sm:$0xff] %vm5893, %v6285
        %6304 = vst.msk [vmem:[#allocation8 + $0x38] sm:$0xff] %vm5893, %v6286
        %6305 = vst.msk [vmem:[#allocation8 + $0x48] sm:$0xff] %vm5893, %v6287
        %6306 = vst.msk [vmem:[#allocation8 + $0x58] sm:$0xff] %vm5893, %v6288
        %6307 = vst.msk [vmem:[#allocation8 + $0x68] sm:$0xff] %vm5893, %v6289
        %6308 = vst.msk [vmem:[#allocation8 + $0x78] sm:$0xff] %vm5893, %v6290
        %6309 = vst.msk [vmem:[#allocation8 + $0x88] sm:$0xff] %vm5893, %v6291
        %6310 = vst.msk [vmem:[#allocation8 + $0x98] sm:$0xff] %vm5893, %v6292
        %6311 = vst.msk [vmem:[#allocation8 + $0xa8] sm:$0xff] %vm5893, %v6293
        %6312 = vst.msk [vmem:[#allocation8 + $0xb8] sm:$0xff] %vm5893, %v6294
        %6313 = vst.msk [vmem:[#allocation8 + $0xc8] sm:$0xff] %vm5893, %v6295
        %6314 = vst.msk [vmem:[#allocation8 + $0xd8] sm:$0xff] %vm5893, %v6296
        %6315 = vst.msk [vmem:[#allocation8 + $0xe8] sm:$0xff] %vm5893, %v6297
        %6316 = vst.msk [vmem:[#allocation8 + $0xf8] sm:$0xff] %vm5893, %v6298
        %6317 = vst.msk [vmem:[#allocation8 + $0x108] sm:$0xff] %vm5893, %v6299
        %vm6318 = vcmask 521216
        %6319 = vst.msk [vmem:[#allocation8 + $0x118] sm:$0x3f] %vm6318, %v6300
        %v6320 = vld [vmem:[#allocation8] sm:$0xff]
        %v6321 = vld [vmem:[#allocation8 + $0x8] sm:$0xff]
        %v6322 = vld [vmem:[#allocation8 + $0x10] sm:$0xff]
        %v6323 = vld [vmem:[#allocation8 + $0x18] sm:$0xff]
        %v6324 = vld [vmem:[#allocation8 + $0x20] sm:$0xff]
        %v6325 = vld [vmem:[#allocation8 + $0x28] sm:$0xff]
        %v6326 = vld [vmem:[#allocation8 + $0x30] sm:$0xff]
        %v6327 = vld [vmem:[#allocation8 + $0x38] sm:$0xff]
        %v6328 = vld [vmem:[#allocation8 + $0x40] sm:$0xff]
        %v6329 = vld [vmem:[#allocation8 + $0x48] sm:$0xff]
        %v6330 = vld [vmem:[#allocation8 + $0x50] sm:$0xff]
        %v6331 = vld [vmem:[#allocation8 + $0x58] sm:$0xff]
        %v6332 = vld [vmem:[#allocation8 + $0x60] sm:$0xff]
        %v6333 = vld [vmem:[#allocation8 + $0x68] sm:$0xff]
        %v6334 = vld [vmem:[#allocation8 + $0x70] sm:$0xff]
        %v6335 = vld [vmem:[#allocation8 + $0x78] sm:$0xff]
        %v6336 = vld [vmem:[#allocation8 + $0x80] sm:$0xff]
        %v6337 = vld [vmem:[#allocation8 + $0x88] sm:$0xff]
        %v6338 = vld [vmem:[#allocation8 + $0x90] sm:$0xff]
        %v6339 = vld [vmem:[#allocation8 + $0x98] sm:$0xff]
        %v6340 = vld [vmem:[#allocation8 + $0xa0] sm:$0xff]
        %v6341 = vld [vmem:[#allocation8 + $0xa8] sm:$0xff]
        %v6342 = vld [vmem:[#allocation8 + $0xb0] sm:$0xff]
        %v6343 = vld [vmem:[#allocation8 + $0xb8] sm:$0xff]
        %v6344 = vld [vmem:[#allocation8 + $0xc0] sm:$0xff]
        %v6345 = vld [vmem:[#allocation8 + $0xc8] sm:$0xff]
        %v6346 = vld [vmem:[#allocation8 + $0xd0] sm:$0xff]
        %v6347 = vld [vmem:[#allocation8 + $0xd8] sm:$0xff]
        %v6348 = vld [vmem:[#allocation8 + $0xe0] sm:$0xff]
        %v6349 = vld [vmem:[#allocation8 + $0xe8] sm:$0xff]
        %v6350 = vld [vmem:[#allocation8 + $0xf0] sm:$0xff]
        %v6351 = vld [vmem:[#allocation8 + $0xf8] sm:$0xff]
        %v6352 = vld [vmem:[#allocation8 + $0x100] sm:$0xff]
        %v6353 = vld [vmem:[#allocation8 + $0x108] sm:$0xff]
        %v6354 = vld [vmem:[#allocation8 + $0x110] sm:$0xff]
        %v6355 = vld [vmem:[#allocation8 + $0x118] sm:$0xff]
        %v6356 = vld [vmem:[#allocation22] sm:$0xff]
        %v6357 = vld [vmem:[#allocation22 + $0x8] sm:$0xff]
        %v6358 = vld [vmem:[#allocation22 + $0x10] sm:$0xff]
        %v6359 = vld [vmem:[#allocation22 + $0x18] sm:$0xff]
        %v6360 = vld [vmem:[#allocation22 + $0x20] sm:$0xff]
        %v6361 = vld [vmem:[#allocation22 + $0x28] sm:$0xff]
        %v6362 = vld [vmem:[#allocation22 + $0x30] sm:$0xff]
        %v6363 = vld [vmem:[#allocation22 + $0x38] sm:$0xff]
        %v6364 = vld [vmem:[#allocation22 + $0x40] sm:$0xff]
        %v6365 = vld [vmem:[#allocation22 + $0x48] sm:$0xff]
        %v6366 = vld [vmem:[#allocation22 + $0x50] sm:$0xff]
        %v6367 = vld [vmem:[#allocation22 + $0x58] sm:$0xff]
        %v6368 = vld [vmem:[#allocation22 + $0x60] sm:$0xff]
        %v6369 = vld [vmem:[#allocation22 + $0x68] sm:$0xff]
        %v6370 = vld [vmem:[#allocation22 + $0x70] sm:$0xff]
        %v6371 = vld [vmem:[#allocation22 + $0x78] sm:$0xff]
        %v6372 = vld [vmem:[#allocation22 + $0x80] sm:$0xff]
        %v6373 = vld [vmem:[#allocation22 + $0x88] sm:$0xff]
        %v6374 = vld [vmem:[#allocation22 + $0x90] sm:$0xff]
        %v6375 = vld [vmem:[#allocation22 + $0x98] sm:$0xff]
        %v6376 = vld [vmem:[#allocation22 + $0xa0] sm:$0xff]
        %v6377 = vld [vmem:[#allocation22 + $0xa8] sm:$0xff]
        %v6378 = vld [vmem:[#allocation22 + $0xb0] sm:$0xff]
        %v6379 = vld [vmem:[#allocation22 + $0xb8] sm:$0xff]
        %v6381 = vsel %vm5893, %v6321, 0
        %v6384 = vsel %vm5893, %v6323, 0
        %v6387 = vsel %vm5893, %v6325, 0
        %v6390 = vsel %vm5893, %v6327, 0
        %v6393 = vsel %vm5893, %v6329, 0
        %v6396 = vsel %vm5893, %v6331, 0
        %v6399 = vsel %vm5893, %v6333, 0
        %v6402 = vsel %vm5893, %v6335, 0
        %v6405 = vsel %vm5893, %v6337, 0
        %v6408 = vsel %vm5893, %v6339, 0
        %v6411 = vsel %vm5893, %v6341, 0
        %v6414 = vsel %vm5893, %v6343, 0
        %v6417 = vsel %vm5893, %v6345, 0
        %v6420 = vsel %vm5893, %v6347, 0
        %v6423 = vsel %vm5893, %v6349, 0
        %v6426 = vsel %vm5893, %v6351, 0
        %v6429 = vsel %vm5893, %v6353, 0
        %v6432 = vsel %vm5893, %v6355, 0
        %6434 = vmatprep.subr.mxu0 0.0
        %6435 = vmatpush1.msra.mxu0 %v6356
        %6436 = vmatprep.subr.mxu0 0.0
        %6437 = vmatpush1.msra.mxu0 %v6357
        %6438 = vmatprep.subr.mxu0 0.0
        %6439 = vmatpush1.msra.mxu0 %v6358
        %6440 = vmatprep.subr.mxu0 0.0
        %6441 = vmatpush1.msra.mxu0 %v6359
        %6442 = vmatprep.subr.mxu0 0.0
        %6443 = vmatpush1.msra.mxu0 %v6360
        %6444 = vmatprep.subr.mxu0 0.0
        %6445 = vmatpush1.msra.mxu0 %v6361
        %6446 = vmatprep.subr.mxu0 0.0
        %6447 = vmatpush1.msra.mxu0 %v6362
        %6448 = vmatprep.subr.mxu0 0.0
        %6449 = vmatpush1.msra.mxu0 %v6363
        %6450 = vmatprep.subr.mxu0 0.0
        %6451 = vmatpush1.msra.mxu0 %v6364
        %6452 = vmatprep.subr.mxu0 0.0
        %6453 = vmatpush1.msra.mxu0 %v6365
        %6454 = vmatprep.subr.mxu0 0.0
        %6455 = vmatpush1.msra.mxu0 %v6366
        %6456 = vmatprep.subr.mxu0 0.0
        %6457 = vmatpush1.msra.mxu0 %v6367
        %6458 = vmatprep.subr.mxu0 0.0
        %6459 = vmatpush1.msra.mxu0 %v6368
        %6460 = vmatprep.subr.mxu0 0.0
        %6461 = vmatpush1.msra.mxu0 %v6369
        %6462 = vmatprep.subr.mxu0 0.0
        %6463 = vmatpush1.msra.mxu0 %v6370
        %6464 = vmatprep.subr.mxu0 0.0
        %6465 = vmatpush1.msra.mxu0 %v6371
        %6466 = vmatprep.subr.mxu0 0.0
        %6467 = vmatpush1.msra.mxu0 %v6372
        %6468 = vmatprep.subr.mxu0 0.0
        %6469 = vmatpush1.msra.mxu0 %v6373
        %6470 = vmatprep.subr.mxu0 0.0
        %6471 = vmatpush1.msra.mxu0 %v6374
        %6472 = vmatprep.subr.mxu0 0.0
        %6473 = vmatpush1.msra.mxu0 %v6375
        %6474 = vmatprep.subr.mxu0 0.0
        %6475 = vmatpush1.msra.mxu0 %v6376
        %6476 = vmatprep.subr.mxu0 0.0
        %6477 = vmatpush1.msra.mxu0 %v6377
        %6478 = vmatprep.subr.mxu0 0.0
        %6479 = vmatpush1.msra.mxu0 %v6378
        %6480 = vmatprep.subr.mxu0 0.0
        %6481 = vmatpush1.msra.mxu0 %v6379
        %6482 = vmatprep.subr.mxu0 0.0
        %6483 = vmatpush1.msra.mxu0 0.0
        %6484 = vmatprep.subr.mxu0 0.0
        %6485 = vmatpush1.msra.mxu0 0.0
        %6486 = vmatprep.subr.mxu0 0.0
        %6487 = vmatpush1.msra.mxu0 0.0
        %6488 = vmatprep.subr.mxu0 0.0
        %6489 = vmatpush1.msra.mxu0 0.0
        %6490 = vmatprep.subr.mxu0 0.0
        %6491 = vmatpush1.msra.mxu0 0.0
        %6492 = vmatprep.subr.mxu0 0.0
        %6493 = vmatpush1.msra.mxu0 0.0
        %6494 = vmatprep.subr.mxu0 0.0
        %6495 = vmatpush1.msra.mxu0 0.0
        %6496 = vmatprep.subr.mxu0 0.0
        %6497 = vmatpush1.msra.mxu0 0.0
        %6498 = vmatprep.mubr.f32.mxu0 %v6381
        %6499 = vmatmul.mubr.f32.gmra.mrb[0].mxu0 %v6320
        %v6500 = vpop.f32.mrb[0].mxu0
        %v6501 = vadd.f32 0.0, %v6500
        %v6502 = vpop.f32.mrb[0].mxu0
        %6503 = vmatprep.mubr.f32.mxu0 %v6384
        %6504 = vmatmul.mubr.f32.gmra.mrb[0].mxu0 %v6322
        %v6505 = vpop.f32.mrb[0].mxu0
        %v6506 = vadd.f32 0.0, %v6505
        %v6507 = vpop.f32.mrb[0].mxu0
        %6508 = vmatprep.mubr.f32.mxu0 %v6387
        %6509 = vmatmul.mubr.f32.gmra.mrb[0].mxu0 %v6324
        %v6510 = vpop.f32.mrb[0].mxu0
        %v6511 = vadd.f32 0.0, %v6510
        %v6512 = vpop.f32.mrb[0].mxu0
        %6513 = vmatprep.mubr.f32.mxu0 %v6390
        %6514 = vmatmul.mubr.f32.gmra.mrb[0].mxu0 %v6326
        %v6515 = vpop.f32.mrb[0].mxu0
        %v6516 = vadd.f32 0.0, %v6515
        %v6517 = vpop.f32.mrb[0].mxu0
        %6518 = vmatprep.mubr.f32.mxu0 %v6393
        %6519 = vmatmul.mubr.f32.gmra.mrb[0].mxu0 %v6328
        %v6520 = vpop.f32.mrb[0].mxu0
        %v6521 = vadd.f32 0.0, %v6520
        %v6522 = vpop.f32.mrb[0].mxu0
        %6523 = vmatprep.mubr.f32.mxu0 %v6396
        %6524 = vmatmul.mubr.f32.gmra.mrb[0].mxu0 %v6330
        %v6525 = vpop.f32.mrb[0].mxu0
        %v6526 = vadd.f32 0.0, %v6525
        %v6527 = vpop.f32.mrb[0].mxu0
        %6528 = vmatprep.mubr.f32.mxu0 %v6399
        %6529 = vmatmul.mubr.f32.gmra.mrb[0].mxu0 %v6332
        %v6530 = vpop.f32.mrb[0].mxu0
        %v6531 = vadd.f32 0.0, %v6530
        %v6532 = vpop.f32.mrb[0].mxu0
        %6533 = vmatprep.mubr.f32.mxu0 %v6402
        %6534 = vmatmul.mubr.f32.gmra.mrb[0].mxu0 %v6334
        %v6535 = vpop.f32.mrb[0].mxu0
        %v6536 = vadd.f32 0.0, %v6535
        %v6537 = vpop.f32.mrb[0].mxu0
        %6538 = vmatprep.mubr.f32.mxu0 %v6405
        %6539 = vmatmul.mubr.f32.gmra.mrb[0].mxu0 %v6336
        %v6540 = vpop.f32.mrb[0].mxu0
        %v6541 = vadd.f32 0.0, %v6540
        %v6542 = vpop.f32.mrb[0].mxu0
        %6543 = vmatprep.mubr.f32.mxu0 %v6408
        %6544 = vmatmul.mubr.f32.gmra.mrb[0].mxu0 %v6338
        %v6545 = vpop.f32.mrb[0].mxu0
        %v6546 = vadd.f32 0.0, %v6545
        %v6547 = vpop.f32.mrb[0].mxu0
        %6548 = vmatprep.mubr.f32.mxu0 %v6411
        %6549 = vmatmul.mubr.f32.gmra.mrb[0].mxu0 %v6340
        %v6550 = vpop.f32.mrb[0].mxu0
        %v6551 = vadd.f32 0.0, %v6550
        %v6552 = vpop.f32.mrb[0].mxu0
        %6553 = vmatprep.mubr.f32.mxu0 %v6414
        %6554 = vmatmul.mubr.f32.gmra.mrb[0].mxu0 %v6342
        %v6555 = vpop.f32.mrb[0].mxu0
        %v6556 = vadd.f32 0.0, %v6555
        %v6557 = vpop.f32.mrb[0].mxu0
        %6558 = vmatprep.mubr.f32.mxu0 %v6417
        %6559 = vmatmul.mubr.f32.gmra.mrb[0].mxu0 %v6344
        %v6560 = vpop.f32.mrb[0].mxu0
        %v6561 = vadd.f32 0.0, %v6560
        %v6562 = vpop.f32.mrb[0].mxu0
        %6563 = vmatprep.mubr.f32.mxu0 %v6420
        %6564 = vmatmul.mubr.f32.gmra.mrb[0].mxu0 %v6346
        %v6565 = vpop.f32.mrb[0].mxu0
        %v6566 = vadd.f32 0.0, %v6565
        %v6567 = vpop.f32.mrb[0].mxu0
        %6568 = vmatprep.mubr.f32.mxu0 %v6423
        %6569 = vmatmul.mubr.f32.gmra.mrb[0].mxu0 %v6348
        %v6570 = vpop.f32.mrb[0].mxu0
        %v6571 = vadd.f32 0.0, %v6570
        %v6572 = vpop.f32.mrb[0].mxu0
        %6573 = vmatprep.mubr.f32.mxu0 %v6426
        %6574 = vmatmul.mubr.f32.gmra.mrb[0].mxu0 %v6350
        %v6575 = vpop.f32.mrb[0].mxu0
        %v6576 = vadd.f32 0.0, %v6575
        %v6577 = vpop.f32.mrb[0].mxu0
        %6578 = vmatprep.mubr.f32.mxu0 %v6429
        %6579 = vmatmul.mubr.f32.gmra.mrb[0].mxu0 %v6352
        %v6580 = vpop.f32.mrb[0].mxu0
        %v6581 = vadd.f32 0.0, %v6580
        %v6582 = vpop.f32.mrb[0].mxu0
        %6583 = vmatprep.mubr.f32.mxu0 %v6432
        %6584 = vmatmul.mubr.f32.gmra.mrb[0].mxu0 %v6354
        %v6585 = vpop.f32.mrb[0].mxu0
        %v6586 = vadd.f32 0.0, %v6585
        %v6587 = vpop.f32.mrb[0].mxu0
        %6588 = vdwg.mxu0
        %6589 = vst [vmem:[#allocation9] sm:$0xff] %v6501
        %6590 = vst [vmem:[#allocation9 + $0x8] sm:$0xff] %v6506
        %6591 = vst [vmem:[#allocation9 + $0x10] sm:$0xff] %v6511
        %6592 = vst [vmem:[#allocation9 + $0x18] sm:$0xff] %v6516
        %6593 = vst [vmem:[#allocation9 + $0x20] sm:$0xff] %v6521
        %6594 = vst [vmem:[#allocation9 + $0x28] sm:$0xff] %v6526
        %6595 = vst [vmem:[#allocation9 + $0x30] sm:$0xff] %v6531
        %6596 = vst [vmem:[#allocation9 + $0x38] sm:$0xff] %v6536
        %6597 = vst [vmem:[#allocation9 + $0x40] sm:$0xff] %v6541
        %6598 = vst [vmem:[#allocation9 + $0x48] sm:$0xff] %v6546
        %6599 = vst [vmem:[#allocation9 + $0x50] sm:$0xff] %v6551
        %6600 = vst [vmem:[#allocation9 + $0x58] sm:$0xff] %v6556
        %6601 = vst [vmem:[#allocation9 + $0x60] sm:$0xff] %v6561
        %6602 = vst [vmem:[#allocation9 + $0x68] sm:$0xff] %v6566
        %6603 = vst [vmem:[#allocation9 + $0x70] sm:$0xff] %v6571
        %6604 = vst [vmem:[#allocation9 + $0x78] sm:$0xff] %v6576
        %6605 = vst [vmem:[#allocation9 + $0x80] sm:$0xff] %v6581
        %6606 = vst [vmem:[#allocation9 + $0x88] sm:$0xff] %v6586
        %v6607 = vld [vmem:[#allocation9] ss:$18 sm:$0xff]
        %s6608 = scalar_lea.vmem [#allocation9], 1
        %v6609 = vld [vmem:[%s6608] ss:$18 sm:$0xff]
        %v6610 = vmax.f32 %v6607, %v6609
        %v6611 = vld [vmem:[#allocation24] sm:$0x1]
        %v6613 = vlaneseq
        %v6614 = vshrl.u32 %v6613, 7
        %v6615 = vsub.s32 0, %v6614
        %v6616 = vrot.slane %v6611, %v6615
        %v6618 = vadd.f32 %v6610, %v6616
        %v6619 = vmax.f32 %v6618, 0.0
        %v6620 = vld [vmem:[#allocation25] sm:$0xff]
        %v6621 = vld [vmem:[#allocation25 + $0x8] sm:$0xff]
        %v6622 = vld [vmem:[#allocation25 + $0x10] sm:$0xff]
        %v6623 = vld [vmem:[#allocation25 + $0x18] sm:$0xff]
        %v6624 = vld [vmem:[#allocation25 + $0x20] sm:$0xff]
        %v6625 = vld [vmem:[#allocation25 + $0x28] sm:$0xff]
        %v6626 = vld [vmem:[#allocation25 + $0x30] sm:$0xff]
        %v6627 = vld [vmem:[#allocation25 + $0x38] sm:$0xff]
        %v6628 = vld [vmem:[#allocation25 + $0x40] sm:$0xff]
        %v6629 = vld [vmem:[#allocation25 + $0x48] sm:$0xff]
        %v6630 = vld [vmem:[#allocation25 + $0x50] sm:$0xff]
        %v6631 = vld [vmem:[#allocation25 + $0x58] sm:$0xff]
        %v6632 = vld [vmem:[#allocation25 + $0x60] sm:$0xff]
        %v6633 = vld [vmem:[#allocation25 + $0x68] sm:$0xff]
        %v6634 = vld [vmem:[#allocation25 + $0x70] sm:$0xff]
        %v6635 = vld [vmem:[#allocation25 + $0x78] sm:$0xff]
        %v6636 = vld [vmem:[#allocation25 + $0x80] sm:$0xff]
        %v6637 = vld [vmem:[#allocation25 + $0x88] sm:$0xff]
        %v6638 = vld [vmem:[#allocation25 + $0x90] sm:$0xff]
        %v6639 = vld [vmem:[#allocation25 + $0x98] sm:$0xff]
        %v6640 = vld [vmem:[#allocation25 + $0xa0] sm:$0xff]
        %v6641 = vld [vmem:[#allocation25 + $0xa8] sm:$0xff]
        %v6642 = vld [vmem:[#allocation25 + $0xb0] sm:$0xff]
        %v6643 = vld [vmem:[#allocation25 + $0xb8] sm:$0xff]
        %v6644 = vld [vmem:[#allocation25 + $0xc0] sm:$0xff]
        %v6645 = vld [vmem:[#allocation25 + $0xc8] sm:$0xff]
        %v6646 = vld [vmem:[#allocation25 + $0xd0] sm:$0xff]
        %v6647 = vld [vmem:[#allocation25 + $0xd8] sm:$0xff]
        %v6648 = vld [vmem:[#allocation25 + $0xe0] sm:$0xff]
        %v6649 = vld [vmem:[#allocation25 + $0xe8] sm:$0xff]
        %v6650 = vld [vmem:[#allocation25 + $0xf0] sm:$0xff]
        %v6651 = vld [vmem:[#allocation25 + $0xf8] sm:$0xff]
        %s6652 = scalar_lea.vmem [#allocation9], 2
        %v6653 = vld [vmem:[%s6652] ss:$18 sm:$0xff]
        %s6654 = scalar_lea.vmem [#allocation9], 3
        %v6655 = vld [vmem:[%s6654] ss:$18 sm:$0xff]
        %v6656 = vmax.f32 %v6653, %v6655
        %v6657 = vadd.f32 %v6656, %v6616
        %v6658 = vmax.f32 %v6657, 0.0
        %v6659 = vld [vmem:[#allocation25 + $0x100] sm:$0xff]
        %v6660 = vld [vmem:[#allocation25 + $0x108] sm:$0xff]
        %v6661 = vld [vmem:[#allocation25 + $0x110] sm:$0xff]
        %v6662 = vld [vmem:[#allocation25 + $0x118] sm:$0xff]
        %v6663 = vld [vmem:[#allocation25 + $0x120] sm:$0xff]
        %v6664 = vld [vmem:[#allocation25 + $0x128] sm:$0xff]
        %v6665 = vld [vmem:[#allocation25 + $0x130] sm:$0xff]
        %v6666 = vld [vmem:[#allocation25 + $0x138] sm:$0xff]
        %v6667 = vld [vmem:[#allocation25 + $0x140] sm:$0xff]
        %v6668 = vld [vmem:[#allocation25 + $0x148] sm:$0xff]
        %v6669 = vld [vmem:[#allocation25 + $0x150] sm:$0xff]
        %v6670 = vld [vmem:[#allocation25 + $0x158] sm:$0xff]
        %v6671 = vld [vmem:[#allocation25 + $0x160] sm:$0xff]
        %v6672 = vld [vmem:[#allocation25 + $0x168] sm:$0xff]
        %v6673 = vld [vmem:[#allocation25 + $0x170] sm:$0xff]
        %v6674 = vld [vmem:[#allocation25 + $0x178] sm:$0xff]
        %v6675 = vld [vmem:[#allocation25 + $0x180] sm:$0xff]
        %v6676 = vld [vmem:[#allocation25 + $0x188] sm:$0xff]
        %v6677 = vld [vmem:[#allocation25 + $0x190] sm:$0xff]
        %v6678 = vld [vmem:[#allocation25 + $0x198] sm:$0xff]
        %v6679 = vld [vmem:[#allocation25 + $0x1a0] sm:$0xff]
        %v6680 = vld [vmem:[#allocation25 + $0x1a8] sm:$0xff]
        %v6681 = vld [vmem:[#allocation25 + $0x1b0] sm:$0xff]
        %v6682 = vld [vmem:[#allocation25 + $0x1b8] sm:$0xff]
        %v6683 = vld [vmem:[#allocation25 + $0x1c0] sm:$0xff]
        %v6684 = vld [vmem:[#allocation25 + $0x1c8] sm:$0xff]
        %v6685 = vld [vmem:[#allocation25 + $0x1d0] sm:$0xff]
        %v6686 = vld [vmem:[#allocation25 + $0x1d8] sm:$0xff]
        %v6687 = vld [vmem:[#allocation25 + $0x1e0] sm:$0xff]
        %v6688 = vld [vmem:[#allocation25 + $0x1e8] sm:$0xff]
        %v6689 = vld [vmem:[#allocation25 + $0x1f0] sm:$0xff]
        %v6690 = vld [vmem:[#allocation25 + $0x1f8] sm:$0xff]
        %6691 = vmatprep.subr.mxu0 %v6660
        %6692 = vmatpush1.msra.mxu0 %v6659
        %6693 = vmatprep.subr.mxu0 %v6662
        %6694 = vmatpush1.msra.mxu0 %v6661
        %6695 = vmatprep.subr.mxu0 %v6664
        %6696 = vmatpush1.msra.mxu0 %v6663
        %6697 = vmatprep.subr.mxu0 %v6666
        %6698 = vmatpush1.msra.mxu0 %v6665
        %6699 = vmatprep.subr.mxu0 %v6668
        %6700 = vmatpush1.msra.mxu0 %v6667
        %6701 = vmatprep.subr.mxu0 %v6670
        %6702 = vmatpush1.msra.mxu0 %v6669
        %6703 = vmatprep.subr.mxu0 %v6672
        %6704 = vmatpush1.msra.mxu0 %v6671
        %6705 = vmatprep.subr.mxu0 %v6674
        %6706 = vmatpush1.msra.mxu0 %v6673
        %6707 = vmatprep.subr.mxu0 %v6676
        %6708 = vmatpush1.msra.mxu0 %v6675
        %6709 = vmatprep.subr.mxu0 %v6678
        %6710 = vmatpush1.msra.mxu0 %v6677
        %6711 = vmatprep.subr.mxu0 %v6680
        %6712 = vmatpush1.msra.mxu0 %v6679
        %6713 = vmatprep.subr.mxu0 %v6682
        %6714 = vmatpush1.msra.mxu0 %v6681
        %6715 = vmatprep.subr.mxu0 %v6684
        %6716 = vmatpush1.msra.mxu0 %v6683
        %6717 = vmatprep.subr.mxu0 %v6686
        %6718 = vmatpush1.msra.mxu0 %v6685
        %6719 = vmatprep.subr.mxu0 %v6688
        %6720 = vmatpush1.msra.mxu0 %v6687
        %6721 = vmatprep.subr.mxu0 %v6690
        %6722 = vmatpush1.msra.mxu0 %v6689
        %6723 = vmatprep.subr.mxu0 0.0
        %6724 = vmatpush1.msra.mxu0 0.0
        %6725 = vmatprep.subr.mxu0 0.0
        %6726 = vmatpush1.msra.mxu0 0.0
        %6727 = vmatprep.subr.mxu0 0.0
        %6728 = vmatpush1.msra.mxu0 0.0
        %6729 = vmatprep.subr.mxu0 0.0
        %6730 = vmatpush1.msra.mxu0 0.0
        %6731 = vmatprep.subr.mxu0 0.0
        %6732 = vmatpush1.msra.mxu0 0.0
        %6733 = vmatprep.subr.mxu0 0.0
        %6734 = vmatpush1.msra.mxu0 0.0
        %6735 = vmatprep.subr.mxu0 0.0
        %6736 = vmatpush1.msra.mxu0 0.0
        %6737 = vmatprep.subr.mxu0 0.0
        %6738 = vmatpush1.msra.mxu0 0.0
        %6739 = vmatprep.subr.mxu0 0.0
        %6740 = vmatpush1.msra.mxu0 0.0
        %6741 = vmatprep.subr.mxu0 0.0
        %6742 = vmatpush1.msra.mxu0 0.0
        %6743 = vmatprep.subr.mxu0 0.0
        %6744 = vmatpush1.msra.mxu0 0.0
        %6745 = vmatprep.subr.mxu0 0.0
        %6746 = vmatpush1.msra.mxu0 0.0
        %6747 = vmatprep.subr.mxu0 0.0
        %6748 = vmatpush1.msra.mxu0 0.0
        %6749 = vmatprep.subr.mxu0 0.0
        %6750 = vmatpush1.msra.mxu0 0.0
        %6751 = vmatprep.subr.mxu0 0.0
        %6752 = vmatpush1.msra.mxu0 0.0
        %6753 = vmatprep.subr.mxu0 0.0
        %6754 = vmatpush1.msra.mxu0 0.0
        %6755 = vmatprep.mubr.f32.mxu0 0.0
        %6756 = vmatmul.mubr.f32.gmra.mrb[0].mxu0 %v6658
        %v6757 = vpop.f32.mrb[0].mxu0
        %v6758 = vadd.f32 0.0, %v6757
        %v6759 = vpop.f32.mrb[0].mxu0
        %v6760 = vadd.f32 0.0, %v6759
        %6761 = vdwg.mxu0
        %6762 = vmatprep.subr.mxu0 %v6621
        %6763 = vmatpush1.msra.mxu0 %v6620
        %6764 = vmatprep.subr.mxu0 %v6623
        %6765 = vmatpush1.msra.mxu0 %v6622
        %6766 = vmatprep.subr.mxu0 %v6625
        %6767 = vmatpush1.msra.mxu0 %v6624
        %6768 = vmatprep.subr.mxu0 %v6627
        %6769 = vmatpush1.msra.mxu0 %v6626
        %6770 = vmatprep.subr.mxu0 %v6629
        %6771 = vmatpush1.msra.mxu0 %v6628
        %6772 = vmatprep.subr.mxu0 %v6631
        %6773 = vmatpush1.msra.mxu0 %v6630
        %6774 = vmatprep.subr.mxu0 %v6633
        %6775 = vmatpush1.msra.mxu0 %v6632
        %6776 = vmatprep.subr.mxu0 %v6635
        %6777 = vmatpush1.msra.mxu0 %v6634
        %6778 = vmatprep.subr.mxu0 %v6637
        %6779 = vmatpush1.msra.mxu0 %v6636
        %6780 = vmatprep.subr.mxu0 %v6639
        %6781 = vmatpush1.msra.mxu0 %v6638
        %6782 = vmatprep.subr.mxu0 %v6641
        %6783 = vmatpush1.msra.mxu0 %v6640
        %6784 = vmatprep.subr.mxu0 %v6643
        %6785 = vmatpush1.msra.mxu0 %v6642
        %6786 = vmatprep.subr.mxu0 %v6645
        %6787 = vmatpush1.msra.mxu0 %v6644
        %6788 = vmatprep.subr.mxu0 %v6647
        %6789 = vmatpush1.msra.mxu0 %v6646
        %6790 = vmatprep.subr.mxu0 %v6649
        %6791 = vmatpush1.msra.mxu0 %v6648
        %6792 = vmatprep.subr.mxu0 %v6651
        %6793 = vmatpush1.msra.mxu0 %v6650
        %6794 = vmatprep.subr.mxu0 0.0
        %6795 = vmatpush1.msra.mxu0 0.0
        %6796 = vmatprep.subr.mxu0 0.0
        %6797 = vmatpush1.msra.mxu0 0.0
        %6798 = vmatprep.subr.mxu0 0.0
        %6799 = vmatpush1.msra.mxu0 0.0
        %6800 = vmatprep.subr.mxu0 0.0
        %6801 = vmatpush1.msra.mxu0 0.0
        %6802 = vmatprep.subr.mxu0 0.0
        %6803 = vmatpush1.msra.mxu0 0.0
        %6804 = vmatprep.subr.mxu0 0.0
        %6805 = vmatpush1.msra.mxu0 0.0
        %6806 = vmatprep.subr.mxu0 0.0
        %6807 = vmatpush1.msra.mxu0 0.0
        %6808 = vmatprep.subr.mxu0 0.0
        %6809 = vmatpush1.msra.mxu0 0.0
        %6810 = vmatprep.subr.mxu0 0.0
        %6811 = vmatpush1.msra.mxu0 0.0
        %6812 = vmatprep.subr.mxu0 0.0
        %6813 = vmatpush1.msra.mxu0 0.0
        %6814 = vmatprep.subr.mxu0 0.0
        %6815 = vmatpush1.msra.mxu0 0.0
        %6816 = vmatprep.subr.mxu0 0.0
        %6817 = vmatpush1.msra.mxu0 0.0
        %6818 = vmatprep.subr.mxu0 0.0
        %6819 = vmatpush1.msra.mxu0 0.0
        %6820 = vmatprep.subr.mxu0 0.0
        %6821 = vmatpush1.msra.mxu0 0.0
        %6822 = vmatprep.subr.mxu0 0.0
        %6823 = vmatpush1.msra.mxu0 0.0
        %6824 = vmatprep.subr.mxu0 0.0
        %6825 = vmatpush1.msra.mxu0 0.0
        %6826 = vmatprep.mubr.f32.mxu0 0.0
        %6827 = vmatmul.mubr.f32.gmra.mrb[0].mxu0 %v6619
        %v6828 = vpop.f32.mrb[0].mxu0
        %v6829 = vadd.f32 %v6758, %v6828
        %v6830 = vpop.f32.mrb[0].mxu0
        %v6831 = vadd.f32 %v6760, %v6830
        %6832 = vdwg.mxu0
        %s6833 = scalar_lea.vmem [#allocation9], 4
        %v6834 = vld [vmem:[%s6833] ss:$18 sm:$0xff]
        %s6835 = scalar_lea.vmem [#allocation9], 5
        %v6836 = vld [vmem:[%s6835] ss:$18 sm:$0xff]
        %v6837 = vmax.f32 %v6834, %v6836
        %v6838 = vadd.f32 %v6837, %v6616
        %v6839 = vmax.f32 %v6838, 0.0
        %v6840 = vld [vmem:[#allocation25 + $0x200] sm:$0xff]
        %v6841 = vld [vmem:[#allocation25 + $0x208] sm:$0xff]
        %v6842 = vld [vmem:[#allocation25 + $0x210] sm:$0xff]
        %v6843 = vld [vmem:[#allocation25 + $0x218] sm:$0xff]
        %v6844 = vld [vmem:[#allocation25 + $0x220] sm:$0xff]
        %v6845 = vld [vmem:[#allocation25 + $0x228] sm:$0xff]
        %v6846 = vld [vmem:[#allocation25 + $0x230] sm:$0xff]
        %v6847 = vld [vmem:[#allocation25 + $0x238] sm:$0xff]
        %v6848 = vld [vmem:[#allocation25 + $0x240] sm:$0xff]
        %v6849 = vld [vmem:[#allocation25 + $0x248] sm:$0xff]
        %v6850 = vld [vmem:[#allocation25 + $0x250] sm:$0xff]
        %v6851 = vld [vmem:[#allocation25 + $0x258] sm:$0xff]
        %v6852 = vld [vmem:[#allocation25 + $0x260] sm:$0xff]
        %v6853 = vld [vmem:[#allocation25 + $0x268] sm:$0xff]
        %v6854 = vld [vmem:[#allocation25 + $0x270] sm:$0xff]
        %v6855 = vld [vmem:[#allocation25 + $0x278] sm:$0xff]
        %v6856 = vld [vmem:[#allocation25 + $0x280] sm:$0xff]
        %v6857 = vld [vmem:[#allocation25 + $0x288] sm:$0xff]
        %v6858 = vld [vmem:[#allocation25 + $0x290] sm:$0xff]
        %v6859 = vld [vmem:[#allocation25 + $0x298] sm:$0xff]
        %v6860 = vld [vmem:[#allocation25 + $0x2a0] sm:$0xff]
        %v6861 = vld [vmem:[#allocation25 + $0x2a8] sm:$0xff]
        %v6862 = vld [vmem:[#allocation25 + $0x2b0] sm:$0xff]
        %v6863 = vld [vmem:[#allocation25 + $0x2b8] sm:$0xff]
        %v6864 = vld [vmem:[#allocation25 + $0x2c0] sm:$0xff]
        %v6865 = vld [vmem:[#allocation25 + $0x2c8] sm:$0xff]
        %v6866 = vld [vmem:[#allocation25 + $0x2d0] sm:$0xff]
        %v6867 = vld [vmem:[#allocation25 + $0x2d8] sm:$0xff]
        %v6868 = vld [vmem:[#allocation25 + $0x2e0] sm:$0xff]
        %v6869 = vld [vmem:[#allocation25 + $0x2e8] sm:$0xff]
        %v6870 = vld [vmem:[#allocation25 + $0x2f0] sm:$0xff]
        %v6871 = vld [vmem:[#allocation25 + $0x2f8] sm:$0xff]
        %6872 = vmatprep.subr.mxu0 %v6841
        %6873 = vmatpush1.msra.mxu0 %v6840
        %6874 = vmatprep.subr.mxu0 %v6843
        %6875 = vmatpush1.msra.mxu0 %v6842
        %6876 = vmatprep.subr.mxu0 %v6845
        %6877 = vmatpush1.msra.mxu0 %v6844
        %6878 = vmatprep.subr.mxu0 %v6847
        %6879 = vmatpush1.msra.mxu0 %v6846
        %6880 = vmatprep.subr.mxu0 %v6849
        %6881 = vmatpush1.msra.mxu0 %v6848
        %6882 = vmatprep.subr.mxu0 %v6851
        %6883 = vmatpush1.msra.mxu0 %v6850
        %6884 = vmatprep.subr.mxu0 %v6853
        %6885 = vmatpush1.msra.mxu0 %v6852
        %6886 = vmatprep.subr.mxu0 %v6855
        %6887 = vmatpush1.msra.mxu0 %v6854
        %6888 = vmatprep.subr.mxu0 %v6857
        %6889 = vmatpush1.msra.mxu0 %v6856
        %6890 = vmatprep.subr.mxu0 %v6859
        %6891 = vmatpush1.msra.mxu0 %v6858
        %6892 = vmatprep.subr.mxu0 %v6861
        %6893 = vmatpush1.msra.mxu0 %v6860
        %6894 = vmatprep.subr.mxu0 %v6863
        %6895 = vmatpush1.msra.mxu0 %v6862
        %6896 = vmatprep.subr.mxu0 %v6865
        %6897 = vmatpush1.msra.mxu0 %v6864
        %6898 = vmatprep.subr.mxu0 %v6867
        %6899 = vmatpush1.msra.mxu0 %v6866
        %6900 = vmatprep.subr.mxu0 %v6869
        %6901 = vmatpush1.msra.mxu0 %v6868
        %6902 = vmatprep.subr.mxu0 %v6871
        %6903 = vmatpush1.msra.mxu0 %v6870
        %6904 = vmatprep.subr.mxu0 0.0
        %6905 = vmatpush1.msra.mxu0 0.0
        %6906 = vmatprep.subr.mxu0 0.0
        %6907 = vmatpush1.msra.mxu0 0.0
        %6908 = vmatprep.subr.mxu0 0.0
        %6909 = vmatpush1.msra.mxu0 0.0
        %6910 = vmatprep.subr.mxu0 0.0
        %6911 = vmatpush1.msra.mxu0 0.0
        %6912 = vmatprep.subr.mxu0 0.0
        %6913 = vmatpush1.msra.mxu0 0.0
        %6914 = vmatprep.subr.mxu0 0.0
        %6915 = vmatpush1.msra.mxu0 0.0
        %6916 = vmatprep.subr.mxu0 0.0
        %6917 = vmatpush1.msra.mxu0 0.0
        %6918 = vmatprep.subr.mxu0 0.0
        %6919 = vmatpush1.msra.mxu0 0.0
        %6920 = vmatprep.subr.mxu0 0.0
        %6921 = vmatpush1.msra.mxu0 0.0
        %6922 = vmatprep.subr.mxu0 0.0
        %6923 = vmatpush1.msra.mxu0 0.0
        %6924 = vmatprep.subr.mxu0 0.0
        %6925 = vmatpush1.msra.mxu0 0.0
        %6926 = vmatprep.subr.mxu0 0.0
        %6927 = vmatpush1.msra.mxu0 0.0
        %6928 = vmatprep.subr.mxu0 0.0
        %6929 = vmatpush1.msra.mxu0 0.0
        %6930 = vmatprep.subr.mxu0 0.0
        %6931 = vmatpush1.msra.mxu0 0.0
        %6932 = vmatprep.subr.mxu0 0.0
        %6933 = vmatpush1.msra.mxu0 0.0
        %6934 = vmatprep.subr.mxu0 0.0
        %6935 = vmatpush1.msra.mxu0 0.0
        %6936 = vmatprep.mubr.f32.mxu0 0.0
        %6937 = vmatmul.mubr.f32.gmra.mrb[0].mxu0 %v6839
        %v6938 = vpop.f32.mrb[0].mxu0
        %v6939 = vadd.f32 0.0, %v6938
        %v6940 = vpop.f32.mrb[0].mxu0
        %v6941 = vadd.f32 0.0, %v6940
        %6942 = vdwg.mxu0
        %v6943 = vadd.f32 %v6829, %v6939
        %v6944 = vadd.f32 %v6831, %v6941
        %s6945 = scalar_lea.vmem [#allocation9], 6
        %v6946 = vld [vmem:[%s6945] ss:$18 sm:$0xff]
        %s6947 = scalar_lea.vmem [#allocation9], 7
        %v6948 = vld [vmem:[%s6947] ss:$18 sm:$0xff]
        %v6949 = vmax.f32 %v6946, %v6948
        %v6950 = vadd.f32 %v6949, %v6616
        %v6951 = vmax.f32 %v6950, 0.0
        %v6952 = vld [vmem:[#allocation25 + $0x300] sm:$0xff]
        %v6953 = vld [vmem:[#allocation25 + $0x308] sm:$0xff]
        %v6954 = vld [vmem:[#allocation25 + $0x310] sm:$0xff]
        %v6955 = vld [vmem:[#allocation25 + $0x318] sm:$0xff]
        %v6956 = vld [vmem:[#allocation25 + $0x320] sm:$0xff]
        %v6957 = vld [vmem:[#allocation25 + $0x328] sm:$0xff]
        %v6958 = vld [vmem:[#allocation25 + $0x330] sm:$0xff]
        %v6959 = vld [vmem:[#allocation25 + $0x338] sm:$0xff]
        %v6960 = vld [vmem:[#allocation25 + $0x340] sm:$0xff]
        %v6961 = vld [vmem:[#allocation25 + $0x348] sm:$0xff]
        %v6962 = vld [vmem:[#allocation25 + $0x350] sm:$0xff]
        %v6963 = vld [vmem:[#allocation25 + $0x358] sm:$0xff]
        %v6964 = vld [vmem:[#allocation25 + $0x360] sm:$0xff]
        %v6965 = vld [vmem:[#allocation25 + $0x368] sm:$0xff]
        %v6966 = vld [vmem:[#allocation25 + $0x370] sm:$0xff]
        %v6967 = vld [vmem:[#allocation25 + $0x378] sm:$0xff]
        %v6968 = vld [vmem:[#allocation25 + $0x380] sm:$0xff]
        %v6969 = vld [vmem:[#allocation25 + $0x388] sm:$0xff]
        %v6970 = vld [vmem:[#allocation25 + $0x390] sm:$0xff]
        %v6971 = vld [vmem:[#allocation25 + $0x398] sm:$0xff]
        %v6972 = vld [vmem:[#allocation25 + $0x3a0] sm:$0xff]
        %v6973 = vld [vmem:[#allocation25 + $0x3a8] sm:$0xff]
        %v6974 = vld [vmem:[#allocation25 + $0x3b0] sm:$0xff]
        %v6975 = vld [vmem:[#allocation25 + $0x3b8] sm:$0xff]
        %v6976 = vld [vmem:[#allocation25 + $0x3c0] sm:$0xff]
        %v6977 = vld [vmem:[#allocation25 + $0x3c8] sm:$0xff]
        %v6978 = vld [vmem:[#allocation25 + $0x3d0] sm:$0xff]
        %v6979 = vld [vmem:[#allocation25 + $0x3d8] sm:$0xff]
        %v6980 = vld [vmem:[#allocation25 + $0x3e0] sm:$0xff]
        %v6981 = vld [vmem:[#allocation25 + $0x3e8] sm:$0xff]
        %v6982 = vld [vmem:[#allocation25 + $0x3f0] sm:$0xff]
        %v6983 = vld [vmem:[#allocation25 + $0x3f8] sm:$0xff]
        %6984 = vmatprep.subr.mxu0 %v6953
        %6985 = vmatpush1.msra.mxu0 %v6952
        %6986 = vmatprep.subr.mxu0 %v6955
        %6987 = vmatpush1.msra.mxu0 %v6954
        %6988 = vmatprep.subr.mxu0 %v6957
        %6989 = vmatpush1.msra.mxu0 %v6956
        %6990 = vmatprep.subr.mxu0 %v6959
        %6991 = vmatpush1.msra.mxu0 %v6958
        %6992 = vmatprep.subr.mxu0 %v6961
        %6993 = vmatpush1.msra.mxu0 %v6960
        %6994 = vmatprep.subr.mxu0 %v6963
        %6995 = vmatpush1.msra.mxu0 %v6962
        %6996 = vmatprep.subr.mxu0 %v6965
        %6997 = vmatpush1.msra.mxu0 %v6964
        %6998 = vmatprep.subr.mxu0 %v6967
        %6999 = vmatpush1.msra.mxu0 %v6966
        %7000 = vmatprep.subr.mxu0 %v6969
        %7001 = vmatpush1.msra.mxu0 %v6968
        %7002 = vmatprep.subr.mxu0 %v6971
        %7003 = vmatpush1.msra.mxu0 %v6970
        %7004 = vmatprep.subr.mxu0 %v6973
        %7005 = vmatpush1.msra.mxu0 %v6972
        %7006 = vmatprep.subr.mxu0 %v6975
        %7007 = vmatpush1.msra.mxu0 %v6974
        %7008 = vmatprep.subr.mxu0 %v6977
        %7009 = vmatpush1.msra.mxu0 %v6976
        %7010 = vmatprep.subr.mxu0 %v6979
        %7011 = vmatpush1.msra.mxu0 %v6978
        %7012 = vmatprep.subr.mxu0 %v6981
        %7013 = vmatpush1.msra.mxu0 %v6980
        %7014 = vmatprep.subr.mxu0 %v6983
        %7015 = vmatpush1.msra.mxu0 %v6982
        %7016 = vmatprep.subr.mxu0 0.0
        %7017 = vmatpush1.msra.mxu0 0.0
        %7018 = vmatprep.subr.mxu0 0.0
        %7019 = vmatpush1.msra.mxu0 0.0
        %7020 = vmatprep.subr.mxu0 0.0
        %7021 = vmatpush1.msra.mxu0 0.0
        %7022 = vmatprep.subr.mxu0 0.0
        %7023 = vmatpush1.msra.mxu0 0.0
        %7024 = vmatprep.subr.mxu0 0.0
        %7025 = vmatpush1.msra.mxu0 0.0
        %7026 = vmatprep.subr.mxu0 0.0
        %7027 = vmatpush1.msra.mxu0 0.0
        %7028 = vmatprep.subr.mxu0 0.0
        %7029 = vmatpush1.msra.mxu0 0.0
        %7030 = vmatprep.subr.mxu0 0.0
        %7031 = vmatpush1.msra.mxu0 0.0
        %7032 = vmatprep.subr.mxu0 0.0
        %7033 = vmatpush1.msra.mxu0 0.0
        %7034 = vmatprep.subr.mxu0 0.0
        %7035 = vmatpush1.msra.mxu0 0.0
        %7036 = vmatprep.subr.mxu0 0.0
        %7037 = vmatpush1.msra.mxu0 0.0
        %7038 = vmatprep.subr.mxu0 0.0
        %7039 = vmatpush1.msra.mxu0 0.0
        %7040 = vmatprep.subr.mxu0 0.0
        %7041 = vmatpush1.msra.mxu0 0.0
        %7042 = vmatprep.subr.mxu0 0.0
        %7043 = vmatpush1.msra.mxu0 0.0
        %7044 = vmatprep.subr.mxu0 0.0
        %7045 = vmatpush1.msra.mxu0 0.0
        %7046 = vmatprep.subr.mxu0 0.0
        %7047 = vmatpush1.msra.mxu0 0.0
        %7048 = vmatprep.mubr.f32.mxu0 0.0
        %7049 = vmatmul.mubr.f32.gmra.mrb[0].mxu0 %v6951
        %v7050 = vpop.f32.mrb[0].mxu0
        %v7051 = vadd.f32 0.0, %v7050
        %v7052 = vpop.f32.mrb[0].mxu0
        %v7053 = vadd.f32 0.0, %v7052
        %7054 = vdwg.mxu0
        %v7055 = vadd.f32 %v6943, %v7051
        %v7056 = vadd.f32 %v6944, %v7053
        %s7057 = scalar_lea.vmem [#allocation9], 8
        %v7058 = vld [vmem:[%s7057] ss:$18 sm:$0xff]
        %s7059 = scalar_lea.vmem [#allocation9], 9
        %v7060 = vld [vmem:[%s7059] ss:$18 sm:$0xff]
        %v7061 = vmax.f32 %v7058, %v7060
        %v7062 = vadd.f32 %v7061, %v6616
        %v7063 = vmax.f32 %v7062, 0.0
        %v7064 = vld [vmem:[#allocation25 + $0x400] sm:$0xff]
        %v7065 = vld [vmem:[#allocation25 + $0x408] sm:$0xff]
        %v7066 = vld [vmem:[#allocation25 + $0x410] sm:$0xff]
        %v7067 = vld [vmem:[#allocation25 + $0x418] sm:$0xff]
        %v7068 = vld [vmem:[#allocation25 + $0x420] sm:$0xff]
        %v7069 = vld [vmem:[#allocation25 + $0x428] sm:$0xff]
        %v7070 = vld [vmem:[#allocation25 + $0x430] sm:$0xff]
        %v7071 = vld [vmem:[#allocation25 + $0x438] sm:$0xff]
        %v7072 = vld [vmem:[#allocation25 + $0x440] sm:$0xff]
        %v7073 = vld [vmem:[#allocation25 + $0x448] sm:$0xff]
        %v7074 = vld [vmem:[#allocation25 + $0x450] sm:$0xff]
        %v7075 = vld [vmem:[#allocation25 + $0x458] sm:$0xff]
        %v7076 = vld [vmem:[#allocation25 + $0x460] sm:$0xff]
        %v7077 = vld [vmem:[#allocation25 + $0x468] sm:$0xff]
        %v7078 = vld [vmem:[#allocation25 + $0x470] sm:$0xff]
        %v7079 = vld [vmem:[#allocation25 + $0x478] sm:$0xff]
        %v7080 = vld [vmem:[#allocation25 + $0x480] sm:$0xff]
        %v7081 = vld [vmem:[#allocation25 + $0x488] sm:$0xff]
        %v7082 = vld [vmem:[#allocation25 + $0x490] sm:$0xff]
        %v7083 = vld [vmem:[#allocation25 + $0x498] sm:$0xff]
        %v7084 = vld [vmem:[#allocation25 + $0x4a0] sm:$0xff]
        %v7085 = vld [vmem:[#allocation25 + $0x4a8] sm:$0xff]
        %v7086 = vld [vmem:[#allocation25 + $0x4b0] sm:$0xff]
        %v7087 = vld [vmem:[#allocation25 + $0x4b8] sm:$0xff]
        %v7088 = vld [vmem:[#allocation25 + $0x4c0] sm:$0xff]
        %v7089 = vld [vmem:[#allocation25 + $0x4c8] sm:$0xff]
        %v7090 = vld [vmem:[#allocation25 + $0x4d0] sm:$0xff]
        %v7091 = vld [vmem:[#allocation25 + $0x4d8] sm:$0xff]
        %v7092 = vld [vmem:[#allocation25 + $0x4e0] sm:$0xff]
        %v7093 = vld [vmem:[#allocation25 + $0x4e8] sm:$0xff]
        %v7094 = vld [vmem:[#allocation25 + $0x4f0] sm:$0xff]
        %v7095 = vld [vmem:[#allocation25 + $0x4f8] sm:$0xff]
        %7096 = vmatprep.subr.mxu0 %v7065
        %7097 = vmatpush1.msra.mxu0 %v7064
        %7098 = vmatprep.subr.mxu0 %v7067
        %7099 = vmatpush1.msra.mxu0 %v7066
        %7100 = vmatprep.subr.mxu0 %v7069
        %7101 = vmatpush1.msra.mxu0 %v7068
        %7102 = vmatprep.subr.mxu0 %v7071
        %7103 = vmatpush1.msra.mxu0 %v7070
        %7104 = vmatprep.subr.mxu0 %v7073
        %7105 = vmatpush1.msra.mxu0 %v7072
        %7106 = vmatprep.subr.mxu0 %v7075
        %7107 = vmatpush1.msra.mxu0 %v7074
        %7108 = vmatprep.subr.mxu0 %v7077
        %7109 = vmatpush1.msra.mxu0 %v7076
        %7110 = vmatprep.subr.mxu0 %v7079
        %7111 = vmatpush1.msra.mxu0 %v7078
        %7112 = vmatprep.subr.mxu0 %v7081
        %7113 = vmatpush1.msra.mxu0 %v7080
        %7114 = vmatprep.subr.mxu0 %v7083
        %7115 = vmatpush1.msra.mxu0 %v7082
        %7116 = vmatprep.subr.mxu0 %v7085
        %7117 = vmatpush1.msra.mxu0 %v7084
        %7118 = vmatprep.subr.mxu0 %v7087
        %7119 = vmatpush1.msra.mxu0 %v7086
        %7120 = vmatprep.subr.mxu0 %v7089
        %7121 = vmatpush1.msra.mxu0 %v7088
        %7122 = vmatprep.subr.mxu0 %v7091
        %7123 = vmatpush1.msra.mxu0 %v7090
        %7124 = vmatprep.subr.mxu0 %v7093
        %7125 = vmatpush1.msra.mxu0 %v7092
        %7126 = vmatprep.subr.mxu0 %v7095
        %7127 = vmatpush1.msra.mxu0 %v7094
        %7128 = vmatprep.subr.mxu0 0.0
        %7129 = vmatpush1.msra.mxu0 0.0
        %7130 = vmatprep.subr.mxu0 0.0
        %7131 = vmatpush1.msra.mxu0 0.0
        %7132 = vmatprep.subr.mxu0 0.0
        %7133 = vmatpush1.msra.mxu0 0.0
        %7134 = vmatprep.subr.mxu0 0.0
        %7135 = vmatpush1.msra.mxu0 0.0
        %7136 = vmatprep.subr.mxu0 0.0
        %7137 = vmatpush1.msra.mxu0 0.0
        %7138 = vmatprep.subr.mxu0 0.0
        %7139 = vmatpush1.msra.mxu0 0.0
        %7140 = vmatprep.subr.mxu0 0.0
        %7141 = vmatpush1.msra.mxu0 0.0
        %7142 = vmatprep.subr.mxu0 0.0
        %7143 = vmatpush1.msra.mxu0 0.0
        %7144 = vmatprep.subr.mxu0 0.0
        %7145 = vmatpush1.msra.mxu0 0.0
        %7146 = vmatprep.subr.mxu0 0.0
        %7147 = vmatpush1.msra.mxu0 0.0
        %7148 = vmatprep.subr.mxu0 0.0
        %7149 = vmatpush1.msra.mxu0 0.0
        %7150 = vmatprep.subr.mxu0 0.0
        %7151 = vmatpush1.msra.mxu0 0.0
        %7152 = vmatprep.subr.mxu0 0.0
        %7153 = vmatpush1.msra.mxu0 0.0
        %7154 = vmatprep.subr.mxu0 0.0
        %7155 = vmatpush1.msra.mxu0 0.0
        %7156 = vmatprep.subr.mxu0 0.0
        %7157 = vmatpush1.msra.mxu0 0.0
        %7158 = vmatprep.subr.mxu0 0.0
        %7159 = vmatpush1.msra.mxu0 0.0
        %7160 = vmatprep.mubr.f32.mxu0 0.0
        %7161 = vmatmul.mubr.f32.gmra.mrb[0].mxu0 %v7063
        %v7162 = vpop.f32.mrb[0].mxu0
        %v7163 = vadd.f32 0.0, %v7162
        %v7164 = vpop.f32.mrb[0].mxu0
        %v7165 = vadd.f32 0.0, %v7164
        %7166 = vdwg.mxu0
        %v7167 = vadd.f32 %v7055, %v7163
        %v7168 = vadd.f32 %v7056, %v7165
        %s7169 = scalar_lea.vmem [#allocation9], 10
        %v7170 = vld [vmem:[%s7169] ss:$18 sm:$0xff]
        %s7171 = scalar_lea.vmem [#allocation9], 11
        %v7172 = vld [vmem:[%s7171] ss:$18 sm:$0xff]
        %v7173 = vmax.f32 %v7170, %v7172
        %v7174 = vadd.f32 %v7173, %v6616
        %v7175 = vmax.f32 %v7174, 0.0
        %v7176 = vld [vmem:[#allocation25 + $0x500] sm:$0xff]
        %v7177 = vld [vmem:[#allocation25 + $0x508] sm:$0xff]
        %v7178 = vld [vmem:[#allocation25 + $0x510] sm:$0xff]
        %v7179 = vld [vmem:[#allocation25 + $0x518] sm:$0xff]
        %v7180 = vld [vmem:[#allocation25 + $0x520] sm:$0xff]
        %v7181 = vld [vmem:[#allocation25 + $0x528] sm:$0xff]
        %v7182 = vld [vmem:[#allocation25 + $0x530] sm:$0xff]
        %v7183 = vld [vmem:[#allocation25 + $0x538] sm:$0xff]
        %v7184 = vld [vmem:[#allocation25 + $0x540] sm:$0xff]
        %v7185 = vld [vmem:[#allocation25 + $0x548] sm:$0xff]
        %v7186 = vld [vmem:[#allocation25 + $0x550] sm:$0xff]
        %v7187 = vld [vmem:[#allocation25 + $0x558] sm:$0xff]
        %v7188 = vld [vmem:[#allocation25 + $0x560] sm:$0xff]
        %v7189 = vld [vmem:[#allocation25 + $0x568] sm:$0xff]
        %v7190 = vld [vmem:[#allocation25 + $0x570] sm:$0xff]
        %v7191 = vld [vmem:[#allocation25 + $0x578] sm:$0xff]
        %v7192 = vld [vmem:[#allocation25 + $0x580] sm:$0xff]
        %v7193 = vld [vmem:[#allocation25 + $0x588] sm:$0xff]
        %v7194 = vld [vmem:[#allocation25 + $0x590] sm:$0xff]
        %v7195 = vld [vmem:[#allocation25 + $0x598] sm:$0xff]
        %v7196 = vld [vmem:[#allocation25 + $0x5a0] sm:$0xff]
        %v7197 = vld [vmem:[#allocation25 + $0x5a8] sm:$0xff]
        %v7198 = vld [vmem:[#allocation25 + $0x5b0] sm:$0xff]
        %v7199 = vld [vmem:[#allocation25 + $0x5b8] sm:$0xff]
        %v7200 = vld [vmem:[#allocation25 + $0x5c0] sm:$0xff]
        %v7201 = vld [vmem:[#allocation25 + $0x5c8] sm:$0xff]
        %v7202 = vld [vmem:[#allocation25 + $0x5d0] sm:$0xff]
        %v7203 = vld [vmem:[#allocation25 + $0x5d8] sm:$0xff]
        %v7204 = vld [vmem:[#allocation25 + $0x5e0] sm:$0xff]
        %v7205 = vld [vmem:[#allocation25 + $0x5e8] sm:$0xff]
        %v7206 = vld [vmem:[#allocation25 + $0x5f0] sm:$0xff]
        %v7207 = vld [vmem:[#allocation25 + $0x5f8] sm:$0xff]
        %7208 = vmatprep.subr.mxu0 %v7177
        %7209 = vmatpush1.msra.mxu0 %v7176
        %7210 = vmatprep.subr.mxu0 %v7179
        %7211 = vmatpush1.msra.mxu0 %v7178
        %7212 = vmatprep.subr.mxu0 %v7181
        %7213 = vmatpush1.msra.mxu0 %v7180
        %7214 = vmatprep.subr.mxu0 %v7183
        %7215 = vmatpush1.msra.mxu0 %v7182
        %7216 = vmatprep.subr.mxu0 %v7185
        %7217 = vmatpush1.msra.mxu0 %v7184
        %7218 = vmatprep.subr.mxu0 %v7187
        %7219 = vmatpush1.msra.mxu0 %v7186
        %7220 = vmatprep.subr.mxu0 %v7189
        %7221 = vmatpush1.msra.mxu0 %v7188
        %7222 = vmatprep.subr.mxu0 %v7191
        %7223 = vmatpush1.msra.mxu0 %v7190
        %7224 = vmatprep.subr.mxu0 %v7193
        %7225 = vmatpush1.msra.mxu0 %v7192
        %7226 = vmatprep.subr.mxu0 %v7195
        %7227 = vmatpush1.msra.mxu0 %v7194
        %7228 = vmatprep.subr.mxu0 %v7197
        %7229 = vmatpush1.msra.mxu0 %v7196
        %7230 = vmatprep.subr.mxu0 %v7199
        %7231 = vmatpush1.msra.mxu0 %v7198
        %7232 = vmatprep.subr.mxu0 %v7201
        %7233 = vmatpush1.msra.mxu0 %v7200
        %7234 = vmatprep.subr.mxu0 %v7203
        %7235 = vmatpush1.msra.mxu0 %v7202
        %7236 = vmatprep.subr.mxu0 %v7205
        %7237 = vmatpush1.msra.mxu0 %v7204
        %7238 = vmatprep.subr.mxu0 %v7207
        %7239 = vmatpush1.msra.mxu0 %v7206
        %7240 = vmatprep.subr.mxu0 0.0
        %7241 = vmatpush1.msra.mxu0 0.0
        %7242 = vmatprep.subr.mxu0 0.0
        %7243 = vmatpush1.msra.mxu0 0.0
        %7244 = vmatprep.subr.mxu0 0.0
        %7245 = vmatpush1.msra.mxu0 0.0
        %7246 = vmatprep.subr.mxu0 0.0
        %7247 = vmatpush1.msra.mxu0 0.0
        %7248 = vmatprep.subr.mxu0 0.0
        %7249 = vmatpush1.msra.mxu0 0.0
        %7250 = vmatprep.subr.mxu0 0.0
        %7251 = vmatpush1.msra.mxu0 0.0
        %7252 = vmatprep.subr.mxu0 0.0
        %7253 = vmatpush1.msra.mxu0 0.0
        %7254 = vmatprep.subr.mxu0 0.0
        %7255 = vmatpush1.msra.mxu0 0.0
        %7256 = vmatprep.subr.mxu0 0.0
        %7257 = vmatpush1.msra.mxu0 0.0
        %7258 = vmatprep.subr.mxu0 0.0
        %7259 = vmatpush1.msra.mxu0 0.0
        %7260 = vmatprep.subr.mxu0 0.0
        %7261 = vmatpush1.msra.mxu0 0.0
        %7262 = vmatprep.subr.mxu0 0.0
        %7263 = vmatpush1.msra.mxu0 0.0
        %7264 = vmatprep.subr.mxu0 0.0
        %7265 = vmatpush1.msra.mxu0 0.0
        %7266 = vmatprep.subr.mxu0 0.0
        %7267 = vmatpush1.msra.mxu0 0.0
        %7268 = vmatprep.subr.mxu0 0.0
        %7269 = vmatpush1.msra.mxu0 0.0
        %7270 = vmatprep.subr.mxu0 0.0
        %7271 = vmatpush1.msra.mxu0 0.0
        %7272 = vmatprep.mubr.f32.mxu0 0.0
        %7273 = vmatmul.mubr.f32.gmra.mrb[0].mxu0 %v7175
        %v7274 = vpop.f32.mrb[0].mxu0
        %v7275 = vadd.f32 0.0, %v7274
        %v7276 = vpop.f32.mrb[0].mxu0
        %v7277 = vadd.f32 0.0, %v7276
        %7278 = vdwg.mxu0
        %v7279 = vadd.f32 %v7167, %v7275
        %v7280 = vadd.f32 %v7168, %v7277
        %s7281 = scalar_lea.vmem [#allocation9], 12
        %v7282 = vld [vmem:[%s7281] ss:$18 sm:$0xff]
        %s7283 = scalar_lea.vmem [#allocation9], 13
        %v7284 = vld [vmem:[%s7283] ss:$18 sm:$0xff]
        %v7285 = vmax.f32 %v7282, %v7284
        %v7286 = vadd.f32 %v7285, %v6616
        %v7287 = vmax.f32 %v7286, 0.0
        %v7288 = vld [vmem:[#allocation25 + $0x600] sm:$0xff]
        %v7289 = vld [vmem:[#allocation25 + $0x608] sm:$0xff]
        %v7290 = vld [vmem:[#allocation25 + $0x610] sm:$0xff]
        %v7291 = vld [vmem:[#allocation25 + $0x618] sm:$0xff]
        %v7292 = vld [vmem:[#allocation25 + $0x620] sm:$0xff]
        %v7293 = vld [vmem:[#allocation25 + $0x628] sm:$0xff]
        %v7294 = vld [vmem:[#allocation25 + $0x630] sm:$0xff]
        %v7295 = vld [vmem:[#allocation25 + $0x638] sm:$0xff]
        %v7296 = vld [vmem:[#allocation25 + $0x640] sm:$0xff]
        %v7297 = vld [vmem:[#allocation25 + $0x648] sm:$0xff]
        %v7298 = vld [vmem:[#allocation25 + $0x650] sm:$0xff]
        %v7299 = vld [vmem:[#allocation25 + $0x658] sm:$0xff]
        %v7300 = vld [vmem:[#allocation25 + $0x660] sm:$0xff]
        %v7301 = vld [vmem:[#allocation25 + $0x668] sm:$0xff]
        %v7302 = vld [vmem:[#allocation25 + $0x670] sm:$0xff]
        %v7303 = vld [vmem:[#allocation25 + $0x678] sm:$0xff]
        %v7304 = vld [vmem:[#allocation25 + $0x680] sm:$0xff]
        %v7305 = vld [vmem:[#allocation25 + $0x688] sm:$0xff]
        %v7306 = vld [vmem:[#allocation25 + $0x690] sm:$0xff]
        %v7307 = vld [vmem:[#allocation25 + $0x698] sm:$0xff]
        %v7308 = vld [vmem:[#allocation25 + $0x6a0] sm:$0xff]
        %v7309 = vld [vmem:[#allocation25 + $0x6a8] sm:$0xff]
        %v7310 = vld [vmem:[#allocation25 + $0x6b0] sm:$0xff]
        %v7311 = vld [vmem:[#allocation25 + $0x6b8] sm:$0xff]
        %v7312 = vld [vmem:[#allocation25 + $0x6c0] sm:$0xff]
        %v7313 = vld [vmem:[#allocation25 + $0x6c8] sm:$0xff]
        %v7314 = vld [vmem:[#allocation25 + $0x6d0] sm:$0xff]
        %v7315 = vld [vmem:[#allocation25 + $0x6d8] sm:$0xff]
        %v7316 = vld [vmem:[#allocation25 + $0x6e0] sm:$0xff]
        %v7317 = vld [vmem:[#allocation25 + $0x6e8] sm:$0xff]
        %v7318 = vld [vmem:[#allocation25 + $0x6f0] sm:$0xff]
        %v7319 = vld [vmem:[#allocation25 + $0x6f8] sm:$0xff]
        %7320 = vmatprep.subr.mxu0 %v7289
        %7321 = vmatpush1.msra.mxu0 %v7288
        %7322 = vmatprep.subr.mxu0 %v7291
        %7323 = vmatpush1.msra.mxu0 %v7290
        %7324 = vmatprep.subr.mxu0 %v7293
        %7325 = vmatpush1.msra.mxu0 %v7292
        %7326 = vmatprep.subr.mxu0 %v7295
        %7327 = vmatpush1.msra.mxu0 %v7294
        %7328 = vmatprep.subr.mxu0 %v7297
        %7329 = vmatpush1.msra.mxu0 %v7296
        %7330 = vmatprep.subr.mxu0 %v7299
        %7331 = vmatpush1.msra.mxu0 %v7298
        %7332 = vmatprep.subr.mxu0 %v7301
        %7333 = vmatpush1.msra.mxu0 %v7300
        %7334 = vmatprep.subr.mxu0 %v7303
        %7335 = vmatpush1.msra.mxu0 %v7302
        %7336 = vmatprep.subr.mxu0 %v7305
        %7337 = vmatpush1.msra.mxu0 %v7304
        %7338 = vmatprep.subr.mxu0 %v7307
        %7339 = vmatpush1.msra.mxu0 %v7306
        %7340 = vmatprep.subr.mxu0 %v7309
        %7341 = vmatpush1.msra.mxu0 %v7308
        %7342 = vmatprep.subr.mxu0 %v7311
        %7343 = vmatpush1.msra.mxu0 %v7310
        %7344 = vmatprep.subr.mxu0 %v7313
        %7345 = vmatpush1.msra.mxu0 %v7312
        %7346 = vmatprep.subr.mxu0 %v7315
        %7347 = vmatpush1.msra.mxu0 %v7314
        %7348 = vmatprep.subr.mxu0 %v7317
        %7349 = vmatpush1.msra.mxu0 %v7316
        %7350 = vmatprep.subr.mxu0 %v7319
        %7351 = vmatpush1.msra.mxu0 %v7318
        %7352 = vmatprep.subr.mxu0 0.0
        %7353 = vmatpush1.msra.mxu0 0.0
        %7354 = vmatprep.subr.mxu0 0.0
        %7355 = vmatpush1.msra.mxu0 0.0
        %7356 = vmatprep.subr.mxu0 0.0
        %7357 = vmatpush1.msra.mxu0 0.0
        %7358 = vmatprep.subr.mxu0 0.0
        %7359 = vmatpush1.msra.mxu0 0.0
        %7360 = vmatprep.subr.mxu0 0.0
        %7361 = vmatpush1.msra.mxu0 0.0
        %7362 = vmatprep.subr.mxu0 0.0
        %7363 = vmatpush1.msra.mxu0 0.0
        %7364 = vmatprep.subr.mxu0 0.0
        %7365 = vmatpush1.msra.mxu0 0.0
        %7366 = vmatprep.subr.mxu0 0.0
        %7367 = vmatpush1.msra.mxu0 0.0
        %7368 = vmatprep.subr.mxu0 0.0
        %7369 = vmatpush1.msra.mxu0 0.0
        %7370 = vmatprep.subr.mxu0 0.0
        %7371 = vmatpush1.msra.mxu0 0.0
        %7372 = vmatprep.subr.mxu0 0.0
        %7373 = vmatpush1.msra.mxu0 0.0
        %7374 = vmatprep.subr.mxu0 0.0
        %7375 = vmatpush1.msra.mxu0 0.0
        %7376 = vmatprep.subr.mxu0 0.0
        %7377 = vmatpush1.msra.mxu0 0.0
        %7378 = vmatprep.subr.mxu0 0.0
        %7379 = vmatpush1.msra.mxu0 0.0
        %7380 = vmatprep.subr.mxu0 0.0
        %7381 = vmatpush1.msra.mxu0 0.0
        %7382 = vmatprep.subr.mxu0 0.0
        %7383 = vmatpush1.msra.mxu0 0.0
        %7384 = vmatprep.mubr.f32.mxu0 0.0
        %7385 = vmatmul.mubr.f32.gmra.mrb[0].mxu0 %v7287
        %v7386 = vpop.f32.mrb[0].mxu0
        %v7387 = vadd.f32 0.0, %v7386
        %v7388 = vpop.f32.mrb[0].mxu0
        %v7389 = vadd.f32 0.0, %v7388
        %7390 = vdwg.mxu0
        %v7391 = vadd.f32 %v7279, %v7387
        %v7392 = vadd.f32 %v7280, %v7389
        %s7393 = scalar_lea.vmem [#allocation9], 14
        %v7394 = vld [vmem:[%s7393] ss:$18 sm:$0xff]
        %s7395 = scalar_lea.vmem [#allocation9], 15
        %v7396 = vld [vmem:[%s7395] ss:$18 sm:$0xff]
        %v7397 = vmax.f32 %v7394, %v7396
        %v7398 = vadd.f32 %v7397, %v6616
        %v7399 = vmax.f32 %v7398, 0.0
        %v7400 = vld [vmem:[#allocation25 + $0x700] sm:$0xff]
        %v7401 = vld [vmem:[#allocation25 + $0x708] sm:$0xff]
        %v7402 = vld [vmem:[#allocation25 + $0x710] sm:$0xff]
        %v7403 = vld [vmem:[#allocation25 + $0x718] sm:$0xff]
        %v7404 = vld [vmem:[#allocation25 + $0x720] sm:$0xff]
        %v7405 = vld [vmem:[#allocation25 + $0x728] sm:$0xff]
        %v7406 = vld [vmem:[#allocation25 + $0x730] sm:$0xff]
        %v7407 = vld [vmem:[#allocation25 + $0x738] sm:$0xff]
        %v7408 = vld [vmem:[#allocation25 + $0x740] sm:$0xff]
        %v7409 = vld [vmem:[#allocation25 + $0x748] sm:$0xff]
        %v7410 = vld [vmem:[#allocation25 + $0x750] sm:$0xff]
        %v7411 = vld [vmem:[#allocation25 + $0x758] sm:$0xff]
        %v7412 = vld [vmem:[#allocation25 + $0x760] sm:$0xff]
        %v7413 = vld [vmem:[#allocation25 + $0x768] sm:$0xff]
        %v7414 = vld [vmem:[#allocation25 + $0x770] sm:$0xff]
        %v7415 = vld [vmem:[#allocation25 + $0x778] sm:$0xff]
        %v7416 = vld [vmem:[#allocation25 + $0x780] sm:$0xff]
        %v7417 = vld [vmem:[#allocation25 + $0x788] sm:$0xff]
        %v7418 = vld [vmem:[#allocation25 + $0x790] sm:$0xff]
        %v7419 = vld [vmem:[#allocation25 + $0x798] sm:$0xff]
        %v7420 = vld [vmem:[#allocation25 + $0x7a0] sm:$0xff]
        %v7421 = vld [vmem:[#allocation25 + $0x7a8] sm:$0xff]
        %v7422 = vld [vmem:[#allocation25 + $0x7b0] sm:$0xff]
        %v7423 = vld [vmem:[#allocation25 + $0x7b8] sm:$0xff]
        %v7424 = vld [vmem:[#allocation25 + $0x7c0] sm:$0xff]
        %v7425 = vld [vmem:[#allocation25 + $0x7c8] sm:$0xff]
        %v7426 = vld [vmem:[#allocation25 + $0x7d0] sm:$0xff]
        %v7427 = vld [vmem:[#allocation25 + $0x7d8] sm:$0xff]
        %v7428 = vld [vmem:[#allocation25 + $0x7e0] sm:$0xff]
        %v7429 = vld [vmem:[#allocation25 + $0x7e8] sm:$0xff]
        %v7430 = vld [vmem:[#allocation25 + $0x7f0] sm:$0xff]
        %v7431 = vld [vmem:[#allocation25 + $0x7f8] sm:$0xff]
        %7432 = vmatprep.subr.mxu0 %v7401
        %7433 = vmatpush1.msra.mxu0 %v7400
        %7434 = vmatprep.subr.mxu0 %v7403
        %7435 = vmatpush1.msra.mxu0 %v7402
        %7436 = vmatprep.subr.mxu0 %v7405
        %7437 = vmatpush1.msra.mxu0 %v7404
        %7438 = vmatprep.subr.mxu0 %v7407
        %7439 = vmatpush1.msra.mxu0 %v7406
        %7440 = vmatprep.subr.mxu0 %v7409
        %7441 = vmatpush1.msra.mxu0 %v7408
        %7442 = vmatprep.subr.mxu0 %v7411
        %7443 = vmatpush1.msra.mxu0 %v7410
        %7444 = vmatprep.subr.mxu0 %v7413
        %7445 = vmatpush1.msra.mxu0 %v7412
        %7446 = vmatprep.subr.mxu0 %v7415
        %7447 = vmatpush1.msra.mxu0 %v7414
        %7448 = vmatprep.subr.mxu0 %v7417
        %7449 = vmatpush1.msra.mxu0 %v7416
        %7450 = vmatprep.subr.mxu0 %v7419
        %7451 = vmatpush1.msra.mxu0 %v7418
        %7452 = vmatprep.subr.mxu0 %v7421
        %7453 = vmatpush1.msra.mxu0 %v7420
        %7454 = vmatprep.subr.mxu0 %v7423
        %7455 = vmatpush1.msra.mxu0 %v7422
        %7456 = vmatprep.subr.mxu0 %v7425
        %7457 = vmatpush1.msra.mxu0 %v7424
        %7458 = vmatprep.subr.mxu0 %v7427
        %7459 = vmatpush1.msra.mxu0 %v7426
        %7460 = vmatprep.subr.mxu0 %v7429
        %7461 = vmatpush1.msra.mxu0 %v7428
        %7462 = vmatprep.subr.mxu0 %v7431
        %7463 = vmatpush1.msra.mxu0 %v7430
        %7464 = vmatprep.subr.mxu0 0.0
        %7465 = vmatpush1.msra.mxu0 0.0
        %7466 = vmatprep.subr.mxu0 0.0
        %7467 = vmatpush1.msra.mxu0 0.0
        %7468 = vmatprep.subr.mxu0 0.0
        %7469 = vmatpush1.msra.mxu0 0.0
        %7470 = vmatprep.subr.mxu0 0.0
        %7471 = vmatpush1.msra.mxu0 0.0
        %7472 = vmatprep.subr.mxu0 0.0
        %7473 = vmatpush1.msra.mxu0 0.0
        %7474 = vmatprep.subr.mxu0 0.0
        %7475 = vmatpush1.msra.mxu0 0.0
        %7476 = vmatprep.subr.mxu0 0.0
        %7477 = vmatpush1.msra.mxu0 0.0
        %7478 = vmatprep.subr.mxu0 0.0
        %7479 = vmatpush1.msra.mxu0 0.0
        %7480 = vmatprep.subr.mxu0 0.0
        %7481 = vmatpush1.msra.mxu0 0.0
        %7482 = vmatprep.subr.mxu0 0.0
        %7483 = vmatpush1.msra.mxu0 0.0
        %7484 = vmatprep.subr.mxu0 0.0
        %7485 = vmatpush1.msra.mxu0 0.0
        %7486 = vmatprep.subr.mxu0 0.0
        %7487 = vmatpush1.msra.mxu0 0.0
        %7488 = vmatprep.subr.mxu0 0.0
        %7489 = vmatpush1.msra.mxu0 0.0
        %7490 = vmatprep.subr.mxu0 0.0
        %7491 = vmatpush1.msra.mxu0 0.0
        %7492 = vmatprep.subr.mxu0 0.0
        %7493 = vmatpush1.msra.mxu0 0.0
        %7494 = vmatprep.subr.mxu0 0.0
        %7495 = vmatpush1.msra.mxu0 0.0
        %7496 = vmatprep.mubr.f32.mxu0 0.0
        %7497 = vmatmul.mubr.f32.gmra.mrb[0].mxu0 %v7399
        %v7498 = vpop.f32.mrb[0].mxu0
        %v7499 = vadd.f32 0.0, %v7498
        %v7500 = vpop.f32.mrb[0].mxu0
        %v7501 = vadd.f32 0.0, %v7500
        %7502 = vdwg.mxu0
        %v7503 = vadd.f32 %v7391, %v7499
        %v7504 = vadd.f32 %v7392, %v7501
        %v7505 = vld [vmem:[#allocation27] sm:$0x3]
        %v7507 = vlaneseq
        %v7508 = vshrl.u32 %v7507, 7
        %v7509 = vsub.s32 0, %v7508
        %v7510 = vrot.slane %v7505, %v7509
        %v7511 = vlaneseq
        %v7512 = vshrl.u32 %v7511, 7
        %v7513 = vsub.s32 1, %v7512
        %v7514 = vrot.slane %v7505, %v7513
        %v7517 = vadd.f32 %v7503, %v7510
        %v7518 = vadd.f32 %v7504, %v7514
        %v7519 = vmax.f32 %v7517, 0.0
        %v7520 = vmax.f32 %v7518, 0.0
        %v7521 = vld [vmem:[#allocation28] sm:$0xff]
        %v7522 = vld [vmem:[#allocation28 + $0x8] sm:$0xff]
        %v7523 = vld [vmem:[#allocation28 + $0x10] sm:$0xff]
        %v7524 = vld [vmem:[#allocation28 + $0x18] sm:$0xff]
        %v7525 = vld [vmem:[#allocation28 + $0x20] sm:$0xff]
        %v7526 = vld [vmem:[#allocation28 + $0x28] sm:$0xff]
        %v7527 = vld [vmem:[#allocation28 + $0x30] sm:$0xff]
        %v7528 = vld [vmem:[#allocation28 + $0x38] sm:$0xff]
        %v7529 = vld [vmem:[#allocation28 + $0x40] sm:$0xff]
        %v7530 = vld [vmem:[#allocation28 + $0x48] sm:$0xff]
        %v7531 = vld [vmem:[#allocation28 + $0x50] sm:$0xff]
        %v7532 = vld [vmem:[#allocation28 + $0x58] sm:$0xff]
        %v7533 = vld [vmem:[#allocation28 + $0x60] sm:$0xff]
        %v7534 = vld [vmem:[#allocation28 + $0x68] sm:$0xff]
        %v7535 = vld [vmem:[#allocation28 + $0x70] sm:$0xff]
        %v7536 = vld [vmem:[#allocation28 + $0x78] sm:$0xff]
        %v7537 = vld [vmem:[#allocation28 + $0x80] sm:$0xff]
        %v7538 = vld [vmem:[#allocation28 + $0x88] sm:$0xff]
        %v7539 = vld [vmem:[#allocation28 + $0x90] sm:$0xff]
        %v7540 = vld [vmem:[#allocation28 + $0x98] sm:$0xff]
        %v7541 = vld [vmem:[#allocation28 + $0xa0] sm:$0xff]
        %v7542 = vld [vmem:[#allocation28 + $0xa8] sm:$0xff]
        %v7543 = vld [vmem:[#allocation28 + $0xb0] sm:$0xff]
        %v7544 = vld [vmem:[#allocation28 + $0xb8] sm:$0xff]
        %v7545 = vld [vmem:[#allocation28 + $0xc0] sm:$0xff]
        %v7546 = vld [vmem:[#allocation28 + $0xc8] sm:$0xff]
        %v7547 = vld [vmem:[#allocation28 + $0xd0] sm:$0xff]
        %v7548 = vld [vmem:[#allocation28 + $0xd8] sm:$0xff]
        %v7549 = vld [vmem:[#allocation28 + $0xe0] sm:$0xff]
        %v7550 = vld [vmem:[#allocation28 + $0xe8] sm:$0xff]
        %v7551 = vld [vmem:[#allocation28 + $0xf0] sm:$0xff]
        %v7552 = vld [vmem:[#allocation28 + $0xf8] sm:$0xff]
        %v7553 = vld [vmem:[#allocation30] sm:$0x1]
        %v7555 = vlaneseq
        %v7556 = vshrl.u32 %v7555, 7
        %v7557 = vsub.s32 0, %v7556
        %v7558 = vrot.slane %v7553, %v7557
        %7560 = vmatprep.subr.mxu0 0.0
        %7561 = vmatpush1.msra.mxu0 %v7521
        %7562 = vmatprep.subr.mxu0 0.0
        %7563 = vmatpush1.msra.mxu0 %v7522
        %7564 = vmatprep.subr.mxu0 0.0
        %7565 = vmatpush1.msra.mxu0 %v7523
        %7566 = vmatprep.subr.mxu0 0.0
        %7567 = vmatpush1.msra.mxu0 %v7524
        %7568 = vmatprep.subr.mxu0 0.0
        %7569 = vmatpush1.msra.mxu0 %v7525
        %7570 = vmatprep.subr.mxu0 0.0
        %7571 = vmatpush1.msra.mxu0 %v7526
        %7572 = vmatprep.subr.mxu0 0.0
        %7573 = vmatpush1.msra.mxu0 %v7527
        %7574 = vmatprep.subr.mxu0 0.0
        %7575 = vmatpush1.msra.mxu0 %v7528
        %7576 = vmatprep.subr.mxu0 0.0
        %7577 = vmatpush1.msra.mxu0 %v7529
        %7578 = vmatprep.subr.mxu0 0.0
        %7579 = vmatpush1.msra.mxu0 %v7530
        %7580 = vmatprep.subr.mxu0 0.0
        %7581 = vmatpush1.msra.mxu0 %v7531
        %7582 = vmatprep.subr.mxu0 0.0
        %7583 = vmatpush1.msra.mxu0 %v7532
        %7584 = vmatprep.subr.mxu0 0.0
        %7585 = vmatpush1.msra.mxu0 %v7533
        %7586 = vmatprep.subr.mxu0 0.0
        %7587 = vmatpush1.msra.mxu0 %v7534
        %7588 = vmatprep.subr.mxu0 0.0
        %7589 = vmatpush1.msra.mxu0 %v7535
        %7590 = vmatprep.subr.mxu0 0.0
        %7591 = vmatpush1.msra.mxu0 %v7536
        %7592 = vmatprep.subr.mxu0 0.0
        %7593 = vmatpush1.msra.mxu0 %v7537
        %7594 = vmatprep.subr.mxu0 0.0
        %7595 = vmatpush1.msra.mxu0 %v7538
        %7596 = vmatprep.subr.mxu0 0.0
        %7597 = vmatpush1.msra.mxu0 %v7539
        %7598 = vmatprep.subr.mxu0 0.0
        %7599 = vmatpush1.msra.mxu0 %v7540
        %7600 = vmatprep.subr.mxu0 0.0
        %7601 = vmatpush1.msra.mxu0 %v7541
        %7602 = vmatprep.subr.mxu0 0.0
        %7603 = vmatpush1.msra.mxu0 %v7542
        %7604 = vmatprep.subr.mxu0 0.0
        %7605 = vmatpush1.msra.mxu0 %v7543
        %7606 = vmatprep.subr.mxu0 0.0
        %7607 = vmatpush1.msra.mxu0 %v7544
        %7608 = vmatprep.subr.mxu0 0.0
        %7609 = vmatpush1.msra.mxu0 %v7545
        %7610 = vmatprep.subr.mxu0 0.0
        %7611 = vmatpush1.msra.mxu0 %v7546
        %7612 = vmatprep.subr.mxu0 0.0
        %7613 = vmatpush1.msra.mxu0 %v7547
        %7614 = vmatprep.subr.mxu0 0.0
        %7615 = vmatpush1.msra.mxu0 %v7548
        %7616 = vmatprep.subr.mxu0 0.0
        %7617 = vmatpush1.msra.mxu0 %v7549
        %7618 = vmatprep.subr.mxu0 0.0
        %7619 = vmatpush1.msra.mxu0 %v7550
        %7620 = vmatprep.subr.mxu0 0.0
        %7621 = vmatpush1.msra.mxu0 %v7551
        %7622 = vmatprep.subr.mxu0 0.0
        %7623 = vmatpush1.msra.mxu0 %v7552
        %7624 = vmatprep.mubr.f32.mxu0 %v7520
        %7625 = vmatmul.mubr.f32.gmra.mrb[0].mxu0 %v7519
        %v7626 = vpop.f32.mrb[0].mxu0
        %v7627 = vadd.f32 %v7558, %v7626
        %v7628 = vpop.f32.mrb[0].mxu0
        %7629 = vdwg.mxu0
        %v7630 = vmax.f32 %v7627, 0.0
        %v7631 = vld [vmem:[#allocation31] sm:$0xff]
        %v7632 = vld [vmem:[#allocation31 + $0x8] sm:$0xff]
        %v7633 = vld [vmem:[#allocation31 + $0x10] sm:$0xff]
        %v7634 = vld [vmem:[#allocation31 + $0x18] sm:$0xff]
        %v7635 = vld [vmem:[#allocation31 + $0x20] sm:$0xff]
        %v7636 = vld [vmem:[#allocation31 + $0x28] sm:$0xff]
        %v7637 = vld [vmem:[#allocation31 + $0x30] sm:$0xff]
        %v7638 = vld [vmem:[#allocation31 + $0x38] sm:$0xff]
        %v7639 = vld [vmem:[#allocation33] sm:$0x1]
        %v7641 = vlaneseq
        %v7642 = vshrl.u32 %v7641, 7
        %v7643 = vsub.s32 0, %v7642
        %v7644 = vrot.slane %v7639, %v7643
        %v7647 = vsel %vm5893, %v7630, 0
        %7649 = vmatprep.subr.mxu0 0.0
        %7650 = vmatpush1.msra.mxu0 %v7631
        %7651 = vmatprep.subr.mxu0 0.0
        %7652 = vmatpush1.msra.mxu0 %v7632
        %7653 = vmatprep.subr.mxu0 0.0
        %7654 = vmatpush1.msra.mxu0 %v7633
        %7655 = vmatprep.subr.mxu0 0.0
        %7656 = vmatpush1.msra.mxu0 %v7634
        %7657 = vmatprep.subr.mxu0 0.0
        %7658 = vmatpush1.msra.mxu0 %v7635
        %7659 = vmatprep.subr.mxu0 0.0
        %7660 = vmatpush1.msra.mxu0 %v7636
        %7661 = vmatprep.subr.mxu0 0.0
        %7662 = vmatpush1.msra.mxu0 %v7637
        %7663 = vmatprep.subr.mxu0 0.0
        %7664 = vmatpush1.msra.mxu0 %v7638
        %7665 = vmatprep.subr.mxu0 0.0
        %7666 = vmatpush1.msra.mxu0 0.0
        %7667 = vmatprep.subr.mxu0 0.0
        %7668 = vmatpush1.msra.mxu0 0.0
        %7669 = vmatprep.subr.mxu0 0.0
        %7670 = vmatpush1.msra.mxu0 0.0
        %7671 = vmatprep.subr.mxu0 0.0
        %7672 = vmatpush1.msra.mxu0 0.0
        %7673 = vmatprep.subr.mxu0 0.0
        %7674 = vmatpush1.msra.mxu0 0.0
        %7675 = vmatprep.subr.mxu0 0.0
        %7676 = vmatpush1.msra.mxu0 0.0
        %7677 = vmatprep.subr.mxu0 0.0
        %7678 = vmatpush1.msra.mxu0 0.0
        %7679 = vmatprep.subr.mxu0 0.0
        %7680 = vmatpush1.msra.mxu0 0.0
        %7681 = vmatprep.subr.mxu0 0.0
        %7682 = vmatpush1.msra.mxu0 0.0
        %7683 = vmatprep.subr.mxu0 0.0
        %7684 = vmatpush1.msra.mxu0 0.0
        %7685 = vmatprep.subr.mxu0 0.0
        %7686 = vmatpush1.msra.mxu0 0.0
        %7687 = vmatprep.subr.mxu0 0.0
        %7688 = vmatpush1.msra.mxu0 0.0
        %7689 = vmatprep.subr.mxu0 0.0
        %7690 = vmatpush1.msra.mxu0 0.0
        %7691 = vmatprep.subr.mxu0 0.0
        %7692 = vmatpush1.msra.mxu0 0.0
        %7693 = vmatprep.subr.mxu0 0.0
        %7694 = vmatpush1.msra.mxu0 0.0
        %7695 = vmatprep.subr.mxu0 0.0
        %7696 = vmatpush1.msra.mxu0 0.0
        %7697 = vmatprep.subr.mxu0 0.0
        %7698 = vmatpush1.msra.mxu0 0.0
        %7699 = vmatprep.subr.mxu0 0.0
        %7700 = vmatpush1.msra.mxu0 0.0
        %7701 = vmatprep.subr.mxu0 0.0
        %7702 = vmatpush1.msra.mxu0 0.0
        %7703 = vmatprep.subr.mxu0 0.0
        %7704 = vmatpush1.msra.mxu0 0.0
        %7705 = vmatprep.subr.mxu0 0.0
        %7706 = vmatpush1.msra.mxu0 0.0
        %7707 = vmatprep.subr.mxu0 0.0
        %7708 = vmatpush1.msra.mxu0 0.0
        %7709 = vmatprep.subr.mxu0 0.0
        %7710 = vmatpush1.msra.mxu0 0.0
        %7711 = vmatprep.subr.mxu0 0.0
        %7712 = vmatpush1.msra.mxu0 0.0
        %7713 = vmatprep.mubr.f32.mxu0 0.0
        %7714 = vmatmul.mubr.f32.gmra.mrb[0].mxu0 %v7647
        %v7715 = vpop.f32.mrb[0].mxu0
        %v7716 = vadd.f32 %v7644, %v7715
        %v7717 = vpop.f32.mrb[0].mxu0
        %7718 = vdwg.mxu0
        %7719 = vst [vmem:[%s701] sm:$0xff] %v7716
        %s7720 = sand.u32 %s367, 1
        %s7721 = scalar_lea.sflag [#allocation12], %s7720
        %s7722 = sand.u32 %s367, 1
        %s7723 = smul.addr %s7722, 8
        %s7724 = scalar_lea.vmem [#allocation34], %s7723
        // Predicated region
        $region141: #{forward.1} parent=79 // pred_check
          %p7725 = pneg %p377
        $region142: #{forward.1} parent=79 // pred_check_branch
          %7727 = sbr.rel (%p7725) target = $region144
        $region143: #{forward.1} parent=79 // pred_region
          %s7729 = ssub.s32 128, 128
          %7730 = vsyncadd %s7721, %s7729
          %s7731 = smul.addr %s39, 128
          %s7732 = scalar_lea.hbm %s15, %s7731
          %s7734 = sshll.u32 %s7724, 4
          %s7735 = int_to_ptr.vmem [resolvable:$true] %s7734
          %7737 = dma.vmem_to_hbm [thread:$0]  %s7735, 128, %s7732, %s7721
        $region144: #{forward.1} parent=79 // pred_fallthru
          _
      $region80: #{forward.1} parent=5 // pred_fallthru
        _
      %p7738 = scmp.le.s32.totalorder 2, %s34
      // Predicated region
      $region145: #{forward.1} parent=5 // pred_check
        %p7739 = pneg %p7738
      $region146: #{forward.1} parent=5 // pred_check_branch
        %7741 = sbr.rel (%p7739) target = $region148
      $region147: #{forward.1} parent=5 // pred_region
        %s7742 = ssub.s32 %s34, 2
        // Predicated region
        $region149: #{forward.1} parent=147 // pred_check
          %p7743 = pneg %p383
        $region150: #{forward.1} parent=147 // pred_check_branch
          %7745 = sbr.rel (%p7743) target = $region152
        $region151: #{forward.1} parent=147 // pred_region
          %s7746 = sand.u32 %s368, 1
          %s7747 = scalar_lea.sflag [#allocation12], %s7746
          %s7748 = sand.u32 %s368, 1
          %s7749 = smul.addr %s7748, 8
          %s7750 = scalar_lea.vmem [#allocation34], %s7749
          %7751 = dma.done %s7747, 128
        $region152: #{forward.1} parent=147 // pred_fallthru
          _
      $region148: #{forward.1} parent=5 // pred_fallthru
        _
    $region6: #{forward.1} parent=1 // loop_footer
      %s38 = sadd.s32 1, %s34
    $region7: #{forward.1} parent=1 // loop_footer_branch
      %33 = sbr.rel target = $region3
    $region8: #{forward.1} parent=1 // loop_exit
      _
    %7752 = vsyncpa [#allocation11], 1
    %s7753 = scalar_lea.sflag [#allocation11], 1
    %7754 = vsyncpa %s7753, 1
    %7755 = vsyncpa [#allocation14], 1
    %7756 = vsyncpa [#allocation17], 1
    %7757 = vsyncpa [#allocation20], 1
    %7758 = vsyncpa [#allocation23], 1
    %7759 = vsyncpa [#allocation26], 1
    %7760 = vsyncpa [#allocation29], 1
    %7761 = vsyncpa [#allocation32], 1
    %7762 = vsyncpa [#allocation12], 1
    %s7763 = scalar_lea.sflag [#allocation12], 1
    %7764 = vsyncpa %s7763, 1

</llo_original>
